<compile_context>
chip_gen: v7x
topology: tpu7x:2x2x1
jax: 0.10.0
libtpu: 0.0.40
codegen_flags: <defaults>
</compile_context>

<pallas_src>
import numpy as np
import jax
import jax.numpy as jnp
from jax.experimental import pallas as pl
from jax.experimental.pallas import tpu as pltpu

_VMEM = pl.BlockSpec(memory_space=pltpu.MemorySpace.VMEM)
_BF16 = jnp.bfloat16
_F32 = jnp.float32


# ----------------------------- fused forward kernel --------------------------

def _fused_forward_kernel(
    x_ref, pd_ref, gsd_ref, scat_ref, pad_ref, unpad_ref,
    mc_ref, ms_ref, md_ref, lat_ref,
    enc_w0_ref, enc_wh_ref, enc_v_ref,
    ge_w_ref, ge_wp_ref, ge_v_ref,
    gd_w_ref, gd_wp_ref, gd_v_ref,
    cx_w64_ref, cx_wkv_ref, cx_v64_ref, cx_v32_ref,
    sa_w_ref, sa_v_ref,
    dc_wq_ref, dc_wkv_ref, dc_wo_ref, dc_w32_ref, dc_v64_ref, dc_v32_ref,
    out_wh_ref, out_w2_ref, out_v_ref, out_b2_ref,
    o_ref):
    """Whole GraphPeceiverOperator forward; everything stays in VMEM."""

    def mm(a, b):                      # bf16 MXU matmul, f32 accumulation (b pre-cast bf16)
        return jnp.dot(a.astype(_BF16), b, preferred_element_type=_F32)

    def mm32(a, b):                    # exact f32 matmul (one-hot gather / scatter / pad)
        return jnp.dot(a, b, preferred_element_type=_F32)

    def ln(h, g, b, eps=1e-5):
        mu = jnp.mean(h, axis=-1, keepdims=True)
        var = jnp.mean(jnp.square(h - mu), axis=-1, keepdims=True)
        return (h - mu) * jax.lax.rsqrt(var + eps) * g + b

    # ---------------- encode MLP (3 linears + ReLU + LayerNorm) -----------------
    h = jnp.maximum(mm(x_ref[...], enc_w0_ref[...]) + enc_v_ref[0:1], 0.0)
    h = jnp.maximum(mm(h, enc_wh_ref[0]) + enc_v_ref[1:2], 0.0)
    h = mm(h, enc_wh_ref[1]) + enc_v_ref[2:3]
    x_enc = ln(h, enc_v_ref[3:4], enc_v_ref[4:5])

    # ---------------- GMP stack (edge-MLP -> scatter-add -> node-MLP, residual) --
    # TODO(synk): GMPStack internals are not provided; MeshGraphNets-style layer assumed.
    gsd = gsd_ref[...]            # [2*Ep, N]  stacked src/dst one-hot gather
    scat = scat_ref[...]          # [N, Ep]    one-hot scatter-add at dst
    pd = pd_ref[...]              # [Ep, pos_dim]
    ep = pd.shape[0]

    def gmp_stack(h, w_ref, wp_ref, v_ref):
        for i in range(w_ref.shape[0]):                       # n_mp, static unroll
            g = mm32(gsd, h)                                  # exact f32 gather
            x_src, x_dst = g[:ep], g[ep:]
            e = (mm(x_src, w_ref[i, 0]) + mm(x_dst, w_ref[i, 1])
                 + mm(pd, wp_ref[i]) + v_ref[i, 0:1])
            e = jnp.maximum(e, 0.0)
            e = jnp.maximum(mm(e, w_ref[i, 2]) + v_ref[i, 1:2], 0.0)
            e = mm(e, w_ref[i, 3]) + v_ref[i, 2:3]
            msg = ln(e, v_ref[i, 3:4], v_ref[i, 4:5])
            agg = mm32(scat, msg)                             # exact f32 scatter-add
            nh = mm(h, w_ref[i, 4]) + mm(agg, w_ref[i, 5]) + v_ref[i, 5:6]
            nh = jnp.maximum(nh, 0.0)
            nh = jnp.maximum(mm(nh, w_ref[i, 6]) + v_ref[i, 6:7], 0.0)
            nh = mm(nh, w_ref[i, 7]) + v_ref[i, 7:8]
            h = h + ln(nh, v_ref[i, 8:9], v_ref[i, 9:10])
        return h

    # ---------------- pre-LN single-head attention block (+FF) ------------------
    def attn(qx, kvx, mask, lnq_g, lnq_b, lnkv_g, lnkv_b,
             wq, bq, wk, bk, wv, bv, wo, bo,
             lnf_g, lnf_b, w1, b1, w2, b2, residual):
        scale = 1.0 / float(np.sqrt(wq.shape[-1]))
        qn = ln(qx, lnq_g, lnq_b)
        kvn = ln(kvx, lnkv_g, lnkv_b)
        q = (mm(qn, wq) + bq) * scale            # fold 1/sqrt(d_attn) into q
        k = mm(kvn, wk) + bk
        v = mm(kvn, wv) + bv
        s = jax.lax.dot_general(q, k, (((1,), (1,)), ((), ())),
                                preferred_element_type=_F32)          # [Mq, Mk]
        s = jnp.where(mask > 0.0, s, _F32(-1e30))
        s = s - jnp.max(s, axis=-1, keepdims=True)
        p = jnp.exp(s) * mask
        den = jnp.maximum(jnp.sum(p, axis=-1, keepdims=True), _F32(1e-30))
        p = p / den                              # exact softmax; all-masked rows -> 0
        o = mm(mm32(p, v), wo) + bo
        h = qx + o if residual else o
        hn = ln(h, lnf_g, lnf_b)
        ff = mm(jax.nn.gelu(mm(hn, w1) + b1), w2) + b2
        return h + ff

    # ------------------------------- process ------------------------------------
    x_g = gmp_stack(x_enc, ge_w_ref, ge_wp_ref, ge_v_ref)

    # _reshape_batches: scatter node rows into the padded [B*max_len] layout (exact f32)
    x_pad = mm32(pad_ref[...], x_g)

    # Perceiver.
    # TODO(synk): HF PerceiverModel defaults to 26 multi-head self-attn layers; it is
    # approximated here (as before) with one single-head latent self-attention block.
    lat = lat_ref[...]                                         # [B*L, dl] pre-replicated
    lat = attn(lat, x_pad, mc_ref[...],
               cx_v64_ref[0:1], cx_v64_ref[1:2], cx_v32_ref[0:1], cx_v32_ref[1:2],
               cx_w64_ref[0], cx_v64_ref[2:3], cx_wkv_ref[0], cx_v64_ref[3:4],
               cx_wkv_ref[1], cx_v64_ref[4:5], cx_w64_ref[1], cx_v64_ref[5:6],
               cx_v64_ref[6:7], cx_v64_ref[7:8], cx_w64_ref[2], cx_v64_ref[8:9],
               cx_w64_ref[3], cx_v64_ref[9:10], residual=True)
    lat = attn(lat, lat, ms_ref[...],
               sa_v_ref[0:1], sa_v_ref[1:2], sa_v_ref[2:3], sa_v_ref[3:4],
               sa_w_ref[0], sa_v_ref[4:5], sa_w_ref[1], sa_v_ref[5:6],
               sa_w_ref[2], sa_v_ref[6:7], sa_w_ref[3], sa_v_ref[7:8],
               sa_v_ref[8:9], sa_v_ref[9:10], sa_w_ref[4], sa_v_ref[10:11],
               sa_w_ref[5], sa_v_ref[11:12], residual=True)
    dec = attn(x_pad, lat, md_ref[...],
               dc_v32_ref[0:1], dc_v32_ref[1:2], dc_v64_ref[0:1], dc_v64_ref[1:2],
               dc_wq_ref[...], dc_v64_ref[2:3], dc_wkv_ref[0], dc_v64_ref[3:4],
               dc_wkv_ref[1], dc_v64_ref[4:5], dc_wo_ref[...], dc_v32_ref[2:3],
               dc_v32_ref[3:4], dc_v32_ref[4:5], dc_w32_ref[0], dc_v32_ref[5:6],
               dc_w32_ref[1], dc_v32_ref[6:7], residual=False)
    dec = mm(dec, dc_w32_ref[2]) + dc_v32_ref[7:8]             # fused final projection

    # _postprocess_output: drop padded rows (exact f32 one-hot gather) + residual
    x_up = mm32(unpad_ref[...], dec)
    x_p = gmp_stack(x_up + x_g, gd_w_ref, gd_wp_ref, gd_v_ref)

    # ------------------------------ decode MLP ----------------------------------
    h = x_p + x_enc
    h = jnp.maximum(mm(h, out_wh_ref[0]) + out_v_ref[0:1], 0.0)
    h = jnp.maximum(mm(h, out_wh_ref[1]) + out_v_ref[1:2], 0.0)
    o_ref[...] = mm(h, out_w2_ref[...]) + out_b2_ref[...]


# ------------------------- parameter initialization --------------------------

class KeyGen:
    def __init__(self, key):
        self._key = key

    def __call__(self):
        self._key, sub = jax.random.split(self._key)
        return sub


def init_linear(kg, d_in, d_out):
    w = jax.random.normal(kg(), (d_in, d_out), _F32) / np.sqrt(d_in)
    return {"w": w, "b": jnp.zeros((d_out,), _F32)}


def init_layernorm(d):
    return {"g": jnp.ones((d,), _F32), "b": jnp.zeros((d,), _F32)}


def init_mlp(kg, d_in, d_hidden, d_out, n_hidden, use_ln):
    dims = [d_in] + [d_hidden] * n_hidden + [d_out]
    p = {"layers": [init_linear(kg, dims[i], dims[i + 1]) for i in range(len(dims) - 1)]}
    if use_ln:
        p["ln"] = init_layernorm(d_out)
    return p


def init_gmp_stack(kg, n_mp, ld, hidden_layer, pos_dim):
    return [{
        "edge": init_mlp(kg, 2 * ld + pos_dim, ld, ld, hidden_layer, True),
        "node": init_mlp(kg, 2 * ld, ld, ld, hidden_layer, True),
    } for _ in range(n_mp)]


def init_attn_block(kg, d_q_in, d_kv_in, d_attn, d_out):
    return {
        "ln_q": init_layernorm(d_q_in),
        "ln_kv": init_layernorm(d_kv_in),
        "wq": init_linear(kg, d_q_in, d_attn),
        "wk": init_linear(kg, d_kv_in, d_attn),
        "wv": init_linear(kg, d_kv_in, d_attn),
        "wo": init_linear(kg, d_attn, d_out),
        "ln_ff": init_layernorm(d_out),
        "ff1": init_linear(kg, d_out, d_out),
        "ff2": init_linear(kg, d_out, d_out),
    }


def init_perceiver(kg, d_model, d_latents, num_latents):
    return {
        "latents": jax.random.normal(kg(), (num_latents, d_latents), _F32) * 0.02,
        "cross": init_attn_block(kg, d_latents, d_model, d_latents, d_latents),
        "selfs": [init_attn_block(kg, d_latents, d_latents, d_latents, d_latents)],
        "dec": init_attn_block(kg, d_model, d_latents, d_latents, d_model),
        "final": init_linear(kg, d_model, d_model),
    }


def init_operator(kg, in_dim, out_dim, pos_dim, d_model, d_latents,
                  mlp_hidden_layer, n_mp, num_latents):
    return {
        "encode": init_mlp(kg, in_dim, d_model, d_model, mlp_hidden_layer, True),
        "process": {
            "gmp_encode": init_gmp_stack(kg, n_mp, d_model, mlp_hidden_layer, pos_dim),
            "gmp_decode": init_gmp_stack(kg, n_mp, d_model, mlp_hidden_layer, pos_dim),
            "perceiver": init_perceiver(kg, d_model, d_latents, num_latents),
        },
        "decode": init_mlp(kg, d_model, d_model, out_dim, mlp_hidden_layer, False),
    }


# ---------------------- pack params + structure for the kernel ---------------

def pack_inputs(params, struct, B):
    """Flatten params into the kernel's packed argument list (weights pre-cast to bf16)."""
    bf = lambda a: a.astype(_BF16)
    ld = params["encode"]["layers"][-1]["w"].shape[1]

    enc = params["encode"]["layers"]
    args = [
        struct["pos_diff"], struct["gsd"], struct["scat"],
        struct["pad"], struct["unpad"],
        struct["mask_cross"], struct["mask_self"], struct["mask_dec"],
        jnp.tile(params["process"]["perceiver"]["latents"], (B, 1)),  # replicate once
        bf(enc[0]["w"]),
        bf(jnp.stack([enc[1]["w"], enc[2]["w"]])),
        jnp.stack([enc[0]["b"], enc[1]["b"], enc[2]["b"],
                   params["encode"]["ln"]["g"], params["encode"]["ln"]["b"]]),
    ]

    def pack_gmp(stack):
        w32, wp, vec = [], [], []
        for lyr in stack:
            e, n = lyr["edge"], lyr["node"]
            ew0, nw0 = e["layers"][0]["w"], n["layers"][0]["w"]
            w32.append(jnp.stack([ew0[:ld], ew0[ld:2 * ld],
                                  e["layers"][1]["w"], e["layers"][2]["w"],
                                  nw0[:ld], nw0[ld:],
                                  n["layers"][1]["w"], n["layers"][2]["w"]]))
            wp.append(ew0[2 * ld:])
            vec.append(jnp.stack([e["layers"][0]["b"], e["layers"][1]["b"],
                                  e["layers"][2]["b"], e["ln"]["g"], e["ln"]["b"],
                                  n["layers"][0]["b"], n["layers"][1]["b"],
                                  n["layers"][2]["b"], n["ln"]["g"], n["ln"]["b"]]))
        return [bf(jnp.stack(w32)), bf(jnp.stack(wp)), jnp.stack(vec)]

    args += pack_gmp(params["process"]["gmp_encode"])
    args += pack_gmp(params["process"]["gmp_decode"])

    pc = params["process"]["perceiver"]
    cx, sa, dc, fin = pc["cross"], pc["selfs"][0], pc["dec"], pc["final"]
    args += [
        bf(jnp.stack([cx["wq"]["w"], cx["wo"]["w"], cx["ff1"]["w"], cx["ff2"]["w"]])),
        bf(jnp.stack([cx["wk"]["w"], cx["wv"]["w"]])),
        jnp.stack([cx["ln_q"]["g"], cx["ln_q"]["b"], cx["wq"]["b"], cx["wk"]["b"],
                   cx["wv"]["b"], cx["wo"]["b"], cx["ln_ff"]["g"], cx["ln_ff"]["b"],
                   cx["ff1"]["b"], cx["ff2"]["b"]]),
        jnp.stack([cx["ln_kv"]["g"], cx["ln_kv"]["b"]]),
        bf(jnp.stack([sa["wq"]["w"], sa["wk"]["w"], sa["wv"]["w"],
                      sa["wo"]["w"], sa["ff1"]["w"], sa["ff2"]["w"]])),
        jnp.stack([sa["ln_q"]["g"], sa["ln_q"]["b"], sa["ln_kv"]["g"], sa["ln_kv"]["b"],
                   sa["wq"]["b"], sa["wk"]["b"], sa["wv"]["b"], sa["wo"]["b"],
                   sa["ln_ff"]["g"], sa["ln_ff"]["b"], sa["ff1"]["b"], sa["ff2"]["b"]]),
        bf(dc["wq"]["w"]),
        bf(jnp.stack([dc["wk"]["w"], dc["wv"]["w"]])),
        bf(dc["wo"]["w"]),
        bf(jnp.stack([dc["ff1"]["w"], dc["ff2"]["w"], fin["w"]])),
        jnp.stack([dc["ln_kv"]["g"], dc["ln_kv"]["b"],
                   dc["wq"]["b"], dc["wk"]["b"], dc["wv"]["b"]]),
        jnp.stack([dc["ln_q"]["g"], dc["ln_q"]["b"], dc["wo"]["b"],
                   dc["ln_ff"]["g"], dc["ln_ff"]["b"],
                   dc["ff1"]["b"], dc["ff2"]["b"], fin["b"]]),
    ]

    out = params["decode"]["layers"]
    args += [
        bf(jnp.stack([out[0]["w"], out[1]["w"]])),
        bf(out[2]["w"]),
        jnp.stack([out[0]["b"], out[1]["b"]]),
        out[2]["b"].reshape(1, -1),
    ]
    return args


# ----------------------------------- main -------------------------------------

if __name__ == "__main__":
    in_dim, out_dim, pos_dim = 6, 3, 2
    d_model, d_latents, num_latents = 32, 64, 8
    mlp_hidden_layer, n_mp = 2, 2

    counts = [10, 12]                      # nodes per graph (2 graphs)
    B, max_len, N = len(counts), max(counts), sum(counts)

    key = jax.random.PRNGKey(0)
    k_x, k_pos, k_params = jax.random.split(key, 3)
    x = jax.random.normal(k_x, (N, in_dim), _F32)
    pos = jax.random.normal(k_pos, (N, pos_dim), _F32)

    # bidirectional ring edges inside each graph
    src_l, dst_l, off = [], [], 0
    for c in counts:
        for i in range(c):
            j = (i + 1) % c
            src_l += [off + i, off + j]
            dst_l += [off + j, off + i]
        off += c
    src = np.asarray(src_l, np.int32)
    dst = np.asarray(dst_l, np.int32)
    E = int(src.shape[0])
    Ep = ((E + 7) // 8) * 8               # pad edges to a sublane multiple

    # static graph-structure operators (built once; exact f32 one-hot gather/scatter)
    gsd = np.zeros((2 * Ep, N), np.float32)     # rows [0:E]=src gather, [Ep:Ep+E]=dst gather
    gsd[np.arange(E), src] = 1.0
    gsd[Ep + np.arange(E), dst] = 1.0
    scat = np.zeros((N, Ep), np.float32)        # scat @ msg == scatter-add at dst
    scat[dst, np.arange(E)] = 1.0
    pos_np = np.asarray(pos)
    pos_diff = np.zeros((Ep, pos_dim), np.float32)
    pos_diff[:E] = pos_np[src] - pos_np[dst]

    # padded-batch layout (_reshape_batches) + block-diagonal attention masks
    pad_idx = np.asarray([g * max_len + i for g, c in enumerate(counts) for i in range(c)],
                         np.int32)
    pad = np.zeros((B * max_len, N), np.float32)
    pad[pad_idx, np.arange(N)] = 1.0
    unpad = np.ascontiguousarray(pad.T)
    valid = pad.sum(axis=1)
    L = num_latents
    mask_cross = np.zeros((B * L, B * max_len), np.float32)
    mask_self = np.zeros((B * L, B * L), np.float32)
    mask_dec = np.zeros((B * max_len, B * L), np.float32)
    for b in range(B):
        mask_cross[b * L:(b + 1) * L, b * max_len:(b + 1) * max_len] = \
            valid[b * max_len:(b + 1) * max_len][None, :]
        mask_self[b * L:(b + 1) * L, b * L:(b + 1) * L] = 1.0
        mask_dec[b * max_len:(b + 1) * max_len, b * L:(b + 1) * L] = 1.0

    struct = {k: jnp.asarray(v) for k, v in dict(
        pos_diff=pos_diff, gsd=gsd, scat=scat, pad=pad, unpad=unpad,
        mask_cross=mask_cross, mask_self=mask_self, mask_dec=mask_dec).items()}

    params = init_operator(KeyGen(k_params), in_dim, out_dim, pos_dim,
                           d_model, d_latents, mlp_hidden_layer, n_mp, num_latents)
    static_args = pack_inputs(params, struct, B)

    fwd_op = pl.pallas_call(
        _fused_forward_kernel,
        out_shape=jax.ShapeDtypeStruct((N, out_dim), _F32),
        in_specs=[_VMEM] * (1 + len(static_args)),
        out_specs=_VMEM,
    )
    forward = jax.jit(lambda x_, *args: fwd_op(x_, *args))

    out = forward(x, *static_args)
    jax.block_until_ready(out)
    assert out.shape == (N, out_dim) and out.dtype == _F32
    assert bool(jnp.all(jnp.isfinite(out)))
    print("KERNEL_OK")
</pallas_src>

<mosaic_0001>
module attributes {stable_mosaic.version = 11 : i64} {
  func.func @_fused_forward_kernel(%arg0: memref<22x6xf32, #tpu.memory_space<vmem>>, %arg1: memref<48x2xf32, #tpu.memory_space<vmem>>, %arg2: memref<96x22xf32, #tpu.memory_space<vmem>>, %arg3: memref<22x48xf32, #tpu.memory_space<vmem>>, %arg4: memref<24x22xf32, #tpu.memory_space<vmem>>, %arg5: memref<22x24xf32, #tpu.memory_space<vmem>>, %arg6: memref<16x24xf32, #tpu.memory_space<vmem>>, %arg7: memref<16x16xf32, #tpu.memory_space<vmem>>, %arg8: memref<24x16xf32, #tpu.memory_space<vmem>>, %arg9: memref<16x64xf32, #tpu.memory_space<vmem>>, %arg10: memref<6x32xbf16, #tpu.memory_space<vmem>>, %arg11: memref<2x32x32xbf16, #tpu.memory_space<vmem>>, %arg12: memref<5x32xf32, #tpu.memory_space<vmem>>, %arg13: memref<2x8x32x32xbf16, #tpu.memory_space<vmem>>, %arg14: memref<2x2x32xbf16, #tpu.memory_space<vmem>>, %arg15: memref<2x10x32xf32, #tpu.memory_space<vmem>>, %arg16: memref<2x8x32x32xbf16, #tpu.memory_space<vmem>>, %arg17: memref<2x2x32xbf16, #tpu.memory_space<vmem>>, %arg18: memref<2x10x32xf32, #tpu.memory_space<vmem>>, %arg19: memref<4x64x64xbf16, #tpu.memory_space<vmem>>, %arg20: memref<2x32x64xbf16, #tpu.memory_space<vmem>>, %arg21: memref<10x64xf32, #tpu.memory_space<vmem>>, %arg22: memref<2x32xf32, #tpu.memory_space<vmem>>, %arg23: memref<6x64x64xbf16, #tpu.memory_space<vmem>>, %arg24: memref<12x64xf32, #tpu.memory_space<vmem>>, %arg25: memref<32x64xbf16, #tpu.memory_space<vmem>>, %arg26: memref<2x64x64xbf16, #tpu.memory_space<vmem>>, %arg27: memref<64x32xbf16, #tpu.memory_space<vmem>>, %arg28: memref<3x32x32xbf16, #tpu.memory_space<vmem>>, %arg29: memref<5x64xf32, #tpu.memory_space<vmem>>, %arg30: memref<8x32xf32, #tpu.memory_space<vmem>>, %arg31: memref<2x32x32xbf16, #tpu.memory_space<vmem>>, %arg32: memref<32x3xbf16, #tpu.memory_space<vmem>>, %arg33: memref<2x32xf32, #tpu.memory_space<vmem>>, %arg34: memref<1x3xf32, #tpu.memory_space<vmem>>, %arg35: memref<22x3xf32, #tpu.memory_space<vmem>>) attributes {dimension_semantics = [], scalar_prefetch = 0 : i64, scratch_operands = 0 : i64, tpu.core_type = #tpu.core_type<tc>} {
    %c0 = arith.constant 0 : index
    %c0_0 = arith.constant 0 : index
    %0 = vector.load %arg0[%c0, %c0_0] : memref<22x6xf32, #tpu.memory_space<vmem>>, vector<22x6xf32>
    %c0_1 = arith.constant 0 : index
    %c0_2 = arith.constant 0 : index
    %1 = vector.load %arg10[%c0_1, %c0_2] : memref<6x32xbf16, #tpu.memory_space<vmem>>, vector<6x32xbf16>
    %2 = arith.truncf %0 : vector<22x6xf32> to vector<22x6xbf16>
    %cst = arith.constant dense<0.000000e+00> : vector<22x32xf32>
    %3 = tpu.matmul %2, %1, %cst {dimension_numbers = #tpu.dot_dimension_numbers<[1], [0], [0], [1], [0, 0, 1, 1], [], []>} : vector<22x6xbf16>, vector<6x32xbf16>, vector<22x32xf32> -> vector<22x32xf32>
    %c0_3 = arith.constant 0 : index
    %c0_4 = arith.constant 0 : index
    %4 = vector.load %arg12[%c0_3, %c0_4] : memref<5x32xf32, #tpu.memory_space<vmem>>, vector<1x32xf32>
    %5 = vector.broadcast %4 : vector<1x32xf32> to vector<22x32xf32>
    %6 = arith.addf %3, %5 : vector<22x32xf32>
    %cst_5 = arith.constant 0.000000e+00 : f32
    %7 = vector.broadcast %cst_5 : f32 to vector<22x32xf32>
    %8 = arith.maximumf %6, %7 : vector<22x32xf32>
    %c0_6 = arith.constant 0 : index
    %c0_7 = arith.constant 0 : index
    %c0_8 = arith.constant 0 : index
    %9 = vector.load %arg11[%c0_6, %c0_7, %c0_8] : memref<2x32x32xbf16, #tpu.memory_space<vmem>>, vector<1x32x32xbf16>
    %10 = vector.shape_cast %9 : vector<1x32x32xbf16> to vector<32x32xbf16>
    %11 = arith.truncf %8 : vector<22x32xf32> to vector<22x32xbf16>
    %cst_9 = arith.constant dense<0.000000e+00> : vector<22x32xf32>
    %12 = tpu.matmul %11, %10, %cst_9 {dimension_numbers = #tpu.dot_dimension_numbers<[1], [0], [0], [1], [0, 0, 1, 1], [], []>} : vector<22x32xbf16>, vector<32x32xbf16>, vector<22x32xf32> -> vector<22x32xf32>
    %c1 = arith.constant 1 : index
    %c0_10 = arith.constant 0 : index
    %13 = vector.load %arg12[%c1, %c0_10] : memref<5x32xf32, #tpu.memory_space<vmem>>, vector<1x32xf32>
    %14 = vector.broadcast %13 : vector<1x32xf32> to vector<22x32xf32>
    %15 = arith.addf %12, %14 : vector<22x32xf32>
    %cst_11 = arith.constant 0.000000e+00 : f32
    %16 = vector.broadcast %cst_11 : f32 to vector<22x32xf32>
    %17 = arith.maximumf %15, %16 : vector<22x32xf32>
    %c1_12 = arith.constant 1 : index
    %c0_13 = arith.constant 0 : index
    %c0_14 = arith.constant 0 : index
    %18 = vector.load %arg11[%c1_12, %c0_13, %c0_14] : memref<2x32x32xbf16, #tpu.memory_space<vmem>>, vector<1x32x32xbf16>
    %19 = vector.shape_cast %18 : vector<1x32x32xbf16> to vector<32x32xbf16>
    %20 = arith.truncf %17 : vector<22x32xf32> to vector<22x32xbf16>
    %cst_15 = arith.constant dense<0.000000e+00> : vector<22x32xf32>
    %21 = tpu.matmul %20, %19, %cst_15 {dimension_numbers = #tpu.dot_dimension_numbers<[1], [0], [0], [1], [0, 0, 1, 1], [], []>} : vector<22x32xbf16>, vector<32x32xbf16>, vector<22x32xf32> -> vector<22x32xf32>
    %c2 = arith.constant 2 : index
    %c0_16 = arith.constant 0 : index
    %22 = vector.load %arg12[%c2, %c0_16] : memref<5x32xf32, #tpu.memory_space<vmem>>, vector<1x32xf32>
    %23 = vector.broadcast %22 : vector<1x32xf32> to vector<22x32xf32>
    %24 = arith.addf %21, %23 : vector<22x32xf32>
    %c3 = arith.constant 3 : index
    %c0_17 = arith.constant 0 : index
    %25 = vector.load %arg12[%c3, %c0_17] : memref<5x32xf32, #tpu.memory_space<vmem>>, vector<1x32xf32>
    %c4 = arith.constant 4 : index
    %c0_18 = arith.constant 0 : index
    %26 = vector.load %arg12[%c4, %c0_18] : memref<5x32xf32, #tpu.memory_space<vmem>>, vector<1x32xf32>
    %cst_19 = arith.constant dense<0.000000e+00> : vector<22xf32>
    %27 = vector.multi_reduction <add>, %24, %cst_19 [1] : vector<22x32xf32> to vector<22xf32>
    %28 = vector.shape_cast %27 : vector<22xf32> to vector<22x1xf32>
    %cst_20 = arith.constant 3.200000e+01 : f32
    %29 = vector.broadcast %cst_20 : f32 to vector<22x1xf32>
    %30 = arith.divf %28, %29 : vector<22x1xf32>
    %31 = vector.broadcast %30 : vector<22x1xf32> to vector<22x32xf32>
    %32 = arith.subf %24, %31 : vector<22x32xf32>
    %33 = arith.mulf %32, %32 : vector<22x32xf32>
    %cst_21 = arith.constant dense<0.000000e+00> : vector<22xf32>
    %34 = vector.multi_reduction <add>, %33, %cst_21 [1] : vector<22x32xf32> to vector<22xf32>
    %35 = vector.shape_cast %34 : vector<22xf32> to vector<22x1xf32>
    %cst_22 = arith.constant 3.200000e+01 : f32
    %36 = vector.broadcast %cst_22 : f32 to vector<22x1xf32>
    %37 = arith.divf %35, %36 : vector<22x1xf32>
    %38 = vector.broadcast %30 : vector<22x1xf32> to vector<22x32xf32>
    %39 = arith.subf %24, %38 : vector<22x32xf32>
    %cst_23 = arith.constant 9.99999974E-6 : f32
    %40 = vector.broadcast %cst_23 : f32 to vector<22x1xf32>
    %41 = arith.addf %37, %40 : vector<22x1xf32>
    %42 = math.rsqrt %41 : vector<22x1xf32>
    %43 = vector.broadcast %42 : vector<22x1xf32> to vector<22x32xf32>
    %44 = arith.mulf %39, %43 : vector<22x32xf32>
    %45 = vector.broadcast %25 : vector<1x32xf32> to vector<22x32xf32>
    %46 = arith.mulf %44, %45 : vector<22x32xf32>
    %47 = vector.broadcast %26 : vector<1x32xf32> to vector<22x32xf32>
    %48 = arith.addf %46, %47 : vector<22x32xf32>
    %c0_24 = arith.constant 0 : index
    %c0_25 = arith.constant 0 : index
    %49 = vector.load %arg2[%c0_24, %c0_25] : memref<96x22xf32, #tpu.memory_space<vmem>>, vector<96x22xf32>
    %c0_26 = arith.constant 0 : index
    %c0_27 = arith.constant 0 : index
    %50 = vector.load %arg3[%c0_26, %c0_27] : memref<22x48xf32, #tpu.memory_space<vmem>>, vector<22x48xf32>
    %c0_28 = arith.constant 0 : index
    %c0_29 = arith.constant 0 : index
    %51 = vector.load %arg1[%c0_28, %c0_29] : memref<48x2xf32, #tpu.memory_space<vmem>>, vector<48x2xf32>
    %cst_30 = arith.constant dense<0.000000e+00> : vector<96x32xf32>
    %52 = tpu.matmul %49, %48, %cst_30 {dimension_numbers = #tpu.dot_dimension_numbers<[1], [0], [0], [1], [0, 0, 1, 1], [], []>} : vector<96x22xf32>, vector<22x32xf32>, vector<96x32xf32> -> vector<96x32xf32>
    %53 = vector.extract_strided_slice %52 {offsets = [0, 0], sizes = [48, 32], strides = [1, 1]} : vector<96x32xf32> to vector<48x32xf32>
    %54 = vector.extract_strided_slice %52 {offsets = [48, 0], sizes = [48, 32], strides = [1, 1]} : vector<96x32xf32> to vector<48x32xf32>
    %c0_31 = arith.constant 0 : index
    %c0_32 = arith.constant 0 : index
    %c0_33 = arith.constant 0 : index
    %c0_34 = arith.constant 0 : index
    %55 = vector.load %arg13[%c0_31, %c0_32, %c0_33, %c0_34] : memref<2x8x32x32xbf16, #tpu.memory_space<vmem>>, vector<1x1x32x32xbf16>
    %56 = vector.shape_cast %55 : vector<1x1x32x32xbf16> to vector<32x32xbf16>
    %57 = arith.truncf %53 : vector<48x32xf32> to vector<48x32xbf16>
    %cst_35 = arith.constant dense<0.000000e+00> : vector<48x32xf32>
    %58 = tpu.matmul %57, %56, %cst_35 {dimension_numbers = #tpu.dot_dimension_numbers<[1], [0], [0], [1], [0, 0, 1, 1], [], []>} : vector<48x32xbf16>, vector<32x32xbf16>, vector<48x32xf32> -> vector<48x32xf32>
    %c0_36 = arith.constant 0 : index
    %c1_37 = arith.constant 1 : index
    %c0_38 = arith.constant 0 : index
    %c0_39 = arith.constant 0 : index
    %59 = vector.load %arg13[%c0_36, %c1_37, %c0_38, %c0_39] : memref<2x8x32x32xbf16, #tpu.memory_space<vmem>>, vector<1x1x32x32xbf16>
    %60 = vector.shape_cast %59 : vector<1x1x32x32xbf16> to vector<32x32xbf16>
    %61 = arith.truncf %54 : vector<48x32xf32> to vector<48x32xbf16>
    %cst_40 = arith.constant dense<0.000000e+00> : vector<48x32xf32>
    %62 = tpu.matmul %61, %60, %cst_40 {dimension_numbers = #tpu.dot_dimension_numbers<[1], [0], [0], [1], [0, 0, 1, 1], [], []>} : vector<48x32xbf16>, vector<32x32xbf16>, vector<48x32xf32> -> vector<48x32xf32>
    %63 = arith.addf %58, %62 : vector<48x32xf32>
    %c0_41 = arith.constant 0 : index
    %c0_42 = arith.constant 0 : index
    %c0_43 = arith.constant 0 : index
    %64 = vector.load %arg14[%c0_41, %c0_42, %c0_43] : memref<2x2x32xbf16, #tpu.memory_space<vmem>>, vector<1x2x32xbf16>
    %65 = vector.shape_cast %64 : vector<1x2x32xbf16> to vector<2x32xbf16>
    %66 = arith.truncf %51 : vector<48x2xf32> to vector<48x2xbf16>
    %cst_44 = arith.constant dense<0.000000e+00> : vector<48x32xf32>
    %67 = tpu.matmul %66, %65, %cst_44 {dimension_numbers = #tpu.dot_dimension_numbers<[1], [0], [0], [1], [0, 0, 1, 1], [], []>} : vector<48x2xbf16>, vector<2x32xbf16>, vector<48x32xf32> -> vector<48x32xf32>
    %68 = arith.addf %63, %67 : vector<48x32xf32>
    %c0_45 = arith.constant 0 : index
    %c0_46 = arith.constant 0 : index
    %c0_47 = arith.constant 0 : index
    %69 = vector.load %arg15[%c0_45, %c0_46, %c0_47] : memref<2x10x32xf32, #tpu.memory_space<vmem>>, vector<1x1x32xf32>
    %70 = vector.shape_cast %69 : vector<1x1x32xf32> to vector<1x32xf32>
    %71 = vector.broadcast %70 : vector<1x32xf32> to vector<48x32xf32>
    %72 = arith.addf %68, %71 : vector<48x32xf32>
    %cst_48 = arith.constant 0.000000e+00 : f32
    %73 = vector.broadcast %cst_48 : f32 to vector<48x32xf32>
    %74 = arith.maximumf %72, %73 : vector<48x32xf32>
    %c0_49 = arith.constant 0 : index
    %c2_50 = arith.constant 2 : index
    %c0_51 = arith.constant 0 : index
    %c0_52 = arith.constant 0 : index
    %75 = vector.load %arg13[%c0_49, %c2_50, %c0_51, %c0_52] : memref<2x8x32x32xbf16, #tpu.memory_space<vmem>>, vector<1x1x32x32xbf16>
    %76 = vector.shape_cast %75 : vector<1x1x32x32xbf16> to vector<32x32xbf16>
    %77 = arith.truncf %74 : vector<48x32xf32> to vector<48x32xbf16>
    %cst_53 = arith.constant dense<0.000000e+00> : vector<48x32xf32>
    %78 = tpu.matmul %77, %76, %cst_53 {dimension_numbers = #tpu.dot_dimension_numbers<[1], [0], [0], [1], [0, 0, 1, 1], [], []>} : vector<48x32xbf16>, vector<32x32xbf16>, vector<48x32xf32> -> vector<48x32xf32>
    %c0_54 = arith.constant 0 : index
    %c1_55 = arith.constant 1 : index
    %c0_56 = arith.constant 0 : index
    %79 = vector.load %arg15[%c0_54, %c1_55, %c0_56] : memref<2x10x32xf32, #tpu.memory_space<vmem>>, vector<1x1x32xf32>
    %80 = vector.shape_cast %79 : vector<1x1x32xf32> to vector<1x32xf32>
    %81 = vector.broadcast %80 : vector<1x32xf32> to vector<48x32xf32>
    %82 = arith.addf %78, %81 : vector<48x32xf32>
    %cst_57 = arith.constant 0.000000e+00 : f32
    %83 = vector.broadcast %cst_57 : f32 to vector<48x32xf32>
    %84 = arith.maximumf %82, %83 : vector<48x32xf32>
    %c0_58 = arith.constant 0 : index
    %c3_59 = arith.constant 3 : index
    %c0_60 = arith.constant 0 : index
    %c0_61 = arith.constant 0 : index
    %85 = vector.load %arg13[%c0_58, %c3_59, %c0_60, %c0_61] : memref<2x8x32x32xbf16, #tpu.memory_space<vmem>>, vector<1x1x32x32xbf16>
    %86 = vector.shape_cast %85 : vector<1x1x32x32xbf16> to vector<32x32xbf16>
    %87 = arith.truncf %84 : vector<48x32xf32> to vector<48x32xbf16>
    %cst_62 = arith.constant dense<0.000000e+00> : vector<48x32xf32>
    %88 = tpu.matmul %87, %86, %cst_62 {dimension_numbers = #tpu.dot_dimension_numbers<[1], [0], [0], [1], [0, 0, 1, 1], [], []>} : vector<48x32xbf16>, vector<32x32xbf16>, vector<48x32xf32> -> vector<48x32xf32>
    %c0_63 = arith.constant 0 : index
    %c2_64 = arith.constant 2 : index
    %c0_65 = arith.constant 0 : index
    %89 = vector.load %arg15[%c0_63, %c2_64, %c0_65] : memref<2x10x32xf32, #tpu.memory_space<vmem>>, vector<1x1x32xf32>
    %90 = vector.shape_cast %89 : vector<1x1x32xf32> to vector<1x32xf32>
    %91 = vector.broadcast %90 : vector<1x32xf32> to vector<48x32xf32>
    %92 = arith.addf %88, %91 : vector<48x32xf32>
    %c0_66 = arith.constant 0 : index
    %c3_67 = arith.constant 3 : index
    %c0_68 = arith.constant 0 : index
    %93 = vector.load %arg15[%c0_66, %c3_67, %c0_68] : memref<2x10x32xf32, #tpu.memory_space<vmem>>, vector<1x1x32xf32>
    %94 = vector.shape_cast %93 : vector<1x1x32xf32> to vector<1x32xf32>
    %c0_69 = arith.constant 0 : index
    %c4_70 = arith.constant 4 : index
    %c0_71 = arith.constant 0 : index
    %95 = vector.load %arg15[%c0_69, %c4_70, %c0_71] : memref<2x10x32xf32, #tpu.memory_space<vmem>>, vector<1x1x32xf32>
    %96 = vector.shape_cast %95 : vector<1x1x32xf32> to vector<1x32xf32>
    %cst_72 = arith.constant dense<0.000000e+00> : vector<48xf32>
    %97 = vector.multi_reduction <add>, %92, %cst_72 [1] : vector<48x32xf32> to vector<48xf32>
    %98 = vector.shape_cast %97 : vector<48xf32> to vector<48x1xf32>
    %cst_73 = arith.constant 3.200000e+01 : f32
    %99 = vector.broadcast %cst_73 : f32 to vector<48x1xf32>
    %100 = arith.divf %98, %99 : vector<48x1xf32>
    %101 = vector.broadcast %100 : vector<48x1xf32> to vector<48x32xf32>
    %102 = arith.subf %92, %101 : vector<48x32xf32>
    %103 = arith.mulf %102, %102 : vector<48x32xf32>
    %cst_74 = arith.constant dense<0.000000e+00> : vector<48xf32>
    %104 = vector.multi_reduction <add>, %103, %cst_74 [1] : vector<48x32xf32> to vector<48xf32>
    %105 = vector.shape_cast %104 : vector<48xf32> to vector<48x1xf32>
    %cst_75 = arith.constant 3.200000e+01 : f32
    %106 = vector.broadcast %cst_75 : f32 to vector<48x1xf32>
    %107 = arith.divf %105, %106 : vector<48x1xf32>
    %108 = vector.broadcast %100 : vector<48x1xf32> to vector<48x32xf32>
    %109 = arith.subf %92, %108 : vector<48x32xf32>
    %cst_76 = arith.constant 9.99999974E-6 : f32
    %110 = vector.broadcast %cst_76 : f32 to vector<48x1xf32>
    %111 = arith.addf %107, %110 : vector<48x1xf32>
    %112 = math.rsqrt %111 : vector<48x1xf32>
    %113 = vector.broadcast %112 : vector<48x1xf32> to vector<48x32xf32>
    %114 = arith.mulf %109, %113 : vector<48x32xf32>
    %115 = vector.broadcast %94 : vector<1x32xf32> to vector<48x32xf32>
    %116 = arith.mulf %114, %115 : vector<48x32xf32>
    %117 = vector.broadcast %96 : vector<1x32xf32> to vector<48x32xf32>
    %118 = arith.addf %116, %117 : vector<48x32xf32>
    %cst_77 = arith.constant dense<0.000000e+00> : vector<22x32xf32>
    %119 = tpu.matmul %50, %118, %cst_77 {dimension_numbers = #tpu.dot_dimension_numbers<[1], [0], [0], [1], [0, 0, 1, 1], [], []>} : vector<22x48xf32>, vector<48x32xf32>, vector<22x32xf32> -> vector<22x32xf32>
    %c0_78 = arith.constant 0 : index
    %c4_79 = arith.constant 4 : index
    %c0_80 = arith.constant 0 : index
    %c0_81 = arith.constant 0 : index
    %120 = vector.load %arg13[%c0_78, %c4_79, %c0_80, %c0_81] : memref<2x8x32x32xbf16, #tpu.memory_space<vmem>>, vector<1x1x32x32xbf16>
    %121 = vector.shape_cast %120 : vector<1x1x32x32xbf16> to vector<32x32xbf16>
    %122 = arith.truncf %48 : vector<22x32xf32> to vector<22x32xbf16>
    %cst_82 = arith.constant dense<0.000000e+00> : vector<22x32xf32>
    %123 = tpu.matmul %122, %121, %cst_82 {dimension_numbers = #tpu.dot_dimension_numbers<[1], [0], [0], [1], [0, 0, 1, 1], [], []>} : vector<22x32xbf16>, vector<32x32xbf16>, vector<22x32xf32> -> vector<22x32xf32>
    %c0_83 = arith.constant 0 : index
    %c5 = arith.constant 5 : index
    %c0_84 = arith.constant 0 : index
    %c0_85 = arith.constant 0 : index
    %124 = vector.load %arg13[%c0_83, %c5, %c0_84, %c0_85] : memref<2x8x32x32xbf16, #tpu.memory_space<vmem>>, vector<1x1x32x32xbf16>
    %125 = vector.shape_cast %124 : vector<1x1x32x32xbf16> to vector<32x32xbf16>
    %126 = arith.truncf %119 : vector<22x32xf32> to vector<22x32xbf16>
    %cst_86 = arith.constant dense<0.000000e+00> : vector<22x32xf32>
    %127 = tpu.matmul %126, %125, %cst_86 {dimension_numbers = #tpu.dot_dimension_numbers<[1], [0], [0], [1], [0, 0, 1, 1], [], []>} : vector<22x32xbf16>, vector<32x32xbf16>, vector<22x32xf32> -> vector<22x32xf32>
    %128 = arith.addf %123, %127 : vector<22x32xf32>
    %c0_87 = arith.constant 0 : index
    %c5_88 = arith.constant 5 : index
    %c0_89 = arith.constant 0 : index
    %129 = vector.load %arg15[%c0_87, %c5_88, %c0_89] : memref<2x10x32xf32, #tpu.memory_space<vmem>>, vector<1x1x32xf32>
    %130 = vector.shape_cast %129 : vector<1x1x32xf32> to vector<1x32xf32>
    %131 = vector.broadcast %130 : vector<1x32xf32> to vector<22x32xf32>
    %132 = arith.addf %128, %131 : vector<22x32xf32>
    %cst_90 = arith.constant 0.000000e+00 : f32
    %133 = vector.broadcast %cst_90 : f32 to vector<22x32xf32>
    %134 = arith.maximumf %132, %133 : vector<22x32xf32>
    %c0_91 = arith.constant 0 : index
    %c6 = arith.constant 6 : index
    %c0_92 = arith.constant 0 : index
    %c0_93 = arith.constant 0 : index
    %135 = vector.load %arg13[%c0_91, %c6, %c0_92, %c0_93] : memref<2x8x32x32xbf16, #tpu.memory_space<vmem>>, vector<1x1x32x32xbf16>
    %136 = vector.shape_cast %135 : vector<1x1x32x32xbf16> to vector<32x32xbf16>
    %137 = arith.truncf %134 : vector<22x32xf32> to vector<22x32xbf16>
    %cst_94 = arith.constant dense<0.000000e+00> : vector<22x32xf32>
    %138 = tpu.matmul %137, %136, %cst_94 {dimension_numbers = #tpu.dot_dimension_numbers<[1], [0], [0], [1], [0, 0, 1, 1], [], []>} : vector<22x32xbf16>, vector<32x32xbf16>, vector<22x32xf32> -> vector<22x32xf32>
    %c0_95 = arith.constant 0 : index
    %c6_96 = arith.constant 6 : index
    %c0_97 = arith.constant 0 : index
    %139 = vector.load %arg15[%c0_95, %c6_96, %c0_97] : memref<2x10x32xf32, #tpu.memory_space<vmem>>, vector<1x1x32xf32>
    %140 = vector.shape_cast %139 : vector<1x1x32xf32> to vector<1x32xf32>
    %141 = vector.broadcast %140 : vector<1x32xf32> to vector<22x32xf32>
    %142 = arith.addf %138, %141 : vector<22x32xf32>
    %cst_98 = arith.constant 0.000000e+00 : f32
    %143 = vector.broadcast %cst_98 : f32 to vector<22x32xf32>
    %144 = arith.maximumf %142, %143 : vector<22x32xf32>
    %c0_99 = arith.constant 0 : index
    %c7 = arith.constant 7 : index
    %c0_100 = arith.constant 0 : index
    %c0_101 = arith.constant 0 : index
    %145 = vector.load %arg13[%c0_99, %c7, %c0_100, %c0_101] : memref<2x8x32x32xbf16, #tpu.memory_space<vmem>>, vector<1x1x32x32xbf16>
    %146 = vector.shape_cast %145 : vector<1x1x32x32xbf16> to vector<32x32xbf16>
    %147 = arith.truncf %144 : vector<22x32xf32> to vector<22x32xbf16>
    %cst_102 = arith.constant dense<0.000000e+00> : vector<22x32xf32>
    %148 = tpu.matmul %147, %146, %cst_102 {dimension_numbers = #tpu.dot_dimension_numbers<[1], [0], [0], [1], [0, 0, 1, 1], [], []>} : vector<22x32xbf16>, vector<32x32xbf16>, vector<22x32xf32> -> vector<22x32xf32>
    %c0_103 = arith.constant 0 : index
    %c7_104 = arith.constant 7 : index
    %c0_105 = arith.constant 0 : index
    %149 = vector.load %arg15[%c0_103, %c7_104, %c0_105] : memref<2x10x32xf32, #tpu.memory_space<vmem>>, vector<1x1x32xf32>
    %150 = vector.shape_cast %149 : vector<1x1x32xf32> to vector<1x32xf32>
    %151 = vector.broadcast %150 : vector<1x32xf32> to vector<22x32xf32>
    %152 = arith.addf %148, %151 : vector<22x32xf32>
    %c0_106 = arith.constant 0 : index
    %c8 = arith.constant 8 : index
    %c0_107 = arith.constant 0 : index
    %153 = vector.load %arg15[%c0_106, %c8, %c0_107] : memref<2x10x32xf32, #tpu.memory_space<vmem>>, vector<1x1x32xf32>
    %154 = vector.shape_cast %153 : vector<1x1x32xf32> to vector<1x32xf32>
    %c0_108 = arith.constant 0 : index
    %c9 = arith.constant 9 : index
    %c0_109 = arith.constant 0 : index
    %155 = vector.load %arg15[%c0_108, %c9, %c0_109] : memref<2x10x32xf32, #tpu.memory_space<vmem>>, vector<1x1x32xf32>
    %156 = vector.shape_cast %155 : vector<1x1x32xf32> to vector<1x32xf32>
    %cst_110 = arith.constant dense<0.000000e+00> : vector<22xf32>
    %157 = vector.multi_reduction <add>, %152, %cst_110 [1] : vector<22x32xf32> to vector<22xf32>
    %158 = vector.shape_cast %157 : vector<22xf32> to vector<22x1xf32>
    %cst_111 = arith.constant 3.200000e+01 : f32
    %159 = vector.broadcast %cst_111 : f32 to vector<22x1xf32>
    %160 = arith.divf %158, %159 : vector<22x1xf32>
    %161 = vector.broadcast %160 : vector<22x1xf32> to vector<22x32xf32>
    %162 = arith.subf %152, %161 : vector<22x32xf32>
    %163 = arith.mulf %162, %162 : vector<22x32xf32>
    %cst_112 = arith.constant dense<0.000000e+00> : vector<22xf32>
    %164 = vector.multi_reduction <add>, %163, %cst_112 [1] : vector<22x32xf32> to vector<22xf32>
    %165 = vector.shape_cast %164 : vector<22xf32> to vector<22x1xf32>
    %cst_113 = arith.constant 3.200000e+01 : f32
    %166 = vector.broadcast %cst_113 : f32 to vector<22x1xf32>
    %167 = arith.divf %165, %166 : vector<22x1xf32>
    %168 = vector.broadcast %160 : vector<22x1xf32> to vector<22x32xf32>
    %169 = arith.subf %152, %168 : vector<22x32xf32>
    %cst_114 = arith.constant 9.99999974E-6 : f32
    %170 = vector.broadcast %cst_114 : f32 to vector<22x1xf32>
    %171 = arith.addf %167, %170 : vector<22x1xf32>
    %172 = math.rsqrt %171 : vector<22x1xf32>
    %173 = vector.broadcast %172 : vector<22x1xf32> to vector<22x32xf32>
    %174 = arith.mulf %169, %173 : vector<22x32xf32>
    %175 = vector.broadcast %154 : vector<1x32xf32> to vector<22x32xf32>
    %176 = arith.mulf %174, %175 : vector<22x32xf32>
    %177 = vector.broadcast %156 : vector<1x32xf32> to vector<22x32xf32>
    %178 = arith.addf %176, %177 : vector<22x32xf32>
    %179 = arith.addf %48, %178 : vector<22x32xf32>
    %cst_115 = arith.constant dense<0.000000e+00> : vector<96x32xf32>
    %180 = tpu.matmul %49, %179, %cst_115 {dimension_numbers = #tpu.dot_dimension_numbers<[1], [0], [0], [1], [0, 0, 1, 1], [], []>} : vector<96x22xf32>, vector<22x32xf32>, vector<96x32xf32> -> vector<96x32xf32>
    %181 = vector.extract_strided_slice %180 {offsets = [0, 0], sizes = [48, 32], strides = [1, 1]} : vector<96x32xf32> to vector<48x32xf32>
    %182 = vector.extract_strided_slice %180 {offsets = [48, 0], sizes = [48, 32], strides = [1, 1]} : vector<96x32xf32> to vector<48x32xf32>
    %c1_116 = arith.constant 1 : index
    %c0_117 = arith.constant 0 : index
    %c0_118 = arith.constant 0 : index
    %c0_119 = arith.constant 0 : index
    %183 = vector.load %arg13[%c1_116, %c0_117, %c0_118, %c0_119] : memref<2x8x32x32xbf16, #tpu.memory_space<vmem>>, vector<1x1x32x32xbf16>
    %184 = vector.shape_cast %183 : vector<1x1x32x32xbf16> to vector<32x32xbf16>
    %185 = arith.truncf %181 : vector<48x32xf32> to vector<48x32xbf16>
    %cst_120 = arith.constant dense<0.000000e+00> : vector<48x32xf32>
    %186 = tpu.matmul %185, %184, %cst_120 {dimension_numbers = #tpu.dot_dimension_numbers<[1], [0], [0], [1], [0, 0, 1, 1], [], []>} : vector<48x32xbf16>, vector<32x32xbf16>, vector<48x32xf32> -> vector<48x32xf32>
    %c1_121 = arith.constant 1 : index
    %c1_122 = arith.constant 1 : index
    %c0_123 = arith.constant 0 : index
    %c0_124 = arith.constant 0 : index
    %187 = vector.load %arg13[%c1_121, %c1_122, %c0_123, %c0_124] : memref<2x8x32x32xbf16, #tpu.memory_space<vmem>>, vector<1x1x32x32xbf16>
    %188 = vector.shape_cast %187 : vector<1x1x32x32xbf16> to vector<32x32xbf16>
    %189 = arith.truncf %182 : vector<48x32xf32> to vector<48x32xbf16>
    %cst_125 = arith.constant dense<0.000000e+00> : vector<48x32xf32>
    %190 = tpu.matmul %189, %188, %cst_125 {dimension_numbers = #tpu.dot_dimension_numbers<[1], [0], [0], [1], [0, 0, 1, 1], [], []>} : vector<48x32xbf16>, vector<32x32xbf16>, vector<48x32xf32> -> vector<48x32xf32>
    %191 = arith.addf %186, %190 : vector<48x32xf32>
    %c1_126 = arith.constant 1 : index
    %c0_127 = arith.constant 0 : index
    %c0_128 = arith.constant 0 : index
    %192 = vector.load %arg14[%c1_126, %c0_127, %c0_128] : memref<2x2x32xbf16, #tpu.memory_space<vmem>>, vector<1x2x32xbf16>
    %193 = vector.shape_cast %192 : vector<1x2x32xbf16> to vector<2x32xbf16>
    %194 = arith.truncf %51 : vector<48x2xf32> to vector<48x2xbf16>
    %cst_129 = arith.constant dense<0.000000e+00> : vector<48x32xf32>
    %195 = tpu.matmul %194, %193, %cst_129 {dimension_numbers = #tpu.dot_dimension_numbers<[1], [0], [0], [1], [0, 0, 1, 1], [], []>} : vector<48x2xbf16>, vector<2x32xbf16>, vector<48x32xf32> -> vector<48x32xf32>
    %196 = arith.addf %191, %195 : vector<48x32xf32>
    %c1_130 = arith.constant 1 : index
    %c0_131 = arith.constant 0 : index
    %c0_132 = arith.constant 0 : index
    %197 = vector.load %arg15[%c1_130, %c0_131, %c0_132] : memref<2x10x32xf32, #tpu.memory_space<vmem>>, vector<1x1x32xf32>
    %198 = vector.shape_cast %197 : vector<1x1x32xf32> to vector<1x32xf32>
    %199 = vector.broadcast %198 : vector<1x32xf32> to vector<48x32xf32>
    %200 = arith.addf %196, %199 : vector<48x32xf32>
    %cst_133 = arith.constant 0.000000e+00 : f32
    %201 = vector.broadcast %cst_133 : f32 to vector<48x32xf32>
    %202 = arith.maximumf %200, %201 : vector<48x32xf32>
    %c1_134 = arith.constant 1 : index
    %c2_135 = arith.constant 2 : index
    %c0_136 = arith.constant 0 : index
    %c0_137 = arith.constant 0 : index
    %203 = vector.load %arg13[%c1_134, %c2_135, %c0_136, %c0_137] : memref<2x8x32x32xbf16, #tpu.memory_space<vmem>>, vector<1x1x32x32xbf16>
    %204 = vector.shape_cast %203 : vector<1x1x32x32xbf16> to vector<32x32xbf16>
    %205 = arith.truncf %202 : vector<48x32xf32> to vector<48x32xbf16>
    %cst_138 = arith.constant dense<0.000000e+00> : vector<48x32xf32>
    %206 = tpu.matmul %205, %204, %cst_138 {dimension_numbers = #tpu.dot_dimension_numbers<[1], [0], [0], [1], [0, 0, 1, 1], [], []>} : vector<48x32xbf16>, vector<32x32xbf16>, vector<48x32xf32> -> vector<48x32xf32>
    %c1_139 = arith.constant 1 : index
    %c1_140 = arith.constant 1 : index
    %c0_141 = arith.constant 0 : index
    %207 = vector.load %arg15[%c1_139, %c1_140, %c0_141] : memref<2x10x32xf32, #tpu.memory_space<vmem>>, vector<1x1x32xf32>
    %208 = vector.shape_cast %207 : vector<1x1x32xf32> to vector<1x32xf32>
    %209 = vector.broadcast %208 : vector<1x32xf32> to vector<48x32xf32>
    %210 = arith.addf %206, %209 : vector<48x32xf32>
    %cst_142 = arith.constant 0.000000e+00 : f32
    %211 = vector.broadcast %cst_142 : f32 to vector<48x32xf32>
    %212 = arith.maximumf %210, %211 : vector<48x32xf32>
    %c1_143 = arith.constant 1 : index
    %c3_144 = arith.constant 3 : index
    %c0_145 = arith.constant 0 : index
    %c0_146 = arith.constant 0 : index
    %213 = vector.load %arg13[%c1_143, %c3_144, %c0_145, %c0_146] : memref<2x8x32x32xbf16, #tpu.memory_space<vmem>>, vector<1x1x32x32xbf16>
    %214 = vector.shape_cast %213 : vector<1x1x32x32xbf16> to vector<32x32xbf16>
    %215 = arith.truncf %212 : vector<48x32xf32> to vector<48x32xbf16>
    %cst_147 = arith.constant dense<0.000000e+00> : vector<48x32xf32>
    %216 = tpu.matmul %215, %214, %cst_147 {dimension_numbers = #tpu.dot_dimension_numbers<[1], [0], [0], [1], [0, 0, 1, 1], [], []>} : vector<48x32xbf16>, vector<32x32xbf16>, vector<48x32xf32> -> vector<48x32xf32>
    %c1_148 = arith.constant 1 : index
    %c2_149 = arith.constant 2 : index
    %c0_150 = arith.constant 0 : index
    %217 = vector.load %arg15[%c1_148, %c2_149, %c0_150] : memref<2x10x32xf32, #tpu.memory_space<vmem>>, vector<1x1x32xf32>
    %218 = vector.shape_cast %217 : vector<1x1x32xf32> to vector<1x32xf32>
    %219 = vector.broadcast %218 : vector<1x32xf32> to vector<48x32xf32>
    %220 = arith.addf %216, %219 : vector<48x32xf32>
    %c1_151 = arith.constant 1 : index
    %c3_152 = arith.constant 3 : index
    %c0_153 = arith.constant 0 : index
    %221 = vector.load %arg15[%c1_151, %c3_152, %c0_153] : memref<2x10x32xf32, #tpu.memory_space<vmem>>, vector<1x1x32xf32>
    %222 = vector.shape_cast %221 : vector<1x1x32xf32> to vector<1x32xf32>
    %c1_154 = arith.constant 1 : index
    %c4_155 = arith.constant 4 : index
    %c0_156 = arith.constant 0 : index
    %223 = vector.load %arg15[%c1_154, %c4_155, %c0_156] : memref<2x10x32xf32, #tpu.memory_space<vmem>>, vector<1x1x32xf32>
    %224 = vector.shape_cast %223 : vector<1x1x32xf32> to vector<1x32xf32>
    %cst_157 = arith.constant dense<0.000000e+00> : vector<48xf32>
    %225 = vector.multi_reduction <add>, %220, %cst_157 [1] : vector<48x32xf32> to vector<48xf32>
    %226 = vector.shape_cast %225 : vector<48xf32> to vector<48x1xf32>
    %cst_158 = arith.constant 3.200000e+01 : f32
    %227 = vector.broadcast %cst_158 : f32 to vector<48x1xf32>
    %228 = arith.divf %226, %227 : vector<48x1xf32>
    %229 = vector.broadcast %228 : vector<48x1xf32> to vector<48x32xf32>
    %230 = arith.subf %220, %229 : vector<48x32xf32>
    %231 = arith.mulf %230, %230 : vector<48x32xf32>
    %cst_159 = arith.constant dense<0.000000e+00> : vector<48xf32>
    %232 = vector.multi_reduction <add>, %231, %cst_159 [1] : vector<48x32xf32> to vector<48xf32>
    %233 = vector.shape_cast %232 : vector<48xf32> to vector<48x1xf32>
    %cst_160 = arith.constant 3.200000e+01 : f32
    %234 = vector.broadcast %cst_160 : f32 to vector<48x1xf32>
    %235 = arith.divf %233, %234 : vector<48x1xf32>
    %236 = vector.broadcast %228 : vector<48x1xf32> to vector<48x32xf32>
    %237 = arith.subf %220, %236 : vector<48x32xf32>
    %cst_161 = arith.constant 9.99999974E-6 : f32
    %238 = vector.broadcast %cst_161 : f32 to vector<48x1xf32>
    %239 = arith.addf %235, %238 : vector<48x1xf32>
    %240 = math.rsqrt %239 : vector<48x1xf32>
    %241 = vector.broadcast %240 : vector<48x1xf32> to vector<48x32xf32>
    %242 = arith.mulf %237, %241 : vector<48x32xf32>
    %243 = vector.broadcast %222 : vector<1x32xf32> to vector<48x32xf32>
    %244 = arith.mulf %242, %243 : vector<48x32xf32>
    %245 = vector.broadcast %224 : vector<1x32xf32> to vector<48x32xf32>
    %246 = arith.addf %244, %245 : vector<48x32xf32>
    %cst_162 = arith.constant dense<0.000000e+00> : vector<22x32xf32>
    %247 = tpu.matmul %50, %246, %cst_162 {dimension_numbers = #tpu.dot_dimension_numbers<[1], [0], [0], [1], [0, 0, 1, 1], [], []>} : vector<22x48xf32>, vector<48x32xf32>, vector<22x32xf32> -> vector<22x32xf32>
    %c1_163 = arith.constant 1 : index
    %c4_164 = arith.constant 4 : index
    %c0_165 = arith.constant 0 : index
    %c0_166 = arith.constant 0 : index
    %248 = vector.load %arg13[%c1_163, %c4_164, %c0_165, %c0_166] : memref<2x8x32x32xbf16, #tpu.memory_space<vmem>>, vector<1x1x32x32xbf16>
    %249 = vector.shape_cast %248 : vector<1x1x32x32xbf16> to vector<32x32xbf16>
    %250 = arith.truncf %179 : vector<22x32xf32> to vector<22x32xbf16>
    %cst_167 = arith.constant dense<0.000000e+00> : vector<22x32xf32>
    %251 = tpu.matmul %250, %249, %cst_167 {dimension_numbers = #tpu.dot_dimension_numbers<[1], [0], [0], [1], [0, 0, 1, 1], [], []>} : vector<22x32xbf16>, vector<32x32xbf16>, vector<22x32xf32> -> vector<22x32xf32>
    %c1_168 = arith.constant 1 : index
    %c5_169 = arith.constant 5 : index
    %c0_170 = arith.constant 0 : index
    %c0_171 = arith.constant 0 : index
    %252 = vector.load %arg13[%c1_168, %c5_169, %c0_170, %c0_171] : memref<2x8x32x32xbf16, #tpu.memory_space<vmem>>, vector<1x1x32x32xbf16>
    %253 = vector.shape_cast %252 : vector<1x1x32x32xbf16> to vector<32x32xbf16>
    %254 = arith.truncf %247 : vector<22x32xf32> to vector<22x32xbf16>
    %cst_172 = arith.constant dense<0.000000e+00> : vector<22x32xf32>
    %255 = tpu.matmul %254, %253, %cst_172 {dimension_numbers = #tpu.dot_dimension_numbers<[1], [0], [0], [1], [0, 0, 1, 1], [], []>} : vector<22x32xbf16>, vector<32x32xbf16>, vector<22x32xf32> -> vector<22x32xf32>
    %256 = arith.addf %251, %255 : vector<22x32xf32>
    %c1_173 = arith.constant 1 : index
    %c5_174 = arith.constant 5 : index
    %c0_175 = arith.constant 0 : index
    %257 = vector.load %arg15[%c1_173, %c5_174, %c0_175] : memref<2x10x32xf32, #tpu.memory_space<vmem>>, vector<1x1x32xf32>
    %258 = vector.shape_cast %257 : vector<1x1x32xf32> to vector<1x32xf32>
    %259 = vector.broadcast %258 : vector<1x32xf32> to vector<22x32xf32>
    %260 = arith.addf %256, %259 : vector<22x32xf32>
    %cst_176 = arith.constant 0.000000e+00 : f32
    %261 = vector.broadcast %cst_176 : f32 to vector<22x32xf32>
    %262 = arith.maximumf %260, %261 : vector<22x32xf32>
    %c1_177 = arith.constant 1 : index
    %c6_178 = arith.constant 6 : index
    %c0_179 = arith.constant 0 : index
    %c0_180 = arith.constant 0 : index
    %263 = vector.load %arg13[%c1_177, %c6_178, %c0_179, %c0_180] : memref<2x8x32x32xbf16, #tpu.memory_space<vmem>>, vector<1x1x32x32xbf16>
    %264 = vector.shape_cast %263 : vector<1x1x32x32xbf16> to vector<32x32xbf16>
    %265 = arith.truncf %262 : vector<22x32xf32> to vector<22x32xbf16>
    %cst_181 = arith.constant dense<0.000000e+00> : vector<22x32xf32>
    %266 = tpu.matmul %265, %264, %cst_181 {dimension_numbers = #tpu.dot_dimension_numbers<[1], [0], [0], [1], [0, 0, 1, 1], [], []>} : vector<22x32xbf16>, vector<32x32xbf16>, vector<22x32xf32> -> vector<22x32xf32>
    %c1_182 = arith.constant 1 : index
    %c6_183 = arith.constant 6 : index
    %c0_184 = arith.constant 0 : index
    %267 = vector.load %arg15[%c1_182, %c6_183, %c0_184] : memref<2x10x32xf32, #tpu.memory_space<vmem>>, vector<1x1x32xf32>
    %268 = vector.shape_cast %267 : vector<1x1x32xf32> to vector<1x32xf32>
    %269 = vector.broadcast %268 : vector<1x32xf32> to vector<22x32xf32>
    %270 = arith.addf %266, %269 : vector<22x32xf32>
    %cst_185 = arith.constant 0.000000e+00 : f32
    %271 = vector.broadcast %cst_185 : f32 to vector<22x32xf32>
    %272 = arith.maximumf %270, %271 : vector<22x32xf32>
    %c1_186 = arith.constant 1 : index
    %c7_187 = arith.constant 7 : index
    %c0_188 = arith.constant 0 : index
    %c0_189 = arith.constant 0 : index
    %273 = vector.load %arg13[%c1_186, %c7_187, %c0_188, %c0_189] : memref<2x8x32x32xbf16, #tpu.memory_space<vmem>>, vector<1x1x32x32xbf16>
    %274 = vector.shape_cast %273 : vector<1x1x32x32xbf16> to vector<32x32xbf16>
    %275 = arith.truncf %272 : vector<22x32xf32> to vector<22x32xbf16>
    %cst_190 = arith.constant dense<0.000000e+00> : vector<22x32xf32>
    %276 = tpu.matmul %275, %274, %cst_190 {dimension_numbers = #tpu.dot_dimension_numbers<[1], [0], [0], [1], [0, 0, 1, 1], [], []>} : vector<22x32xbf16>, vector<32x32xbf16>, vector<22x32xf32> -> vector<22x32xf32>
    %c1_191 = arith.constant 1 : index
    %c7_192 = arith.constant 7 : index
    %c0_193 = arith.constant 0 : index
    %277 = vector.load %arg15[%c1_191, %c7_192, %c0_193] : memref<2x10x32xf32, #tpu.memory_space<vmem>>, vector<1x1x32xf32>
    %278 = vector.shape_cast %277 : vector<1x1x32xf32> to vector<1x32xf32>
    %279 = vector.broadcast %278 : vector<1x32xf32> to vector<22x32xf32>
    %280 = arith.addf %276, %279 : vector<22x32xf32>
    %c1_194 = arith.constant 1 : index
    %c8_195 = arith.constant 8 : index
    %c0_196 = arith.constant 0 : index
    %281 = vector.load %arg15[%c1_194, %c8_195, %c0_196] : memref<2x10x32xf32, #tpu.memory_space<vmem>>, vector<1x1x32xf32>
    %282 = vector.shape_cast %281 : vector<1x1x32xf32> to vector<1x32xf32>
    %c1_197 = arith.constant 1 : index
    %c9_198 = arith.constant 9 : index
    %c0_199 = arith.constant 0 : index
    %283 = vector.load %arg15[%c1_197, %c9_198, %c0_199] : memref<2x10x32xf32, #tpu.memory_space<vmem>>, vector<1x1x32xf32>
    %284 = vector.shape_cast %283 : vector<1x1x32xf32> to vector<1x32xf32>
    %cst_200 = arith.constant dense<0.000000e+00> : vector<22xf32>
    %285 = vector.multi_reduction <add>, %280, %cst_200 [1] : vector<22x32xf32> to vector<22xf32>
    %286 = vector.shape_cast %285 : vector<22xf32> to vector<22x1xf32>
    %cst_201 = arith.constant 3.200000e+01 : f32
    %287 = vector.broadcast %cst_201 : f32 to vector<22x1xf32>
    %288 = arith.divf %286, %287 : vector<22x1xf32>
    %289 = vector.broadcast %288 : vector<22x1xf32> to vector<22x32xf32>
    %290 = arith.subf %280, %289 : vector<22x32xf32>
    %291 = arith.mulf %290, %290 : vector<22x32xf32>
    %cst_202 = arith.constant dense<0.000000e+00> : vector<22xf32>
    %292 = vector.multi_reduction <add>, %291, %cst_202 [1] : vector<22x32xf32> to vector<22xf32>
    %293 = vector.shape_cast %292 : vector<22xf32> to vector<22x1xf32>
    %cst_203 = arith.constant 3.200000e+01 : f32
    %294 = vector.broadcast %cst_203 : f32 to vector<22x1xf32>
    %295 = arith.divf %293, %294 : vector<22x1xf32>
    %296 = vector.broadcast %288 : vector<22x1xf32> to vector<22x32xf32>
    %297 = arith.subf %280, %296 : vector<22x32xf32>
    %cst_204 = arith.constant 9.99999974E-6 : f32
    %298 = vector.broadcast %cst_204 : f32 to vector<22x1xf32>
    %299 = arith.addf %295, %298 : vector<22x1xf32>
    %300 = math.rsqrt %299 : vector<22x1xf32>
    %301 = vector.broadcast %300 : vector<22x1xf32> to vector<22x32xf32>
    %302 = arith.mulf %297, %301 : vector<22x32xf32>
    %303 = vector.broadcast %282 : vector<1x32xf32> to vector<22x32xf32>
    %304 = arith.mulf %302, %303 : vector<22x32xf32>
    %305 = vector.broadcast %284 : vector<1x32xf32> to vector<22x32xf32>
    %306 = arith.addf %304, %305 : vector<22x32xf32>
    %307 = arith.addf %179, %306 : vector<22x32xf32>
    %c0_205 = arith.constant 0 : index
    %c0_206 = arith.constant 0 : index
    %308 = vector.load %arg4[%c0_205, %c0_206] : memref<24x22xf32, #tpu.memory_space<vmem>>, vector<24x22xf32>
    %cst_207 = arith.constant dense<0.000000e+00> : vector<24x32xf32>
    %309 = tpu.matmul %308, %307, %cst_207 {dimension_numbers = #tpu.dot_dimension_numbers<[1], [0], [0], [1], [0, 0, 1, 1], [], []>} : vector<24x22xf32>, vector<22x32xf32>, vector<24x32xf32> -> vector<24x32xf32>
    %c0_208 = arith.constant 0 : index
    %c0_209 = arith.constant 0 : index
    %310 = vector.load %arg9[%c0_208, %c0_209] : memref<16x64xf32, #tpu.memory_space<vmem>>, vector<16x64xf32>
    %c0_210 = arith.constant 0 : index
    %c0_211 = arith.constant 0 : index
    %311 = vector.load %arg6[%c0_210, %c0_211] : memref<16x24xf32, #tpu.memory_space<vmem>>, vector<16x24xf32>
    %c0_212 = arith.constant 0 : index
    %c0_213 = arith.constant 0 : index
    %312 = vector.load %arg21[%c0_212, %c0_213] : memref<10x64xf32, #tpu.memory_space<vmem>>, vector<1x64xf32>
    %c1_214 = arith.constant 1 : index
    %c0_215 = arith.constant 0 : index
    %313 = vector.load %arg21[%c1_214, %c0_215] : memref<10x64xf32, #tpu.memory_space<vmem>>, vector<1x64xf32>
    %c0_216 = arith.constant 0 : index
    %c0_217 = arith.constant 0 : index
    %314 = vector.load %arg22[%c0_216, %c0_217] : memref<2x32xf32, #tpu.memory_space<vmem>>, vector<1x32xf32>
    %c1_218 = arith.constant 1 : index
    %c0_219 = arith.constant 0 : index
    %315 = vector.load %arg22[%c1_218, %c0_219] : memref<2x32xf32, #tpu.memory_space<vmem>>, vector<1x32xf32>
    %c0_220 = arith.constant 0 : index
    %c0_221 = arith.constant 0 : index
    %c0_222 = arith.constant 0 : index
    %316 = vector.load %arg19[%c0_220, %c0_221, %c0_222] : memref<4x64x64xbf16, #tpu.memory_space<vmem>>, vector<1x64x64xbf16>
    %317 = vector.shape_cast %316 : vector<1x64x64xbf16> to vector<64x64xbf16>
    %c2_223 = arith.constant 2 : index
    %c0_224 = arith.constant 0 : index
    %318 = vector.load %arg21[%c2_223, %c0_224] : memref<10x64xf32, #tpu.memory_space<vmem>>, vector<1x64xf32>
    %c0_225 = arith.constant 0 : index
    %c0_226 = arith.constant 0 : index
    %c0_227 = arith.constant 0 : index
    %319 = vector.load %arg20[%c0_225, %c0_226, %c0_227] : memref<2x32x64xbf16, #tpu.memory_space<vmem>>, vector<1x32x64xbf16>
    %320 = vector.shape_cast %319 : vector<1x32x64xbf16> to vector<32x64xbf16>
    %c3_228 = arith.constant 3 : index
    %c0_229 = arith.constant 0 : index
    %321 = vector.load %arg21[%c3_228, %c0_229] : memref<10x64xf32, #tpu.memory_space<vmem>>, vector<1x64xf32>
    %c1_230 = arith.constant 1 : index
    %c0_231 = arith.constant 0 : index
    %c0_232 = arith.constant 0 : index
    %322 = vector.load %arg20[%c1_230, %c0_231, %c0_232] : memref<2x32x64xbf16, #tpu.memory_space<vmem>>, vector<1x32x64xbf16>
    %323 = vector.shape_cast %322 : vector<1x32x64xbf16> to vector<32x64xbf16>
    %c4_233 = arith.constant 4 : index
    %c0_234 = arith.constant 0 : index
    %324 = vector.load %arg21[%c4_233, %c0_234] : memref<10x64xf32, #tpu.memory_space<vmem>>, vector<1x64xf32>
    %c1_235 = arith.constant 1 : index
    %c0_236 = arith.constant 0 : index
    %c0_237 = arith.constant 0 : index
    %325 = vector.load %arg19[%c1_235, %c0_236, %c0_237] : memref<4x64x64xbf16, #tpu.memory_space<vmem>>, vector<1x64x64xbf16>
    %326 = vector.shape_cast %325 : vector<1x64x64xbf16> to vector<64x64xbf16>
    %c5_238 = arith.constant 5 : index
    %c0_239 = arith.constant 0 : index
    %327 = vector.load %arg21[%c5_238, %c0_239] : memref<10x64xf32, #tpu.memory_space<vmem>>, vector<1x64xf32>
    %c6_240 = arith.constant 6 : index
    %c0_241 = arith.constant 0 : index
    %328 = vector.load %arg21[%c6_240, %c0_241] : memref<10x64xf32, #tpu.memory_space<vmem>>, vector<1x64xf32>
    %c7_242 = arith.constant 7 : index
    %c0_243 = arith.constant 0 : index
    %329 = vector.load %arg21[%c7_242, %c0_243] : memref<10x64xf32, #tpu.memory_space<vmem>>, vector<1x64xf32>
    %c2_244 = arith.constant 2 : index
    %c0_245 = arith.constant 0 : index
    %c0_246 = arith.constant 0 : index
    %330 = vector.load %arg19[%c2_244, %c0_245, %c0_246] : memref<4x64x64xbf16, #tpu.memory_space<vmem>>, vector<1x64x64xbf16>
    %331 = vector.shape_cast %330 : vector<1x64x64xbf16> to vector<64x64xbf16>
    %c8_247 = arith.constant 8 : index
    %c0_248 = arith.constant 0 : index
    %332 = vector.load %arg21[%c8_247, %c0_248] : memref<10x64xf32, #tpu.memory_space<vmem>>, vector<1x64xf32>
    %c3_249 = arith.constant 3 : index
    %c0_250 = arith.constant 0 : index
    %c0_251 = arith.constant 0 : index
    %333 = vector.load %arg19[%c3_249, %c0_250, %c0_251] : memref<4x64x64xbf16, #tpu.memory_space<vmem>>, vector<1x64x64xbf16>
    %334 = vector.shape_cast %333 : vector<1x64x64xbf16> to vector<64x64xbf16>
    %c9_252 = arith.constant 9 : index
    %c0_253 = arith.constant 0 : index
    %335 = vector.load %arg21[%c9_252, %c0_253] : memref<10x64xf32, #tpu.memory_space<vmem>>, vector<1x64xf32>
    %cst_254 = arith.constant dense<0.000000e+00> : vector<16xf32>
    %336 = vector.multi_reduction <add>, %310, %cst_254 [1] : vector<16x64xf32> to vector<16xf32>
    %337 = vector.shape_cast %336 : vector<16xf32> to vector<16x1xf32>
    %cst_255 = arith.constant 6.400000e+01 : f32
    %338 = vector.broadcast %cst_255 : f32 to vector<16x1xf32>
    %339 = arith.divf %337, %338 : vector<16x1xf32>
    %340 = vector.broadcast %339 : vector<16x1xf32> to vector<16x64xf32>
    %341 = arith.subf %310, %340 : vector<16x64xf32>
    %342 = arith.mulf %341, %341 : vector<16x64xf32>
    %cst_256 = arith.constant dense<0.000000e+00> : vector<16xf32>
    %343 = vector.multi_reduction <add>, %342, %cst_256 [1] : vector<16x64xf32> to vector<16xf32>
    %344 = vector.shape_cast %343 : vector<16xf32> to vector<16x1xf32>
    %cst_257 = arith.constant 6.400000e+01 : f32
    %345 = vector.broadcast %cst_257 : f32 to vector<16x1xf32>
    %346 = arith.divf %344, %345 : vector<16x1xf32>
    %347 = vector.broadcast %339 : vector<16x1xf32> to vector<16x64xf32>
    %348 = arith.subf %310, %347 : vector<16x64xf32>
    %cst_258 = arith.constant 9.99999974E-6 : f32
    %349 = vector.broadcast %cst_258 : f32 to vector<16x1xf32>
    %350 = arith.addf %346, %349 : vector<16x1xf32>
    %351 = math.rsqrt %350 : vector<16x1xf32>
    %352 = vector.broadcast %351 : vector<16x1xf32> to vector<16x64xf32>
    %353 = arith.mulf %348, %352 : vector<16x64xf32>
    %354 = vector.broadcast %312 : vector<1x64xf32> to vector<16x64xf32>
    %355 = arith.mulf %353, %354 : vector<16x64xf32>
    %356 = vector.broadcast %313 : vector<1x64xf32> to vector<16x64xf32>
    %357 = arith.addf %355, %356 : vector<16x64xf32>
    %cst_259 = arith.constant dense<0.000000e+00> : vector<24xf32>
    %358 = vector.multi_reduction <add>, %309, %cst_259 [1] : vector<24x32xf32> to vector<24xf32>
    %359 = vector.shape_cast %358 : vector<24xf32> to vector<24x1xf32>
    %cst_260 = arith.constant 3.200000e+01 : f32
    %360 = vector.broadcast %cst_260 : f32 to vector<24x1xf32>
    %361 = arith.divf %359, %360 : vector<24x1xf32>
    %362 = vector.broadcast %361 : vector<24x1xf32> to vector<24x32xf32>
    %363 = arith.subf %309, %362 : vector<24x32xf32>
    %364 = arith.mulf %363, %363 : vector<24x32xf32>
    %cst_261 = arith.constant dense<0.000000e+00> : vector<24xf32>
    %365 = vector.multi_reduction <add>, %364, %cst_261 [1] : vector<24x32xf32> to vector<24xf32>
    %366 = vector.shape_cast %365 : vector<24xf32> to vector<24x1xf32>
    %cst_262 = arith.constant 3.200000e+01 : f32
    %367 = vector.broadcast %cst_262 : f32 to vector<24x1xf32>
    %368 = arith.divf %366, %367 : vector<24x1xf32>
    %369 = vector.broadcast %361 : vector<24x1xf32> to vector<24x32xf32>
    %370 = arith.subf %309, %369 : vector<24x32xf32>
    %cst_263 = arith.constant 9.99999974E-6 : f32
    %371 = vector.broadcast %cst_263 : f32 to vector<24x1xf32>
    %372 = arith.addf %368, %371 : vector<24x1xf32>
    %373 = math.rsqrt %372 : vector<24x1xf32>
    %374 = vector.broadcast %373 : vector<24x1xf32> to vector<24x32xf32>
    %375 = arith.mulf %370, %374 : vector<24x32xf32>
    %376 = vector.broadcast %314 : vector<1x32xf32> to vector<24x32xf32>
    %377 = arith.mulf %375, %376 : vector<24x32xf32>
    %378 = vector.broadcast %315 : vector<1x32xf32> to vector<24x32xf32>
    %379 = arith.addf %377, %378 : vector<24x32xf32>
    %380 = arith.truncf %357 : vector<16x64xf32> to vector<16x64xbf16>
    %cst_264 = arith.constant dense<0.000000e+00> : vector<16x64xf32>
    %381 = tpu.matmul %380, %317, %cst_264 {dimension_numbers = #tpu.dot_dimension_numbers<[1], [0], [0], [1], [0, 0, 1, 1], [], []>} : vector<16x64xbf16>, vector<64x64xbf16>, vector<16x64xf32> -> vector<16x64xf32>
    %382 = vector.broadcast %318 : vector<1x64xf32> to vector<16x64xf32>
    %383 = arith.addf %381, %382 : vector<16x64xf32>
    %cst_265 = arith.constant 1.250000e-01 : f32
    %384 = vector.broadcast %cst_265 : f32 to vector<16x64xf32>
    %385 = arith.mulf %383, %384 : vector<16x64xf32>
    %386 = arith.truncf %379 : vector<24x32xf32> to vector<24x32xbf16>
    %cst_266 = arith.constant dense<0.000000e+00> : vector<24x64xf32>
    %387 = tpu.matmul %386, %320, %cst_266 {dimension_numbers = #tpu.dot_dimension_numbers<[1], [0], [0], [1], [0, 0, 1, 1], [], []>} : vector<24x32xbf16>, vector<32x64xbf16>, vector<24x64xf32> -> vector<24x64xf32>
    %388 = vector.broadcast %321 : vector<1x64xf32> to vector<24x64xf32>
    %389 = arith.addf %387, %388 : vector<24x64xf32>
    %390 = arith.truncf %379 : vector<24x32xf32> to vector<24x32xbf16>
    %cst_267 = arith.constant dense<0.000000e+00> : vector<24x64xf32>
    %391 = tpu.matmul %390, %323, %cst_267 {dimension_numbers = #tpu.dot_dimension_numbers<[1], [0], [0], [1], [0, 0, 1, 1], [], []>} : vector<24x32xbf16>, vector<32x64xbf16>, vector<24x64xf32> -> vector<24x64xf32>
    %392 = vector.broadcast %324 : vector<1x64xf32> to vector<24x64xf32>
    %393 = arith.addf %391, %392 : vector<24x64xf32>
    %cst_268 = arith.constant dense<0.000000e+00> : vector<16x24xf32>
    %394 = tpu.matmul %385, %389, %cst_268 {dimension_numbers = #tpu.dot_dimension_numbers<[1], [1], [0], [0], [0, 0, 1, 0], [], []>} : vector<16x64xf32>, vector<24x64xf32>, vector<16x24xf32> -> vector<16x24xf32>
    %cst_269 = arith.constant 0.000000e+00 : f32
    %395 = vector.broadcast %cst_269 : f32 to vector<16x24xf32>
    %396 = arith.cmpf ogt, %311, %395 : vector<16x24xf32>
    %cst_270 = arith.constant -1.000000e+30 : f32
    %397 = vector.broadcast %cst_270 : f32 to vector<16x24xf32>
    %398 = arith.select %396, %394, %397 : vector<16x24xi1>, vector<16x24xf32>
    %cst_271 = arith.constant dense<0xFF800000> : vector<16xf32>
    %399 = vector.multi_reduction <maximumf>, %398, %cst_271 [1] : vector<16x24xf32> to vector<16xf32>
    %400 = vector.shape_cast %399 : vector<16xf32> to vector<16x1xf32>
    %401 = vector.broadcast %400 : vector<16x1xf32> to vector<16x24xf32>
    %402 = arith.subf %398, %401 : vector<16x24xf32>
    %403 = math.exp %402 : vector<16x24xf32>
    %404 = arith.mulf %403, %311 : vector<16x24xf32>
    %cst_272 = arith.constant dense<0.000000e+00> : vector<16xf32>
    %405 = vector.multi_reduction <add>, %404, %cst_272 [1] : vector<16x24xf32> to vector<16xf32>
    %406 = vector.shape_cast %405 : vector<16xf32> to vector<16x1xf32>
    %cst_273 = arith.constant 1.000000e-30 : f32
    %407 = vector.broadcast %cst_273 : f32 to vector<16x1xf32>
    %408 = arith.maximumf %406, %407 : vector<16x1xf32>
    %409 = vector.broadcast %408 : vector<16x1xf32> to vector<16x24xf32>
    %410 = arith.divf %404, %409 : vector<16x24xf32>
    %cst_274 = arith.constant dense<0.000000e+00> : vector<16x64xf32>
    %411 = tpu.matmul %410, %393, %cst_274 {dimension_numbers = #tpu.dot_dimension_numbers<[1], [0], [0], [1], [0, 0, 1, 1], [], []>} : vector<16x24xf32>, vector<24x64xf32>, vector<16x64xf32> -> vector<16x64xf32>
    %412 = arith.truncf %411 : vector<16x64xf32> to vector<16x64xbf16>
    %cst_275 = arith.constant dense<0.000000e+00> : vector<16x64xf32>
    %413 = tpu.matmul %412, %326, %cst_275 {dimension_numbers = #tpu.dot_dimension_numbers<[1], [0], [0], [1], [0, 0, 1, 1], [], []>} : vector<16x64xbf16>, vector<64x64xbf16>, vector<16x64xf32> -> vector<16x64xf32>
    %414 = vector.broadcast %327 : vector<1x64xf32> to vector<16x64xf32>
    %415 = arith.addf %413, %414 : vector<16x64xf32>
    %416 = arith.addf %310, %415 : vector<16x64xf32>
    %cst_276 = arith.constant dense<0.000000e+00> : vector<16xf32>
    %417 = vector.multi_reduction <add>, %416, %cst_276 [1] : vector<16x64xf32> to vector<16xf32>
    %418 = vector.shape_cast %417 : vector<16xf32> to vector<16x1xf32>
    %cst_277 = arith.constant 6.400000e+01 : f32
    %419 = vector.broadcast %cst_277 : f32 to vector<16x1xf32>
    %420 = arith.divf %418, %419 : vector<16x1xf32>
    %421 = vector.broadcast %420 : vector<16x1xf32> to vector<16x64xf32>
    %422 = arith.subf %416, %421 : vector<16x64xf32>
    %423 = arith.mulf %422, %422 : vector<16x64xf32>
    %cst_278 = arith.constant dense<0.000000e+00> : vector<16xf32>
    %424 = vector.multi_reduction <add>, %423, %cst_278 [1] : vector<16x64xf32> to vector<16xf32>
    %425 = vector.shape_cast %424 : vector<16xf32> to vector<16x1xf32>
    %cst_279 = arith.constant 6.400000e+01 : f32
    %426 = vector.broadcast %cst_279 : f32 to vector<16x1xf32>
    %427 = arith.divf %425, %426 : vector<16x1xf32>
    %428 = vector.broadcast %420 : vector<16x1xf32> to vector<16x64xf32>
    %429 = arith.subf %416, %428 : vector<16x64xf32>
    %cst_280 = arith.constant 9.99999974E-6 : f32
    %430 = vector.broadcast %cst_280 : f32 to vector<16x1xf32>
    %431 = arith.addf %427, %430 : vector<16x1xf32>
    %432 = math.rsqrt %431 : vector<16x1xf32>
    %433 = vector.broadcast %432 : vector<16x1xf32> to vector<16x64xf32>
    %434 = arith.mulf %429, %433 : vector<16x64xf32>
    %435 = vector.broadcast %328 : vector<1x64xf32> to vector<16x64xf32>
    %436 = arith.mulf %434, %435 : vector<16x64xf32>
    %437 = vector.broadcast %329 : vector<1x64xf32> to vector<16x64xf32>
    %438 = arith.addf %436, %437 : vector<16x64xf32>
    %439 = arith.truncf %438 : vector<16x64xf32> to vector<16x64xbf16>
    %cst_281 = arith.constant dense<0.000000e+00> : vector<16x64xf32>
    %440 = tpu.matmul %439, %331, %cst_281 {dimension_numbers = #tpu.dot_dimension_numbers<[1], [0], [0], [1], [0, 0, 1, 1], [], []>} : vector<16x64xbf16>, vector<64x64xbf16>, vector<16x64xf32> -> vector<16x64xf32>
    %441 = vector.broadcast %332 : vector<1x64xf32> to vector<16x64xf32>
    %442 = arith.addf %440, %441 : vector<16x64xf32>
    %443 = arith.mulf %442, %442 : vector<16x64xf32>
    %444 = arith.mulf %442, %443 : vector<16x64xf32>
    %cst_282 = arith.constant 4.471500e-02 : f32
    %445 = vector.broadcast %cst_282 : f32 to vector<16x64xf32>
    %446 = arith.mulf %445, %444 : vector<16x64xf32>
    %447 = arith.addf %442, %446 : vector<16x64xf32>
    %cst_283 = arith.constant 0.797884583 : f32
    %448 = vector.broadcast %cst_283 : f32 to vector<16x64xf32>
    %449 = arith.mulf %448, %447 : vector<16x64xf32>
    %450 = math.tanh %449 : vector<16x64xf32>
    %cst_284 = arith.constant 1.000000e+00 : f32
    %451 = vector.broadcast %cst_284 : f32 to vector<16x64xf32>
    %452 = arith.addf %451, %450 : vector<16x64xf32>
    %cst_285 = arith.constant 5.000000e-01 : f32
    %453 = vector.broadcast %cst_285 : f32 to vector<16x64xf32>
    %454 = arith.mulf %453, %452 : vector<16x64xf32>
    %455 = arith.mulf %442, %454 : vector<16x64xf32>
    %456 = arith.truncf %455 : vector<16x64xf32> to vector<16x64xbf16>
    %cst_286 = arith.constant dense<0.000000e+00> : vector<16x64xf32>
    %457 = tpu.matmul %456, %334, %cst_286 {dimension_numbers = #tpu.dot_dimension_numbers<[1], [0], [0], [1], [0, 0, 1, 1], [], []>} : vector<16x64xbf16>, vector<64x64xbf16>, vector<16x64xf32> -> vector<16x64xf32>
    %458 = vector.broadcast %335 : vector<1x64xf32> to vector<16x64xf32>
    %459 = arith.addf %457, %458 : vector<16x64xf32>
    %460 = arith.addf %416, %459 : vector<16x64xf32>
    %c0_287 = arith.constant 0 : index
    %c0_288 = arith.constant 0 : index
    %461 = vector.load %arg7[%c0_287, %c0_288] : memref<16x16xf32, #tpu.memory_space<vmem>>, vector<16x16xf32>
    %c0_289 = arith.constant 0 : index
    %c0_290 = arith.constant 0 : index
    %462 = vector.load %arg24[%c0_289, %c0_290] : memref<12x64xf32, #tpu.memory_space<vmem>>, vector<1x64xf32>
    %c1_291 = arith.constant 1 : index
    %c0_292 = arith.constant 0 : index
    %463 = vector.load %arg24[%c1_291, %c0_292] : memref<12x64xf32, #tpu.memory_space<vmem>>, vector<1x64xf32>
    %c2_293 = arith.constant 2 : index
    %c0_294 = arith.constant 0 : index
    %464 = vector.load %arg24[%c2_293, %c0_294] : memref<12x64xf32, #tpu.memory_space<vmem>>, vector<1x64xf32>
    %c3_295 = arith.constant 3 : index
    %c0_296 = arith.constant 0 : index
    %465 = vector.load %arg24[%c3_295, %c0_296] : memref<12x64xf32, #tpu.memory_space<vmem>>, vector<1x64xf32>
    %c0_297 = arith.constant 0 : index
    %c0_298 = arith.constant 0 : index
    %c0_299 = arith.constant 0 : index
    %466 = vector.load %arg23[%c0_297, %c0_298, %c0_299] : memref<6x64x64xbf16, #tpu.memory_space<vmem>>, vector<1x64x64xbf16>
    %467 = vector.shape_cast %466 : vector<1x64x64xbf16> to vector<64x64xbf16>
    %c4_300 = arith.constant 4 : index
    %c0_301 = arith.constant 0 : index
    %468 = vector.load %arg24[%c4_300, %c0_301] : memref<12x64xf32, #tpu.memory_space<vmem>>, vector<1x64xf32>
    %c1_302 = arith.constant 1 : index
    %c0_303 = arith.constant 0 : index
    %c0_304 = arith.constant 0 : index
    %469 = vector.load %arg23[%c1_302, %c0_303, %c0_304] : memref<6x64x64xbf16, #tpu.memory_space<vmem>>, vector<1x64x64xbf16>
    %470 = vector.shape_cast %469 : vector<1x64x64xbf16> to vector<64x64xbf16>
    %c5_305 = arith.constant 5 : index
    %c0_306 = arith.constant 0 : index
    %471 = vector.load %arg24[%c5_305, %c0_306] : memref<12x64xf32, #tpu.memory_space<vmem>>, vector<1x64xf32>
    %c2_307 = arith.constant 2 : index
    %c0_308 = arith.constant 0 : index
    %c0_309 = arith.constant 0 : index
    %472 = vector.load %arg23[%c2_307, %c0_308, %c0_309] : memref<6x64x64xbf16, #tpu.memory_space<vmem>>, vector<1x64x64xbf16>
    %473 = vector.shape_cast %472 : vector<1x64x64xbf16> to vector<64x64xbf16>
    %c6_310 = arith.constant 6 : index
    %c0_311 = arith.constant 0 : index
    %474 = vector.load %arg24[%c6_310, %c0_311] : memref<12x64xf32, #tpu.memory_space<vmem>>, vector<1x64xf32>
    %c3_312 = arith.constant 3 : index
    %c0_313 = arith.constant 0 : index
    %c0_314 = arith.constant 0 : index
    %475 = vector.load %arg23[%c3_312, %c0_313, %c0_314] : memref<6x64x64xbf16, #tpu.memory_space<vmem>>, vector<1x64x64xbf16>
    %476 = vector.shape_cast %475 : vector<1x64x64xbf16> to vector<64x64xbf16>
    %c7_315 = arith.constant 7 : index
    %c0_316 = arith.constant 0 : index
    %477 = vector.load %arg24[%c7_315, %c0_316] : memref<12x64xf32, #tpu.memory_space<vmem>>, vector<1x64xf32>
    %c8_317 = arith.constant 8 : index
    %c0_318 = arith.constant 0 : index
    %478 = vector.load %arg24[%c8_317, %c0_318] : memref<12x64xf32, #tpu.memory_space<vmem>>, vector<1x64xf32>
    %c9_319 = arith.constant 9 : index
    %c0_320 = arith.constant 0 : index
    %479 = vector.load %arg24[%c9_319, %c0_320] : memref<12x64xf32, #tpu.memory_space<vmem>>, vector<1x64xf32>
    %c4_321 = arith.constant 4 : index
    %c0_322 = arith.constant 0 : index
    %c0_323 = arith.constant 0 : index
    %480 = vector.load %arg23[%c4_321, %c0_322, %c0_323] : memref<6x64x64xbf16, #tpu.memory_space<vmem>>, vector<1x64x64xbf16>
    %481 = vector.shape_cast %480 : vector<1x64x64xbf16> to vector<64x64xbf16>
    %c10 = arith.constant 10 : index
    %c0_324 = arith.constant 0 : index
    %482 = vector.load %arg24[%c10, %c0_324] : memref<12x64xf32, #tpu.memory_space<vmem>>, vector<1x64xf32>
    %c5_325 = arith.constant 5 : index
    %c0_326 = arith.constant 0 : index
    %c0_327 = arith.constant 0 : index
    %483 = vector.load %arg23[%c5_325, %c0_326, %c0_327] : memref<6x64x64xbf16, #tpu.memory_space<vmem>>, vector<1x64x64xbf16>
    %484 = vector.shape_cast %483 : vector<1x64x64xbf16> to vector<64x64xbf16>
    %c11 = arith.constant 11 : index
    %c0_328 = arith.constant 0 : index
    %485 = vector.load %arg24[%c11, %c0_328] : memref<12x64xf32, #tpu.memory_space<vmem>>, vector<1x64xf32>
    %cst_329 = arith.constant dense<0.000000e+00> : vector<16xf32>
    %486 = vector.multi_reduction <add>, %460, %cst_329 [1] : vector<16x64xf32> to vector<16xf32>
    %487 = vector.shape_cast %486 : vector<16xf32> to vector<16x1xf32>
    %cst_330 = arith.constant 6.400000e+01 : f32
    %488 = vector.broadcast %cst_330 : f32 to vector<16x1xf32>
    %489 = arith.divf %487, %488 : vector<16x1xf32>
    %490 = vector.broadcast %489 : vector<16x1xf32> to vector<16x64xf32>
    %491 = arith.subf %460, %490 : vector<16x64xf32>
    %492 = arith.mulf %491, %491 : vector<16x64xf32>
    %cst_331 = arith.constant dense<0.000000e+00> : vector<16xf32>
    %493 = vector.multi_reduction <add>, %492, %cst_331 [1] : vector<16x64xf32> to vector<16xf32>
    %494 = vector.shape_cast %493 : vector<16xf32> to vector<16x1xf32>
    %cst_332 = arith.constant 6.400000e+01 : f32
    %495 = vector.broadcast %cst_332 : f32 to vector<16x1xf32>
    %496 = arith.divf %494, %495 : vector<16x1xf32>
    %497 = vector.broadcast %489 : vector<16x1xf32> to vector<16x64xf32>
    %498 = arith.subf %460, %497 : vector<16x64xf32>
    %cst_333 = arith.constant 9.99999974E-6 : f32
    %499 = vector.broadcast %cst_333 : f32 to vector<16x1xf32>
    %500 = arith.addf %496, %499 : vector<16x1xf32>
    %501 = math.rsqrt %500 : vector<16x1xf32>
    %502 = vector.broadcast %501 : vector<16x1xf32> to vector<16x64xf32>
    %503 = arith.mulf %498, %502 : vector<16x64xf32>
    %504 = vector.broadcast %462 : vector<1x64xf32> to vector<16x64xf32>
    %505 = arith.mulf %503, %504 : vector<16x64xf32>
    %506 = vector.broadcast %463 : vector<1x64xf32> to vector<16x64xf32>
    %507 = arith.addf %505, %506 : vector<16x64xf32>
    %cst_334 = arith.constant dense<0.000000e+00> : vector<16xf32>
    %508 = vector.multi_reduction <add>, %460, %cst_334 [1] : vector<16x64xf32> to vector<16xf32>
    %509 = vector.shape_cast %508 : vector<16xf32> to vector<16x1xf32>
    %cst_335 = arith.constant 6.400000e+01 : f32
    %510 = vector.broadcast %cst_335 : f32 to vector<16x1xf32>
    %511 = arith.divf %509, %510 : vector<16x1xf32>
    %512 = vector.broadcast %511 : vector<16x1xf32> to vector<16x64xf32>
    %513 = arith.subf %460, %512 : vector<16x64xf32>
    %514 = arith.mulf %513, %513 : vector<16x64xf32>
    %cst_336 = arith.constant dense<0.000000e+00> : vector<16xf32>
    %515 = vector.multi_reduction <add>, %514, %cst_336 [1] : vector<16x64xf32> to vector<16xf32>
    %516 = vector.shape_cast %515 : vector<16xf32> to vector<16x1xf32>
    %cst_337 = arith.constant 6.400000e+01 : f32
    %517 = vector.broadcast %cst_337 : f32 to vector<16x1xf32>
    %518 = arith.divf %516, %517 : vector<16x1xf32>
    %519 = vector.broadcast %511 : vector<16x1xf32> to vector<16x64xf32>
    %520 = arith.subf %460, %519 : vector<16x64xf32>
    %cst_338 = arith.constant 9.99999974E-6 : f32
    %521 = vector.broadcast %cst_338 : f32 to vector<16x1xf32>
    %522 = arith.addf %518, %521 : vector<16x1xf32>
    %523 = math.rsqrt %522 : vector<16x1xf32>
    %524 = vector.broadcast %523 : vector<16x1xf32> to vector<16x64xf32>
    %525 = arith.mulf %520, %524 : vector<16x64xf32>
    %526 = vector.broadcast %464 : vector<1x64xf32> to vector<16x64xf32>
    %527 = arith.mulf %525, %526 : vector<16x64xf32>
    %528 = vector.broadcast %465 : vector<1x64xf32> to vector<16x64xf32>
    %529 = arith.addf %527, %528 : vector<16x64xf32>
    %530 = arith.truncf %507 : vector<16x64xf32> to vector<16x64xbf16>
    %cst_339 = arith.constant dense<0.000000e+00> : vector<16x64xf32>
    %531 = tpu.matmul %530, %467, %cst_339 {dimension_numbers = #tpu.dot_dimension_numbers<[1], [0], [0], [1], [0, 0, 1, 1], [], []>} : vector<16x64xbf16>, vector<64x64xbf16>, vector<16x64xf32> -> vector<16x64xf32>
    %532 = vector.broadcast %468 : vector<1x64xf32> to vector<16x64xf32>
    %533 = arith.addf %531, %532 : vector<16x64xf32>
    %cst_340 = arith.constant 1.250000e-01 : f32
    %534 = vector.broadcast %cst_340 : f32 to vector<16x64xf32>
    %535 = arith.mulf %533, %534 : vector<16x64xf32>
    %536 = arith.truncf %529 : vector<16x64xf32> to vector<16x64xbf16>
    %cst_341 = arith.constant dense<0.000000e+00> : vector<16x64xf32>
    %537 = tpu.matmul %536, %470, %cst_341 {dimension_numbers = #tpu.dot_dimension_numbers<[1], [0], [0], [1], [0, 0, 1, 1], [], []>} : vector<16x64xbf16>, vector<64x64xbf16>, vector<16x64xf32> -> vector<16x64xf32>
    %538 = vector.broadcast %471 : vector<1x64xf32> to vector<16x64xf32>
    %539 = arith.addf %537, %538 : vector<16x64xf32>
    %540 = arith.truncf %529 : vector<16x64xf32> to vector<16x64xbf16>
    %cst_342 = arith.constant dense<0.000000e+00> : vector<16x64xf32>
    %541 = tpu.matmul %540, %473, %cst_342 {dimension_numbers = #tpu.dot_dimension_numbers<[1], [0], [0], [1], [0, 0, 1, 1], [], []>} : vector<16x64xbf16>, vector<64x64xbf16>, vector<16x64xf32> -> vector<16x64xf32>
    %542 = vector.broadcast %474 : vector<1x64xf32> to vector<16x64xf32>
    %543 = arith.addf %541, %542 : vector<16x64xf32>
    %cst_343 = arith.constant dense<0.000000e+00> : vector<16x16xf32>
    %544 = tpu.matmul %535, %539, %cst_343 {dimension_numbers = #tpu.dot_dimension_numbers<[1], [1], [0], [0], [0, 0, 1, 0], [], []>} : vector<16x64xf32>, vector<16x64xf32>, vector<16x16xf32> -> vector<16x16xf32>
    %cst_344 = arith.constant 0.000000e+00 : f32
    %545 = vector.broadcast %cst_344 : f32 to vector<16x16xf32>
    %546 = arith.cmpf ogt, %461, %545 : vector<16x16xf32>
    %cst_345 = arith.constant -1.000000e+30 : f32
    %547 = vector.broadcast %cst_345 : f32 to vector<16x16xf32>
    %548 = arith.select %546, %544, %547 : vector<16x16xi1>, vector<16x16xf32>
    %cst_346 = arith.constant dense<0xFF800000> : vector<16xf32>
    %549 = vector.multi_reduction <maximumf>, %548, %cst_346 [1] : vector<16x16xf32> to vector<16xf32>
    %550 = vector.shape_cast %549 : vector<16xf32> to vector<16x1xf32>
    %551 = vector.broadcast %550 : vector<16x1xf32> to vector<16x16xf32>
    %552 = arith.subf %548, %551 : vector<16x16xf32>
    %553 = math.exp %552 : vector<16x16xf32>
    %554 = arith.mulf %553, %461 : vector<16x16xf32>
    %cst_347 = arith.constant dense<0.000000e+00> : vector<16xf32>
    %555 = vector.multi_reduction <add>, %554, %cst_347 [1] : vector<16x16xf32> to vector<16xf32>
    %556 = vector.shape_cast %555 : vector<16xf32> to vector<16x1xf32>
    %cst_348 = arith.constant 1.000000e-30 : f32
    %557 = vector.broadcast %cst_348 : f32 to vector<16x1xf32>
    %558 = arith.maximumf %556, %557 : vector<16x1xf32>
    %559 = vector.broadcast %558 : vector<16x1xf32> to vector<16x16xf32>
    %560 = arith.divf %554, %559 : vector<16x16xf32>
    %cst_349 = arith.constant dense<0.000000e+00> : vector<16x64xf32>
    %561 = tpu.matmul %560, %543, %cst_349 {dimension_numbers = #tpu.dot_dimension_numbers<[1], [0], [0], [1], [0, 0, 1, 1], [], []>} : vector<16x16xf32>, vector<16x64xf32>, vector<16x64xf32> -> vector<16x64xf32>
    %562 = arith.truncf %561 : vector<16x64xf32> to vector<16x64xbf16>
    %cst_350 = arith.constant dense<0.000000e+00> : vector<16x64xf32>
    %563 = tpu.matmul %562, %476, %cst_350 {dimension_numbers = #tpu.dot_dimension_numbers<[1], [0], [0], [1], [0, 0, 1, 1], [], []>} : vector<16x64xbf16>, vector<64x64xbf16>, vector<16x64xf32> -> vector<16x64xf32>
    %564 = vector.broadcast %477 : vector<1x64xf32> to vector<16x64xf32>
    %565 = arith.addf %563, %564 : vector<16x64xf32>
    %566 = arith.addf %460, %565 : vector<16x64xf32>
    %cst_351 = arith.constant dense<0.000000e+00> : vector<16xf32>
    %567 = vector.multi_reduction <add>, %566, %cst_351 [1] : vector<16x64xf32> to vector<16xf32>
    %568 = vector.shape_cast %567 : vector<16xf32> to vector<16x1xf32>
    %cst_352 = arith.constant 6.400000e+01 : f32
    %569 = vector.broadcast %cst_352 : f32 to vector<16x1xf32>
    %570 = arith.divf %568, %569 : vector<16x1xf32>
    %571 = vector.broadcast %570 : vector<16x1xf32> to vector<16x64xf32>
    %572 = arith.subf %566, %571 : vector<16x64xf32>
    %573 = arith.mulf %572, %572 : vector<16x64xf32>
    %cst_353 = arith.constant dense<0.000000e+00> : vector<16xf32>
    %574 = vector.multi_reduction <add>, %573, %cst_353 [1] : vector<16x64xf32> to vector<16xf32>
    %575 = vector.shape_cast %574 : vector<16xf32> to vector<16x1xf32>
    %cst_354 = arith.constant 6.400000e+01 : f32
    %576 = vector.broadcast %cst_354 : f32 to vector<16x1xf32>
    %577 = arith.divf %575, %576 : vector<16x1xf32>
    %578 = vector.broadcast %570 : vector<16x1xf32> to vector<16x64xf32>
    %579 = arith.subf %566, %578 : vector<16x64xf32>
    %cst_355 = arith.constant 9.99999974E-6 : f32
    %580 = vector.broadcast %cst_355 : f32 to vector<16x1xf32>
    %581 = arith.addf %577, %580 : vector<16x1xf32>
    %582 = math.rsqrt %581 : vector<16x1xf32>
    %583 = vector.broadcast %582 : vector<16x1xf32> to vector<16x64xf32>
    %584 = arith.mulf %579, %583 : vector<16x64xf32>
    %585 = vector.broadcast %478 : vector<1x64xf32> to vector<16x64xf32>
    %586 = arith.mulf %584, %585 : vector<16x64xf32>
    %587 = vector.broadcast %479 : vector<1x64xf32> to vector<16x64xf32>
    %588 = arith.addf %586, %587 : vector<16x64xf32>
    %589 = arith.truncf %588 : vector<16x64xf32> to vector<16x64xbf16>
    %cst_356 = arith.constant dense<0.000000e+00> : vector<16x64xf32>
    %590 = tpu.matmul %589, %481, %cst_356 {dimension_numbers = #tpu.dot_dimension_numbers<[1], [0], [0], [1], [0, 0, 1, 1], [], []>} : vector<16x64xbf16>, vector<64x64xbf16>, vector<16x64xf32> -> vector<16x64xf32>
    %591 = vector.broadcast %482 : vector<1x64xf32> to vector<16x64xf32>
    %592 = arith.addf %590, %591 : vector<16x64xf32>
    %593 = arith.mulf %592, %592 : vector<16x64xf32>
    %594 = arith.mulf %592, %593 : vector<16x64xf32>
    %cst_357 = arith.constant 4.471500e-02 : f32
    %595 = vector.broadcast %cst_357 : f32 to vector<16x64xf32>
    %596 = arith.mulf %595, %594 : vector<16x64xf32>
    %597 = arith.addf %592, %596 : vector<16x64xf32>
    %cst_358 = arith.constant 0.797884583 : f32
    %598 = vector.broadcast %cst_358 : f32 to vector<16x64xf32>
    %599 = arith.mulf %598, %597 : vector<16x64xf32>
    %600 = math.tanh %599 : vector<16x64xf32>
    %cst_359 = arith.constant 1.000000e+00 : f32
    %601 = vector.broadcast %cst_359 : f32 to vector<16x64xf32>
    %602 = arith.addf %601, %600 : vector<16x64xf32>
    %cst_360 = arith.constant 5.000000e-01 : f32
    %603 = vector.broadcast %cst_360 : f32 to vector<16x64xf32>
    %604 = arith.mulf %603, %602 : vector<16x64xf32>
    %605 = arith.mulf %592, %604 : vector<16x64xf32>
    %606 = arith.truncf %605 : vector<16x64xf32> to vector<16x64xbf16>
    %cst_361 = arith.constant dense<0.000000e+00> : vector<16x64xf32>
    %607 = tpu.matmul %606, %484, %cst_361 {dimension_numbers = #tpu.dot_dimension_numbers<[1], [0], [0], [1], [0, 0, 1, 1], [], []>} : vector<16x64xbf16>, vector<64x64xbf16>, vector<16x64xf32> -> vector<16x64xf32>
    %608 = vector.broadcast %485 : vector<1x64xf32> to vector<16x64xf32>
    %609 = arith.addf %607, %608 : vector<16x64xf32>
    %610 = arith.addf %566, %609 : vector<16x64xf32>
    %c0_362 = arith.constant 0 : index
    %c0_363 = arith.constant 0 : index
    %611 = vector.load %arg8[%c0_362, %c0_363] : memref<24x16xf32, #tpu.memory_space<vmem>>, vector<24x16xf32>
    %c0_364 = arith.constant 0 : index
    %c0_365 = arith.constant 0 : index
    %612 = vector.load %arg30[%c0_364, %c0_365] : memref<8x32xf32, #tpu.memory_space<vmem>>, vector<1x32xf32>
    %c1_366 = arith.constant 1 : index
    %c0_367 = arith.constant 0 : index
    %613 = vector.load %arg30[%c1_366, %c0_367] : memref<8x32xf32, #tpu.memory_space<vmem>>, vector<1x32xf32>
    %c0_368 = arith.constant 0 : index
    %c0_369 = arith.constant 0 : index
    %614 = vector.load %arg29[%c0_368, %c0_369] : memref<5x64xf32, #tpu.memory_space<vmem>>, vector<1x64xf32>
    %c1_370 = arith.constant 1 : index
    %c0_371 = arith.constant 0 : index
    %615 = vector.load %arg29[%c1_370, %c0_371] : memref<5x64xf32, #tpu.memory_space<vmem>>, vector<1x64xf32>
    %c0_372 = arith.constant 0 : index
    %c0_373 = arith.constant 0 : index
    %616 = vector.load %arg25[%c0_372, %c0_373] : memref<32x64xbf16, #tpu.memory_space<vmem>>, vector<32x64xbf16>
    %c2_374 = arith.constant 2 : index
    %c0_375 = arith.constant 0 : index
    %617 = vector.load %arg29[%c2_374, %c0_375] : memref<5x64xf32, #tpu.memory_space<vmem>>, vector<1x64xf32>
    %c0_376 = arith.constant 0 : index
    %c0_377 = arith.constant 0 : index
    %c0_378 = arith.constant 0 : index
    %618 = vector.load %arg26[%c0_376, %c0_377, %c0_378] : memref<2x64x64xbf16, #tpu.memory_space<vmem>>, vector<1x64x64xbf16>
    %619 = vector.shape_cast %618 : vector<1x64x64xbf16> to vector<64x64xbf16>
    %c3_379 = arith.constant 3 : index
    %c0_380 = arith.constant 0 : index
    %620 = vector.load %arg29[%c3_379, %c0_380] : memref<5x64xf32, #tpu.memory_space<vmem>>, vector<1x64xf32>
    %c1_381 = arith.constant 1 : index
    %c0_382 = arith.constant 0 : index
    %c0_383 = arith.constant 0 : index
    %621 = vector.load %arg26[%c1_381, %c0_382, %c0_383] : memref<2x64x64xbf16, #tpu.memory_space<vmem>>, vector<1x64x64xbf16>
    %622 = vector.shape_cast %621 : vector<1x64x64xbf16> to vector<64x64xbf16>
    %c4_384 = arith.constant 4 : index
    %c0_385 = arith.constant 0 : index
    %623 = vector.load %arg29[%c4_384, %c0_385] : memref<5x64xf32, #tpu.memory_space<vmem>>, vector<1x64xf32>
    %c0_386 = arith.constant 0 : index
    %c0_387 = arith.constant 0 : index
    %624 = vector.load %arg27[%c0_386, %c0_387] : memref<64x32xbf16, #tpu.memory_space<vmem>>, vector<64x32xbf16>
    %c2_388 = arith.constant 2 : index
    %c0_389 = arith.constant 0 : index
    %625 = vector.load %arg30[%c2_388, %c0_389] : memref<8x32xf32, #tpu.memory_space<vmem>>, vector<1x32xf32>
    %c3_390 = arith.constant 3 : index
    %c0_391 = arith.constant 0 : index
    %626 = vector.load %arg30[%c3_390, %c0_391] : memref<8x32xf32, #tpu.memory_space<vmem>>, vector<1x32xf32>
    %c4_392 = arith.constant 4 : index
    %c0_393 = arith.constant 0 : index
    %627 = vector.load %arg30[%c4_392, %c0_393] : memref<8x32xf32, #tpu.memory_space<vmem>>, vector<1x32xf32>
    %c0_394 = arith.constant 0 : index
    %c0_395 = arith.constant 0 : index
    %c0_396 = arith.constant 0 : index
    %628 = vector.load %arg28[%c0_394, %c0_395, %c0_396] : memref<3x32x32xbf16, #tpu.memory_space<vmem>>, vector<1x32x32xbf16>
    %629 = vector.shape_cast %628 : vector<1x32x32xbf16> to vector<32x32xbf16>
    %c5_397 = arith.constant 5 : index
    %c0_398 = arith.constant 0 : index
    %630 = vector.load %arg30[%c5_397, %c0_398] : memref<8x32xf32, #tpu.memory_space<vmem>>, vector<1x32xf32>
    %c1_399 = arith.constant 1 : index
    %c0_400 = arith.constant 0 : index
    %c0_401 = arith.constant 0 : index
    %631 = vector.load %arg28[%c1_399, %c0_400, %c0_401] : memref<3x32x32xbf16, #tpu.memory_space<vmem>>, vector<1x32x32xbf16>
    %632 = vector.shape_cast %631 : vector<1x32x32xbf16> to vector<32x32xbf16>
    %c6_402 = arith.constant 6 : index
    %c0_403 = arith.constant 0 : index
    %633 = vector.load %arg30[%c6_402, %c0_403] : memref<8x32xf32, #tpu.memory_space<vmem>>, vector<1x32xf32>
    %cst_404 = arith.constant dense<0.000000e+00> : vector<24xf32>
    %634 = vector.multi_reduction <add>, %309, %cst_404 [1] : vector<24x32xf32> to vector<24xf32>
    %635 = vector.shape_cast %634 : vector<24xf32> to vector<24x1xf32>
    %cst_405 = arith.constant 3.200000e+01 : f32
    %636 = vector.broadcast %cst_405 : f32 to vector<24x1xf32>
    %637 = arith.divf %635, %636 : vector<24x1xf32>
    %638 = vector.broadcast %637 : vector<24x1xf32> to vector<24x32xf32>
    %639 = arith.subf %309, %638 : vector<24x32xf32>
    %640 = arith.mulf %639, %639 : vector<24x32xf32>
    %cst_406 = arith.constant dense<0.000000e+00> : vector<24xf32>
    %641 = vector.multi_reduction <add>, %640, %cst_406 [1] : vector<24x32xf32> to vector<24xf32>
    %642 = vector.shape_cast %641 : vector<24xf32> to vector<24x1xf32>
    %cst_407 = arith.constant 3.200000e+01 : f32
    %643 = vector.broadcast %cst_407 : f32 to vector<24x1xf32>
    %644 = arith.divf %642, %643 : vector<24x1xf32>
    %645 = vector.broadcast %637 : vector<24x1xf32> to vector<24x32xf32>
    %646 = arith.subf %309, %645 : vector<24x32xf32>
    %cst_408 = arith.constant 9.99999974E-6 : f32
    %647 = vector.broadcast %cst_408 : f32 to vector<24x1xf32>
    %648 = arith.addf %644, %647 : vector<24x1xf32>
    %649 = math.rsqrt %648 : vector<24x1xf32>
    %650 = vector.broadcast %649 : vector<24x1xf32> to vector<24x32xf32>
    %651 = arith.mulf %646, %650 : vector<24x32xf32>
    %652 = vector.broadcast %612 : vector<1x32xf32> to vector<24x32xf32>
    %653 = arith.mulf %651, %652 : vector<24x32xf32>
    %654 = vector.broadcast %613 : vector<1x32xf32> to vector<24x32xf32>
    %655 = arith.addf %653, %654 : vector<24x32xf32>
    %cst_409 = arith.constant dense<0.000000e+00> : vector<16xf32>
    %656 = vector.multi_reduction <add>, %610, %cst_409 [1] : vector<16x64xf32> to vector<16xf32>
    %657 = vector.shape_cast %656 : vector<16xf32> to vector<16x1xf32>
    %cst_410 = arith.constant 6.400000e+01 : f32
    %658 = vector.broadcast %cst_410 : f32 to vector<16x1xf32>
    %659 = arith.divf %657, %658 : vector<16x1xf32>
    %660 = vector.broadcast %659 : vector<16x1xf32> to vector<16x64xf32>
    %661 = arith.subf %610, %660 : vector<16x64xf32>
    %662 = arith.mulf %661, %661 : vector<16x64xf32>
    %cst_411 = arith.constant dense<0.000000e+00> : vector<16xf32>
    %663 = vector.multi_reduction <add>, %662, %cst_411 [1] : vector<16x64xf32> to vector<16xf32>
    %664 = vector.shape_cast %663 : vector<16xf32> to vector<16x1xf32>
    %cst_412 = arith.constant 6.400000e+01 : f32
    %665 = vector.broadcast %cst_412 : f32 to vector<16x1xf32>
    %666 = arith.divf %664, %665 : vector<16x1xf32>
    %667 = vector.broadcast %659 : vector<16x1xf32> to vector<16x64xf32>
    %668 = arith.subf %610, %667 : vector<16x64xf32>
    %cst_413 = arith.constant 9.99999974E-6 : f32
    %669 = vector.broadcast %cst_413 : f32 to vector<16x1xf32>
    %670 = arith.addf %666, %669 : vector<16x1xf32>
    %671 = math.rsqrt %670 : vector<16x1xf32>
    %672 = vector.broadcast %671 : vector<16x1xf32> to vector<16x64xf32>
    %673 = arith.mulf %668, %672 : vector<16x64xf32>
    %674 = vector.broadcast %614 : vector<1x64xf32> to vector<16x64xf32>
    %675 = arith.mulf %673, %674 : vector<16x64xf32>
    %676 = vector.broadcast %615 : vector<1x64xf32> to vector<16x64xf32>
    %677 = arith.addf %675, %676 : vector<16x64xf32>
    %678 = arith.truncf %655 : vector<24x32xf32> to vector<24x32xbf16>
    %cst_414 = arith.constant dense<0.000000e+00> : vector<24x64xf32>
    %679 = tpu.matmul %678, %616, %cst_414 {dimension_numbers = #tpu.dot_dimension_numbers<[1], [0], [0], [1], [0, 0, 1, 1], [], []>} : vector<24x32xbf16>, vector<32x64xbf16>, vector<24x64xf32> -> vector<24x64xf32>
    %680 = vector.broadcast %617 : vector<1x64xf32> to vector<24x64xf32>
    %681 = arith.addf %679, %680 : vector<24x64xf32>
    %cst_415 = arith.constant 1.250000e-01 : f32
    %682 = vector.broadcast %cst_415 : f32 to vector<24x64xf32>
    %683 = arith.mulf %681, %682 : vector<24x64xf32>
    %684 = arith.truncf %677 : vector<16x64xf32> to vector<16x64xbf16>
    %cst_416 = arith.constant dense<0.000000e+00> : vector<16x64xf32>
    %685 = tpu.matmul %684, %619, %cst_416 {dimension_numbers = #tpu.dot_dimension_numbers<[1], [0], [0], [1], [0, 0, 1, 1], [], []>} : vector<16x64xbf16>, vector<64x64xbf16>, vector<16x64xf32> -> vector<16x64xf32>
    %686 = vector.broadcast %620 : vector<1x64xf32> to vector<16x64xf32>
    %687 = arith.addf %685, %686 : vector<16x64xf32>
    %688 = arith.truncf %677 : vector<16x64xf32> to vector<16x64xbf16>
    %cst_417 = arith.constant dense<0.000000e+00> : vector<16x64xf32>
    %689 = tpu.matmul %688, %622, %cst_417 {dimension_numbers = #tpu.dot_dimension_numbers<[1], [0], [0], [1], [0, 0, 1, 1], [], []>} : vector<16x64xbf16>, vector<64x64xbf16>, vector<16x64xf32> -> vector<16x64xf32>
    %690 = vector.broadcast %623 : vector<1x64xf32> to vector<16x64xf32>
    %691 = arith.addf %689, %690 : vector<16x64xf32>
    %cst_418 = arith.constant dense<0.000000e+00> : vector<24x16xf32>
    %692 = tpu.matmul %683, %687, %cst_418 {dimension_numbers = #tpu.dot_dimension_numbers<[1], [1], [0], [0], [0, 0, 1, 0], [], []>} : vector<24x64xf32>, vector<16x64xf32>, vector<24x16xf32> -> vector<24x16xf32>
    %cst_419 = arith.constant 0.000000e+00 : f32
    %693 = vector.broadcast %cst_419 : f32 to vector<24x16xf32>
    %694 = arith.cmpf ogt, %611, %693 : vector<24x16xf32>
    %cst_420 = arith.constant -1.000000e+30 : f32
    %695 = vector.broadcast %cst_420 : f32 to vector<24x16xf32>
    %696 = arith.select %694, %692, %695 : vector<24x16xi1>, vector<24x16xf32>
    %cst_421 = arith.constant dense<0xFF800000> : vector<24xf32>
    %697 = vector.multi_reduction <maximumf>, %696, %cst_421 [1] : vector<24x16xf32> to vector<24xf32>
    %698 = vector.shape_cast %697 : vector<24xf32> to vector<24x1xf32>
    %699 = vector.broadcast %698 : vector<24x1xf32> to vector<24x16xf32>
    %700 = arith.subf %696, %699 : vector<24x16xf32>
    %701 = math.exp %700 : vector<24x16xf32>
    %702 = arith.mulf %701, %611 : vector<24x16xf32>
    %cst_422 = arith.constant dense<0.000000e+00> : vector<24xf32>
    %703 = vector.multi_reduction <add>, %702, %cst_422 [1] : vector<24x16xf32> to vector<24xf32>
    %704 = vector.shape_cast %703 : vector<24xf32> to vector<24x1xf32>
    %cst_423 = arith.constant 1.000000e-30 : f32
    %705 = vector.broadcast %cst_423 : f32 to vector<24x1xf32>
    %706 = arith.maximumf %704, %705 : vector<24x1xf32>
    %707 = vector.broadcast %706 : vector<24x1xf32> to vector<24x16xf32>
    %708 = arith.divf %702, %707 : vector<24x16xf32>
    %cst_424 = arith.constant dense<0.000000e+00> : vector<24x64xf32>
    %709 = tpu.matmul %708, %691, %cst_424 {dimension_numbers = #tpu.dot_dimension_numbers<[1], [0], [0], [1], [0, 0, 1, 1], [], []>} : vector<24x16xf32>, vector<16x64xf32>, vector<24x64xf32> -> vector<24x64xf32>
    %710 = arith.truncf %709 : vector<24x64xf32> to vector<24x64xbf16>
    %cst_425 = arith.constant dense<0.000000e+00> : vector<24x32xf32>
    %711 = tpu.matmul %710, %624, %cst_425 {dimension_numbers = #tpu.dot_dimension_numbers<[1], [0], [0], [1], [0, 0, 1, 1], [], []>} : vector<24x64xbf16>, vector<64x32xbf16>, vector<24x32xf32> -> vector<24x32xf32>
    %712 = vector.broadcast %625 : vector<1x32xf32> to vector<24x32xf32>
    %713 = arith.addf %711, %712 : vector<24x32xf32>
    %cst_426 = arith.constant dense<0.000000e+00> : vector<24xf32>
    %714 = vector.multi_reduction <add>, %713, %cst_426 [1] : vector<24x32xf32> to vector<24xf32>
    %715 = vector.shape_cast %714 : vector<24xf32> to vector<24x1xf32>
    %cst_427 = arith.constant 3.200000e+01 : f32
    %716 = vector.broadcast %cst_427 : f32 to vector<24x1xf32>
    %717 = arith.divf %715, %716 : vector<24x1xf32>
    %718 = vector.broadcast %717 : vector<24x1xf32> to vector<24x32xf32>
    %719 = arith.subf %713, %718 : vector<24x32xf32>
    %720 = arith.mulf %719, %719 : vector<24x32xf32>
    %cst_428 = arith.constant dense<0.000000e+00> : vector<24xf32>
    %721 = vector.multi_reduction <add>, %720, %cst_428 [1] : vector<24x32xf32> to vector<24xf32>
    %722 = vector.shape_cast %721 : vector<24xf32> to vector<24x1xf32>
    %cst_429 = arith.constant 3.200000e+01 : f32
    %723 = vector.broadcast %cst_429 : f32 to vector<24x1xf32>
    %724 = arith.divf %722, %723 : vector<24x1xf32>
    %725 = vector.broadcast %717 : vector<24x1xf32> to vector<24x32xf32>
    %726 = arith.subf %713, %725 : vector<24x32xf32>
    %cst_430 = arith.constant 9.99999974E-6 : f32
    %727 = vector.broadcast %cst_430 : f32 to vector<24x1xf32>
    %728 = arith.addf %724, %727 : vector<24x1xf32>
    %729 = math.rsqrt %728 : vector<24x1xf32>
    %730 = vector.broadcast %729 : vector<24x1xf32> to vector<24x32xf32>
    %731 = arith.mulf %726, %730 : vector<24x32xf32>
    %732 = vector.broadcast %626 : vector<1x32xf32> to vector<24x32xf32>
    %733 = arith.mulf %731, %732 : vector<24x32xf32>
    %734 = vector.broadcast %627 : vector<1x32xf32> to vector<24x32xf32>
    %735 = arith.addf %733, %734 : vector<24x32xf32>
    %736 = arith.truncf %735 : vector<24x32xf32> to vector<24x32xbf16>
    %cst_431 = arith.constant dense<0.000000e+00> : vector<24x32xf32>
    %737 = tpu.matmul %736, %629, %cst_431 {dimension_numbers = #tpu.dot_dimension_numbers<[1], [0], [0], [1], [0, 0, 1, 1], [], []>} : vector<24x32xbf16>, vector<32x32xbf16>, vector<24x32xf32> -> vector<24x32xf32>
    %738 = vector.broadcast %630 : vector<1x32xf32> to vector<24x32xf32>
    %739 = arith.addf %737, %738 : vector<24x32xf32>
    %740 = arith.mulf %739, %739 : vector<24x32xf32>
    %741 = arith.mulf %739, %740 : vector<24x32xf32>
    %cst_432 = arith.constant 4.471500e-02 : f32
    %742 = vector.broadcast %cst_432 : f32 to vector<24x32xf32>
    %743 = arith.mulf %742, %741 : vector<24x32xf32>
    %744 = arith.addf %739, %743 : vector<24x32xf32>
    %cst_433 = arith.constant 0.797884583 : f32
    %745 = vector.broadcast %cst_433 : f32 to vector<24x32xf32>
    %746 = arith.mulf %745, %744 : vector<24x32xf32>
    %747 = math.tanh %746 : vector<24x32xf32>
    %cst_434 = arith.constant 1.000000e+00 : f32
    %748 = vector.broadcast %cst_434 : f32 to vector<24x32xf32>
    %749 = arith.addf %748, %747 : vector<24x32xf32>
    %cst_435 = arith.constant 5.000000e-01 : f32
    %750 = vector.broadcast %cst_435 : f32 to vector<24x32xf32>
    %751 = arith.mulf %750, %749 : vector<24x32xf32>
    %752 = arith.mulf %739, %751 : vector<24x32xf32>
    %753 = arith.truncf %752 : vector<24x32xf32> to vector<24x32xbf16>
    %cst_436 = arith.constant dense<0.000000e+00> : vector<24x32xf32>
    %754 = tpu.matmul %753, %632, %cst_436 {dimension_numbers = #tpu.dot_dimension_numbers<[1], [0], [0], [1], [0, 0, 1, 1], [], []>} : vector<24x32xbf16>, vector<32x32xbf16>, vector<24x32xf32> -> vector<24x32xf32>
    %755 = vector.broadcast %633 : vector<1x32xf32> to vector<24x32xf32>
    %756 = arith.addf %754, %755 : vector<24x32xf32>
    %757 = arith.addf %713, %756 : vector<24x32xf32>
    %c2_437 = arith.constant 2 : index
    %c0_438 = arith.constant 0 : index
    %c0_439 = arith.constant 0 : index
    %758 = vector.load %arg28[%c2_437, %c0_438, %c0_439] : memref<3x32x32xbf16, #tpu.memory_space<vmem>>, vector<1x32x32xbf16>
    %759 = vector.shape_cast %758 : vector<1x32x32xbf16> to vector<32x32xbf16>
    %760 = arith.truncf %757 : vector<24x32xf32> to vector<24x32xbf16>
    %cst_440 = arith.constant dense<0.000000e+00> : vector<24x32xf32>
    %761 = tpu.matmul %760, %759, %cst_440 {dimension_numbers = #tpu.dot_dimension_numbers<[1], [0], [0], [1], [0, 0, 1, 1], [], []>} : vector<24x32xbf16>, vector<32x32xbf16>, vector<24x32xf32> -> vector<24x32xf32>
    %c7_441 = arith.constant 7 : index
    %c0_442 = arith.constant 0 : index
    %762 = vector.load %arg30[%c7_441, %c0_442] : memref<8x32xf32, #tpu.memory_space<vmem>>, vector<1x32xf32>
    %763 = vector.broadcast %762 : vector<1x32xf32> to vector<24x32xf32>
    %764 = arith.addf %761, %763 : vector<24x32xf32>
    %c0_443 = arith.constant 0 : index
    %c0_444 = arith.constant 0 : index
    %765 = vector.load %arg5[%c0_443, %c0_444] : memref<22x24xf32, #tpu.memory_space<vmem>>, vector<22x24xf32>
    %cst_445 = arith.constant dense<0.000000e+00> : vector<22x32xf32>
    %766 = tpu.matmul %765, %764, %cst_445 {dimension_numbers = #tpu.dot_dimension_numbers<[1], [0], [0], [1], [0, 0, 1, 1], [], []>} : vector<22x24xf32>, vector<24x32xf32>, vector<22x32xf32> -> vector<22x32xf32>
    %767 = arith.addf %766, %307 : vector<22x32xf32>
    %cst_446 = arith.constant dense<0.000000e+00> : vector<96x32xf32>
    %768 = tpu.matmul %49, %767, %cst_446 {dimension_numbers = #tpu.dot_dimension_numbers<[1], [0], [0], [1], [0, 0, 1, 1], [], []>} : vector<96x22xf32>, vector<22x32xf32>, vector<96x32xf32> -> vector<96x32xf32>
    %769 = vector.extract_strided_slice %768 {offsets = [0, 0], sizes = [48, 32], strides = [1, 1]} : vector<96x32xf32> to vector<48x32xf32>
    %770 = vector.extract_strided_slice %768 {offsets = [48, 0], sizes = [48, 32], strides = [1, 1]} : vector<96x32xf32> to vector<48x32xf32>
    %c0_447 = arith.constant 0 : index
    %c0_448 = arith.constant 0 : index
    %c0_449 = arith.constant 0 : index
    %c0_450 = arith.constant 0 : index
    %771 = vector.load %arg16[%c0_447, %c0_448, %c0_449, %c0_450] : memref<2x8x32x32xbf16, #tpu.memory_space<vmem>>, vector<1x1x32x32xbf16>
    %772 = vector.shape_cast %771 : vector<1x1x32x32xbf16> to vector<32x32xbf16>
    %773 = arith.truncf %769 : vector<48x32xf32> to vector<48x32xbf16>
    %cst_451 = arith.constant dense<0.000000e+00> : vector<48x32xf32>
    %774 = tpu.matmul %773, %772, %cst_451 {dimension_numbers = #tpu.dot_dimension_numbers<[1], [0], [0], [1], [0, 0, 1, 1], [], []>} : vector<48x32xbf16>, vector<32x32xbf16>, vector<48x32xf32> -> vector<48x32xf32>
    %c0_452 = arith.constant 0 : index
    %c1_453 = arith.constant 1 : index
    %c0_454 = arith.constant 0 : index
    %c0_455 = arith.constant 0 : index
    %775 = vector.load %arg16[%c0_452, %c1_453, %c0_454, %c0_455] : memref<2x8x32x32xbf16, #tpu.memory_space<vmem>>, vector<1x1x32x32xbf16>
    %776 = vector.shape_cast %775 : vector<1x1x32x32xbf16> to vector<32x32xbf16>
    %777 = arith.truncf %770 : vector<48x32xf32> to vector<48x32xbf16>
    %cst_456 = arith.constant dense<0.000000e+00> : vector<48x32xf32>
    %778 = tpu.matmul %777, %776, %cst_456 {dimension_numbers = #tpu.dot_dimension_numbers<[1], [0], [0], [1], [0, 0, 1, 1], [], []>} : vector<48x32xbf16>, vector<32x32xbf16>, vector<48x32xf32> -> vector<48x32xf32>
    %779 = arith.addf %774, %778 : vector<48x32xf32>
    %c0_457 = arith.constant 0 : index
    %c0_458 = arith.constant 0 : index
    %c0_459 = arith.constant 0 : index
    %780 = vector.load %arg17[%c0_457, %c0_458, %c0_459] : memref<2x2x32xbf16, #tpu.memory_space<vmem>>, vector<1x2x32xbf16>
    %781 = vector.shape_cast %780 : vector<1x2x32xbf16> to vector<2x32xbf16>
    %782 = arith.truncf %51 : vector<48x2xf32> to vector<48x2xbf16>
    %cst_460 = arith.constant dense<0.000000e+00> : vector<48x32xf32>
    %783 = tpu.matmul %782, %781, %cst_460 {dimension_numbers = #tpu.dot_dimension_numbers<[1], [0], [0], [1], [0, 0, 1, 1], [], []>} : vector<48x2xbf16>, vector<2x32xbf16>, vector<48x32xf32> -> vector<48x32xf32>
    %784 = arith.addf %779, %783 : vector<48x32xf32>
    %c0_461 = arith.constant 0 : index
    %c0_462 = arith.constant 0 : index
    %c0_463 = arith.constant 0 : index
    %785 = vector.load %arg18[%c0_461, %c0_462, %c0_463] : memref<2x10x32xf32, #tpu.memory_space<vmem>>, vector<1x1x32xf32>
    %786 = vector.shape_cast %785 : vector<1x1x32xf32> to vector<1x32xf32>
    %787 = vector.broadcast %786 : vector<1x32xf32> to vector<48x32xf32>
    %788 = arith.addf %784, %787 : vector<48x32xf32>
    %cst_464 = arith.constant 0.000000e+00 : f32
    %789 = vector.broadcast %cst_464 : f32 to vector<48x32xf32>
    %790 = arith.maximumf %788, %789 : vector<48x32xf32>
    %c0_465 = arith.constant 0 : index
    %c2_466 = arith.constant 2 : index
    %c0_467 = arith.constant 0 : index
    %c0_468 = arith.constant 0 : index
    %791 = vector.load %arg16[%c0_465, %c2_466, %c0_467, %c0_468] : memref<2x8x32x32xbf16, #tpu.memory_space<vmem>>, vector<1x1x32x32xbf16>
    %792 = vector.shape_cast %791 : vector<1x1x32x32xbf16> to vector<32x32xbf16>
    %793 = arith.truncf %790 : vector<48x32xf32> to vector<48x32xbf16>
    %cst_469 = arith.constant dense<0.000000e+00> : vector<48x32xf32>
    %794 = tpu.matmul %793, %792, %cst_469 {dimension_numbers = #tpu.dot_dimension_numbers<[1], [0], [0], [1], [0, 0, 1, 1], [], []>} : vector<48x32xbf16>, vector<32x32xbf16>, vector<48x32xf32> -> vector<48x32xf32>
    %c0_470 = arith.constant 0 : index
    %c1_471 = arith.constant 1 : index
    %c0_472 = arith.constant 0 : index
    %795 = vector.load %arg18[%c0_470, %c1_471, %c0_472] : memref<2x10x32xf32, #tpu.memory_space<vmem>>, vector<1x1x32xf32>
    %796 = vector.shape_cast %795 : vector<1x1x32xf32> to vector<1x32xf32>
    %797 = vector.broadcast %796 : vector<1x32xf32> to vector<48x32xf32>
    %798 = arith.addf %794, %797 : vector<48x32xf32>
    %cst_473 = arith.constant 0.000000e+00 : f32
    %799 = vector.broadcast %cst_473 : f32 to vector<48x32xf32>
    %800 = arith.maximumf %798, %799 : vector<48x32xf32>
    %c0_474 = arith.constant 0 : index
    %c3_475 = arith.constant 3 : index
    %c0_476 = arith.constant 0 : index
    %c0_477 = arith.constant 0 : index
    %801 = vector.load %arg16[%c0_474, %c3_475, %c0_476, %c0_477] : memref<2x8x32x32xbf16, #tpu.memory_space<vmem>>, vector<1x1x32x32xbf16>
    %802 = vector.shape_cast %801 : vector<1x1x32x32xbf16> to vector<32x32xbf16>
    %803 = arith.truncf %800 : vector<48x32xf32> to vector<48x32xbf16>
    %cst_478 = arith.constant dense<0.000000e+00> : vector<48x32xf32>
    %804 = tpu.matmul %803, %802, %cst_478 {dimension_numbers = #tpu.dot_dimension_numbers<[1], [0], [0], [1], [0, 0, 1, 1], [], []>} : vector<48x32xbf16>, vector<32x32xbf16>, vector<48x32xf32> -> vector<48x32xf32>
    %c0_479 = arith.constant 0 : index
    %c2_480 = arith.constant 2 : index
    %c0_481 = arith.constant 0 : index
    %805 = vector.load %arg18[%c0_479, %c2_480, %c0_481] : memref<2x10x32xf32, #tpu.memory_space<vmem>>, vector<1x1x32xf32>
    %806 = vector.shape_cast %805 : vector<1x1x32xf32> to vector<1x32xf32>
    %807 = vector.broadcast %806 : vector<1x32xf32> to vector<48x32xf32>
    %808 = arith.addf %804, %807 : vector<48x32xf32>
    %c0_482 = arith.constant 0 : index
    %c3_483 = arith.constant 3 : index
    %c0_484 = arith.constant 0 : index
    %809 = vector.load %arg18[%c0_482, %c3_483, %c0_484] : memref<2x10x32xf32, #tpu.memory_space<vmem>>, vector<1x1x32xf32>
    %810 = vector.shape_cast %809 : vector<1x1x32xf32> to vector<1x32xf32>
    %c0_485 = arith.constant 0 : index
    %c4_486 = arith.constant 4 : index
    %c0_487 = arith.constant 0 : index
    %811 = vector.load %arg18[%c0_485, %c4_486, %c0_487] : memref<2x10x32xf32, #tpu.memory_space<vmem>>, vector<1x1x32xf32>
    %812 = vector.shape_cast %811 : vector<1x1x32xf32> to vector<1x32xf32>
    %cst_488 = arith.constant dense<0.000000e+00> : vector<48xf32>
    %813 = vector.multi_reduction <add>, %808, %cst_488 [1] : vector<48x32xf32> to vector<48xf32>
    %814 = vector.shape_cast %813 : vector<48xf32> to vector<48x1xf32>
    %cst_489 = arith.constant 3.200000e+01 : f32
    %815 = vector.broadcast %cst_489 : f32 to vector<48x1xf32>
    %816 = arith.divf %814, %815 : vector<48x1xf32>
    %817 = vector.broadcast %816 : vector<48x1xf32> to vector<48x32xf32>
    %818 = arith.subf %808, %817 : vector<48x32xf32>
    %819 = arith.mulf %818, %818 : vector<48x32xf32>
    %cst_490 = arith.constant dense<0.000000e+00> : vector<48xf32>
    %820 = vector.multi_reduction <add>, %819, %cst_490 [1] : vector<48x32xf32> to vector<48xf32>
    %821 = vector.shape_cast %820 : vector<48xf32> to vector<48x1xf32>
    %cst_491 = arith.constant 3.200000e+01 : f32
    %822 = vector.broadcast %cst_491 : f32 to vector<48x1xf32>
    %823 = arith.divf %821, %822 : vector<48x1xf32>
    %824 = vector.broadcast %816 : vector<48x1xf32> to vector<48x32xf32>
    %825 = arith.subf %808, %824 : vector<48x32xf32>
    %cst_492 = arith.constant 9.99999974E-6 : f32
    %826 = vector.broadcast %cst_492 : f32 to vector<48x1xf32>
    %827 = arith.addf %823, %826 : vector<48x1xf32>
    %828 = math.rsqrt %827 : vector<48x1xf32>
    %829 = vector.broadcast %828 : vector<48x1xf32> to vector<48x32xf32>
    %830 = arith.mulf %825, %829 : vector<48x32xf32>
    %831 = vector.broadcast %810 : vector<1x32xf32> to vector<48x32xf32>
    %832 = arith.mulf %830, %831 : vector<48x32xf32>
    %833 = vector.broadcast %812 : vector<1x32xf32> to vector<48x32xf32>
    %834 = arith.addf %832, %833 : vector<48x32xf32>
    %cst_493 = arith.constant dense<0.000000e+00> : vector<22x32xf32>
    %835 = tpu.matmul %50, %834, %cst_493 {dimension_numbers = #tpu.dot_dimension_numbers<[1], [0], [0], [1], [0, 0, 1, 1], [], []>} : vector<22x48xf32>, vector<48x32xf32>, vector<22x32xf32> -> vector<22x32xf32>
    %c0_494 = arith.constant 0 : index
    %c4_495 = arith.constant 4 : index
    %c0_496 = arith.constant 0 : index
    %c0_497 = arith.constant 0 : index
    %836 = vector.load %arg16[%c0_494, %c4_495, %c0_496, %c0_497] : memref<2x8x32x32xbf16, #tpu.memory_space<vmem>>, vector<1x1x32x32xbf16>
    %837 = vector.shape_cast %836 : vector<1x1x32x32xbf16> to vector<32x32xbf16>
    %838 = arith.truncf %767 : vector<22x32xf32> to vector<22x32xbf16>
    %cst_498 = arith.constant dense<0.000000e+00> : vector<22x32xf32>
    %839 = tpu.matmul %838, %837, %cst_498 {dimension_numbers = #tpu.dot_dimension_numbers<[1], [0], [0], [1], [0, 0, 1, 1], [], []>} : vector<22x32xbf16>, vector<32x32xbf16>, vector<22x32xf32> -> vector<22x32xf32>
    %c0_499 = arith.constant 0 : index
    %c5_500 = arith.constant 5 : index
    %c0_501 = arith.constant 0 : index
    %c0_502 = arith.constant 0 : index
    %840 = vector.load %arg16[%c0_499, %c5_500, %c0_501, %c0_502] : memref<2x8x32x32xbf16, #tpu.memory_space<vmem>>, vector<1x1x32x32xbf16>
    %841 = vector.shape_cast %840 : vector<1x1x32x32xbf16> to vector<32x32xbf16>
    %842 = arith.truncf %835 : vector<22x32xf32> to vector<22x32xbf16>
    %cst_503 = arith.constant dense<0.000000e+00> : vector<22x32xf32>
    %843 = tpu.matmul %842, %841, %cst_503 {dimension_numbers = #tpu.dot_dimension_numbers<[1], [0], [0], [1], [0, 0, 1, 1], [], []>} : vector<22x32xbf16>, vector<32x32xbf16>, vector<22x32xf32> -> vector<22x32xf32>
    %844 = arith.addf %839, %843 : vector<22x32xf32>
    %c0_504 = arith.constant 0 : index
    %c5_505 = arith.constant 5 : index
    %c0_506 = arith.constant 0 : index
    %845 = vector.load %arg18[%c0_504, %c5_505, %c0_506] : memref<2x10x32xf32, #tpu.memory_space<vmem>>, vector<1x1x32xf32>
    %846 = vector.shape_cast %845 : vector<1x1x32xf32> to vector<1x32xf32>
    %847 = vector.broadcast %846 : vector<1x32xf32> to vector<22x32xf32>
    %848 = arith.addf %844, %847 : vector<22x32xf32>
    %cst_507 = arith.constant 0.000000e+00 : f32
    %849 = vector.broadcast %cst_507 : f32 to vector<22x32xf32>
    %850 = arith.maximumf %848, %849 : vector<22x32xf32>
    %c0_508 = arith.constant 0 : index
    %c6_509 = arith.constant 6 : index
    %c0_510 = arith.constant 0 : index
    %c0_511 = arith.constant 0 : index
    %851 = vector.load %arg16[%c0_508, %c6_509, %c0_510, %c0_511] : memref<2x8x32x32xbf16, #tpu.memory_space<vmem>>, vector<1x1x32x32xbf16>
    %852 = vector.shape_cast %851 : vector<1x1x32x32xbf16> to vector<32x32xbf16>
    %853 = arith.truncf %850 : vector<22x32xf32> to vector<22x32xbf16>
    %cst_512 = arith.constant dense<0.000000e+00> : vector<22x32xf32>
    %854 = tpu.matmul %853, %852, %cst_512 {dimension_numbers = #tpu.dot_dimension_numbers<[1], [0], [0], [1], [0, 0, 1, 1], [], []>} : vector<22x32xbf16>, vector<32x32xbf16>, vector<22x32xf32> -> vector<22x32xf32>
    %c0_513 = arith.constant 0 : index
    %c6_514 = arith.constant 6 : index
    %c0_515 = arith.constant 0 : index
    %855 = vector.load %arg18[%c0_513, %c6_514, %c0_515] : memref<2x10x32xf32, #tpu.memory_space<vmem>>, vector<1x1x32xf32>
    %856 = vector.shape_cast %855 : vector<1x1x32xf32> to vector<1x32xf32>
    %857 = vector.broadcast %856 : vector<1x32xf32> to vector<22x32xf32>
    %858 = arith.addf %854, %857 : vector<22x32xf32>
    %cst_516 = arith.constant 0.000000e+00 : f32
    %859 = vector.broadcast %cst_516 : f32 to vector<22x32xf32>
    %860 = arith.maximumf %858, %859 : vector<22x32xf32>
    %c0_517 = arith.constant 0 : index
    %c7_518 = arith.constant 7 : index
    %c0_519 = arith.constant 0 : index
    %c0_520 = arith.constant 0 : index
    %861 = vector.load %arg16[%c0_517, %c7_518, %c0_519, %c0_520] : memref<2x8x32x32xbf16, #tpu.memory_space<vmem>>, vector<1x1x32x32xbf16>
    %862 = vector.shape_cast %861 : vector<1x1x32x32xbf16> to vector<32x32xbf16>
    %863 = arith.truncf %860 : vector<22x32xf32> to vector<22x32xbf16>
    %cst_521 = arith.constant dense<0.000000e+00> : vector<22x32xf32>
    %864 = tpu.matmul %863, %862, %cst_521 {dimension_numbers = #tpu.dot_dimension_numbers<[1], [0], [0], [1], [0, 0, 1, 1], [], []>} : vector<22x32xbf16>, vector<32x32xbf16>, vector<22x32xf32> -> vector<22x32xf32>
    %c0_522 = arith.constant 0 : index
    %c7_523 = arith.constant 7 : index
    %c0_524 = arith.constant 0 : index
    %865 = vector.load %arg18[%c0_522, %c7_523, %c0_524] : memref<2x10x32xf32, #tpu.memory_space<vmem>>, vector<1x1x32xf32>
    %866 = vector.shape_cast %865 : vector<1x1x32xf32> to vector<1x32xf32>
    %867 = vector.broadcast %866 : vector<1x32xf32> to vector<22x32xf32>
    %868 = arith.addf %864, %867 : vector<22x32xf32>
    %c0_525 = arith.constant 0 : index
    %c8_526 = arith.constant 8 : index
    %c0_527 = arith.constant 0 : index
    %869 = vector.load %arg18[%c0_525, %c8_526, %c0_527] : memref<2x10x32xf32, #tpu.memory_space<vmem>>, vector<1x1x32xf32>
    %870 = vector.shape_cast %869 : vector<1x1x32xf32> to vector<1x32xf32>
    %c0_528 = arith.constant 0 : index
    %c9_529 = arith.constant 9 : index
    %c0_530 = arith.constant 0 : index
    %871 = vector.load %arg18[%c0_528, %c9_529, %c0_530] : memref<2x10x32xf32, #tpu.memory_space<vmem>>, vector<1x1x32xf32>
    %872 = vector.shape_cast %871 : vector<1x1x32xf32> to vector<1x32xf32>
    %cst_531 = arith.constant dense<0.000000e+00> : vector<22xf32>
    %873 = vector.multi_reduction <add>, %868, %cst_531 [1] : vector<22x32xf32> to vector<22xf32>
    %874 = vector.shape_cast %873 : vector<22xf32> to vector<22x1xf32>
    %cst_532 = arith.constant 3.200000e+01 : f32
    %875 = vector.broadcast %cst_532 : f32 to vector<22x1xf32>
    %876 = arith.divf %874, %875 : vector<22x1xf32>
    %877 = vector.broadcast %876 : vector<22x1xf32> to vector<22x32xf32>
    %878 = arith.subf %868, %877 : vector<22x32xf32>
    %879 = arith.mulf %878, %878 : vector<22x32xf32>
    %cst_533 = arith.constant dense<0.000000e+00> : vector<22xf32>
    %880 = vector.multi_reduction <add>, %879, %cst_533 [1] : vector<22x32xf32> to vector<22xf32>
    %881 = vector.shape_cast %880 : vector<22xf32> to vector<22x1xf32>
    %cst_534 = arith.constant 3.200000e+01 : f32
    %882 = vector.broadcast %cst_534 : f32 to vector<22x1xf32>
    %883 = arith.divf %881, %882 : vector<22x1xf32>
    %884 = vector.broadcast %876 : vector<22x1xf32> to vector<22x32xf32>
    %885 = arith.subf %868, %884 : vector<22x32xf32>
    %cst_535 = arith.constant 9.99999974E-6 : f32
    %886 = vector.broadcast %cst_535 : f32 to vector<22x1xf32>
    %887 = arith.addf %883, %886 : vector<22x1xf32>
    %888 = math.rsqrt %887 : vector<22x1xf32>
    %889 = vector.broadcast %888 : vector<22x1xf32> to vector<22x32xf32>
    %890 = arith.mulf %885, %889 : vector<22x32xf32>
    %891 = vector.broadcast %870 : vector<1x32xf32> to vector<22x32xf32>
    %892 = arith.mulf %890, %891 : vector<22x32xf32>
    %893 = vector.broadcast %872 : vector<1x32xf32> to vector<22x32xf32>
    %894 = arith.addf %892, %893 : vector<22x32xf32>
    %895 = arith.addf %767, %894 : vector<22x32xf32>
    %cst_536 = arith.constant dense<0.000000e+00> : vector<96x32xf32>
    %896 = tpu.matmul %49, %895, %cst_536 {dimension_numbers = #tpu.dot_dimension_numbers<[1], [0], [0], [1], [0, 0, 1, 1], [], []>} : vector<96x22xf32>, vector<22x32xf32>, vector<96x32xf32> -> vector<96x32xf32>
    %897 = vector.extract_strided_slice %896 {offsets = [0, 0], sizes = [48, 32], strides = [1, 1]} : vector<96x32xf32> to vector<48x32xf32>
    %898 = vector.extract_strided_slice %896 {offsets = [48, 0], sizes = [48, 32], strides = [1, 1]} : vector<96x32xf32> to vector<48x32xf32>
    %c1_537 = arith.constant 1 : index
    %c0_538 = arith.constant 0 : index
    %c0_539 = arith.constant 0 : index
    %c0_540 = arith.constant 0 : index
    %899 = vector.load %arg16[%c1_537, %c0_538, %c0_539, %c0_540] : memref<2x8x32x32xbf16, #tpu.memory_space<vmem>>, vector<1x1x32x32xbf16>
    %900 = vector.shape_cast %899 : vector<1x1x32x32xbf16> to vector<32x32xbf16>
    %901 = arith.truncf %897 : vector<48x32xf32> to vector<48x32xbf16>
    %cst_541 = arith.constant dense<0.000000e+00> : vector<48x32xf32>
    %902 = tpu.matmul %901, %900, %cst_541 {dimension_numbers = #tpu.dot_dimension_numbers<[1], [0], [0], [1], [0, 0, 1, 1], [], []>} : vector<48x32xbf16>, vector<32x32xbf16>, vector<48x32xf32> -> vector<48x32xf32>
    %c1_542 = arith.constant 1 : index
    %c1_543 = arith.constant 1 : index
    %c0_544 = arith.constant 0 : index
    %c0_545 = arith.constant 0 : index
    %903 = vector.load %arg16[%c1_542, %c1_543, %c0_544, %c0_545] : memref<2x8x32x32xbf16, #tpu.memory_space<vmem>>, vector<1x1x32x32xbf16>
    %904 = vector.shape_cast %903 : vector<1x1x32x32xbf16> to vector<32x32xbf16>
    %905 = arith.truncf %898 : vector<48x32xf32> to vector<48x32xbf16>
    %cst_546 = arith.constant dense<0.000000e+00> : vector<48x32xf32>
    %906 = tpu.matmul %905, %904, %cst_546 {dimension_numbers = #tpu.dot_dimension_numbers<[1], [0], [0], [1], [0, 0, 1, 1], [], []>} : vector<48x32xbf16>, vector<32x32xbf16>, vector<48x32xf32> -> vector<48x32xf32>
    %907 = arith.addf %902, %906 : vector<48x32xf32>
    %c1_547 = arith.constant 1 : index
    %c0_548 = arith.constant 0 : index
    %c0_549 = arith.constant 0 : index
    %908 = vector.load %arg17[%c1_547, %c0_548, %c0_549] : memref<2x2x32xbf16, #tpu.memory_space<vmem>>, vector<1x2x32xbf16>
    %909 = vector.shape_cast %908 : vector<1x2x32xbf16> to vector<2x32xbf16>
    %910 = arith.truncf %51 : vector<48x2xf32> to vector<48x2xbf16>
    %cst_550 = arith.constant dense<0.000000e+00> : vector<48x32xf32>
    %911 = tpu.matmul %910, %909, %cst_550 {dimension_numbers = #tpu.dot_dimension_numbers<[1], [0], [0], [1], [0, 0, 1, 1], [], []>} : vector<48x2xbf16>, vector<2x32xbf16>, vector<48x32xf32> -> vector<48x32xf32>
    %912 = arith.addf %907, %911 : vector<48x32xf32>
    %c1_551 = arith.constant 1 : index
    %c0_552 = arith.constant 0 : index
    %c0_553 = arith.constant 0 : index
    %913 = vector.load %arg18[%c1_551, %c0_552, %c0_553] : memref<2x10x32xf32, #tpu.memory_space<vmem>>, vector<1x1x32xf32>
    %914 = vector.shape_cast %913 : vector<1x1x32xf32> to vector<1x32xf32>
    %915 = vector.broadcast %914 : vector<1x32xf32> to vector<48x32xf32>
    %916 = arith.addf %912, %915 : vector<48x32xf32>
    %cst_554 = arith.constant 0.000000e+00 : f32
    %917 = vector.broadcast %cst_554 : f32 to vector<48x32xf32>
    %918 = arith.maximumf %916, %917 : vector<48x32xf32>
    %c1_555 = arith.constant 1 : index
    %c2_556 = arith.constant 2 : index
    %c0_557 = arith.constant 0 : index
    %c0_558 = arith.constant 0 : index
    %919 = vector.load %arg16[%c1_555, %c2_556, %c0_557, %c0_558] : memref<2x8x32x32xbf16, #tpu.memory_space<vmem>>, vector<1x1x32x32xbf16>
    %920 = vector.shape_cast %919 : vector<1x1x32x32xbf16> to vector<32x32xbf16>
    %921 = arith.truncf %918 : vector<48x32xf32> to vector<48x32xbf16>
    %cst_559 = arith.constant dense<0.000000e+00> : vector<48x32xf32>
    %922 = tpu.matmul %921, %920, %cst_559 {dimension_numbers = #tpu.dot_dimension_numbers<[1], [0], [0], [1], [0, 0, 1, 1], [], []>} : vector<48x32xbf16>, vector<32x32xbf16>, vector<48x32xf32> -> vector<48x32xf32>
    %c1_560 = arith.constant 1 : index
    %c1_561 = arith.constant 1 : index
    %c0_562 = arith.constant 0 : index
    %923 = vector.load %arg18[%c1_560, %c1_561, %c0_562] : memref<2x10x32xf32, #tpu.memory_space<vmem>>, vector<1x1x32xf32>
    %924 = vector.shape_cast %923 : vector<1x1x32xf32> to vector<1x32xf32>
    %925 = vector.broadcast %924 : vector<1x32xf32> to vector<48x32xf32>
    %926 = arith.addf %922, %925 : vector<48x32xf32>
    %cst_563 = arith.constant 0.000000e+00 : f32
    %927 = vector.broadcast %cst_563 : f32 to vector<48x32xf32>
    %928 = arith.maximumf %926, %927 : vector<48x32xf32>
    %c1_564 = arith.constant 1 : index
    %c3_565 = arith.constant 3 : index
    %c0_566 = arith.constant 0 : index
    %c0_567 = arith.constant 0 : index
    %929 = vector.load %arg16[%c1_564, %c3_565, %c0_566, %c0_567] : memref<2x8x32x32xbf16, #tpu.memory_space<vmem>>, vector<1x1x32x32xbf16>
    %930 = vector.shape_cast %929 : vector<1x1x32x32xbf16> to vector<32x32xbf16>
    %931 = arith.truncf %928 : vector<48x32xf32> to vector<48x32xbf16>
    %cst_568 = arith.constant dense<0.000000e+00> : vector<48x32xf32>
    %932 = tpu.matmul %931, %930, %cst_568 {dimension_numbers = #tpu.dot_dimension_numbers<[1], [0], [0], [1], [0, 0, 1, 1], [], []>} : vector<48x32xbf16>, vector<32x32xbf16>, vector<48x32xf32> -> vector<48x32xf32>
    %c1_569 = arith.constant 1 : index
    %c2_570 = arith.constant 2 : index
    %c0_571 = arith.constant 0 : index
    %933 = vector.load %arg18[%c1_569, %c2_570, %c0_571] : memref<2x10x32xf32, #tpu.memory_space<vmem>>, vector<1x1x32xf32>
    %934 = vector.shape_cast %933 : vector<1x1x32xf32> to vector<1x32xf32>
    %935 = vector.broadcast %934 : vector<1x32xf32> to vector<48x32xf32>
    %936 = arith.addf %932, %935 : vector<48x32xf32>
    %c1_572 = arith.constant 1 : index
    %c3_573 = arith.constant 3 : index
    %c0_574 = arith.constant 0 : index
    %937 = vector.load %arg18[%c1_572, %c3_573, %c0_574] : memref<2x10x32xf32, #tpu.memory_space<vmem>>, vector<1x1x32xf32>
    %938 = vector.shape_cast %937 : vector<1x1x32xf32> to vector<1x32xf32>
    %c1_575 = arith.constant 1 : index
    %c4_576 = arith.constant 4 : index
    %c0_577 = arith.constant 0 : index
    %939 = vector.load %arg18[%c1_575, %c4_576, %c0_577] : memref<2x10x32xf32, #tpu.memory_space<vmem>>, vector<1x1x32xf32>
    %940 = vector.shape_cast %939 : vector<1x1x32xf32> to vector<1x32xf32>
    %cst_578 = arith.constant dense<0.000000e+00> : vector<48xf32>
    %941 = vector.multi_reduction <add>, %936, %cst_578 [1] : vector<48x32xf32> to vector<48xf32>
    %942 = vector.shape_cast %941 : vector<48xf32> to vector<48x1xf32>
    %cst_579 = arith.constant 3.200000e+01 : f32
    %943 = vector.broadcast %cst_579 : f32 to vector<48x1xf32>
    %944 = arith.divf %942, %943 : vector<48x1xf32>
    %945 = vector.broadcast %944 : vector<48x1xf32> to vector<48x32xf32>
    %946 = arith.subf %936, %945 : vector<48x32xf32>
    %947 = arith.mulf %946, %946 : vector<48x32xf32>
    %cst_580 = arith.constant dense<0.000000e+00> : vector<48xf32>
    %948 = vector.multi_reduction <add>, %947, %cst_580 [1] : vector<48x32xf32> to vector<48xf32>
    %949 = vector.shape_cast %948 : vector<48xf32> to vector<48x1xf32>
    %cst_581 = arith.constant 3.200000e+01 : f32
    %950 = vector.broadcast %cst_581 : f32 to vector<48x1xf32>
    %951 = arith.divf %949, %950 : vector<48x1xf32>
    %952 = vector.broadcast %944 : vector<48x1xf32> to vector<48x32xf32>
    %953 = arith.subf %936, %952 : vector<48x32xf32>
    %cst_582 = arith.constant 9.99999974E-6 : f32
    %954 = vector.broadcast %cst_582 : f32 to vector<48x1xf32>
    %955 = arith.addf %951, %954 : vector<48x1xf32>
    %956 = math.rsqrt %955 : vector<48x1xf32>
    %957 = vector.broadcast %956 : vector<48x1xf32> to vector<48x32xf32>
    %958 = arith.mulf %953, %957 : vector<48x32xf32>
    %959 = vector.broadcast %938 : vector<1x32xf32> to vector<48x32xf32>
    %960 = arith.mulf %958, %959 : vector<48x32xf32>
    %961 = vector.broadcast %940 : vector<1x32xf32> to vector<48x32xf32>
    %962 = arith.addf %960, %961 : vector<48x32xf32>
    %cst_583 = arith.constant dense<0.000000e+00> : vector<22x32xf32>
    %963 = tpu.matmul %50, %962, %cst_583 {dimension_numbers = #tpu.dot_dimension_numbers<[1], [0], [0], [1], [0, 0, 1, 1], [], []>} : vector<22x48xf32>, vector<48x32xf32>, vector<22x32xf32> -> vector<22x32xf32>
    %c1_584 = arith.constant 1 : index
    %c4_585 = arith.constant 4 : index
    %c0_586 = arith.constant 0 : index
    %c0_587 = arith.constant 0 : index
    %964 = vector.load %arg16[%c1_584, %c4_585, %c0_586, %c0_587] : memref<2x8x32x32xbf16, #tpu.memory_space<vmem>>, vector<1x1x32x32xbf16>
    %965 = vector.shape_cast %964 : vector<1x1x32x32xbf16> to vector<32x32xbf16>
    %966 = arith.truncf %895 : vector<22x32xf32> to vector<22x32xbf16>
    %cst_588 = arith.constant dense<0.000000e+00> : vector<22x32xf32>
    %967 = tpu.matmul %966, %965, %cst_588 {dimension_numbers = #tpu.dot_dimension_numbers<[1], [0], [0], [1], [0, 0, 1, 1], [], []>} : vector<22x32xbf16>, vector<32x32xbf16>, vector<22x32xf32> -> vector<22x32xf32>
    %c1_589 = arith.constant 1 : index
    %c5_590 = arith.constant 5 : index
    %c0_591 = arith.constant 0 : index
    %c0_592 = arith.constant 0 : index
    %968 = vector.load %arg16[%c1_589, %c5_590, %c0_591, %c0_592] : memref<2x8x32x32xbf16, #tpu.memory_space<vmem>>, vector<1x1x32x32xbf16>
    %969 = vector.shape_cast %968 : vector<1x1x32x32xbf16> to vector<32x32xbf16>
    %970 = arith.truncf %963 : vector<22x32xf32> to vector<22x32xbf16>
    %cst_593 = arith.constant dense<0.000000e+00> : vector<22x32xf32>
    %971 = tpu.matmul %970, %969, %cst_593 {dimension_numbers = #tpu.dot_dimension_numbers<[1], [0], [0], [1], [0, 0, 1, 1], [], []>} : vector<22x32xbf16>, vector<32x32xbf16>, vector<22x32xf32> -> vector<22x32xf32>
    %972 = arith.addf %967, %971 : vector<22x32xf32>
    %c1_594 = arith.constant 1 : index
    %c5_595 = arith.constant 5 : index
    %c0_596 = arith.constant 0 : index
    %973 = vector.load %arg18[%c1_594, %c5_595, %c0_596] : memref<2x10x32xf32, #tpu.memory_space<vmem>>, vector<1x1x32xf32>
    %974 = vector.shape_cast %973 : vector<1x1x32xf32> to vector<1x32xf32>
    %975 = vector.broadcast %974 : vector<1x32xf32> to vector<22x32xf32>
    %976 = arith.addf %972, %975 : vector<22x32xf32>
    %cst_597 = arith.constant 0.000000e+00 : f32
    %977 = vector.broadcast %cst_597 : f32 to vector<22x32xf32>
    %978 = arith.maximumf %976, %977 : vector<22x32xf32>
    %c1_598 = arith.constant 1 : index
    %c6_599 = arith.constant 6 : index
    %c0_600 = arith.constant 0 : index
    %c0_601 = arith.constant 0 : index
    %979 = vector.load %arg16[%c1_598, %c6_599, %c0_600, %c0_601] : memref<2x8x32x32xbf16, #tpu.memory_space<vmem>>, vector<1x1x32x32xbf16>
    %980 = vector.shape_cast %979 : vector<1x1x32x32xbf16> to vector<32x32xbf16>
    %981 = arith.truncf %978 : vector<22x32xf32> to vector<22x32xbf16>
    %cst_602 = arith.constant dense<0.000000e+00> : vector<22x32xf32>
    %982 = tpu.matmul %981, %980, %cst_602 {dimension_numbers = #tpu.dot_dimension_numbers<[1], [0], [0], [1], [0, 0, 1, 1], [], []>} : vector<22x32xbf16>, vector<32x32xbf16>, vector<22x32xf32> -> vector<22x32xf32>
    %c1_603 = arith.constant 1 : index
    %c6_604 = arith.constant 6 : index
    %c0_605 = arith.constant 0 : index
    %983 = vector.load %arg18[%c1_603, %c6_604, %c0_605] : memref<2x10x32xf32, #tpu.memory_space<vmem>>, vector<1x1x32xf32>
    %984 = vector.shape_cast %983 : vector<1x1x32xf32> to vector<1x32xf32>
    %985 = vector.broadcast %984 : vector<1x32xf32> to vector<22x32xf32>
    %986 = arith.addf %982, %985 : vector<22x32xf32>
    %cst_606 = arith.constant 0.000000e+00 : f32
    %987 = vector.broadcast %cst_606 : f32 to vector<22x32xf32>
    %988 = arith.maximumf %986, %987 : vector<22x32xf32>
    %c1_607 = arith.constant 1 : index
    %c7_608 = arith.constant 7 : index
    %c0_609 = arith.constant 0 : index
    %c0_610 = arith.constant 0 : index
    %989 = vector.load %arg16[%c1_607, %c7_608, %c0_609, %c0_610] : memref<2x8x32x32xbf16, #tpu.memory_space<vmem>>, vector<1x1x32x32xbf16>
    %990 = vector.shape_cast %989 : vector<1x1x32x32xbf16> to vector<32x32xbf16>
    %991 = arith.truncf %988 : vector<22x32xf32> to vector<22x32xbf16>
    %cst_611 = arith.constant dense<0.000000e+00> : vector<22x32xf32>
    %992 = tpu.matmul %991, %990, %cst_611 {dimension_numbers = #tpu.dot_dimension_numbers<[1], [0], [0], [1], [0, 0, 1, 1], [], []>} : vector<22x32xbf16>, vector<32x32xbf16>, vector<22x32xf32> -> vector<22x32xf32>
    %c1_612 = arith.constant 1 : index
    %c7_613 = arith.constant 7 : index
    %c0_614 = arith.constant 0 : index
    %993 = vector.load %arg18[%c1_612, %c7_613, %c0_614] : memref<2x10x32xf32, #tpu.memory_space<vmem>>, vector<1x1x32xf32>
    %994 = vector.shape_cast %993 : vector<1x1x32xf32> to vector<1x32xf32>
    %995 = vector.broadcast %994 : vector<1x32xf32> to vector<22x32xf32>
    %996 = arith.addf %992, %995 : vector<22x32xf32>
    %c1_615 = arith.constant 1 : index
    %c8_616 = arith.constant 8 : index
    %c0_617 = arith.constant 0 : index
    %997 = vector.load %arg18[%c1_615, %c8_616, %c0_617] : memref<2x10x32xf32, #tpu.memory_space<vmem>>, vector<1x1x32xf32>
    %998 = vector.shape_cast %997 : vector<1x1x32xf32> to vector<1x32xf32>
    %c1_618 = arith.constant 1 : index
    %c9_619 = arith.constant 9 : index
    %c0_620 = arith.constant 0 : index
    %999 = vector.load %arg18[%c1_618, %c9_619, %c0_620] : memref<2x10x32xf32, #tpu.memory_space<vmem>>, vector<1x1x32xf32>
    %1000 = vector.shape_cast %999 : vector<1x1x32xf32> to vector<1x32xf32>
    %cst_621 = arith.constant dense<0.000000e+00> : vector<22xf32>
    %1001 = vector.multi_reduction <add>, %996, %cst_621 [1] : vector<22x32xf32> to vector<22xf32>
    %1002 = vector.shape_cast %1001 : vector<22xf32> to vector<22x1xf32>
    %cst_622 = arith.constant 3.200000e+01 : f32
    %1003 = vector.broadcast %cst_622 : f32 to vector<22x1xf32>
    %1004 = arith.divf %1002, %1003 : vector<22x1xf32>
    %1005 = vector.broadcast %1004 : vector<22x1xf32> to vector<22x32xf32>
    %1006 = arith.subf %996, %1005 : vector<22x32xf32>
    %1007 = arith.mulf %1006, %1006 : vector<22x32xf32>
    %cst_623 = arith.constant dense<0.000000e+00> : vector<22xf32>
    %1008 = vector.multi_reduction <add>, %1007, %cst_623 [1] : vector<22x32xf32> to vector<22xf32>
    %1009 = vector.shape_cast %1008 : vector<22xf32> to vector<22x1xf32>
    %cst_624 = arith.constant 3.200000e+01 : f32
    %1010 = vector.broadcast %cst_624 : f32 to vector<22x1xf32>
    %1011 = arith.divf %1009, %1010 : vector<22x1xf32>
    %1012 = vector.broadcast %1004 : vector<22x1xf32> to vector<22x32xf32>
    %1013 = arith.subf %996, %1012 : vector<22x32xf32>
    %cst_625 = arith.constant 9.99999974E-6 : f32
    %1014 = vector.broadcast %cst_625 : f32 to vector<22x1xf32>
    %1015 = arith.addf %1011, %1014 : vector<22x1xf32>
    %1016 = math.rsqrt %1015 : vector<22x1xf32>
    %1017 = vector.broadcast %1016 : vector<22x1xf32> to vector<22x32xf32>
    %1018 = arith.mulf %1013, %1017 : vector<22x32xf32>
    %1019 = vector.broadcast %998 : vector<1x32xf32> to vector<22x32xf32>
    %1020 = arith.mulf %1018, %1019 : vector<22x32xf32>
    %1021 = vector.broadcast %1000 : vector<1x32xf32> to vector<22x32xf32>
    %1022 = arith.addf %1020, %1021 : vector<22x32xf32>
    %1023 = arith.addf %895, %1022 : vector<22x32xf32>
    %1024 = arith.addf %1023, %48 : vector<22x32xf32>
    %c0_626 = arith.constant 0 : index
    %c0_627 = arith.constant 0 : index
    %c0_628 = arith.constant 0 : index
    %1025 = vector.load %arg31[%c0_626, %c0_627, %c0_628] : memref<2x32x32xbf16, #tpu.memory_space<vmem>>, vector<1x32x32xbf16>
    %1026 = vector.shape_cast %1025 : vector<1x32x32xbf16> to vector<32x32xbf16>
    %1027 = arith.truncf %1024 : vector<22x32xf32> to vector<22x32xbf16>
    %cst_629 = arith.constant dense<0.000000e+00> : vector<22x32xf32>
    %1028 = tpu.matmul %1027, %1026, %cst_629 {dimension_numbers = #tpu.dot_dimension_numbers<[1], [0], [0], [1], [0, 0, 1, 1], [], []>} : vector<22x32xbf16>, vector<32x32xbf16>, vector<22x32xf32> -> vector<22x32xf32>
    %c0_630 = arith.constant 0 : index
    %c0_631 = arith.constant 0 : index
    %1029 = vector.load %arg33[%c0_630, %c0_631] : memref<2x32xf32, #tpu.memory_space<vmem>>, vector<1x32xf32>
    %1030 = vector.broadcast %1029 : vector<1x32xf32> to vector<22x32xf32>
    %1031 = arith.addf %1028, %1030 : vector<22x32xf32>
    %cst_632 = arith.constant 0.000000e+00 : f32
    %1032 = vector.broadcast %cst_632 : f32 to vector<22x32xf32>
    %1033 = arith.maximumf %1031, %1032 : vector<22x32xf32>
    %c1_633 = arith.constant 1 : index
    %c0_634 = arith.constant 0 : index
    %c0_635 = arith.constant 0 : index
    %1034 = vector.load %arg31[%c1_633, %c0_634, %c0_635] : memref<2x32x32xbf16, #tpu.memory_space<vmem>>, vector<1x32x32xbf16>
    %1035 = vector.shape_cast %1034 : vector<1x32x32xbf16> to vector<32x32xbf16>
    %1036 = arith.truncf %1033 : vector<22x32xf32> to vector<22x32xbf16>
    %cst_636 = arith.constant dense<0.000000e+00> : vector<22x32xf32>
    %1037 = tpu.matmul %1036, %1035, %cst_636 {dimension_numbers = #tpu.dot_dimension_numbers<[1], [0], [0], [1], [0, 0, 1, 1], [], []>} : vector<22x32xbf16>, vector<32x32xbf16>, vector<22x32xf32> -> vector<22x32xf32>
    %c1_637 = arith.constant 1 : index
    %c0_638 = arith.constant 0 : index
    %1038 = vector.load %arg33[%c1_637, %c0_638] : memref<2x32xf32, #tpu.memory_space<vmem>>, vector<1x32xf32>
    %1039 = vector.broadcast %1038 : vector<1x32xf32> to vector<22x32xf32>
    %1040 = arith.addf %1037, %1039 : vector<22x32xf32>
    %cst_639 = arith.constant 0.000000e+00 : f32
    %1041 = vector.broadcast %cst_639 : f32 to vector<22x32xf32>
    %1042 = arith.maximumf %1040, %1041 : vector<22x32xf32>
    %c0_640 = arith.constant 0 : index
    %c0_641 = arith.constant 0 : index
    %1043 = vector.load %arg32[%c0_640, %c0_641] : memref<32x3xbf16, #tpu.memory_space<vmem>>, vector<32x3xbf16>
    %1044 = arith.truncf %1042 : vector<22x32xf32> to vector<22x32xbf16>
    %cst_642 = arith.constant dense<0.000000e+00> : vector<22x3xf32>
    %1045 = tpu.matmul %1044, %1043, %cst_642 {dimension_numbers = #tpu.dot_dimension_numbers<[1], [0], [0], [1], [0, 0, 1, 1], [], []>} : vector<22x32xbf16>, vector<32x3xbf16>, vector<22x3xf32> -> vector<22x3xf32>
    %c0_643 = arith.constant 0 : index
    %c0_644 = arith.constant 0 : index
    %1046 = vector.load %arg34[%c0_643, %c0_644] : memref<1x3xf32, #tpu.memory_space<vmem>>, vector<1x3xf32>
    %1047 = vector.broadcast %1046 : vector<1x3xf32> to vector<22x3xf32>
    %1048 = arith.addf %1045, %1047 : vector<22x3xf32>
    %c0_645 = arith.constant 0 : index
    %c0_646 = arith.constant 0 : index
    %1049 = vector.load %arg35[%c0_645, %c0_646] : memref<22x3xf32, #tpu.memory_space<vmem>>, vector<22x3xf32>
    tpu.vector_store %arg35[%c0_645, %c0_646], %1048 {strides = array<i32>} : memref<22x3xf32, #tpu.memory_space<vmem>>, vector<22x3xf32>,
    return
  }
}

</mosaic_0001>

<llo_original>
// kernel: _lambda_.1
$region0: #{_lambda_.1}
  #allocation0 [shape = 'u32[]', space=smem, size = 0x4, offset = 0x4, fixed_abs, tag = 'smem constant byte address 0x4 - core index']
  #allocation1 [shape = 'u32[144,128]{1,0:T(1,128)}', space=vmem, size = 0x12000, scoped, tag = 'internal scratch']
  %s0 = inlined_call_operand.smem [shape: u32[36], index: -1, kind: input, shape index: {}]
  %s1 = sld [smem:[%s0]]
  %s2 = scalar_lea.smem %s0, 1
  %s3 = sld [smem:[%s2]]
  %s4 = scalar_lea.smem %s0, 2
  %s5 = sld [smem:[%s4]]
  %s6 = scalar_lea.smem %s0, 3
  %s7 = sld [smem:[%s6]]
  %s8 = scalar_lea.smem %s0, 4
  %s9 = sld [smem:[%s8]]
  %s10 = scalar_lea.smem %s0, 5
  %s11 = sld [smem:[%s10]]
  %s12 = scalar_lea.smem %s0, 6
  %s13 = sld [smem:[%s12]]
  %s14 = scalar_lea.smem %s0, 7
  %s15 = sld [smem:[%s14]]
  %s16 = scalar_lea.smem %s0, 8
  %s17 = sld [smem:[%s16]]
  %s18 = scalar_lea.smem %s0, 9
  %s19 = sld [smem:[%s18]]
  %s20 = scalar_lea.smem %s0, 10
  %s21 = sld [smem:[%s20]]
  %s22 = scalar_lea.smem %s0, 11
  %s23 = sld [smem:[%s22]]
  %s24 = scalar_lea.smem %s0, 12
  %s25 = sld [smem:[%s24]]
  %s26 = scalar_lea.smem %s0, 13
  %s27 = sld [smem:[%s26]]
  %s28 = scalar_lea.smem %s0, 14
  %s29 = sld [smem:[%s28]]
  %s30 = scalar_lea.smem %s0, 15
  %s31 = sld [smem:[%s30]]
  %s32 = scalar_lea.smem %s0, 16
  %s33 = sld [smem:[%s32]]
  %s34 = scalar_lea.smem %s0, 17
  %s35 = sld [smem:[%s34]]
  %s36 = scalar_lea.smem %s0, 18
  %s37 = sld [smem:[%s36]]
  %s38 = scalar_lea.smem %s0, 19
  %s39 = sld [smem:[%s38]]
  %s40 = scalar_lea.smem %s0, 20
  %s41 = sld [smem:[%s40]]
  %s42 = scalar_lea.smem %s0, 21
  %s43 = sld [smem:[%s42]]
  %s44 = scalar_lea.smem %s0, 22
  %s45 = sld [smem:[%s44]]
  %s46 = scalar_lea.smem %s0, 23
  %s47 = sld [smem:[%s46]]
  %s48 = scalar_lea.smem %s0, 24
  %s49 = sld [smem:[%s48]]
  %s50 = scalar_lea.smem %s0, 25
  %s51 = sld [smem:[%s50]]
  %s52 = scalar_lea.smem %s0, 26
  %s53 = sld [smem:[%s52]]
  %s54 = scalar_lea.smem %s0, 27
  %s55 = sld [smem:[%s54]]
  %s56 = scalar_lea.smem %s0, 28
  %s57 = sld [smem:[%s56]]
  %s58 = scalar_lea.smem %s0, 29
  %s59 = sld [smem:[%s58]]
  %s60 = scalar_lea.smem %s0, 30
  %s61 = sld [smem:[%s60]]
  %s62 = scalar_lea.smem %s0, 31
  %s63 = sld [smem:[%s62]]
  %s64 = scalar_lea.smem %s0, 32
  %s65 = sld [smem:[%s64]]
  %s66 = scalar_lea.smem %s0, 33
  %s67 = sld [smem:[%s66]]
  %s68 = scalar_lea.smem %s0, 34
  %s69 = sld [smem:[%s68]]
  %s70 = scalar_lea.smem %s0, 35
  %s71 = sld [smem:[%s70]]
  %s72 = sld [smem:[#allocation0]]
  $region230: #{_lambda_.1} parent=0
    _
  %s74 = ssub.s32 1, %s72
  %s75 = scalar_select 0, %s74, %s72
  $region1: #{_lambda_.1} parent=0
    #allocation2 [shape = 'u8[12288]{0}', space=vmem, size = 0x3000, scoped, tag = 'input window, operand 3, single buffered']
    #allocation3 [shape = 's32[1]{0}', space=sflag, size = 0x4, scoped, tag = 'scoped memory for _lambda_.1']
    #allocation4 [shape = 'u8[12288]{0}', space=vmem, size = 0x3000, scoped, tag = 'input window, operand 4, single buffered']
    #allocation5 [shape = 's32[1]{0}', space=sflag, size = 0x4, scoped, tag = 'scoped memory for _lambda_.1']
    #allocation6 [shape = 'u8[12288]{0}', space=vmem, size = 0x3000, scoped, tag = 'input window, operand 5, single buffered']
    #allocation7 [shape = 'u8[8192]{0}', space=vmem, size = 0x2000, scoped, tag = 'input window, operand 6, single buffered']
    #allocation8 [shape = 's32[1]{0}', space=sflag, size = 0x4, scoped, tag = 'scoped memory for _lambda_.1']
    #allocation9 [shape = 'u8[8192]{0}', space=vmem, size = 0x2000, scoped, tag = 'input window, operand 7, single buffered']
    #allocation10 [shape = 'u8[8192]{0}', space=vmem, size = 0x2000, scoped, tag = 'input window, operand 9, single buffered']
    #allocation11 [shape = 's32[1]{0}', space=sflag, size = 0x4, scoped, tag = 'scoped memory for _lambda_.1']
    #allocation12 [shape = 'u8[2048]{0}', space=vmem, size = 0x800, scoped, tag = 'input window, operand 10, single buffered']
    #allocation13 [shape = 'u8[16384]{0}', space=vmem, size = 0x4000, scoped, tag = 'input window, operand 11, single buffered']
    #allocation14 [shape = 's32[1]{0}', space=sflag, size = 0x4, scoped, tag = 'scoped memory for _lambda_.1']
    #allocation15 [shape = 'u8[4096]{0}', space=vmem, size = 0x1000, scoped, tag = 'input window, operand 12, single buffered']
    #allocation16 [shape = 'u8[131072]{0}', space=vmem, size = 0x20000, scoped, tag = 'input window, operand 16, single buffered']
    #allocation17 [shape = 's32[1]{0}', space=sflag, size = 0x4, scoped, tag = 'scoped memory for _lambda_.1']
    #allocation18 [shape = 'u8[1024]{0}', space=vmem, size = 0x400, scoped, tag = 'input window, operand 17, single buffered']
    #allocation19 [shape = 'u8[65536]{0}', space=vmem, size = 0x10000, scoped, tag = 'input window, operand 19, single buffered']
    #allocation20 [shape = 's32[1]{0}', space=sflag, size = 0x4, scoped, tag = 'scoped memory for _lambda_.1']
    #allocation21 [shape = 'u8[16384]{0}', space=vmem, size = 0x4000, scoped, tag = 'input window, operand 20, single buffered']
    #allocation22 [shape = 'u8[8192]{0}', space=vmem, size = 0x2000, scoped, tag = 'input window, operand 21, single buffered']
    #allocation23 [shape = 's32[1]{0}', space=sflag, size = 0x4, scoped, tag = 'scoped memory for _lambda_.1']
    #allocation24 [shape = 'u8[1024]{0}', space=vmem, size = 0x400, scoped, tag = 'input window, operand 22, single buffered']
    #allocation25 [shape = 'u8[8192]{0}', space=vmem, size = 0x2000, scoped, tag = 'input window, operand 24, single buffered']
    #allocation26 [shape = 's32[1]{0}', space=sflag, size = 0x4, scoped, tag = 'scoped memory for _lambda_.1']
    #allocation27 [shape = 'u8[8192]{0}', space=vmem, size = 0x2000, scoped, tag = 'input window, operand 25, single buffered']
    #allocation28 [shape = 'u8[32768]{0}', space=vmem, size = 0x8000, scoped, tag = 'input window, operand 26, single buffered']
    #allocation29 [shape = 's32[1]{0}', space=sflag, size = 0x4, scoped, tag = 'scoped memory for _lambda_.1']
    #allocation30 [shape = 'u8[4096]{0}', space=vmem, size = 0x1000, scoped, tag = 'input window, operand 29, single buffered']
    #allocation31 [shape = 'u8[16384]{0}', space=vmem, size = 0x4000, scoped, tag = 'input window, operand 31, single buffered']
    #allocation32 [shape = 's32[1]{0}', space=sflag, size = 0x4, scoped, tag = 'scoped memory for _lambda_.1']
    %76 = vsyncpa [#allocation3], 0
    %77 = vsyncpa [#allocation5], 0
    %78 = vsyncpa [#allocation8], 0
    %79 = vsyncpa [#allocation11], 0
    %80 = vsyncpa [#allocation14], 0
    %81 = vsyncpa [#allocation17], 0
    %82 = vsyncpa [#allocation20], 0
    %83 = vsyncpa [#allocation23], 0
    %84 = vsyncpa [#allocation26], 0
    %85 = vsyncpa [#allocation29], 0
    %86 = vsyncpa [#allocation32], 0
    // Predicated region
    $region2: #{_lambda_.1} parent=1 // pred_check
      _
    $region3: #{_lambda_.1} parent=1 // pred_check_branch
      %88 = sbr.rel (0) target = $region5
    $region4: #{_lambda_.1} parent=1 // pred_region
      _
    $region5: #{_lambda_.1} parent=1 // pred_fallthru
      _
    // Predicated region
    $region6: #{_lambda_.1} parent=1 // pred_check
      _
    $region7: #{_lambda_.1} parent=1 // pred_check_branch
      %90 = sbr.rel (0) target = $region9
    $region8: #{_lambda_.1} parent=1 // pred_region
      _
    $region9: #{_lambda_.1} parent=1 // pred_fallthru
      _
    // Predicated region
    $region10: #{_lambda_.1} parent=1 // pred_check
      _
    $region11: #{_lambda_.1} parent=1 // pred_check_branch
      %92 = sbr.rel (0) target = $region13
    $region12: #{_lambda_.1} parent=1 // pred_region
      _
    $region13: #{_lambda_.1} parent=1 // pred_fallthru
      _
    // Predicated region
    $region14: #{_lambda_.1} parent=1 // pred_check
      _
    $region15: #{_lambda_.1} parent=1 // pred_check_branch
      %94 = sbr.rel (0) target = $region17
    $region16: #{_lambda_.1} parent=1 // pred_region
      %s96 = ssub.s32 384, 384
      %97 = vsyncadd [#allocation3], %s96
      %s98 = sshll.u32 [#allocation2], 4
      %s99 = int_to_ptr.vmem [resolvable:$true] %s98
      %104 = dma.hbm_to_vmem [thread:$0]  %s7, 384, %s99, [#allocation3], 128, 128, 8
    $region17: #{_lambda_.1} parent=1 // pred_fallthru
      _
    // Predicated region
    $region18: #{_lambda_.1} parent=1 // pred_check
      _
    $region19: #{_lambda_.1} parent=1 // pred_check_branch
      %106 = sbr.rel (0) target = $region21
    $region20: #{_lambda_.1} parent=1 // pred_region
      %s108 = ssub.s32 384, 384
      %109 = vsyncadd [#allocation5], %s108
      %s110 = sshll.u32 [#allocation4], 4
      %s111 = int_to_ptr.vmem [resolvable:$true] %s110
      %116 = dma.hbm_to_vmem [thread:$0]  %s9, 384, %s111, [#allocation5], 128, 128, 8
    $region21: #{_lambda_.1} parent=1 // pred_fallthru
      _
    // Predicated region
    $region22: #{_lambda_.1} parent=1 // pred_check
      _
    $region23: #{_lambda_.1} parent=1 // pred_check_branch
      %118 = sbr.rel (0) target = $region25
    $region24: #{_lambda_.1} parent=1 // pred_region
      %s120 = ssub.s32 384, 384
      %121 = vsyncadd [#allocation5], %s120
      %s122 = sshll.u32 [#allocation6], 4
      %s123 = int_to_ptr.vmem [resolvable:$true] %s122
      %128 = dma.hbm_to_vmem [thread:$0]  %s11, 384, %s123, [#allocation5], 128, 128, 8
    $region25: #{_lambda_.1} parent=1 // pred_fallthru
      _
    // Predicated region
    $region26: #{_lambda_.1} parent=1 // pred_check
      _
    $region27: #{_lambda_.1} parent=1 // pred_check_branch
      %130 = sbr.rel (0) target = $region29
    $region28: #{_lambda_.1} parent=1 // pred_region
      %s132 = ssub.s32 256, 256
      %133 = vsyncadd [#allocation8], %s132
      %s134 = sshll.u32 [#allocation7], 4
      %s135 = int_to_ptr.vmem [resolvable:$true] %s134
      %140 = dma.hbm_to_vmem [thread:$0]  %s13, 256, %s135, [#allocation8], 128, 128, 8
    $region29: #{_lambda_.1} parent=1 // pred_fallthru
      _
    // Predicated region
    $region30: #{_lambda_.1} parent=1 // pred_check
      _
    $region31: #{_lambda_.1} parent=1 // pred_check_branch
      %142 = sbr.rel (0) target = $region33
    $region32: #{_lambda_.1} parent=1 // pred_region
      %s144 = ssub.s32 256, 256
      %145 = vsyncadd [#allocation8], %s144
      %s146 = sshll.u32 [#allocation9], 4
      %s147 = int_to_ptr.vmem [resolvable:$true] %s146
      %152 = dma.hbm_to_vmem [thread:$0]  %s15, 256, %s147, [#allocation8], 128, 128, 8
    $region33: #{_lambda_.1} parent=1 // pred_fallthru
      _
    // Predicated region
    $region34: #{_lambda_.1} parent=1 // pred_check
      _
    $region35: #{_lambda_.1} parent=1 // pred_check_branch
      %154 = sbr.rel (0) target = $region37
    $region36: #{_lambda_.1} parent=1 // pred_region
      _
    $region37: #{_lambda_.1} parent=1 // pred_fallthru
      _
    // Predicated region
    $region38: #{_lambda_.1} parent=1 // pred_check
      _
    $region39: #{_lambda_.1} parent=1 // pred_check_branch
      %156 = sbr.rel (0) target = $region41
    $region40: #{_lambda_.1} parent=1 // pred_region
      %s158 = ssub.s32 256, 256
      %159 = vsyncadd [#allocation11], %s158
      %s160 = sshll.u32 [#allocation10], 4
      %s161 = int_to_ptr.vmem [resolvable:$true] %s160
      %166 = dma.hbm_to_vmem [thread:$0]  %s19, 256, %s161, [#allocation11], 128, 128, 8
    $region41: #{_lambda_.1} parent=1 // pred_fallthru
      _
    // Predicated region
    $region42: #{_lambda_.1} parent=1 // pred_check
      _
    $region43: #{_lambda_.1} parent=1 // pred_check_branch
      %168 = sbr.rel (0) target = $region45
    $region44: #{_lambda_.1} parent=1 // pred_region
      %s170 = ssub.s32 64, 64
      %171 = vsyncadd [#allocation11], %s170
      %s173 = sshll.u32 [#allocation12], 4
      %s174 = int_to_ptr.vmem [resolvable:$true] %s173
      %176 = dma.hbm_to_vmem [thread:$0]  %s21, 64, %s174, [#allocation11]
    $region45: #{_lambda_.1} parent=1 // pred_fallthru
      _
    // Predicated region
    $region46: #{_lambda_.1} parent=1 // pred_check
      _
    $region47: #{_lambda_.1} parent=1 // pred_check_branch
      %178 = sbr.rel (0) target = $region49
    $region48: #{_lambda_.1} parent=1 // pred_region
      %s180 = ssub.s32 512, 512
      %181 = vsyncadd [#allocation14], %s180
      %s182 = sshll.u32 [#allocation13], 4
      %s183 = int_to_ptr.vmem [resolvable:$true] %s182
      %188 = dma.hbm_to_vmem [thread:$0]  %s23, 512, %s183, [#allocation14], 64, 64, 4
    $region49: #{_lambda_.1} parent=1 // pred_fallthru
      _
    // Predicated region
    $region50: #{_lambda_.1} parent=1 // pred_check
      _
    $region51: #{_lambda_.1} parent=1 // pred_check_branch
      %190 = sbr.rel (0) target = $region53
    $region52: #{_lambda_.1} parent=1 // pred_region
      %s192 = ssub.s32 128, 128
      %193 = vsyncadd [#allocation14], %s192
      %s195 = sshll.u32 [#allocation15], 4
      %s196 = int_to_ptr.vmem [resolvable:$true] %s195
      %198 = dma.hbm_to_vmem [thread:$0]  %s25, 128, %s196, [#allocation14]
    $region53: #{_lambda_.1} parent=1 // pred_fallthru
      _
    // Predicated region
    $region54: #{_lambda_.1} parent=1 // pred_check
      _
    $region55: #{_lambda_.1} parent=1 // pred_check_branch
      %200 = sbr.rel (0) target = $region57
    $region56: #{_lambda_.1} parent=1 // pred_region
      _
    $region57: #{_lambda_.1} parent=1 // pred_fallthru
      _
    // Predicated region
    $region58: #{_lambda_.1} parent=1 // pred_check
      _
    $region59: #{_lambda_.1} parent=1 // pred_check_branch
      %202 = sbr.rel (0) target = $region61
    $region60: #{_lambda_.1} parent=1 // pred_region
      _
    $region61: #{_lambda_.1} parent=1 // pred_fallthru
      _
    // Predicated region
    $region62: #{_lambda_.1} parent=1 // pred_check
      _
    $region63: #{_lambda_.1} parent=1 // pred_check_branch
      %204 = sbr.rel (0) target = $region65
    $region64: #{_lambda_.1} parent=1 // pred_region
      _
    $region65: #{_lambda_.1} parent=1 // pred_fallthru
      _
    // Predicated region
    $region66: #{_lambda_.1} parent=1 // pred_check
      _
    $region67: #{_lambda_.1} parent=1 // pred_check_branch
      %206 = sbr.rel (0) target = $region69
    $region68: #{_lambda_.1} parent=1 // pred_region
      %s208 = ssub.s32 4096, 4096
      %209 = vsyncadd [#allocation17], %s208
      %s210 = sshll.u32 [#allocation16], 4
      %s211 = int_to_ptr.vmem [resolvable:$true] %s210
      %216 = dma.hbm_to_vmem [thread:$0]  %s33, 4096, %s211, [#allocation17], 64, 64, 4
    $region69: #{_lambda_.1} parent=1 // pred_fallthru
      _
    // Predicated region
    $region70: #{_lambda_.1} parent=1 // pred_check
      _
    $region71: #{_lambda_.1} parent=1 // pred_check_branch
      %218 = sbr.rel (0) target = $region73
    $region72: #{_lambda_.1} parent=1 // pred_region
      %s220 = ssub.s32 32, 32
      %221 = vsyncadd [#allocation17], %s220
      %s222 = sshll.u32 [#allocation18], 4
      %s223 = int_to_ptr.vmem [resolvable:$true] %s222
      %228 = dma.hbm_to_vmem [thread:$0]  %s35, 32, %s223, [#allocation17], 16, 16, 1
    $region73: #{_lambda_.1} parent=1 // pred_fallthru
      _
    // Predicated region
    $region74: #{_lambda_.1} parent=1 // pred_check
      _
    $region75: #{_lambda_.1} parent=1 // pred_check_branch
      %230 = sbr.rel (0) target = $region77
    $region76: #{_lambda_.1} parent=1 // pred_region
      _
    $region77: #{_lambda_.1} parent=1 // pred_fallthru
      _
    // Predicated region
    $region78: #{_lambda_.1} parent=1 // pred_check
      _
    $region79: #{_lambda_.1} parent=1 // pred_check_branch
      %232 = sbr.rel (0) target = $region81
    $region80: #{_lambda_.1} parent=1 // pred_region
      %s234 = ssub.s32 2048, 2048
      %235 = vsyncadd [#allocation20], %s234
      %s236 = sshll.u32 [#allocation19], 4
      %s237 = int_to_ptr.vmem [resolvable:$true] %s236
      %242 = dma.hbm_to_vmem [thread:$0]  %s39, 2048, %s237, [#allocation20], 64, 64, 4
    $region81: #{_lambda_.1} parent=1 // pred_fallthru
      _
    // Predicated region
    $region82: #{_lambda_.1} parent=1 // pred_check
      _
    $region83: #{_lambda_.1} parent=1 // pred_check_branch
      %244 = sbr.rel (0) target = $region85
    $region84: #{_lambda_.1} parent=1 // pred_region
      %s246 = ssub.s32 512, 512
      %247 = vsyncadd [#allocation20], %s246
      %s248 = sshll.u32 [#allocation21], 4
      %s249 = int_to_ptr.vmem [resolvable:$true] %s248
      %254 = dma.hbm_to_vmem [thread:$0]  %s41, 512, %s249, [#allocation20], 64, 64, 4
    $region85: #{_lambda_.1} parent=1 // pred_fallthru
      _
    // Predicated region
    $region86: #{_lambda_.1} parent=1 // pred_check
      _
    $region87: #{_lambda_.1} parent=1 // pred_check_branch
      %256 = sbr.rel (0) target = $region89
    $region88: #{_lambda_.1} parent=1 // pred_region
      %s258 = ssub.s32 256, 256
      %259 = vsyncadd [#allocation23], %s258
      %s260 = sshll.u32 [#allocation22], 4
      %s261 = int_to_ptr.vmem [resolvable:$true] %s260
      %266 = dma.hbm_to_vmem [thread:$0]  %s43, 256, %s261, [#allocation23], 128, 128, 8
    $region89: #{_lambda_.1} parent=1 // pred_fallthru
      _
    // Predicated region
    $region90: #{_lambda_.1} parent=1 // pred_check
      _
    $region91: #{_lambda_.1} parent=1 // pred_check_branch
      %268 = sbr.rel (0) target = $region93
    $region92: #{_lambda_.1} parent=1 // pred_region
      %s270 = ssub.s32 32, 32
      %271 = vsyncadd [#allocation23], %s270
      %s273 = sshll.u32 [#allocation24], 4
      %s274 = int_to_ptr.vmem [resolvable:$true] %s273
      %276 = dma.hbm_to_vmem [thread:$0]  %s45, 32, %s274, [#allocation23]
    $region93: #{_lambda_.1} parent=1 // pred_fallthru
      _
    // Predicated region
    $region94: #{_lambda_.1} parent=1 // pred_check
      _
    $region95: #{_lambda_.1} parent=1 // pred_check_branch
      %278 = sbr.rel (0) target = $region97
    $region96: #{_lambda_.1} parent=1 // pred_region
      _
    $region97: #{_lambda_.1} parent=1 // pred_fallthru
      _
    // Predicated region
    $region98: #{_lambda_.1} parent=1 // pred_check
      _
    $region99: #{_lambda_.1} parent=1 // pred_check_branch
      %280 = sbr.rel (0) target = $region101
    $region100: #{_lambda_.1} parent=1 // pred_region
      %s282 = ssub.s32 256, 256
      %283 = vsyncadd [#allocation26], %s282
      %s284 = sshll.u32 [#allocation25], 4
      %s285 = int_to_ptr.vmem [resolvable:$true] %s284
      %290 = dma.hbm_to_vmem [thread:$0]  %s49, 256, %s285, [#allocation26], 128, 128, 8
    $region101: #{_lambda_.1} parent=1 // pred_fallthru
      _
    // Predicated region
    $region102: #{_lambda_.1} parent=1 // pred_check
      _
    $region103: #{_lambda_.1} parent=1 // pred_check_branch
      %292 = sbr.rel (0) target = $region105
    $region104: #{_lambda_.1} parent=1 // pred_region
      %s294 = ssub.s32 256, 256
      %295 = vsyncadd [#allocation26], %s294
      %s296 = sshll.u32 [#allocation27], 4
      %s297 = int_to_ptr.vmem [resolvable:$true] %s296
      %302 = dma.hbm_to_vmem [thread:$0]  %s51, 256, %s297, [#allocation26], 64, 64, 4
    $region105: #{_lambda_.1} parent=1 // pred_fallthru
      _
    // Predicated region
    $region106: #{_lambda_.1} parent=1 // pred_check
      _
    $region107: #{_lambda_.1} parent=1 // pred_check_branch
      %304 = sbr.rel (0) target = $region109
    $region108: #{_lambda_.1} parent=1 // pred_region
      %s306 = ssub.s32 1024, 1024
      %307 = vsyncadd [#allocation29], %s306
      %s308 = sshll.u32 [#allocation28], 4
      %s309 = int_to_ptr.vmem [resolvable:$true] %s308
      %314 = dma.hbm_to_vmem [thread:$0]  %s53, 1024, %s309, [#allocation29], 64, 64, 4
    $region109: #{_lambda_.1} parent=1 // pred_fallthru
      _
    // Predicated region
    $region110: #{_lambda_.1} parent=1 // pred_check
      _
    $region111: #{_lambda_.1} parent=1 // pred_check_branch
      %316 = sbr.rel (0) target = $region113
    $region112: #{_lambda_.1} parent=1 // pred_region
      _
    $region113: #{_lambda_.1} parent=1 // pred_fallthru
      _
    // Predicated region
    $region114: #{_lambda_.1} parent=1 // pred_check
      _
    $region115: #{_lambda_.1} parent=1 // pred_check_branch
      %318 = sbr.rel (0) target = $region117
    $region116: #{_lambda_.1} parent=1 // pred_region
      _
    $region117: #{_lambda_.1} parent=1 // pred_fallthru
      _
    // Predicated region
    $region118: #{_lambda_.1} parent=1 // pred_check
      _
    $region119: #{_lambda_.1} parent=1 // pred_check_branch
      %320 = sbr.rel (0) target = $region121
    $region120: #{_lambda_.1} parent=1 // pred_region
      %s322 = ssub.s32 128, 128
      %323 = vsyncadd [#allocation29], %s322
      %s325 = sshll.u32 [#allocation30], 4
      %s326 = int_to_ptr.vmem [resolvable:$true] %s325
      %328 = dma.hbm_to_vmem [thread:$0]  %s59, 128, %s326, [#allocation29]
    $region121: #{_lambda_.1} parent=1 // pred_fallthru
      _
    // Predicated region
    $region122: #{_lambda_.1} parent=1 // pred_check
      _
    $region123: #{_lambda_.1} parent=1 // pred_check_branch
      %330 = sbr.rel (0) target = $region125
    $region124: #{_lambda_.1} parent=1 // pred_region
      _
    $region125: #{_lambda_.1} parent=1 // pred_fallthru
      _
    // Predicated region
    $region126: #{_lambda_.1} parent=1 // pred_check
      _
    $region127: #{_lambda_.1} parent=1 // pred_check_branch
      %332 = sbr.rel (0) target = $region129
    $region128: #{_lambda_.1} parent=1 // pred_region
      %s334 = ssub.s32 512, 512
      %335 = vsyncadd [#allocation32], %s334
      %s336 = sshll.u32 [#allocation31], 4
      %s337 = int_to_ptr.vmem [resolvable:$true] %s336
      %342 = dma.hbm_to_vmem [thread:$0]  %s63, 512, %s337, [#allocation32], 64, 64, 4
    $region129: #{_lambda_.1} parent=1 // pred_fallthru
      _
    // Predicated region
    $region130: #{_lambda_.1} parent=1 // pred_check
      _
    $region131: #{_lambda_.1} parent=1 // pred_check_branch
      %344 = sbr.rel (0) target = $region133
    $region132: #{_lambda_.1} parent=1 // pred_region
      _
    $region133: #{_lambda_.1} parent=1 // pred_fallthru
      _
    // Predicated region
    $region134: #{_lambda_.1} parent=1 // pred_check
      _
    $region135: #{_lambda_.1} parent=1 // pred_check_branch
      %346 = sbr.rel (0) target = $region137
    $region136: #{_lambda_.1} parent=1 // pred_region
      _
    $region137: #{_lambda_.1} parent=1 // pred_fallthru
      _
    // Predicated region
    $region138: #{_lambda_.1} parent=1 // pred_check
      _
    $region139: #{_lambda_.1} parent=1 // pred_check_branch
      %348 = sbr.rel (0) target = $region141
    $region140: #{_lambda_.1} parent=1 // pred_region
      _
    $region141: #{_lambda_.1} parent=1 // pred_fallthru
      _
    // Predicated region
    $region142: #{_lambda_.1} parent=1 // pred_check
      _
    $region143: #{_lambda_.1} parent=1 // pred_check_branch
      %350 = sbr.rel (0) target = $region145
    $region144: #{_lambda_.1} parent=1 // pred_region
      %351 = dma.done [#allocation3], 384
    $region145: #{_lambda_.1} parent=1 // pred_fallthru
      _
    // Predicated region
    $region146: #{_lambda_.1} parent=1 // pred_check
      _
    $region147: #{_lambda_.1} parent=1 // pred_check_branch
      %353 = sbr.rel (0) target = $region149
    $region148: #{_lambda_.1} parent=1 // pred_region
      %354 = dma.done [#allocation5], 384
    $region149: #{_lambda_.1} parent=1 // pred_fallthru
      _
    // Predicated region
    $region150: #{_lambda_.1} parent=1 // pred_check
      _
    $region151: #{_lambda_.1} parent=1 // pred_check_branch
      %356 = sbr.rel (0) target = $region153
    $region152: #{_lambda_.1} parent=1 // pred_region
      %357 = dma.done [#allocation5], 384
    $region153: #{_lambda_.1} parent=1 // pred_fallthru
      _
    // Predicated region
    $region154: #{_lambda_.1} parent=1 // pred_check
      _
    $region155: #{_lambda_.1} parent=1 // pred_check_branch
      %359 = sbr.rel (0) target = $region157
    $region156: #{_lambda_.1} parent=1 // pred_region
      %360 = dma.done [#allocation8], 256
    $region157: #{_lambda_.1} parent=1 // pred_fallthru
      _
    // Predicated region
    $region158: #{_lambda_.1} parent=1 // pred_check
      _
    $region159: #{_lambda_.1} parent=1 // pred_check_branch
      %362 = sbr.rel (0) target = $region161
    $region160: #{_lambda_.1} parent=1 // pred_region
      %363 = dma.done [#allocation8], 256
    $region161: #{_lambda_.1} parent=1 // pred_fallthru
      _
    // Predicated region
    $region162: #{_lambda_.1} parent=1 // pred_check
      _
    $region163: #{_lambda_.1} parent=1 // pred_check_branch
      %365 = sbr.rel (0) target = $region165
    $region164: #{_lambda_.1} parent=1 // pred_region
      %366 = dma.done [#allocation11], 256
    $region165: #{_lambda_.1} parent=1 // pred_fallthru
      _
    // Predicated region
    $region166: #{_lambda_.1} parent=1 // pred_check
      _
    $region167: #{_lambda_.1} parent=1 // pred_check_branch
      %368 = sbr.rel (0) target = $region169
    $region168: #{_lambda_.1} parent=1 // pred_region
      %369 = dma.done [#allocation11], 64
    $region169: #{_lambda_.1} parent=1 // pred_fallthru
      _
    // Predicated region
    $region170: #{_lambda_.1} parent=1 // pred_check
      _
    $region171: #{_lambda_.1} parent=1 // pred_check_branch
      %371 = sbr.rel (0) target = $region173
    $region172: #{_lambda_.1} parent=1 // pred_region
      %372 = dma.done [#allocation14], 512
    $region173: #{_lambda_.1} parent=1 // pred_fallthru
      _
    // Predicated region
    $region174: #{_lambda_.1} parent=1 // pred_check
      _
    $region175: #{_lambda_.1} parent=1 // pred_check_branch
      %374 = sbr.rel (0) target = $region177
    $region176: #{_lambda_.1} parent=1 // pred_region
      %375 = dma.done [#allocation14], 128
    $region177: #{_lambda_.1} parent=1 // pred_fallthru
      _
    // Predicated region
    $region178: #{_lambda_.1} parent=1 // pred_check
      _
    $region179: #{_lambda_.1} parent=1 // pred_check_branch
      %377 = sbr.rel (0) target = $region181
    $region180: #{_lambda_.1} parent=1 // pred_region
      %378 = dma.done [#allocation17], 4096
    $region181: #{_lambda_.1} parent=1 // pred_fallthru
      _
    // Predicated region
    $region182: #{_lambda_.1} parent=1 // pred_check
      _
    $region183: #{_lambda_.1} parent=1 // pred_check_branch
      %380 = sbr.rel (0) target = $region185
    $region184: #{_lambda_.1} parent=1 // pred_region
      %381 = dma.done [#allocation17], 32
    $region185: #{_lambda_.1} parent=1 // pred_fallthru
      _
    // Predicated region
    $region186: #{_lambda_.1} parent=1 // pred_check
      _
    $region187: #{_lambda_.1} parent=1 // pred_check_branch
      %383 = sbr.rel (0) target = $region189
    $region188: #{_lambda_.1} parent=1 // pred_region
      %384 = dma.done [#allocation20], 2048
    $region189: #{_lambda_.1} parent=1 // pred_fallthru
      _
    // Predicated region
    $region190: #{_lambda_.1} parent=1 // pred_check
      _
    $region191: #{_lambda_.1} parent=1 // pred_check_branch
      %386 = sbr.rel (0) target = $region193
    $region192: #{_lambda_.1} parent=1 // pred_region
      %387 = dma.done [#allocation20], 512
    $region193: #{_lambda_.1} parent=1 // pred_fallthru
      _
    // Predicated region
    $region194: #{_lambda_.1} parent=1 // pred_check
      _
    $region195: #{_lambda_.1} parent=1 // pred_check_branch
      %389 = sbr.rel (0) target = $region197
    $region196: #{_lambda_.1} parent=1 // pred_region
      %390 = dma.done [#allocation23], 256
    $region197: #{_lambda_.1} parent=1 // pred_fallthru
      _
    // Predicated region
    $region198: #{_lambda_.1} parent=1 // pred_check
      _
    $region199: #{_lambda_.1} parent=1 // pred_check_branch
      %392 = sbr.rel (0) target = $region201
    $region200: #{_lambda_.1} parent=1 // pred_region
      %393 = dma.done [#allocation23], 32
    $region201: #{_lambda_.1} parent=1 // pred_fallthru
      _
    // Predicated region
    $region202: #{_lambda_.1} parent=1 // pred_check
      _
    $region203: #{_lambda_.1} parent=1 // pred_check_branch
      %395 = sbr.rel (0) target = $region205
    $region204: #{_lambda_.1} parent=1 // pred_region
      %396 = dma.done [#allocation26], 256
    $region205: #{_lambda_.1} parent=1 // pred_fallthru
      _
    // Predicated region
    $region206: #{_lambda_.1} parent=1 // pred_check
      _
    $region207: #{_lambda_.1} parent=1 // pred_check_branch
      %398 = sbr.rel (0) target = $region209
    $region208: #{_lambda_.1} parent=1 // pred_region
      %399 = dma.done [#allocation26], 256
    $region209: #{_lambda_.1} parent=1 // pred_fallthru
      _
    // Predicated region
    $region210: #{_lambda_.1} parent=1 // pred_check
      _
    $region211: #{_lambda_.1} parent=1 // pred_check_branch
      %401 = sbr.rel (0) target = $region213
    $region212: #{_lambda_.1} parent=1 // pred_region
      %402 = dma.done [#allocation29], 1024
    $region213: #{_lambda_.1} parent=1 // pred_fallthru
      _
    // Predicated region
    $region214: #{_lambda_.1} parent=1 // pred_check
      _
    $region215: #{_lambda_.1} parent=1 // pred_check_branch
      %404 = sbr.rel (0) target = $region217
    $region216: #{_lambda_.1} parent=1 // pred_region
      %405 = dma.done [#allocation29], 128
    $region217: #{_lambda_.1} parent=1 // pred_fallthru
      _
    // Predicated region
    $region218: #{_lambda_.1} parent=1 // pred_check
      _
    $region219: #{_lambda_.1} parent=1 // pred_check_branch
      %407 = sbr.rel (0) target = $region221
    $region220: #{_lambda_.1} parent=1 // pred_region
      %408 = dma.done [#allocation32], 512
    $region221: #{_lambda_.1} parent=1 // pred_fallthru
      _
    %v410 = vld [vmem:[%s1] sm:$0xff]
    %v411 = vld [vmem:[%s1 + $0x8] sm:$0xff]
    %v412 = vld [vmem:[%s1 + $0x10] sm:$0x3f]
    %v413 = vld [vmem:[#allocation12] sm:$0x7]
    %v414 = vpack.c.bf16 %v411, %v410
    %v415 = vpack.c.bf16 %v412, %v412
    %v416 = vld [vmem:[#allocation15] sm:$0x1]
    %v417 = vlaneseq
    %v418 = vshrl.u32 %v417, 7
    %v419 = vsub.s32 0, %v418
    %v420 = vrot.slane %v416, %v419
    %vm421 = vcmask 48128
    %v423 = vsel %vm421, %v414, 0
    %v426 = vsel %vm421, %v415, 0
    %vm428 = vcmask 1042432
    %v430 = vsel %vm428, %v413, 0
    %432 = vmatprep.subr.bf16.mxu0 0
    %433 = vmatpush1.bf16.msra.mxu0 %v430
    %434 = vmatprep.subr.bf16.mxu0 0
    %435 = vmatpush1.bf16.msra.mxu0 0
    %436 = vmatprep.subr.bf16.mxu0 0
    %437 = vmatpush1.bf16.msra.mxu0 0
    %438 = vmatprep.subr.bf16.mxu0 0
    %439 = vmatpush1.bf16.msra.mxu0 0
    %440 = vmatprep.subr.bf16.mxu0 0
    %441 = vmatpush1.bf16.msra.mxu0 0
    %442 = vmatprep.subr.bf16.mxu0 0
    %443 = vmatpush1.bf16.msra.mxu0 0
    %444 = vmatprep.subr.bf16.mxu0 0
    %445 = vmatpush1.bf16.msra.mxu0 0
    %446 = vmatprep.subr.bf16.mxu0 0
    %447 = vmatpush1.bf16.msra.mxu0 0
    %448 = vmatprep.subr.bf16.mxu0 0
    %449 = vmatpush1.bf16.msra.mxu0 0
    %450 = vmatprep.subr.bf16.mxu0 0
    %451 = vmatpush1.bf16.msra.mxu0 0
    %452 = vmatprep.subr.bf16.mxu0 0
    %453 = vmatpush1.bf16.msra.mxu0 0
    %454 = vmatprep.subr.bf16.mxu0 0
    %455 = vmatpush1.bf16.msra.mxu0 0
    %456 = vmatprep.subr.bf16.mxu0 0
    %457 = vmatpush1.bf16.msra.mxu0 0
    %458 = vmatprep.subr.bf16.mxu0 0
    %459 = vmatpush1.bf16.msra.mxu0 0
    %460 = vmatprep.subr.bf16.mxu0 0
    %461 = vmatpush1.bf16.msra.mxu0 0
    %462 = vmatprep.subr.bf16.mxu0 0
    %463 = vmatpush1.bf16.msra.mxu0 0
    %464 = vmatprep.mubr.bf16.mxu0 0
    %465 = vmatmul.mubr.bf16.gmra.mrb[0].mxu0 %v423
    %v466 = vpop.f32.mrb[0].mxu0
    %v467 = vadd.f32 %v420, %v466
    %v468 = vpop.f32.mrb[0].mxu0
    %v469 = vpop.f32.mrb[0].mxu0
    %v470 = vadd.f32 %v420, %v469
    %v471 = vpop.f32.mrb[0].mxu0
    %472 = vmatprep.mubr.bf16.mxu0 0
    %473 = vmatmul.mubr.bf16.gmra.mrb[0].mxu0 %v426
    %v474 = vpop.f32.mrb[0].mxu0
    %v475 = vadd.f32 %v420, %v474
    %v476 = vpop.f32.mrb[0].mxu0
    %v477 = vpop.f32.mrb[0].mxu0
    %v478 = vpop.f32.mrb[0].mxu0
    %479 = vdwg.mxu0
    %v480 = vmax.f32 %v467, 0.0
    %v481 = vmax.f32 %v470, 0.0
    %v482 = vmax.f32 %v475, 0.0
    %v483 = vld [vmem:[#allocation13] sm:$0xf]
    %v484 = vld [vmem:[#allocation13 + $0x4] sm:$0xf]
    %v485 = vld [vmem:[#allocation13 + $0x8] sm:$0xf]
    %v486 = vld [vmem:[#allocation13 + $0xc] sm:$0xf]
    %v487 = vpack.c.bf16 %v481, %v480
    %v488 = vpack.c.bf16 %v482, %v482
    %v489 = vld [vmem:[#allocation15 + $0x1] sm:$0x1]
    %v490 = vlaneseq
    %v491 = vshrl.u32 %v490, 7
    %v492 = vsub.s32 0, %v491
    %v493 = vrot.slane %v489, %v492
    %v498 = vunpack.c.l.b16 %v483
    %v499 = vunpack.c.l.b16 %v484
    %v500 = vunpack.c.l.b16 %v485
    %v501 = vunpack.c.l.b16 %v486
    %v502 = vpack.c.b16 %v499, %v498
    %v503 = vpack.c.b16 %v501, %v500
    %vm506 = vcmask 261120
    %v508 = vsel %vm506, %v487, 0
    %v511 = vsel %vm506, %v488, 0
    %513 = vmatprep.subr.bf16.mxu0 0
    %514 = vmatpush1.bf16.msra.mxu0 %v502
    %515 = vmatprep.subr.bf16.mxu0 0
    %516 = vmatpush1.bf16.msra.mxu0 %v503
    %517 = vmatprep.subr.bf16.mxu0 0
    %518 = vmatpush1.bf16.msra.mxu0 0
    %519 = vmatprep.subr.bf16.mxu0 0
    %520 = vmatpush1.bf16.msra.mxu0 0
    %521 = vmatprep.subr.bf16.mxu0 0
    %522 = vmatpush1.bf16.msra.mxu0 0
    %523 = vmatprep.subr.bf16.mxu0 0
    %524 = vmatpush1.bf16.msra.mxu0 0
    %525 = vmatprep.subr.bf16.mxu0 0
    %526 = vmatpush1.bf16.msra.mxu0 0
    %527 = vmatprep.subr.bf16.mxu0 0
    %528 = vmatpush1.bf16.msra.mxu0 0
    %529 = vmatprep.subr.bf16.mxu0 0
    %530 = vmatpush1.bf16.msra.mxu0 0
    %531 = vmatprep.subr.bf16.mxu0 0
    %532 = vmatpush1.bf16.msra.mxu0 0
    %533 = vmatprep.subr.bf16.mxu0 0
    %534 = vmatpush1.bf16.msra.mxu0 0
    %535 = vmatprep.subr.bf16.mxu0 0
    %536 = vmatpush1.bf16.msra.mxu0 0
    %537 = vmatprep.subr.bf16.mxu0 0
    %538 = vmatpush1.bf16.msra.mxu0 0
    %539 = vmatprep.subr.bf16.mxu0 0
    %540 = vmatpush1.bf16.msra.mxu0 0
    %541 = vmatprep.subr.bf16.mxu0 0
    %542 = vmatpush1.bf16.msra.mxu0 0
    %543 = vmatprep.subr.bf16.mxu0 0
    %544 = vmatpush1.bf16.msra.mxu0 0
    %545 = vmatprep.mubr.bf16.mxu0 0
    %546 = vmatmul.mubr.bf16.gmra.mrb[0].mxu0 %v508
    %v547 = vpop.f32.mrb[0].mxu0
    %v548 = vadd.f32 %v493, %v547
    %v549 = vpop.f32.mrb[0].mxu0
    %v550 = vpop.f32.mrb[0].mxu0
    %v551 = vadd.f32 %v493, %v550
    %v552 = vpop.f32.mrb[0].mxu0
    %553 = vmatprep.mubr.bf16.mxu0 0
    %554 = vmatmul.mubr.bf16.gmra.mrb[0].mxu0 %v511
    %v555 = vpop.f32.mrb[0].mxu0
    %v556 = vadd.f32 %v493, %v555
    %v557 = vpop.f32.mrb[0].mxu0
    %v558 = vpop.f32.mrb[0].mxu0
    %v559 = vpop.f32.mrb[0].mxu0
    %560 = vdwg.mxu0
    %v561 = vmax.f32 %v548, 0.0
    %v562 = vmax.f32 %v551, 0.0
    %v563 = vmax.f32 %v556, 0.0
    %s564 = scalar_lea.vmem [#allocation13], 16
    %v565 = vld [vmem:[%s564] sm:$0xf]
    %v566 = vld [vmem:[%s564 + $0x4] sm:$0xf]
    %v567 = vld [vmem:[%s564 + $0x8] sm:$0xf]
    %v568 = vld [vmem:[%s564 + $0xc] sm:$0xf]
    %v569 = vpack.c.bf16 %v562, %v561
    %v570 = vpack.c.bf16 %v563, %v563
    %v571 = vld [vmem:[#allocation15 + $0x2] sm:$0x1]
    %v572 = vlaneseq
    %v573 = vshrl.u32 %v572, 7
    %v574 = vsub.s32 0, %v573
    %v575 = vrot.slane %v571, %v574
    %v580 = vunpack.c.l.b16 %v565
    %v581 = vunpack.c.l.b16 %v566
    %v582 = vunpack.c.l.b16 %v567
    %v583 = vunpack.c.l.b16 %v568
    %v584 = vpack.c.b16 %v581, %v580
    %v585 = vpack.c.b16 %v583, %v582
    %v589 = vsel %vm506, %v569, 0
    %v592 = vsel %vm506, %v570, 0
    %594 = vmatprep.subr.bf16.mxu0 0
    %595 = vmatpush1.bf16.msra.mxu0 %v584
    %596 = vmatprep.subr.bf16.mxu0 0
    %597 = vmatpush1.bf16.msra.mxu0 %v585
    %598 = vmatprep.subr.bf16.mxu0 0
    %599 = vmatpush1.bf16.msra.mxu0 0
    %600 = vmatprep.subr.bf16.mxu0 0
    %601 = vmatpush1.bf16.msra.mxu0 0
    %602 = vmatprep.subr.bf16.mxu0 0
    %603 = vmatpush1.bf16.msra.mxu0 0
    %604 = vmatprep.subr.bf16.mxu0 0
    %605 = vmatpush1.bf16.msra.mxu0 0
    %606 = vmatprep.subr.bf16.mxu0 0
    %607 = vmatpush1.bf16.msra.mxu0 0
    %608 = vmatprep.subr.bf16.mxu0 0
    %609 = vmatpush1.bf16.msra.mxu0 0
    %610 = vmatprep.subr.bf16.mxu0 0
    %611 = vmatpush1.bf16.msra.mxu0 0
    %612 = vmatprep.subr.bf16.mxu0 0
    %613 = vmatpush1.bf16.msra.mxu0 0
    %614 = vmatprep.subr.bf16.mxu0 0
    %615 = vmatpush1.bf16.msra.mxu0 0
    %616 = vmatprep.subr.bf16.mxu0 0
    %617 = vmatpush1.bf16.msra.mxu0 0
    %618 = vmatprep.subr.bf16.mxu0 0
    %619 = vmatpush1.bf16.msra.mxu0 0
    %620 = vmatprep.subr.bf16.mxu0 0
    %621 = vmatpush1.bf16.msra.mxu0 0
    %622 = vmatprep.subr.bf16.mxu0 0
    %623 = vmatpush1.bf16.msra.mxu0 0
    %624 = vmatprep.subr.bf16.mxu0 0
    %625 = vmatpush1.bf16.msra.mxu0 0
    %626 = vmatprep.mubr.bf16.mxu0 0
    %627 = vmatmul.mubr.bf16.gmra.mrb[0].mxu0 %v589
    %v628 = vpop.f32.mrb[0].mxu0
    %v629 = vadd.f32 %v575, %v628
    %v630 = vpop.f32.mrb[0].mxu0
    %v631 = vpop.f32.mrb[0].mxu0
    %v632 = vadd.f32 %v575, %v631
    %v633 = vpop.f32.mrb[0].mxu0
    %634 = vmatprep.mubr.bf16.mxu0 0
    %635 = vmatmul.mubr.bf16.gmra.mrb[0].mxu0 %v592
    %v636 = vpop.f32.mrb[0].mxu0
    %v637 = vadd.f32 %v575, %v636
    %v638 = vpop.f32.mrb[0].mxu0
    %v639 = vpop.f32.mrb[0].mxu0
    %v640 = vpop.f32.mrb[0].mxu0
    %641 = vdwg.mxu0
    %v642 = vld [vmem:[#allocation15 + $0x3] sm:$0x1]
    %v643 = vld [vmem:[#allocation15 + $0x4] sm:$0x1]
    %v644 = vsel %vm506, %v629, 0.0
    %645 = vadd.xlane.f32.xlu0 %v644
    %v646 = vpop.xlane.xlu0 %645
    %v647 = vsel %vm506, %v632, 0.0
    %648 = vadd.xlane.f32.xlu0 %v647
    %v649 = vpop.xlane.xlu0 %648
    %vm650 = vcmask 259072
    %v651 = vsel %vm650, %v637, 0.0
    %652 = vadd.xlane.f32.xlu0 %v651
    %v653 = vpop.xlane.xlu0 %652
    %v654 = vrcp.pop 32.0
    %v655 = vmul.f32 %v646, %v654
    %v656 = vmul.f32 %v649, %v654
    %v657 = vmul.f32 %v653, %v654
    %v658 = vsub.f32 %v629, %v655
    %v659 = vsub.f32 %v632, %v656
    %v660 = vsub.f32 %v637, %v657
    %v661 = vmul.f32 %v658, %v658
    %v662 = vmul.f32 %v659, %v659
    %v663 = vmul.f32 %v660, %v660
    %v664 = vsel %vm506, %v661, 0.0
    %665 = vadd.xlane.f32.xlu0 %v664
    %v666 = vpop.xlane.xlu0 %665
    %v667 = vsel %vm506, %v662, 0.0
    %668 = vadd.xlane.f32.xlu0 %v667
    %v669 = vpop.xlane.xlu0 %668
    %v670 = vsel %vm650, %v663, 0.0
    %671 = vadd.xlane.f32.xlu0 %v670
    %v672 = vpop.xlane.xlu0 %671
    %v673 = vmul.f32 %v666, %v654
    %v674 = vmul.f32 %v669, %v654
    %v675 = vmul.f32 %v672, %v654
    %v676 = vadd.f32 %v673, 1e-05
    %v677 = vadd.f32 %v674, 1e-05
    %v678 = vadd.f32 %v675, 1e-05
    %v679 = vrsqrt.pop %v676
    %v680 = vrsqrt.pop %v677
    %v681 = vrsqrt.pop %v678
    %v682 = vmul.f32 %v658, %v679
    %v683 = vmul.f32 %v659, %v680
    %v684 = vmul.f32 %v660, %v681
    %v685 = vlaneseq
    %v686 = vshrl.u32 %v685, 7
    %v687 = vsub.s32 0, %v686
    %v688 = vrot.slane %v642, %v687
    %v689 = vmul.f32 %v682, %v688
    %v690 = vmul.f32 %v683, %v688
    %v691 = vmul.f32 %v684, %v688
    %v692 = vlaneseq
    %v693 = vshrl.u32 %v692, 7
    %v694 = vsub.s32 0, %v693
    %v695 = vrot.slane %v643, %v694
    %v696 = vadd.f32 %v689, %v695
    %v697 = vadd.f32 %v690, %v695
    %v698 = vadd.f32 %v691, %v695
    %v699 = vld [vmem:[%s5] sm:$0xff]
    %v700 = vld [vmem:[%s5 + $0x8] sm:$0xff]
    %v701 = vld [vmem:[%s5 + $0x10] sm:$0xff]
    %v702 = vld [vmem:[%s5 + $0x18] sm:$0xff]
    %v703 = vld [vmem:[%s5 + $0x20] sm:$0xff]
    %v704 = vld [vmem:[%s5 + $0x28] sm:$0xff]
    %v705 = vld [vmem:[%s5 + $0x30] sm:$0xff]
    %v706 = vld [vmem:[%s5 + $0x38] sm:$0xff]
    %v707 = vld [vmem:[%s5 + $0x40] sm:$0xff]
    %v708 = vld [vmem:[%s5 + $0x48] sm:$0xff]
    %v709 = vld [vmem:[%s5 + $0x50] sm:$0xff]
    %v710 = vld [vmem:[%s5 + $0x58] sm:$0xff]
    %v711 = vld [vmem:[#allocation2] sm:$0xff]
    %v712 = vld [vmem:[#allocation2 + $0x8] sm:$0xff]
    %v713 = vld [vmem:[#allocation2 + $0x10] sm:$0x3f]
    %v714 = vld [vmem:[%s3] sm:$0xff]
    %v715 = vld [vmem:[%s3 + $0x8] sm:$0xff]
    %v716 = vld [vmem:[%s3 + $0x10] sm:$0xff]
    %v717 = vld [vmem:[%s3 + $0x18] sm:$0xff]
    %v718 = vld [vmem:[%s3 + $0x20] sm:$0xff]
    %v719 = vld [vmem:[%s3 + $0x28] sm:$0xff]
    %vm720 = vcmask 179200
    %v722 = vsel %vm720, %v699, 0
    %v725 = vsel %vm720, %v700, 0
    %v728 = vsel %vm720, %v701, 0
    %v731 = vsel %vm720, %v702, 0
    %v734 = vsel %vm720, %v703, 0
    %v737 = vsel %vm720, %v704, 0
    %v740 = vsel %vm720, %v705, 0
    %v743 = vsel %vm720, %v706, 0
    %v746 = vsel %vm720, %v707, 0
    %v749 = vsel %vm720, %v708, 0
    %v752 = vsel %vm720, %v709, 0
    %v755 = vsel %vm720, %v710, 0
    %vm757 = vcmask 1045504
    %v759 = vsel %vm757, %v698, 0
    %761 = vmatprep.subr.mxu0 0.0
    %762 = vmatpush1.msra.mxu0 %v696
    %763 = vmatprep.subr.mxu0 0.0
    %764 = vmatpush1.msra.mxu0 %v697
    %765 = vmatprep.subr.mxu0 0.0
    %766 = vmatpush1.msra.mxu0 %v759
    %767 = vmatprep.subr.mxu0 0.0
    %768 = vmatpush1.msra.mxu0 0.0
    %769 = vmatprep.subr.mxu0 0.0
    %770 = vmatpush1.msra.mxu0 0.0
    %771 = vmatprep.subr.mxu0 0.0
    %772 = vmatpush1.msra.mxu0 0.0
    %773 = vmatprep.subr.mxu0 0.0
    %774 = vmatpush1.msra.mxu0 0.0
    %775 = vmatprep.subr.mxu0 0.0
    %776 = vmatpush1.msra.mxu0 0.0
    %777 = vmatprep.subr.mxu0 0.0
    %778 = vmatpush1.msra.mxu0 0.0
    %779 = vmatprep.subr.mxu0 0.0
    %780 = vmatpush1.msra.mxu0 0.0
    %781 = vmatprep.subr.mxu0 0.0
    %782 = vmatpush1.msra.mxu0 0.0
    %783 = vmatprep.subr.mxu0 0.0
    %784 = vmatpush1.msra.mxu0 0.0
    %785 = vmatprep.subr.mxu0 0.0
    %786 = vmatpush1.msra.mxu0 0.0
    %787 = vmatprep.subr.mxu0 0.0
    %788 = vmatpush1.msra.mxu0 0.0
    %789 = vmatprep.subr.mxu0 0.0
    %790 = vmatpush1.msra.mxu0 0.0
    %791 = vmatprep.subr.mxu0 0.0
    %792 = vmatpush1.msra.mxu0 0.0
    %793 = vmatprep.subr.mxu0 0.0
    %794 = vmatpush1.msra.mxu0 0.0
    %795 = vmatprep.subr.mxu0 0.0
    %796 = vmatpush1.msra.mxu0 0.0
    %797 = vmatprep.subr.mxu0 0.0
    %798 = vmatpush1.msra.mxu0 0.0
    %799 = vmatprep.subr.mxu0 0.0
    %800 = vmatpush1.msra.mxu0 0.0
    %801 = vmatprep.subr.mxu0 0.0
    %802 = vmatpush1.msra.mxu0 0.0
    %803 = vmatprep.subr.mxu0 0.0
    %804 = vmatpush1.msra.mxu0 0.0
    %805 = vmatprep.subr.mxu0 0.0
    %806 = vmatpush1.msra.mxu0 0.0
    %807 = vmatprep.subr.mxu0 0.0
    %808 = vmatpush1.msra.mxu0 0.0
    %809 = vmatprep.subr.mxu0 0.0
    %810 = vmatpush1.msra.mxu0 0.0
    %811 = vmatprep.subr.mxu0 0.0
    %812 = vmatpush1.msra.mxu0 0.0
    %813 = vmatprep.subr.mxu0 0.0
    %814 = vmatpush1.msra.mxu0 0.0
    %815 = vmatprep.subr.mxu0 0.0
    %816 = vmatpush1.msra.mxu0 0.0
    %817 = vmatprep.subr.mxu0 0.0
    %818 = vmatpush1.msra.mxu0 0.0
    %819 = vmatprep.subr.mxu0 0.0
    %820 = vmatpush1.msra.mxu0 0.0
    %821 = vmatprep.subr.mxu0 0.0
    %822 = vmatpush1.msra.mxu0 0.0
    %823 = vmatprep.subr.mxu0 0.0
    %824 = vmatpush1.msra.mxu0 0.0
    %825 = vmatprep.mubr.f32.mxu0 0.0
    %826 = vmatmul.mubr.f32.gmra.mrb[0].mxu0 %v722
    %v827 = vpop.f32.mrb[0].mxu0
    %v828 = vadd.f32 0.0, %v827
    %v829 = vpop.f32.mrb[0].mxu0
    %830 = vmatprep.mubr.f32.mxu0 0.0
    %831 = vmatmul.mubr.f32.gmra.mrb[0].mxu0 %v725
    %v832 = vpop.f32.mrb[0].mxu0
    %v833 = vadd.f32 0.0, %v832
    %v834 = vpop.f32.mrb[0].mxu0
    %835 = vmatprep.mubr.f32.mxu0 0.0
    %836 = vmatmul.mubr.f32.gmra.mrb[0].mxu0 %v728
    %v837 = vpop.f32.mrb[0].mxu0
    %v838 = vadd.f32 0.0, %v837
    %v839 = vpop.f32.mrb[0].mxu0
    %840 = vmatprep.mubr.f32.mxu0 0.0
    %841 = vmatmul.mubr.f32.gmra.mrb[0].mxu0 %v731
    %v842 = vpop.f32.mrb[0].mxu0
    %v843 = vadd.f32 0.0, %v842
    %v844 = vpop.f32.mrb[0].mxu0
    %845 = vmatprep.mubr.f32.mxu0 0.0
    %846 = vmatmul.mubr.f32.gmra.mrb[0].mxu0 %v734
    %v847 = vpop.f32.mrb[0].mxu0
    %v848 = vadd.f32 0.0, %v847
    %v849 = vpop.f32.mrb[0].mxu0
    %850 = vmatprep.mubr.f32.mxu0 0.0
    %851 = vmatmul.mubr.f32.gmra.mrb[0].mxu0 %v737
    %v852 = vpop.f32.mrb[0].mxu0
    %v853 = vadd.f32 0.0, %v852
    %v854 = vpop.f32.mrb[0].mxu0
    %855 = vmatprep.mubr.f32.mxu0 0.0
    %856 = vmatmul.mubr.f32.gmra.mrb[0].mxu0 %v740
    %v857 = vpop.f32.mrb[0].mxu0
    %v858 = vadd.f32 0.0, %v857
    %v859 = vpop.f32.mrb[0].mxu0
    %860 = vmatprep.mubr.f32.mxu0 0.0
    %861 = vmatmul.mubr.f32.gmra.mrb[0].mxu0 %v743
    %v862 = vpop.f32.mrb[0].mxu0
    %v863 = vadd.f32 0.0, %v862
    %v864 = vpop.f32.mrb[0].mxu0
    %865 = vmatprep.mubr.f32.mxu0 0.0
    %866 = vmatmul.mubr.f32.gmra.mrb[0].mxu0 %v746
    %v867 = vpop.f32.mrb[0].mxu0
    %v868 = vadd.f32 0.0, %v867
    %v869 = vpop.f32.mrb[0].mxu0
    %870 = vmatprep.mubr.f32.mxu0 0.0
    %871 = vmatmul.mubr.f32.gmra.mrb[0].mxu0 %v749
    %v872 = vpop.f32.mrb[0].mxu0
    %v873 = vadd.f32 0.0, %v872
    %v874 = vpop.f32.mrb[0].mxu0
    %875 = vmatprep.mubr.f32.mxu0 0.0
    %876 = vmatmul.mubr.f32.gmra.mrb[0].mxu0 %v752
    %v877 = vpop.f32.mrb[0].mxu0
    %v878 = vadd.f32 0.0, %v877
    %v879 = vpop.f32.mrb[0].mxu0
    %880 = vmatprep.mubr.f32.mxu0 0.0
    %881 = vmatmul.mubr.f32.gmra.mrb[0].mxu0 %v755
    %v882 = vpop.f32.mrb[0].mxu0
    %v883 = vadd.f32 0.0, %v882
    %v884 = vpop.f32.mrb[0].mxu0
    %885 = vdwg.mxu0
    %v886 = vld [vmem:[%s27] sm:$0xf]
    %v887 = vld [vmem:[%s27 + $0x4] sm:$0xf]
    %v888 = vld [vmem:[%s27 + $0x8] sm:$0xf]
    %v889 = vld [vmem:[%s27 + $0xc] sm:$0xf]
    %v890 = vpack.c.bf16 %v833, %v828
    %v891 = vpack.c.bf16 %v843, %v838
    %v892 = vpack.c.bf16 %v853, %v848
    %s893 = scalar_lea.vmem %s27, 16
    %v894 = vld [vmem:[%s893] sm:$0xf]
    %v895 = vld [vmem:[%s893 + $0x4] sm:$0xf]
    %v896 = vld [vmem:[%s893 + $0x8] sm:$0xf]
    %v897 = vld [vmem:[%s893 + $0xc] sm:$0xf]
    %v898 = vpack.c.bf16 %v863, %v858
    %v899 = vpack.c.bf16 %v873, %v868
    %v900 = vpack.c.bf16 %v883, %v878
    %v905 = vunpack.c.l.b16 %v894
    %v906 = vunpack.c.l.b16 %v895
    %v907 = vunpack.c.l.b16 %v896
    %v908 = vunpack.c.l.b16 %v897
    %v909 = vpack.c.b16 %v906, %v905
    %v910 = vpack.c.b16 %v908, %v907
    %v914 = vsel %vm506, %v898, 0
    %v917 = vsel %vm506, %v899, 0
    %v920 = vsel %vm506, %v900, 0
    %922 = vmatprep.subr.bf16.mxu0 0
    %923 = vmatpush1.bf16.msra.mxu0 %v909
    %924 = vmatprep.subr.bf16.mxu0 0
    %925 = vmatpush1.bf16.msra.mxu0 %v910
    %926 = vmatprep.subr.bf16.mxu0 0
    %927 = vmatpush1.bf16.msra.mxu0 0
    %928 = vmatprep.subr.bf16.mxu0 0
    %929 = vmatpush1.bf16.msra.mxu0 0
    %930 = vmatprep.subr.bf16.mxu0 0
    %931 = vmatpush1.bf16.msra.mxu0 0
    %932 = vmatprep.subr.bf16.mxu0 0
    %933 = vmatpush1.bf16.msra.mxu0 0
    %934 = vmatprep.subr.bf16.mxu0 0
    %935 = vmatpush1.bf16.msra.mxu0 0
    %936 = vmatprep.subr.bf16.mxu0 0
    %937 = vmatpush1.bf16.msra.mxu0 0
    %938 = vmatprep.subr.bf16.mxu0 0
    %939 = vmatpush1.bf16.msra.mxu0 0
    %940 = vmatprep.subr.bf16.mxu0 0
    %941 = vmatpush1.bf16.msra.mxu0 0
    %942 = vmatprep.subr.bf16.mxu0 0
    %943 = vmatpush1.bf16.msra.mxu0 0
    %944 = vmatprep.subr.bf16.mxu0 0
    %945 = vmatpush1.bf16.msra.mxu0 0
    %946 = vmatprep.subr.bf16.mxu0 0
    %947 = vmatpush1.bf16.msra.mxu0 0
    %948 = vmatprep.subr.bf16.mxu0 0
    %949 = vmatpush1.bf16.msra.mxu0 0
    %950 = vmatprep.subr.bf16.mxu0 0
    %951 = vmatpush1.bf16.msra.mxu0 0
    %952 = vmatprep.subr.bf16.mxu0 0
    %953 = vmatpush1.bf16.msra.mxu0 0
    %954 = vmatprep.mubr.bf16.mxu0 0
    %955 = vmatmul.mubr.bf16.gmra.mrb[0].mxu0 %v914
    %v956 = vpop.f32.mrb[0].mxu0
    %v957 = vadd.f32 0.0, %v956
    %v958 = vpop.f32.mrb[0].mxu0
    %v959 = vpop.f32.mrb[0].mxu0
    %v960 = vadd.f32 0.0, %v959
    %v961 = vpop.f32.mrb[0].mxu0
    %962 = vmatprep.mubr.bf16.mxu0 0
    %963 = vmatmul.mubr.bf16.gmra.mrb[0].mxu0 %v917
    %v964 = vpop.f32.mrb[0].mxu0
    %v965 = vadd.f32 0.0, %v964
    %v966 = vpop.f32.mrb[0].mxu0
    %v967 = vpop.f32.mrb[0].mxu0
    %v968 = vadd.f32 0.0, %v967
    %v969 = vpop.f32.mrb[0].mxu0
    %970 = vmatprep.mubr.bf16.mxu0 0
    %971 = vmatmul.mubr.bf16.gmra.mrb[0].mxu0 %v920
    %v972 = vpop.f32.mrb[0].mxu0
    %v973 = vadd.f32 0.0, %v972
    %v974 = vpop.f32.mrb[0].mxu0
    %v975 = vpop.f32.mrb[0].mxu0
    %v976 = vadd.f32 0.0, %v975
    %v977 = vpop.f32.mrb[0].mxu0
    %978 = vdwg.mxu0
    %v983 = vunpack.c.l.b16 %v886
    %v984 = vunpack.c.l.b16 %v887
    %v985 = vunpack.c.l.b16 %v888
    %v986 = vunpack.c.l.b16 %v889
    %v987 = vpack.c.b16 %v984, %v983
    %v988 = vpack.c.b16 %v986, %v985
    %v992 = vsel %vm506, %v890, 0
    %v995 = vsel %vm506, %v891, 0
    %v998 = vsel %vm506, %v892, 0
    %1000 = vmatprep.subr.bf16.mxu0 0
    %1001 = vmatpush1.bf16.msra.mxu0 %v987
    %1002 = vmatprep.subr.bf16.mxu0 0
    %1003 = vmatpush1.bf16.msra.mxu0 %v988
    %1004 = vmatprep.subr.bf16.mxu0 0
    %1005 = vmatpush1.bf16.msra.mxu0 0
    %1006 = vmatprep.subr.bf16.mxu0 0
    %1007 = vmatpush1.bf16.msra.mxu0 0
    %1008 = vmatprep.subr.bf16.mxu0 0
    %1009 = vmatpush1.bf16.msra.mxu0 0
    %1010 = vmatprep.subr.bf16.mxu0 0
    %1011 = vmatpush1.bf16.msra.mxu0 0
    %1012 = vmatprep.subr.bf16.mxu0 0
    %1013 = vmatpush1.bf16.msra.mxu0 0
    %1014 = vmatprep.subr.bf16.mxu0 0
    %1015 = vmatpush1.bf16.msra.mxu0 0
    %1016 = vmatprep.subr.bf16.mxu0 0
    %1017 = vmatpush1.bf16.msra.mxu0 0
    %1018 = vmatprep.subr.bf16.mxu0 0
    %1019 = vmatpush1.bf16.msra.mxu0 0
    %1020 = vmatprep.subr.bf16.mxu0 0
    %1021 = vmatpush1.bf16.msra.mxu0 0
    %1022 = vmatprep.subr.bf16.mxu0 0
    %1023 = vmatpush1.bf16.msra.mxu0 0
    %1024 = vmatprep.subr.bf16.mxu0 0
    %1025 = vmatpush1.bf16.msra.mxu0 0
    %1026 = vmatprep.subr.bf16.mxu0 0
    %1027 = vmatpush1.bf16.msra.mxu0 0
    %1028 = vmatprep.subr.bf16.mxu0 0
    %1029 = vmatpush1.bf16.msra.mxu0 0
    %1030 = vmatprep.subr.bf16.mxu0 0
    %1031 = vmatpush1.bf16.msra.mxu0 0
    %1032 = vmatprep.mubr.bf16.mxu0 0
    %1033 = vmatmul.mubr.bf16.gmra.mrb[0].mxu0 %v992
    %v1034 = vpop.f32.mrb[0].mxu0
    %v1035 = vadd.f32 %v957, %v1034
    %v1036 = vpop.f32.mrb[0].mxu0
    %v1037 = vpop.f32.mrb[0].mxu0
    %v1038 = vadd.f32 %v960, %v1037
    %v1039 = vpop.f32.mrb[0].mxu0
    %1040 = vmatprep.mubr.bf16.mxu0 0
    %1041 = vmatmul.mubr.bf16.gmra.mrb[0].mxu0 %v995
    %v1042 = vpop.f32.mrb[0].mxu0
    %v1043 = vadd.f32 %v965, %v1042
    %v1044 = vpop.f32.mrb[0].mxu0
    %v1045 = vpop.f32.mrb[0].mxu0
    %v1046 = vadd.f32 %v968, %v1045
    %v1047 = vpop.f32.mrb[0].mxu0
    %1048 = vmatprep.mubr.bf16.mxu0 0
    %1049 = vmatmul.mubr.bf16.gmra.mrb[0].mxu0 %v998
    %v1050 = vpop.f32.mrb[0].mxu0
    %v1051 = vadd.f32 %v973, %v1050
    %v1052 = vpop.f32.mrb[0].mxu0
    %v1053 = vpop.f32.mrb[0].mxu0
    %v1054 = vadd.f32 %v976, %v1053
    %v1055 = vpop.f32.mrb[0].mxu0
    %1056 = vdwg.mxu0
    %v1057 = vld [vmem:[%s29] sm:$0x1]
    %v1058 = vpack.c.bf16 %v715, %v714
    %v1059 = vpack.c.bf16 %v717, %v716
    %v1060 = vpack.c.bf16 %v719, %v718
    %vm1061 = vcmask 15360
    %v1063 = vsel %vm1061, %v1058, 0
    %v1066 = vsel %vm1061, %v1059, 0
    %v1069 = vsel %vm1061, %v1060, 0
    %vm1071 = vcmask 1040384
    %v1073 = vsel %vm1071, %v1057, 0
    %1075 = vmatprep.subr.bf16.mxu0 0
    %1076 = vmatpush1.bf16.msra.mxu0 %v1073
    %1077 = vmatprep.subr.bf16.mxu0 0
    %1078 = vmatpush1.bf16.msra.mxu0 0
    %1079 = vmatprep.subr.bf16.mxu0 0
    %1080 = vmatpush1.bf16.msra.mxu0 0
    %1081 = vmatprep.subr.bf16.mxu0 0
    %1082 = vmatpush1.bf16.msra.mxu0 0
    %1083 = vmatprep.subr.bf16.mxu0 0
    %1084 = vmatpush1.bf16.msra.mxu0 0
    %1085 = vmatprep.subr.bf16.mxu0 0
    %1086 = vmatpush1.bf16.msra.mxu0 0
    %1087 = vmatprep.subr.bf16.mxu0 0
    %1088 = vmatpush1.bf16.msra.mxu0 0
    %1089 = vmatprep.subr.bf16.mxu0 0
    %1090 = vmatpush1.bf16.msra.mxu0 0
    %1091 = vmatprep.subr.bf16.mxu0 0
    %1092 = vmatpush1.bf16.msra.mxu0 0
    %1093 = vmatprep.subr.bf16.mxu0 0
    %1094 = vmatpush1.bf16.msra.mxu0 0
    %1095 = vmatprep.subr.bf16.mxu0 0
    %1096 = vmatpush1.bf16.msra.mxu0 0
    %1097 = vmatprep.subr.bf16.mxu0 0
    %1098 = vmatpush1.bf16.msra.mxu0 0
    %1099 = vmatprep.subr.bf16.mxu0 0
    %1100 = vmatpush1.bf16.msra.mxu0 0
    %1101 = vmatprep.subr.bf16.mxu0 0
    %1102 = vmatpush1.bf16.msra.mxu0 0
    %1103 = vmatprep.subr.bf16.mxu0 0
    %1104 = vmatpush1.bf16.msra.mxu0 0
    %1105 = vmatprep.subr.bf16.mxu0 0
    %1106 = vmatpush1.bf16.msra.mxu0 0
    %1107 = vmatprep.mubr.bf16.mxu0 0
    %1108 = vmatmul.mubr.bf16.gmra.mrb[0].mxu0 %v1063
    %v1109 = vpop.f32.mrb[0].mxu0
    %v1110 = vadd.f32 0.0, %v1109
    %v1111 = vpop.f32.mrb[0].mxu0
    %v1112 = vpop.f32.mrb[0].mxu0
    %v1113 = vadd.f32 0.0, %v1112
    %v1114 = vpop.f32.mrb[0].mxu0
    %1115 = vmatprep.mubr.bf16.mxu0 0
    %1116 = vmatmul.mubr.bf16.gmra.mrb[0].mxu0 %v1066
    %v1117 = vpop.f32.mrb[0].mxu0
    %v1118 = vadd.f32 0.0, %v1117
    %v1119 = vpop.f32.mrb[0].mxu0
    %v1120 = vpop.f32.mrb[0].mxu0
    %v1121 = vadd.f32 0.0, %v1120
    %v1122 = vpop.f32.mrb[0].mxu0
    %1123 = vmatprep.mubr.bf16.mxu0 0
    %1124 = vmatmul.mubr.bf16.gmra.mrb[0].mxu0 %v1069
    %v1125 = vpop.f32.mrb[0].mxu0
    %v1126 = vadd.f32 0.0, %v1125
    %v1127 = vpop.f32.mrb[0].mxu0
    %v1128 = vpop.f32.mrb[0].mxu0
    %v1129 = vadd.f32 0.0, %v1128
    %v1130 = vpop.f32.mrb[0].mxu0
    %1131 = vdwg.mxu0
    %v1132 = vadd.f32 %v1035, %v1110
    %v1133 = vadd.f32 %v1038, %v1113
    %v1134 = vadd.f32 %v1043, %v1118
    %v1135 = vadd.f32 %v1046, %v1121
    %v1136 = vadd.f32 %v1051, %v1126
    %v1137 = vadd.f32 %v1054, %v1129
    %v1138 = vld [vmem:[%s31] sm:$0x1]
    %v1139 = vlaneseq
    %v1140 = vshrl.u32 %v1139, 7
    %v1141 = vsub.s32 0, %v1140
    %v1142 = vrot.slane %v1138, %v1141
    %v1143 = vadd.f32 %v1132, %v1142
    %v1144 = vadd.f32 %v1133, %v1142
    %v1145 = vadd.f32 %v1134, %v1142
    %v1146 = vadd.f32 %v1135, %v1142
    %v1147 = vadd.f32 %v1136, %v1142
    %v1148 = vadd.f32 %v1137, %v1142
    %v1149 = vmax.f32 %v1143, 0.0
    %v1150 = vmax.f32 %v1144, 0.0
    %v1151 = vmax.f32 %v1145, 0.0
    %v1152 = vmax.f32 %v1146, 0.0
    %v1153 = vmax.f32 %v1147, 0.0
    %v1154 = vmax.f32 %v1148, 0.0
    %s1155 = scalar_lea.vmem %s27, 32
    %v1156 = vld [vmem:[%s1155] sm:$0xf]
    %v1157 = vld [vmem:[%s1155 + $0x4] sm:$0xf]
    %v1158 = vld [vmem:[%s1155 + $0x8] sm:$0xf]
    %v1159 = vld [vmem:[%s1155 + $0xc] sm:$0xf]
    %v1160 = vpack.c.bf16 %v1150, %v1149
    %v1161 = vpack.c.bf16 %v1152, %v1151
    %v1162 = vpack.c.bf16 %v1154, %v1153
    %v1163 = vld [vmem:[%s31 + $0x1] sm:$0x1]
    %v1164 = vlaneseq
    %v1165 = vshrl.u32 %v1164, 7
    %v1166 = vsub.s32 0, %v1165
    %v1167 = vrot.slane %v1163, %v1166
    %v1172 = vunpack.c.l.b16 %v1156
    %v1173 = vunpack.c.l.b16 %v1157
    %v1174 = vunpack.c.l.b16 %v1158
    %v1175 = vunpack.c.l.b16 %v1159
    %v1176 = vpack.c.b16 %v1173, %v1172
    %v1177 = vpack.c.b16 %v1175, %v1174
    %v1181 = vsel %vm506, %v1160, 0
    %v1184 = vsel %vm506, %v1161, 0
    %v1187 = vsel %vm506, %v1162, 0
    %1189 = vmatprep.subr.bf16.mxu0 0
    %1190 = vmatpush1.bf16.msra.mxu0 %v1176
    %1191 = vmatprep.subr.bf16.mxu0 0
    %1192 = vmatpush1.bf16.msra.mxu0 %v1177
    %1193 = vmatprep.subr.bf16.mxu0 0
    %1194 = vmatpush1.bf16.msra.mxu0 0
    %1195 = vmatprep.subr.bf16.mxu0 0
    %1196 = vmatpush1.bf16.msra.mxu0 0
    %1197 = vmatprep.subr.bf16.mxu0 0
    %1198 = vmatpush1.bf16.msra.mxu0 0
    %1199 = vmatprep.subr.bf16.mxu0 0
    %1200 = vmatpush1.bf16.msra.mxu0 0
    %1201 = vmatprep.subr.bf16.mxu0 0
    %1202 = vmatpush1.bf16.msra.mxu0 0
    %1203 = vmatprep.subr.bf16.mxu0 0
    %1204 = vmatpush1.bf16.msra.mxu0 0
    %1205 = vmatprep.subr.bf16.mxu0 0
    %1206 = vmatpush1.bf16.msra.mxu0 0
    %1207 = vmatprep.subr.bf16.mxu0 0
    %1208 = vmatpush1.bf16.msra.mxu0 0
    %1209 = vmatprep.subr.bf16.mxu0 0
    %1210 = vmatpush1.bf16.msra.mxu0 0
    %1211 = vmatprep.subr.bf16.mxu0 0
    %1212 = vmatpush1.bf16.msra.mxu0 0
    %1213 = vmatprep.subr.bf16.mxu0 0
    %1214 = vmatpush1.bf16.msra.mxu0 0
    %1215 = vmatprep.subr.bf16.mxu0 0
    %1216 = vmatpush1.bf16.msra.mxu0 0
    %1217 = vmatprep.subr.bf16.mxu0 0
    %1218 = vmatpush1.bf16.msra.mxu0 0
    %1219 = vmatprep.subr.bf16.mxu0 0
    %1220 = vmatpush1.bf16.msra.mxu0 0
    %1221 = vmatprep.mubr.bf16.mxu0 0
    %1222 = vmatmul.mubr.bf16.gmra.mrb[0].mxu0 %v1181
    %v1223 = vpop.f32.mrb[0].mxu0
    %v1224 = vadd.f32 %v1167, %v1223
    %v1225 = vpop.f32.mrb[0].mxu0
    %v1226 = vpop.f32.mrb[0].mxu0
    %v1227 = vadd.f32 %v1167, %v1226
    %v1228 = vpop.f32.mrb[0].mxu0
    %1229 = vmatprep.mubr.bf16.mxu0 0
    %1230 = vmatmul.mubr.bf16.gmra.mrb[0].mxu0 %v1184
    %v1231 = vpop.f32.mrb[0].mxu0
    %v1232 = vadd.f32 %v1167, %v1231
    %v1233 = vpop.f32.mrb[0].mxu0
    %v1234 = vpop.f32.mrb[0].mxu0
    %v1235 = vadd.f32 %v1167, %v1234
    %v1236 = vpop.f32.mrb[0].mxu0
    %1237 = vmatprep.mubr.bf16.mxu0 0
    %1238 = vmatmul.mubr.bf16.gmra.mrb[0].mxu0 %v1187
    %v1239 = vpop.f32.mrb[0].mxu0
    %v1240 = vadd.f32 %v1167, %v1239
    %v1241 = vpop.f32.mrb[0].mxu0
    %v1242 = vpop.f32.mrb[0].mxu0
    %v1243 = vadd.f32 %v1167, %v1242
    %v1244 = vpop.f32.mrb[0].mxu0
    %1245 = vdwg.mxu0
    %v1246 = vmax.f32 %v1224, 0.0
    %v1247 = vmax.f32 %v1227, 0.0
    %v1248 = vmax.f32 %v1232, 0.0
    %v1249 = vmax.f32 %v1235, 0.0
    %v1250 = vmax.f32 %v1240, 0.0
    %v1251 = vmax.f32 %v1243, 0.0
    %s1252 = scalar_lea.vmem %s27, 48
    %v1253 = vld [vmem:[%s1252] sm:$0xf]
    %v1254 = vld [vmem:[%s1252 + $0x4] sm:$0xf]
    %v1255 = vld [vmem:[%s1252 + $0x8] sm:$0xf]
    %v1256 = vld [vmem:[%s1252 + $0xc] sm:$0xf]
    %v1257 = vpack.c.bf16 %v1247, %v1246
    %v1258 = vpack.c.bf16 %v1249, %v1248
    %v1259 = vpack.c.bf16 %v1251, %v1250
    %v1260 = vld [vmem:[%s31 + $0x2] sm:$0x1]
    %v1261 = vlaneseq
    %v1262 = vshrl.u32 %v1261, 7
    %v1263 = vsub.s32 0, %v1262
    %v1264 = vrot.slane %v1260, %v1263
    %v1269 = vunpack.c.l.b16 %v1253
    %v1270 = vunpack.c.l.b16 %v1254
    %v1271 = vunpack.c.l.b16 %v1255
    %v1272 = vunpack.c.l.b16 %v1256
    %v1273 = vpack.c.b16 %v1270, %v1269
    %v1274 = vpack.c.b16 %v1272, %v1271
    %v1278 = vsel %vm506, %v1257, 0
    %v1281 = vsel %vm506, %v1258, 0
    %v1284 = vsel %vm506, %v1259, 0
    %1286 = vmatprep.subr.bf16.mxu0 0
    %1287 = vmatpush1.bf16.msra.mxu0 %v1273
    %1288 = vmatprep.subr.bf16.mxu0 0
    %1289 = vmatpush1.bf16.msra.mxu0 %v1274
    %1290 = vmatprep.subr.bf16.mxu0 0
    %1291 = vmatpush1.bf16.msra.mxu0 0
    %1292 = vmatprep.subr.bf16.mxu0 0
    %1293 = vmatpush1.bf16.msra.mxu0 0
    %1294 = vmatprep.subr.bf16.mxu0 0
    %1295 = vmatpush1.bf16.msra.mxu0 0
    %1296 = vmatprep.subr.bf16.mxu0 0
    %1297 = vmatpush1.bf16.msra.mxu0 0
    %1298 = vmatprep.subr.bf16.mxu0 0
    %1299 = vmatpush1.bf16.msra.mxu0 0
    %1300 = vmatprep.subr.bf16.mxu0 0
    %1301 = vmatpush1.bf16.msra.mxu0 0
    %1302 = vmatprep.subr.bf16.mxu0 0
    %1303 = vmatpush1.bf16.msra.mxu0 0
    %1304 = vmatprep.subr.bf16.mxu0 0
    %1305 = vmatpush1.bf16.msra.mxu0 0
    %1306 = vmatprep.subr.bf16.mxu0 0
    %1307 = vmatpush1.bf16.msra.mxu0 0
    %1308 = vmatprep.subr.bf16.mxu0 0
    %1309 = vmatpush1.bf16.msra.mxu0 0
    %1310 = vmatprep.subr.bf16.mxu0 0
    %1311 = vmatpush1.bf16.msra.mxu0 0
    %1312 = vmatprep.subr.bf16.mxu0 0
    %1313 = vmatpush1.bf16.msra.mxu0 0
    %1314 = vmatprep.subr.bf16.mxu0 0
    %1315 = vmatpush1.bf16.msra.mxu0 0
    %1316 = vmatprep.subr.bf16.mxu0 0
    %1317 = vmatpush1.bf16.msra.mxu0 0
    %1318 = vmatprep.mubr.bf16.mxu0 0
    %1319 = vmatmul.mubr.bf16.gmra.mrb[0].mxu0 %v1278
    %v1320 = vpop.f32.mrb[0].mxu0
    %v1321 = vadd.f32 %v1264, %v1320
    %v1322 = vpop.f32.mrb[0].mxu0
    %v1323 = vpop.f32.mrb[0].mxu0
    %v1324 = vadd.f32 %v1264, %v1323
    %v1325 = vpop.f32.mrb[0].mxu0
    %1326 = vmatprep.mubr.bf16.mxu0 0
    %1327 = vmatmul.mubr.bf16.gmra.mrb[0].mxu0 %v1281
    %v1328 = vpop.f32.mrb[0].mxu0
    %v1329 = vadd.f32 %v1264, %v1328
    %v1330 = vpop.f32.mrb[0].mxu0
    %v1331 = vpop.f32.mrb[0].mxu0
    %v1332 = vadd.f32 %v1264, %v1331
    %v1333 = vpop.f32.mrb[0].mxu0
    %1334 = vmatprep.mubr.bf16.mxu0 0
    %1335 = vmatmul.mubr.bf16.gmra.mrb[0].mxu0 %v1284
    %v1336 = vpop.f32.mrb[0].mxu0
    %v1337 = vadd.f32 %v1264, %v1336
    %v1338 = vpop.f32.mrb[0].mxu0
    %v1339 = vpop.f32.mrb[0].mxu0
    %v1340 = vadd.f32 %v1264, %v1339
    %v1341 = vpop.f32.mrb[0].mxu0
    %1342 = vdwg.mxu0
    %v1343 = vld [vmem:[%s31 + $0x3] sm:$0x1]
    %v1344 = vld [vmem:[%s31 + $0x4] sm:$0x1]
    %v1345 = vsel %vm506, %v1321, 0.0
    %1346 = vadd.xlane.f32.xlu0 %v1345
    %v1347 = vpop.xlane.xlu0 %1346
    %v1348 = vsel %vm506, %v1324, 0.0
    %1349 = vadd.xlane.f32.xlu0 %v1348
    %v1350 = vpop.xlane.xlu0 %1349
    %v1351 = vsel %vm506, %v1329, 0.0
    %1352 = vadd.xlane.f32.xlu0 %v1351
    %v1353 = vpop.xlane.xlu0 %1352
    %v1354 = vsel %vm506, %v1332, 0.0
    %1355 = vadd.xlane.f32.xlu0 %v1354
    %v1356 = vpop.xlane.xlu0 %1355
    %v1357 = vsel %vm506, %v1337, 0.0
    %1358 = vadd.xlane.f32.xlu0 %v1357
    %v1359 = vpop.xlane.xlu0 %1358
    %v1360 = vsel %vm506, %v1340, 0.0
    %1361 = vadd.xlane.f32.xlu0 %v1360
    %v1362 = vpop.xlane.xlu0 %1361
    %v1363 = vmul.f32 %v1347, %v654
    %v1364 = vmul.f32 %v1350, %v654
    %v1365 = vmul.f32 %v1353, %v654
    %v1366 = vmul.f32 %v1356, %v654
    %v1367 = vmul.f32 %v1359, %v654
    %v1368 = vmul.f32 %v1362, %v654
    %v1369 = vsub.f32 %v1321, %v1363
    %v1370 = vsub.f32 %v1324, %v1364
    %v1371 = vsub.f32 %v1329, %v1365
    %v1372 = vsub.f32 %v1332, %v1366
    %v1373 = vsub.f32 %v1337, %v1367
    %v1374 = vsub.f32 %v1340, %v1368
    %v1375 = vmul.f32 %v1369, %v1369
    %v1376 = vmul.f32 %v1370, %v1370
    %v1377 = vmul.f32 %v1371, %v1371
    %v1378 = vmul.f32 %v1372, %v1372
    %v1379 = vmul.f32 %v1373, %v1373
    %v1380 = vmul.f32 %v1374, %v1374
    %v1381 = vsel %vm506, %v1375, 0.0
    %1382 = vadd.xlane.f32.xlu0 %v1381
    %v1383 = vpop.xlane.xlu0 %1382
    %v1384 = vsel %vm506, %v1376, 0.0
    %1385 = vadd.xlane.f32.xlu0 %v1384
    %v1386 = vpop.xlane.xlu0 %1385
    %v1387 = vsel %vm506, %v1377, 0.0
    %1388 = vadd.xlane.f32.xlu0 %v1387
    %v1389 = vpop.xlane.xlu0 %1388
    %v1390 = vsel %vm506, %v1378, 0.0
    %1391 = vadd.xlane.f32.xlu0 %v1390
    %v1392 = vpop.xlane.xlu0 %1391
    %v1393 = vsel %vm506, %v1379, 0.0
    %1394 = vadd.xlane.f32.xlu0 %v1393
    %v1395 = vpop.xlane.xlu0 %1394
    %v1396 = vsel %vm506, %v1380, 0.0
    %1397 = vadd.xlane.f32.xlu0 %v1396
    %v1398 = vpop.xlane.xlu0 %1397
    %v1399 = vmul.f32 %v1383, %v654
    %v1400 = vmul.f32 %v1386, %v654
    %v1401 = vmul.f32 %v1389, %v654
    %v1402 = vmul.f32 %v1392, %v654
    %v1403 = vmul.f32 %v1395, %v654
    %v1404 = vmul.f32 %v1398, %v654
    %v1405 = vadd.f32 %v1399, 1e-05
    %v1406 = vadd.f32 %v1400, 1e-05
    %v1407 = vadd.f32 %v1401, 1e-05
    %v1408 = vadd.f32 %v1402, 1e-05
    %v1409 = vadd.f32 %v1403, 1e-05
    %v1410 = vadd.f32 %v1404, 1e-05
    %v1411 = vrsqrt.pop %v1405
    %v1412 = vrsqrt.pop %v1406
    %v1413 = vrsqrt.pop %v1407
    %v1414 = vrsqrt.pop %v1408
    %v1415 = vrsqrt.pop %v1409
    %v1416 = vrsqrt.pop %v1410
    %v1417 = vmul.f32 %v1369, %v1411
    %v1418 = vmul.f32 %v1370, %v1412
    %v1419 = vmul.f32 %v1371, %v1413
    %v1420 = vmul.f32 %v1372, %v1414
    %v1421 = vmul.f32 %v1373, %v1415
    %v1422 = vmul.f32 %v1374, %v1416
    %v1423 = vlaneseq
    %v1424 = vshrl.u32 %v1423, 7
    %v1425 = vsub.s32 0, %v1424
    %v1426 = vrot.slane %v1343, %v1425
    %v1427 = vmul.f32 %v1417, %v1426
    %v1428 = vmul.f32 %v1418, %v1426
    %v1429 = vmul.f32 %v1419, %v1426
    %v1430 = vmul.f32 %v1420, %v1426
    %v1431 = vmul.f32 %v1421, %v1426
    %v1432 = vmul.f32 %v1422, %v1426
    %v1433 = vlaneseq
    %v1434 = vshrl.u32 %v1433, 7
    %v1435 = vsub.s32 0, %v1434
    %v1436 = vrot.slane %v1344, %v1435
    %v1437 = vadd.f32 %v1427, %v1436
    %v1438 = vadd.f32 %v1428, %v1436
    %v1439 = vadd.f32 %v1429, %v1436
    %v1440 = vadd.f32 %v1430, %v1436
    %v1441 = vadd.f32 %v1431, %v1436
    %v1442 = vadd.f32 %v1432, %v1436
    %vm1443 = vcmask 392192
    %v1445 = vsel %vm1443, %v711, 0
    %v1448 = vsel %vm1443, %v712, 0
    %v1451 = vsel %vm1443, %v713, 0
    %1453 = vmatprep.subr.mxu0 0.0
    %1454 = vmatpush1.msra.mxu0 %v1437
    %1455 = vmatprep.subr.mxu0 0.0
    %1456 = vmatpush1.msra.mxu0 %v1438
    %1457 = vmatprep.subr.mxu0 0.0
    %1458 = vmatpush1.msra.mxu0 %v1439
    %1459 = vmatprep.subr.mxu0 0.0
    %1460 = vmatpush1.msra.mxu0 %v1440
    %1461 = vmatprep.subr.mxu0 0.0
    %1462 = vmatpush1.msra.mxu0 %v1441
    %1463 = vmatprep.subr.mxu0 0.0
    %1464 = vmatpush1.msra.mxu0 %v1442
    %1465 = vmatprep.subr.mxu0 0.0
    %1466 = vmatpush1.msra.mxu0 0.0
    %1467 = vmatprep.subr.mxu0 0.0
    %1468 = vmatpush1.msra.mxu0 0.0
    %1469 = vmatprep.subr.mxu0 0.0
    %1470 = vmatpush1.msra.mxu0 0.0
    %1471 = vmatprep.subr.mxu0 0.0
    %1472 = vmatpush1.msra.mxu0 0.0
    %1473 = vmatprep.subr.mxu0 0.0
    %1474 = vmatpush1.msra.mxu0 0.0
    %1475 = vmatprep.subr.mxu0 0.0
    %1476 = vmatpush1.msra.mxu0 0.0
    %1477 = vmatprep.subr.mxu0 0.0
    %1478 = vmatpush1.msra.mxu0 0.0
    %1479 = vmatprep.subr.mxu0 0.0
    %1480 = vmatpush1.msra.mxu0 0.0
    %1481 = vmatprep.subr.mxu0 0.0
    %1482 = vmatpush1.msra.mxu0 0.0
    %1483 = vmatprep.subr.mxu0 0.0
    %1484 = vmatpush1.msra.mxu0 0.0
    %1485 = vmatprep.subr.mxu0 0.0
    %1486 = vmatpush1.msra.mxu0 0.0
    %1487 = vmatprep.subr.mxu0 0.0
    %1488 = vmatpush1.msra.mxu0 0.0
    %1489 = vmatprep.subr.mxu0 0.0
    %1490 = vmatpush1.msra.mxu0 0.0
    %1491 = vmatprep.subr.mxu0 0.0
    %1492 = vmatpush1.msra.mxu0 0.0
    %1493 = vmatprep.subr.mxu0 0.0
    %1494 = vmatpush1.msra.mxu0 0.0
    %1495 = vmatprep.subr.mxu0 0.0
    %1496 = vmatpush1.msra.mxu0 0.0
    %1497 = vmatprep.subr.mxu0 0.0
    %1498 = vmatpush1.msra.mxu0 0.0
    %1499 = vmatprep.subr.mxu0 0.0
    %1500 = vmatpush1.msra.mxu0 0.0
    %1501 = vmatprep.subr.mxu0 0.0
    %1502 = vmatpush1.msra.mxu0 0.0
    %1503 = vmatprep.subr.mxu0 0.0
    %1504 = vmatpush1.msra.mxu0 0.0
    %1505 = vmatprep.subr.mxu0 0.0
    %1506 = vmatpush1.msra.mxu0 0.0
    %1507 = vmatprep.subr.mxu0 0.0
    %1508 = vmatpush1.msra.mxu0 0.0
    %1509 = vmatprep.subr.mxu0 0.0
    %1510 = vmatpush1.msra.mxu0 0.0
    %1511 = vmatprep.subr.mxu0 0.0
    %1512 = vmatpush1.msra.mxu0 0.0
    %1513 = vmatprep.subr.mxu0 0.0
    %1514 = vmatpush1.msra.mxu0 0.0
    %1515 = vmatprep.subr.mxu0 0.0
    %1516 = vmatpush1.msra.mxu0 0.0
    %1517 = vmatprep.mubr.f32.mxu0 0.0
    %1518 = vmatmul.mubr.f32.gmra.mrb[0].mxu0 %v1445
    %v1519 = vpop.f32.mrb[0].mxu0
    %v1520 = vadd.f32 0.0, %v1519
    %v1521 = vpop.f32.mrb[0].mxu0
    %1522 = vmatprep.mubr.f32.mxu0 0.0
    %1523 = vmatmul.mubr.f32.gmra.mrb[0].mxu0 %v1448
    %v1524 = vpop.f32.mrb[0].mxu0
    %v1525 = vadd.f32 0.0, %v1524
    %v1526 = vpop.f32.mrb[0].mxu0
    %1527 = vmatprep.mubr.f32.mxu0 0.0
    %1528 = vmatmul.mubr.f32.gmra.mrb[0].mxu0 %v1451
    %v1529 = vpop.f32.mrb[0].mxu0
    %v1530 = vadd.f32 0.0, %v1529
    %v1531 = vpop.f32.mrb[0].mxu0
    %1532 = vdwg.mxu0
    %s1533 = scalar_lea.vmem %s27, 64
    %v1534 = vld [vmem:[%s1533] sm:$0xf]
    %v1535 = vld [vmem:[%s1533 + $0x4] sm:$0xf]
    %v1536 = vld [vmem:[%s1533 + $0x8] sm:$0xf]
    %v1537 = vld [vmem:[%s1533 + $0xc] sm:$0xf]
    %v1538 = vpack.c.bf16 %v697, %v696
    %v1539 = vpack.c.bf16 %v698, %v698
    %s1540 = scalar_lea.vmem %s27, 80
    %v1541 = vld [vmem:[%s1540] sm:$0xf]
    %v1542 = vld [vmem:[%s1540 + $0x4] sm:$0xf]
    %v1543 = vld [vmem:[%s1540 + $0x8] sm:$0xf]
    %v1544 = vld [vmem:[%s1540 + $0xc] sm:$0xf]
    %v1545 = vpack.c.bf16 %v1525, %v1520
    %v1546 = vpack.c.bf16 %v1530, %v1530
    %v1551 = vunpack.c.l.b16 %v1541
    %v1552 = vunpack.c.l.b16 %v1542
    %v1553 = vunpack.c.l.b16 %v1543
    %v1554 = vunpack.c.l.b16 %v1544
    %v1555 = vpack.c.b16 %v1552, %v1551
    %v1556 = vpack.c.b16 %v1554, %v1553
    %v1560 = vsel %vm506, %v1545, 0
    %v1563 = vsel %vm506, %v1546, 0
    %1565 = vmatprep.subr.bf16.mxu0 0
    %1566 = vmatpush1.bf16.msra.mxu0 %v1555
    %1567 = vmatprep.subr.bf16.mxu0 0
    %1568 = vmatpush1.bf16.msra.mxu0 %v1556
    %1569 = vmatprep.subr.bf16.mxu0 0
    %1570 = vmatpush1.bf16.msra.mxu0 0
    %1571 = vmatprep.subr.bf16.mxu0 0
    %1572 = vmatpush1.bf16.msra.mxu0 0
    %1573 = vmatprep.subr.bf16.mxu0 0
    %1574 = vmatpush1.bf16.msra.mxu0 0
    %1575 = vmatprep.subr.bf16.mxu0 0
    %1576 = vmatpush1.bf16.msra.mxu0 0
    %1577 = vmatprep.subr.bf16.mxu0 0
    %1578 = vmatpush1.bf16.msra.mxu0 0
    %1579 = vmatprep.subr.bf16.mxu0 0
    %1580 = vmatpush1.bf16.msra.mxu0 0
    %1581 = vmatprep.subr.bf16.mxu0 0
    %1582 = vmatpush1.bf16.msra.mxu0 0
    %1583 = vmatprep.subr.bf16.mxu0 0
    %1584 = vmatpush1.bf16.msra.mxu0 0
    %1585 = vmatprep.subr.bf16.mxu0 0
    %1586 = vmatpush1.bf16.msra.mxu0 0
    %1587 = vmatprep.subr.bf16.mxu0 0
    %1588 = vmatpush1.bf16.msra.mxu0 0
    %1589 = vmatprep.subr.bf16.mxu0 0
    %1590 = vmatpush1.bf16.msra.mxu0 0
    %1591 = vmatprep.subr.bf16.mxu0 0
    %1592 = vmatpush1.bf16.msra.mxu0 0
    %1593 = vmatprep.subr.bf16.mxu0 0
    %1594 = vmatpush1.bf16.msra.mxu0 0
    %1595 = vmatprep.subr.bf16.mxu0 0
    %1596 = vmatpush1.bf16.msra.mxu0 0
    %1597 = vmatprep.mubr.bf16.mxu0 0
    %1598 = vmatmul.mubr.bf16.gmra.mrb[0].mxu0 %v1560
    %v1599 = vpop.f32.mrb[0].mxu0
    %v1600 = vadd.f32 0.0, %v1599
    %v1601 = vpop.f32.mrb[0].mxu0
    %v1602 = vpop.f32.mrb[0].mxu0
    %v1603 = vadd.f32 0.0, %v1602
    %v1604 = vpop.f32.mrb[0].mxu0
    %1605 = vmatprep.mubr.bf16.mxu0 0
    %1606 = vmatmul.mubr.bf16.gmra.mrb[0].mxu0 %v1563
    %v1607 = vpop.f32.mrb[0].mxu0
    %v1608 = vadd.f32 0.0, %v1607
    %v1609 = vpop.f32.mrb[0].mxu0
    %v1610 = vpop.f32.mrb[0].mxu0
    %v1611 = vpop.f32.mrb[0].mxu0
    %1612 = vdwg.mxu0
    %v1617 = vunpack.c.l.b16 %v1534
    %v1618 = vunpack.c.l.b16 %v1535
    %v1619 = vunpack.c.l.b16 %v1536
    %v1620 = vunpack.c.l.b16 %v1537
    %v1621 = vpack.c.b16 %v1618, %v1617
    %v1622 = vpack.c.b16 %v1620, %v1619
    %v1626 = vsel %vm506, %v1538, 0
    %v1629 = vsel %vm506, %v1539, 0
    %1631 = vmatprep.subr.bf16.mxu0 0
    %1632 = vmatpush1.bf16.msra.mxu0 %v1621
    %1633 = vmatprep.subr.bf16.mxu0 0
    %1634 = vmatpush1.bf16.msra.mxu0 %v1622
    %1635 = vmatprep.subr.bf16.mxu0 0
    %1636 = vmatpush1.bf16.msra.mxu0 0
    %1637 = vmatprep.subr.bf16.mxu0 0
    %1638 = vmatpush1.bf16.msra.mxu0 0
    %1639 = vmatprep.subr.bf16.mxu0 0
    %1640 = vmatpush1.bf16.msra.mxu0 0
    %1641 = vmatprep.subr.bf16.mxu0 0
    %1642 = vmatpush1.bf16.msra.mxu0 0
    %1643 = vmatprep.subr.bf16.mxu0 0
    %1644 = vmatpush1.bf16.msra.mxu0 0
    %1645 = vmatprep.subr.bf16.mxu0 0
    %1646 = vmatpush1.bf16.msra.mxu0 0
    %1647 = vmatprep.subr.bf16.mxu0 0
    %1648 = vmatpush1.bf16.msra.mxu0 0
    %1649 = vmatprep.subr.bf16.mxu0 0
    %1650 = vmatpush1.bf16.msra.mxu0 0
    %1651 = vmatprep.subr.bf16.mxu0 0
    %1652 = vmatpush1.bf16.msra.mxu0 0
    %1653 = vmatprep.subr.bf16.mxu0 0
    %1654 = vmatpush1.bf16.msra.mxu0 0
    %1655 = vmatprep.subr.bf16.mxu0 0
    %1656 = vmatpush1.bf16.msra.mxu0 0
    %1657 = vmatprep.subr.bf16.mxu0 0
    %1658 = vmatpush1.bf16.msra.mxu0 0
    %1659 = vmatprep.subr.bf16.mxu0 0
    %1660 = vmatpush1.bf16.msra.mxu0 0
    %1661 = vmatprep.subr.bf16.mxu0 0
    %1662 = vmatpush1.bf16.msra.mxu0 0
    %1663 = vmatprep.mubr.bf16.mxu0 0
    %1664 = vmatmul.mubr.bf16.gmra.mrb[0].mxu0 %v1626
    %v1665 = vpop.f32.mrb[0].mxu0
    %v1666 = vadd.f32 %v1600, %v1665
    %v1667 = vpop.f32.mrb[0].mxu0
    %v1668 = vpop.f32.mrb[0].mxu0
    %v1669 = vadd.f32 %v1603, %v1668
    %v1670 = vpop.f32.mrb[0].mxu0
    %1671 = vmatprep.mubr.bf16.mxu0 0
    %1672 = vmatmul.mubr.bf16.gmra.mrb[0].mxu0 %v1629
    %v1673 = vpop.f32.mrb[0].mxu0
    %v1674 = vadd.f32 %v1608, %v1673
    %v1675 = vpop.f32.mrb[0].mxu0
    %v1676 = vpop.f32.mrb[0].mxu0
    %v1677 = vpop.f32.mrb[0].mxu0
    %1678 = vdwg.mxu0
    %v1679 = vld [vmem:[%s31 + $0x5] sm:$0x1]
    %v1680 = vlaneseq
    %v1681 = vshrl.u32 %v1680, 7
    %v1682 = vsub.s32 0, %v1681
    %v1683 = vrot.slane %v1679, %v1682
    %v1684 = vadd.f32 %v1666, %v1683
    %v1685 = vadd.f32 %v1669, %v1683
    %v1686 = vadd.f32 %v1674, %v1683
    %v1687 = vmax.f32 %v1684, 0.0
    %v1688 = vmax.f32 %v1685, 0.0
    %v1689 = vmax.f32 %v1686, 0.0
    %s1690 = scalar_lea.vmem %s27, 96
    %v1691 = vld [vmem:[%s1690] sm:$0xf]
    %v1692 = vld [vmem:[%s1690 + $0x4] sm:$0xf]
    %v1693 = vld [vmem:[%s1690 + $0x8] sm:$0xf]
    %v1694 = vld [vmem:[%s1690 + $0xc] sm:$0xf]
    %v1695 = vpack.c.bf16 %v1688, %v1687
    %v1696 = vpack.c.bf16 %v1689, %v1689
    %v1697 = vld [vmem:[%s31 + $0x6] sm:$0x1]
    %v1698 = vlaneseq
    %v1699 = vshrl.u32 %v1698, 7
    %v1700 = vsub.s32 0, %v1699
    %v1701 = vrot.slane %v1697, %v1700
    %v1706 = vunpack.c.l.b16 %v1691
    %v1707 = vunpack.c.l.b16 %v1692
    %v1708 = vunpack.c.l.b16 %v1693
    %v1709 = vunpack.c.l.b16 %v1694
    %v1710 = vpack.c.b16 %v1707, %v1706
    %v1711 = vpack.c.b16 %v1709, %v1708
    %v1715 = vsel %vm506, %v1695, 0
    %v1718 = vsel %vm506, %v1696, 0
    %1720 = vmatprep.subr.bf16.mxu0 0
    %1721 = vmatpush1.bf16.msra.mxu0 %v1710
    %1722 = vmatprep.subr.bf16.mxu0 0
    %1723 = vmatpush1.bf16.msra.mxu0 %v1711
    %1724 = vmatprep.subr.bf16.mxu0 0
    %1725 = vmatpush1.bf16.msra.mxu0 0
    %1726 = vmatprep.subr.bf16.mxu0 0
    %1727 = vmatpush1.bf16.msra.mxu0 0
    %1728 = vmatprep.subr.bf16.mxu0 0
    %1729 = vmatpush1.bf16.msra.mxu0 0
    %1730 = vmatprep.subr.bf16.mxu0 0
    %1731 = vmatpush1.bf16.msra.mxu0 0
    %1732 = vmatprep.subr.bf16.mxu0 0
    %1733 = vmatpush1.bf16.msra.mxu0 0
    %1734 = vmatprep.subr.bf16.mxu0 0
    %1735 = vmatpush1.bf16.msra.mxu0 0
    %1736 = vmatprep.subr.bf16.mxu0 0
    %1737 = vmatpush1.bf16.msra.mxu0 0
    %1738 = vmatprep.subr.bf16.mxu0 0
    %1739 = vmatpush1.bf16.msra.mxu0 0
    %1740 = vmatprep.subr.bf16.mxu0 0
    %1741 = vmatpush1.bf16.msra.mxu0 0
    %1742 = vmatprep.subr.bf16.mxu0 0
    %1743 = vmatpush1.bf16.msra.mxu0 0
    %1744 = vmatprep.subr.bf16.mxu0 0
    %1745 = vmatpush1.bf16.msra.mxu0 0
    %1746 = vmatprep.subr.bf16.mxu0 0
    %1747 = vmatpush1.bf16.msra.mxu0 0
    %1748 = vmatprep.subr.bf16.mxu0 0
    %1749 = vmatpush1.bf16.msra.mxu0 0
    %1750 = vmatprep.subr.bf16.mxu0 0
    %1751 = vmatpush1.bf16.msra.mxu0 0
    %1752 = vmatprep.mubr.bf16.mxu0 0
    %1753 = vmatmul.mubr.bf16.gmra.mrb[0].mxu0 %v1715
    %v1754 = vpop.f32.mrb[0].mxu0
    %v1755 = vadd.f32 %v1701, %v1754
    %v1756 = vpop.f32.mrb[0].mxu0
    %v1757 = vpop.f32.mrb[0].mxu0
    %v1758 = vadd.f32 %v1701, %v1757
    %v1759 = vpop.f32.mrb[0].mxu0
    %1760 = vmatprep.mubr.bf16.mxu0 0
    %1761 = vmatmul.mubr.bf16.gmra.mrb[0].mxu0 %v1718
    %v1762 = vpop.f32.mrb[0].mxu0
    %v1763 = vadd.f32 %v1701, %v1762
    %v1764 = vpop.f32.mrb[0].mxu0
    %v1765 = vpop.f32.mrb[0].mxu0
    %v1766 = vpop.f32.mrb[0].mxu0
    %1767 = vdwg.mxu0
    %v1768 = vmax.f32 %v1755, 0.0
    %v1769 = vmax.f32 %v1758, 0.0
    %v1770 = vmax.f32 %v1763, 0.0
    %s1771 = scalar_lea.vmem %s27, 112
    %v1772 = vld [vmem:[%s1771] sm:$0xf]
    %v1773 = vld [vmem:[%s1771 + $0x4] sm:$0xf]
    %v1774 = vld [vmem:[%s1771 + $0x8] sm:$0xf]
    %v1775 = vld [vmem:[%s1771 + $0xc] sm:$0xf]
    %v1776 = vpack.c.bf16 %v1769, %v1768
    %v1777 = vpack.c.bf16 %v1770, %v1770
    %v1778 = vld [vmem:[%s31 + $0x7] sm:$0x1]
    %v1779 = vlaneseq
    %v1780 = vshrl.u32 %v1779, 7
    %v1781 = vsub.s32 0, %v1780
    %v1782 = vrot.slane %v1778, %v1781
    %v1787 = vunpack.c.l.b16 %v1772
    %v1788 = vunpack.c.l.b16 %v1773
    %v1789 = vunpack.c.l.b16 %v1774
    %v1790 = vunpack.c.l.b16 %v1775
    %v1791 = vpack.c.b16 %v1788, %v1787
    %v1792 = vpack.c.b16 %v1790, %v1789
    %v1796 = vsel %vm506, %v1776, 0
    %v1799 = vsel %vm506, %v1777, 0
    %1801 = vmatprep.subr.bf16.mxu0 0
    %1802 = vmatpush1.bf16.msra.mxu0 %v1791
    %1803 = vmatprep.subr.bf16.mxu0 0
    %1804 = vmatpush1.bf16.msra.mxu0 %v1792
    %1805 = vmatprep.subr.bf16.mxu0 0
    %1806 = vmatpush1.bf16.msra.mxu0 0
    %1807 = vmatprep.subr.bf16.mxu0 0
    %1808 = vmatpush1.bf16.msra.mxu0 0
    %1809 = vmatprep.subr.bf16.mxu0 0
    %1810 = vmatpush1.bf16.msra.mxu0 0
    %1811 = vmatprep.subr.bf16.mxu0 0
    %1812 = vmatpush1.bf16.msra.mxu0 0
    %1813 = vmatprep.subr.bf16.mxu0 0
    %1814 = vmatpush1.bf16.msra.mxu0 0
    %1815 = vmatprep.subr.bf16.mxu0 0
    %1816 = vmatpush1.bf16.msra.mxu0 0
    %1817 = vmatprep.subr.bf16.mxu0 0
    %1818 = vmatpush1.bf16.msra.mxu0 0
    %1819 = vmatprep.subr.bf16.mxu0 0
    %1820 = vmatpush1.bf16.msra.mxu0 0
    %1821 = vmatprep.subr.bf16.mxu0 0
    %1822 = vmatpush1.bf16.msra.mxu0 0
    %1823 = vmatprep.subr.bf16.mxu0 0
    %1824 = vmatpush1.bf16.msra.mxu0 0
    %1825 = vmatprep.subr.bf16.mxu0 0
    %1826 = vmatpush1.bf16.msra.mxu0 0
    %1827 = vmatprep.subr.bf16.mxu0 0
    %1828 = vmatpush1.bf16.msra.mxu0 0
    %1829 = vmatprep.subr.bf16.mxu0 0
    %1830 = vmatpush1.bf16.msra.mxu0 0
    %1831 = vmatprep.subr.bf16.mxu0 0
    %1832 = vmatpush1.bf16.msra.mxu0 0
    %1833 = vmatprep.mubr.bf16.mxu0 0
    %1834 = vmatmul.mubr.bf16.gmra.mrb[0].mxu0 %v1796
    %v1835 = vpop.f32.mrb[0].mxu0
    %v1836 = vadd.f32 %v1782, %v1835
    %v1837 = vpop.f32.mrb[0].mxu0
    %v1838 = vpop.f32.mrb[0].mxu0
    %v1839 = vadd.f32 %v1782, %v1838
    %v1840 = vpop.f32.mrb[0].mxu0
    %1841 = vmatprep.mubr.bf16.mxu0 0
    %1842 = vmatmul.mubr.bf16.gmra.mrb[0].mxu0 %v1799
    %v1843 = vpop.f32.mrb[0].mxu0
    %v1844 = vadd.f32 %v1782, %v1843
    %v1845 = vpop.f32.mrb[0].mxu0
    %v1846 = vpop.f32.mrb[0].mxu0
    %v1847 = vpop.f32.mrb[0].mxu0
    %1848 = vdwg.mxu0
    %v1849 = vld [vmem:[%s31 + $0x8] sm:$0x1]
    %v1850 = vld [vmem:[%s31 + $0x9] sm:$0x1]
    %v1851 = vsel %vm506, %v1836, 0.0
    %1852 = vadd.xlane.f32.xlu0 %v1851
    %v1853 = vpop.xlane.xlu0 %1852
    %v1854 = vsel %vm506, %v1839, 0.0
    %1855 = vadd.xlane.f32.xlu0 %v1854
    %v1856 = vpop.xlane.xlu0 %1855
    %v1857 = vsel %vm650, %v1844, 0.0
    %1858 = vadd.xlane.f32.xlu0 %v1857
    %v1859 = vpop.xlane.xlu0 %1858
    %v1860 = vmul.f32 %v1853, %v654
    %v1861 = vmul.f32 %v1856, %v654
    %v1862 = vmul.f32 %v1859, %v654
    %v1863 = vsub.f32 %v1836, %v1860
    %v1864 = vsub.f32 %v1839, %v1861
    %v1865 = vsub.f32 %v1844, %v1862
    %v1866 = vmul.f32 %v1863, %v1863
    %v1867 = vmul.f32 %v1864, %v1864
    %v1868 = vmul.f32 %v1865, %v1865
    %v1869 = vsel %vm506, %v1866, 0.0
    %1870 = vadd.xlane.f32.xlu0 %v1869
    %v1871 = vpop.xlane.xlu0 %1870
    %v1872 = vsel %vm506, %v1867, 0.0
    %1873 = vadd.xlane.f32.xlu0 %v1872
    %v1874 = vpop.xlane.xlu0 %1873
    %v1875 = vsel %vm650, %v1868, 0.0
    %1876 = vadd.xlane.f32.xlu0 %v1875
    %v1877 = vpop.xlane.xlu0 %1876
    %v1878 = vmul.f32 %v1871, %v654
    %v1879 = vmul.f32 %v1874, %v654
    %v1880 = vmul.f32 %v1877, %v654
    %v1881 = vadd.f32 %v1878, 1e-05
    %v1882 = vadd.f32 %v1879, 1e-05
    %v1883 = vadd.f32 %v1880, 1e-05
    %v1884 = vrsqrt.pop %v1881
    %v1885 = vrsqrt.pop %v1882
    %v1886 = vrsqrt.pop %v1883
    %v1887 = vmul.f32 %v1863, %v1884
    %v1888 = vmul.f32 %v1864, %v1885
    %v1889 = vmul.f32 %v1865, %v1886
    %v1890 = vlaneseq
    %v1891 = vshrl.u32 %v1890, 7
    %v1892 = vsub.s32 0, %v1891
    %v1893 = vrot.slane %v1849, %v1892
    %v1894 = vmul.f32 %v1887, %v1893
    %v1895 = vmul.f32 %v1888, %v1893
    %v1896 = vmul.f32 %v1889, %v1893
    %v1897 = vlaneseq
    %v1898 = vshrl.u32 %v1897, 7
    %v1899 = vsub.s32 0, %v1898
    %v1900 = vrot.slane %v1850, %v1899
    %v1901 = vadd.f32 %v1894, %v1900
    %v1902 = vadd.f32 %v1895, %v1900
    %v1903 = vadd.f32 %v1896, %v1900
    %v1904 = vadd.f32 %v696, %v1901
    %v1905 = vadd.f32 %v697, %v1902
    %v1906 = vadd.f32 %v698, %v1903
    %v1908 = vsel %vm757, %v1906, 0
    %1910 = vmatprep.subr.mxu0 0.0
    %1911 = vmatpush1.msra.mxu0 %v1904
    %1912 = vmatprep.subr.mxu0 0.0
    %1913 = vmatpush1.msra.mxu0 %v1905
    %1914 = vmatprep.subr.mxu0 0.0
    %1915 = vmatpush1.msra.mxu0 %v1908
    %1916 = vmatprep.subr.mxu0 0.0
    %1917 = vmatpush1.msra.mxu0 0.0
    %1918 = vmatprep.subr.mxu0 0.0
    %1919 = vmatpush1.msra.mxu0 0.0
    %1920 = vmatprep.subr.mxu0 0.0
    %1921 = vmatpush1.msra.mxu0 0.0
    %1922 = vmatprep.subr.mxu0 0.0
    %1923 = vmatpush1.msra.mxu0 0.0
    %1924 = vmatprep.subr.mxu0 0.0
    %1925 = vmatpush1.msra.mxu0 0.0
    %1926 = vmatprep.subr.mxu0 0.0
    %1927 = vmatpush1.msra.mxu0 0.0
    %1928 = vmatprep.subr.mxu0 0.0
    %1929 = vmatpush1.msra.mxu0 0.0
    %1930 = vmatprep.subr.mxu0 0.0
    %1931 = vmatpush1.msra.mxu0 0.0
    %1932 = vmatprep.subr.mxu0 0.0
    %1933 = vmatpush1.msra.mxu0 0.0
    %1934 = vmatprep.subr.mxu0 0.0
    %1935 = vmatpush1.msra.mxu0 0.0
    %1936 = vmatprep.subr.mxu0 0.0
    %1937 = vmatpush1.msra.mxu0 0.0
    %1938 = vmatprep.subr.mxu0 0.0
    %1939 = vmatpush1.msra.mxu0 0.0
    %1940 = vmatprep.subr.mxu0 0.0
    %1941 = vmatpush1.msra.mxu0 0.0
    %1942 = vmatprep.subr.mxu0 0.0
    %1943 = vmatpush1.msra.mxu0 0.0
    %1944 = vmatprep.subr.mxu0 0.0
    %1945 = vmatpush1.msra.mxu0 0.0
    %1946 = vmatprep.subr.mxu0 0.0
    %1947 = vmatpush1.msra.mxu0 0.0
    %1948 = vmatprep.subr.mxu0 0.0
    %1949 = vmatpush1.msra.mxu0 0.0
    %1950 = vmatprep.subr.mxu0 0.0
    %1951 = vmatpush1.msra.mxu0 0.0
    %1952 = vmatprep.subr.mxu0 0.0
    %1953 = vmatpush1.msra.mxu0 0.0
    %1954 = vmatprep.subr.mxu0 0.0
    %1955 = vmatpush1.msra.mxu0 0.0
    %1956 = vmatprep.subr.mxu0 0.0
    %1957 = vmatpush1.msra.mxu0 0.0
    %1958 = vmatprep.subr.mxu0 0.0
    %1959 = vmatpush1.msra.mxu0 0.0
    %1960 = vmatprep.subr.mxu0 0.0
    %1961 = vmatpush1.msra.mxu0 0.0
    %1962 = vmatprep.subr.mxu0 0.0
    %1963 = vmatpush1.msra.mxu0 0.0
    %1964 = vmatprep.subr.mxu0 0.0
    %1965 = vmatpush1.msra.mxu0 0.0
    %1966 = vmatprep.subr.mxu0 0.0
    %1967 = vmatpush1.msra.mxu0 0.0
    %1968 = vmatprep.subr.mxu0 0.0
    %1969 = vmatpush1.msra.mxu0 0.0
    %1970 = vmatprep.subr.mxu0 0.0
    %1971 = vmatpush1.msra.mxu0 0.0
    %1972 = vmatprep.subr.mxu0 0.0
    %1973 = vmatpush1.msra.mxu0 0.0
    %1974 = vmatprep.mubr.f32.mxu0 0.0
    %1975 = vmatmul.mubr.f32.gmra.mrb[0].mxu0 %v722
    %v1976 = vpop.f32.mrb[0].mxu0
    %v1977 = vadd.f32 0.0, %v1976
    %v1978 = vpop.f32.mrb[0].mxu0
    %1979 = vmatprep.mubr.f32.mxu0 0.0
    %1980 = vmatmul.mubr.f32.gmra.mrb[0].mxu0 %v725
    %v1981 = vpop.f32.mrb[0].mxu0
    %v1982 = vadd.f32 0.0, %v1981
    %v1983 = vpop.f32.mrb[0].mxu0
    %1984 = vmatprep.mubr.f32.mxu0 0.0
    %1985 = vmatmul.mubr.f32.gmra.mrb[0].mxu0 %v728
    %v1986 = vpop.f32.mrb[0].mxu0
    %v1987 = vadd.f32 0.0, %v1986
    %v1988 = vpop.f32.mrb[0].mxu0
    %1989 = vmatprep.mubr.f32.mxu0 0.0
    %1990 = vmatmul.mubr.f32.gmra.mrb[0].mxu0 %v731
    %v1991 = vpop.f32.mrb[0].mxu0
    %v1992 = vadd.f32 0.0, %v1991
    %v1993 = vpop.f32.mrb[0].mxu0
    %1994 = vmatprep.mubr.f32.mxu0 0.0
    %1995 = vmatmul.mubr.f32.gmra.mrb[0].mxu0 %v734
    %v1996 = vpop.f32.mrb[0].mxu0
    %v1997 = vadd.f32 0.0, %v1996
    %v1998 = vpop.f32.mrb[0].mxu0
    %1999 = vmatprep.mubr.f32.mxu0 0.0
    %2000 = vmatmul.mubr.f32.gmra.mrb[0].mxu0 %v737
    %v2001 = vpop.f32.mrb[0].mxu0
    %v2002 = vadd.f32 0.0, %v2001
    %v2003 = vpop.f32.mrb[0].mxu0
    %2004 = vmatprep.mubr.f32.mxu0 0.0
    %2005 = vmatmul.mubr.f32.gmra.mrb[0].mxu0 %v740
    %v2006 = vpop.f32.mrb[0].mxu0
    %v2007 = vadd.f32 0.0, %v2006
    %v2008 = vpop.f32.mrb[0].mxu0
    %2009 = vmatprep.mubr.f32.mxu0 0.0
    %2010 = vmatmul.mubr.f32.gmra.mrb[0].mxu0 %v743
    %v2011 = vpop.f32.mrb[0].mxu0
    %v2012 = vadd.f32 0.0, %v2011
    %v2013 = vpop.f32.mrb[0].mxu0
    %2014 = vmatprep.mubr.f32.mxu0 0.0
    %2015 = vmatmul.mubr.f32.gmra.mrb[0].mxu0 %v746
    %v2016 = vpop.f32.mrb[0].mxu0
    %v2017 = vadd.f32 0.0, %v2016
    %v2018 = vpop.f32.mrb[0].mxu0
    %2019 = vmatprep.mubr.f32.mxu0 0.0
    %2020 = vmatmul.mubr.f32.gmra.mrb[0].mxu0 %v749
    %v2021 = vpop.f32.mrb[0].mxu0
    %v2022 = vadd.f32 0.0, %v2021
    %v2023 = vpop.f32.mrb[0].mxu0
    %2024 = vmatprep.mubr.f32.mxu0 0.0
    %2025 = vmatmul.mubr.f32.gmra.mrb[0].mxu0 %v752
    %v2026 = vpop.f32.mrb[0].mxu0
    %v2027 = vadd.f32 0.0, %v2026
    %v2028 = vpop.f32.mrb[0].mxu0
    %2029 = vmatprep.mubr.f32.mxu0 0.0
    %2030 = vmatmul.mubr.f32.gmra.mrb[0].mxu0 %v755
    %v2031 = vpop.f32.mrb[0].mxu0
    %v2032 = vadd.f32 0.0, %v2031
    %v2033 = vpop.f32.mrb[0].mxu0
    %2034 = vdwg.mxu0
    %s2035 = scalar_lea.vmem %s27, 128
    %v2036 = vld [vmem:[%s2035] sm:$0xf]
    %v2037 = vld [vmem:[%s2035 + $0x4] sm:$0xf]
    %v2038 = vld [vmem:[%s2035 + $0x8] sm:$0xf]
    %v2039 = vld [vmem:[%s2035 + $0xc] sm:$0xf]
    %v2040 = vpack.c.bf16 %v1982, %v1977
    %v2041 = vpack.c.bf16 %v1992, %v1987
    %v2042 = vpack.c.bf16 %v2002, %v1997
    %s2043 = scalar_lea.vmem %s27, 144
    %v2044 = vld [vmem:[%s2043] sm:$0xf]
    %v2045 = vld [vmem:[%s2043 + $0x4] sm:$0xf]
    %v2046 = vld [vmem:[%s2043 + $0x8] sm:$0xf]
    %v2047 = vld [vmem:[%s2043 + $0xc] sm:$0xf]
    %v2048 = vpack.c.bf16 %v2012, %v2007
    %v2049 = vpack.c.bf16 %v2022, %v2017
    %v2050 = vpack.c.bf16 %v2032, %v2027
    %v2055 = vunpack.c.l.b16 %v2044
    %v2056 = vunpack.c.l.b16 %v2045
    %v2057 = vunpack.c.l.b16 %v2046
    %v2058 = vunpack.c.l.b16 %v2047
    %v2059 = vpack.c.b16 %v2056, %v2055
    %v2060 = vpack.c.b16 %v2058, %v2057
    %v2064 = vsel %vm506, %v2048, 0
    %v2067 = vsel %vm506, %v2049, 0
    %v2070 = vsel %vm506, %v2050, 0
    %2072 = vmatprep.subr.bf16.mxu0 0
    %2073 = vmatpush1.bf16.msra.mxu0 %v2059
    %2074 = vmatprep.subr.bf16.mxu0 0
    %2075 = vmatpush1.bf16.msra.mxu0 %v2060
    %2076 = vmatprep.subr.bf16.mxu0 0
    %2077 = vmatpush1.bf16.msra.mxu0 0
    %2078 = vmatprep.subr.bf16.mxu0 0
    %2079 = vmatpush1.bf16.msra.mxu0 0
    %2080 = vmatprep.subr.bf16.mxu0 0
    %2081 = vmatpush1.bf16.msra.mxu0 0
    %2082 = vmatprep.subr.bf16.mxu0 0
    %2083 = vmatpush1.bf16.msra.mxu0 0
    %2084 = vmatprep.subr.bf16.mxu0 0
    %2085 = vmatpush1.bf16.msra.mxu0 0
    %2086 = vmatprep.subr.bf16.mxu0 0
    %2087 = vmatpush1.bf16.msra.mxu0 0
    %2088 = vmatprep.subr.bf16.mxu0 0
    %2089 = vmatpush1.bf16.msra.mxu0 0
    %2090 = vmatprep.subr.bf16.mxu0 0
    %2091 = vmatpush1.bf16.msra.mxu0 0
    %2092 = vmatprep.subr.bf16.mxu0 0
    %2093 = vmatpush1.bf16.msra.mxu0 0
    %2094 = vmatprep.subr.bf16.mxu0 0
    %2095 = vmatpush1.bf16.msra.mxu0 0
    %2096 = vmatprep.subr.bf16.mxu0 0
    %2097 = vmatpush1.bf16.msra.mxu0 0
    %2098 = vmatprep.subr.bf16.mxu0 0
    %2099 = vmatpush1.bf16.msra.mxu0 0
    %2100 = vmatprep.subr.bf16.mxu0 0
    %2101 = vmatpush1.bf16.msra.mxu0 0
    %2102 = vmatprep.subr.bf16.mxu0 0
    %2103 = vmatpush1.bf16.msra.mxu0 0
    %2104 = vmatprep.mubr.bf16.mxu0 0
    %2105 = vmatmul.mubr.bf16.gmra.mrb[0].mxu0 %v2064
    %v2106 = vpop.f32.mrb[0].mxu0
    %v2107 = vadd.f32 0.0, %v2106
    %v2108 = vpop.f32.mrb[0].mxu0
    %v2109 = vpop.f32.mrb[0].mxu0
    %v2110 = vadd.f32 0.0, %v2109
    %v2111 = vpop.f32.mrb[0].mxu0
    %2112 = vmatprep.mubr.bf16.mxu0 0
    %2113 = vmatmul.mubr.bf16.gmra.mrb[0].mxu0 %v2067
    %v2114 = vpop.f32.mrb[0].mxu0
    %v2115 = vadd.f32 0.0, %v2114
    %v2116 = vpop.f32.mrb[0].mxu0
    %v2117 = vpop.f32.mrb[0].mxu0
    %v2118 = vadd.f32 0.0, %v2117
    %v2119 = vpop.f32.mrb[0].mxu0
    %2120 = vmatprep.mubr.bf16.mxu0 0
    %2121 = vmatmul.mubr.bf16.gmra.mrb[0].mxu0 %v2070
    %v2122 = vpop.f32.mrb[0].mxu0
    %v2123 = vadd.f32 0.0, %v2122
    %v2124 = vpop.f32.mrb[0].mxu0
    %v2125 = vpop.f32.mrb[0].mxu0
    %v2126 = vadd.f32 0.0, %v2125
    %v2127 = vpop.f32.mrb[0].mxu0
    %2128 = vdwg.mxu0
    %v2133 = vunpack.c.l.b16 %v2036
    %v2134 = vunpack.c.l.b16 %v2037
    %v2135 = vunpack.c.l.b16 %v2038
    %v2136 = vunpack.c.l.b16 %v2039
    %v2137 = vpack.c.b16 %v2134, %v2133
    %v2138 = vpack.c.b16 %v2136, %v2135
    %v2142 = vsel %vm506, %v2040, 0
    %v2145 = vsel %vm506, %v2041, 0
    %v2148 = vsel %vm506, %v2042, 0
    %2150 = vmatprep.subr.bf16.mxu0 0
    %2151 = vmatpush1.bf16.msra.mxu0 %v2137
    %2152 = vmatprep.subr.bf16.mxu0 0
    %2153 = vmatpush1.bf16.msra.mxu0 %v2138
    %2154 = vmatprep.subr.bf16.mxu0 0
    %2155 = vmatpush1.bf16.msra.mxu0 0
    %2156 = vmatprep.subr.bf16.mxu0 0
    %2157 = vmatpush1.bf16.msra.mxu0 0
    %2158 = vmatprep.subr.bf16.mxu0 0
    %2159 = vmatpush1.bf16.msra.mxu0 0
    %2160 = vmatprep.subr.bf16.mxu0 0
    %2161 = vmatpush1.bf16.msra.mxu0 0
    %2162 = vmatprep.subr.bf16.mxu0 0
    %2163 = vmatpush1.bf16.msra.mxu0 0
    %2164 = vmatprep.subr.bf16.mxu0 0
    %2165 = vmatpush1.bf16.msra.mxu0 0
    %2166 = vmatprep.subr.bf16.mxu0 0
    %2167 = vmatpush1.bf16.msra.mxu0 0
    %2168 = vmatprep.subr.bf16.mxu0 0
    %2169 = vmatpush1.bf16.msra.mxu0 0
    %2170 = vmatprep.subr.bf16.mxu0 0
    %2171 = vmatpush1.bf16.msra.mxu0 0
    %2172 = vmatprep.subr.bf16.mxu0 0
    %2173 = vmatpush1.bf16.msra.mxu0 0
    %2174 = vmatprep.subr.bf16.mxu0 0
    %2175 = vmatpush1.bf16.msra.mxu0 0
    %2176 = vmatprep.subr.bf16.mxu0 0
    %2177 = vmatpush1.bf16.msra.mxu0 0
    %2178 = vmatprep.subr.bf16.mxu0 0
    %2179 = vmatpush1.bf16.msra.mxu0 0
    %2180 = vmatprep.subr.bf16.mxu0 0
    %2181 = vmatpush1.bf16.msra.mxu0 0
    %2182 = vmatprep.mubr.bf16.mxu0 0
    %2183 = vmatmul.mubr.bf16.gmra.mrb[0].mxu0 %v2142
    %v2184 = vpop.f32.mrb[0].mxu0
    %v2185 = vadd.f32 %v2107, %v2184
    %v2186 = vpop.f32.mrb[0].mxu0
    %v2187 = vpop.f32.mrb[0].mxu0
    %v2188 = vadd.f32 %v2110, %v2187
    %v2189 = vpop.f32.mrb[0].mxu0
    %2190 = vmatprep.mubr.bf16.mxu0 0
    %2191 = vmatmul.mubr.bf16.gmra.mrb[0].mxu0 %v2145
    %v2192 = vpop.f32.mrb[0].mxu0
    %v2193 = vadd.f32 %v2115, %v2192
    %v2194 = vpop.f32.mrb[0].mxu0
    %v2195 = vpop.f32.mrb[0].mxu0
    %v2196 = vadd.f32 %v2118, %v2195
    %v2197 = vpop.f32.mrb[0].mxu0
    %2198 = vmatprep.mubr.bf16.mxu0 0
    %2199 = vmatmul.mubr.bf16.gmra.mrb[0].mxu0 %v2148
    %v2200 = vpop.f32.mrb[0].mxu0
    %v2201 = vadd.f32 %v2123, %v2200
    %v2202 = vpop.f32.mrb[0].mxu0
    %v2203 = vpop.f32.mrb[0].mxu0
    %v2204 = vadd.f32 %v2126, %v2203
    %v2205 = vpop.f32.mrb[0].mxu0
    %2206 = vdwg.mxu0
    %s2207 = scalar_lea.vmem %s29, 1
    %v2208 = vld [vmem:[%s2207] sm:$0x1]
    %v2210 = vsel %vm1071, %v2208, 0
    %2212 = vmatprep.subr.bf16.mxu0 0
    %2213 = vmatpush1.bf16.msra.mxu0 %v2210
    %2214 = vmatprep.subr.bf16.mxu0 0
    %2215 = vmatpush1.bf16.msra.mxu0 0
    %2216 = vmatprep.subr.bf16.mxu0 0
    %2217 = vmatpush1.bf16.msra.mxu0 0
    %2218 = vmatprep.subr.bf16.mxu0 0
    %2219 = vmatpush1.bf16.msra.mxu0 0
    %2220 = vmatprep.subr.bf16.mxu0 0
    %2221 = vmatpush1.bf16.msra.mxu0 0
    %2222 = vmatprep.subr.bf16.mxu0 0
    %2223 = vmatpush1.bf16.msra.mxu0 0
    %2224 = vmatprep.subr.bf16.mxu0 0
    %2225 = vmatpush1.bf16.msra.mxu0 0
    %2226 = vmatprep.subr.bf16.mxu0 0
    %2227 = vmatpush1.bf16.msra.mxu0 0
    %2228 = vmatprep.subr.bf16.mxu0 0
    %2229 = vmatpush1.bf16.msra.mxu0 0
    %2230 = vmatprep.subr.bf16.mxu0 0
    %2231 = vmatpush1.bf16.msra.mxu0 0
    %2232 = vmatprep.subr.bf16.mxu0 0
    %2233 = vmatpush1.bf16.msra.mxu0 0
    %2234 = vmatprep.subr.bf16.mxu0 0
    %2235 = vmatpush1.bf16.msra.mxu0 0
    %2236 = vmatprep.subr.bf16.mxu0 0
    %2237 = vmatpush1.bf16.msra.mxu0 0
    %2238 = vmatprep.subr.bf16.mxu0 0
    %2239 = vmatpush1.bf16.msra.mxu0 0
    %2240 = vmatprep.subr.bf16.mxu0 0
    %2241 = vmatpush1.bf16.msra.mxu0 0
    %2242 = vmatprep.subr.bf16.mxu0 0
    %2243 = vmatpush1.bf16.msra.mxu0 0
    %2244 = vmatprep.mubr.bf16.mxu0 0
    %2245 = vmatmul.mubr.bf16.gmra.mrb[0].mxu0 %v1063
    %v2246 = vpop.f32.mrb[0].mxu0
    %v2247 = vadd.f32 0.0, %v2246
    %v2248 = vpop.f32.mrb[0].mxu0
    %v2249 = vpop.f32.mrb[0].mxu0
    %v2250 = vadd.f32 0.0, %v2249
    %v2251 = vpop.f32.mrb[0].mxu0
    %2252 = vmatprep.mubr.bf16.mxu0 0
    %2253 = vmatmul.mubr.bf16.gmra.mrb[0].mxu0 %v1066
    %v2254 = vpop.f32.mrb[0].mxu0
    %v2255 = vadd.f32 0.0, %v2254
    %v2256 = vpop.f32.mrb[0].mxu0
    %v2257 = vpop.f32.mrb[0].mxu0
    %v2258 = vadd.f32 0.0, %v2257
    %v2259 = vpop.f32.mrb[0].mxu0
    %2260 = vmatprep.mubr.bf16.mxu0 0
    %2261 = vmatmul.mubr.bf16.gmra.mrb[0].mxu0 %v1069
    %v2262 = vpop.f32.mrb[0].mxu0
    %v2263 = vadd.f32 0.0, %v2262
    %v2264 = vpop.f32.mrb[0].mxu0
    %v2265 = vpop.f32.mrb[0].mxu0
    %v2266 = vadd.f32 0.0, %v2265
    %v2267 = vpop.f32.mrb[0].mxu0
    %2268 = vdwg.mxu0
    %v2269 = vadd.f32 %v2185, %v2247
    %v2270 = vadd.f32 %v2188, %v2250
    %v2271 = vadd.f32 %v2193, %v2255
    %v2272 = vadd.f32 %v2196, %v2258
    %v2273 = vadd.f32 %v2201, %v2263
    %v2274 = vadd.f32 %v2204, %v2266
    %s2275 = scalar_lea.vmem %s31, 16
    %v2276 = vld [vmem:[%s2275] sm:$0x1]
    %v2277 = vlaneseq
    %v2278 = vshrl.u32 %v2277, 7
    %v2279 = vsub.s32 0, %v2278
    %v2280 = vrot.slane %v2276, %v2279
    %v2281 = vadd.f32 %v2269, %v2280
    %v2282 = vadd.f32 %v2270, %v2280
    %v2283 = vadd.f32 %v2271, %v2280
    %v2284 = vadd.f32 %v2272, %v2280
    %v2285 = vadd.f32 %v2273, %v2280
    %v2286 = vadd.f32 %v2274, %v2280
    %v2287 = vmax.f32 %v2281, 0.0
    %v2288 = vmax.f32 %v2282, 0.0
    %v2289 = vmax.f32 %v2283, 0.0
    %v2290 = vmax.f32 %v2284, 0.0
    %v2291 = vmax.f32 %v2285, 0.0
    %v2292 = vmax.f32 %v2286, 0.0
    %s2293 = scalar_lea.vmem %s27, 160
    %v2294 = vld [vmem:[%s2293] sm:$0xf]
    %v2295 = vld [vmem:[%s2293 + $0x4] sm:$0xf]
    %v2296 = vld [vmem:[%s2293 + $0x8] sm:$0xf]
    %v2297 = vld [vmem:[%s2293 + $0xc] sm:$0xf]
    %v2298 = vpack.c.bf16 %v2288, %v2287
    %v2299 = vpack.c.bf16 %v2290, %v2289
    %v2300 = vpack.c.bf16 %v2292, %v2291
    %v2301 = vld [vmem:[%s2275 + $0x1] sm:$0x1]
    %v2302 = vlaneseq
    %v2303 = vshrl.u32 %v2302, 7
    %v2304 = vsub.s32 0, %v2303
    %v2305 = vrot.slane %v2301, %v2304
    %v2310 = vunpack.c.l.b16 %v2294
    %v2311 = vunpack.c.l.b16 %v2295
    %v2312 = vunpack.c.l.b16 %v2296
    %v2313 = vunpack.c.l.b16 %v2297
    %v2314 = vpack.c.b16 %v2311, %v2310
    %v2315 = vpack.c.b16 %v2313, %v2312
    %v2319 = vsel %vm506, %v2298, 0
    %v2322 = vsel %vm506, %v2299, 0
    %v2325 = vsel %vm506, %v2300, 0
    %2327 = vmatprep.subr.bf16.mxu0 0
    %2328 = vmatpush1.bf16.msra.mxu0 %v2314
    %2329 = vmatprep.subr.bf16.mxu0 0
    %2330 = vmatpush1.bf16.msra.mxu0 %v2315
    %2331 = vmatprep.subr.bf16.mxu0 0
    %2332 = vmatpush1.bf16.msra.mxu0 0
    %2333 = vmatprep.subr.bf16.mxu0 0
    %2334 = vmatpush1.bf16.msra.mxu0 0
    %2335 = vmatprep.subr.bf16.mxu0 0
    %2336 = vmatpush1.bf16.msra.mxu0 0
    %2337 = vmatprep.subr.bf16.mxu0 0
    %2338 = vmatpush1.bf16.msra.mxu0 0
    %2339 = vmatprep.subr.bf16.mxu0 0
    %2340 = vmatpush1.bf16.msra.mxu0 0
    %2341 = vmatprep.subr.bf16.mxu0 0
    %2342 = vmatpush1.bf16.msra.mxu0 0
    %2343 = vmatprep.subr.bf16.mxu0 0
    %2344 = vmatpush1.bf16.msra.mxu0 0
    %2345 = vmatprep.subr.bf16.mxu0 0
    %2346 = vmatpush1.bf16.msra.mxu0 0
    %2347 = vmatprep.subr.bf16.mxu0 0
    %2348 = vmatpush1.bf16.msra.mxu0 0
    %2349 = vmatprep.subr.bf16.mxu0 0
    %2350 = vmatpush1.bf16.msra.mxu0 0
    %2351 = vmatprep.subr.bf16.mxu0 0
    %2352 = vmatpush1.bf16.msra.mxu0 0
    %2353 = vmatprep.subr.bf16.mxu0 0
    %2354 = vmatpush1.bf16.msra.mxu0 0
    %2355 = vmatprep.subr.bf16.mxu0 0
    %2356 = vmatpush1.bf16.msra.mxu0 0
    %2357 = vmatprep.subr.bf16.mxu0 0
    %2358 = vmatpush1.bf16.msra.mxu0 0
    %2359 = vmatprep.mubr.bf16.mxu0 0
    %2360 = vmatmul.mubr.bf16.gmra.mrb[0].mxu0 %v2319
    %v2361 = vpop.f32.mrb[0].mxu0
    %v2362 = vadd.f32 %v2305, %v2361
    %v2363 = vpop.f32.mrb[0].mxu0
    %v2364 = vpop.f32.mrb[0].mxu0
    %v2365 = vadd.f32 %v2305, %v2364
    %v2366 = vpop.f32.mrb[0].mxu0
    %2367 = vmatprep.mubr.bf16.mxu0 0
    %2368 = vmatmul.mubr.bf16.gmra.mrb[0].mxu0 %v2322
    %v2369 = vpop.f32.mrb[0].mxu0
    %v2370 = vadd.f32 %v2305, %v2369
    %v2371 = vpop.f32.mrb[0].mxu0
    %v2372 = vpop.f32.mrb[0].mxu0
    %v2373 = vadd.f32 %v2305, %v2372
    %v2374 = vpop.f32.mrb[0].mxu0
    %2375 = vmatprep.mubr.bf16.mxu0 0
    %2376 = vmatmul.mubr.bf16.gmra.mrb[0].mxu0 %v2325
    %v2377 = vpop.f32.mrb[0].mxu0
    %v2378 = vadd.f32 %v2305, %v2377
    %v2379 = vpop.f32.mrb[0].mxu0
    %v2380 = vpop.f32.mrb[0].mxu0
    %v2381 = vadd.f32 %v2305, %v2380
    %v2382 = vpop.f32.mrb[0].mxu0
    %2383 = vdwg.mxu0
    %v2384 = vmax.f32 %v2362, 0.0
    %v2385 = vmax.f32 %v2365, 0.0
    %v2386 = vmax.f32 %v2370, 0.0
    %v2387 = vmax.f32 %v2373, 0.0
    %v2388 = vmax.f32 %v2378, 0.0
    %v2389 = vmax.f32 %v2381, 0.0
    %s2390 = scalar_lea.vmem %s27, 176
    %v2391 = vld [vmem:[%s2390] sm:$0xf]
    %v2392 = vld [vmem:[%s2390 + $0x4] sm:$0xf]
    %v2393 = vld [vmem:[%s2390 + $0x8] sm:$0xf]
    %v2394 = vld [vmem:[%s2390 + $0xc] sm:$0xf]
    %v2395 = vpack.c.bf16 %v2385, %v2384
    %v2396 = vpack.c.bf16 %v2387, %v2386
    %v2397 = vpack.c.bf16 %v2389, %v2388
    %v2398 = vld [vmem:[%s2275 + $0x2] sm:$0x1]
    %v2399 = vlaneseq
    %v2400 = vshrl.u32 %v2399, 7
    %v2401 = vsub.s32 0, %v2400
    %v2402 = vrot.slane %v2398, %v2401
    %v2407 = vunpack.c.l.b16 %v2391
    %v2408 = vunpack.c.l.b16 %v2392
    %v2409 = vunpack.c.l.b16 %v2393
    %v2410 = vunpack.c.l.b16 %v2394
    %v2411 = vpack.c.b16 %v2408, %v2407
    %v2412 = vpack.c.b16 %v2410, %v2409
    %v2416 = vsel %vm506, %v2395, 0
    %v2419 = vsel %vm506, %v2396, 0
    %v2422 = vsel %vm506, %v2397, 0
    %2424 = vmatprep.subr.bf16.mxu0 0
    %2425 = vmatpush1.bf16.msra.mxu0 %v2411
    %2426 = vmatprep.subr.bf16.mxu0 0
    %2427 = vmatpush1.bf16.msra.mxu0 %v2412
    %2428 = vmatprep.subr.bf16.mxu0 0
    %2429 = vmatpush1.bf16.msra.mxu0 0
    %2430 = vmatprep.subr.bf16.mxu0 0
    %2431 = vmatpush1.bf16.msra.mxu0 0
    %2432 = vmatprep.subr.bf16.mxu0 0
    %2433 = vmatpush1.bf16.msra.mxu0 0
    %2434 = vmatprep.subr.bf16.mxu0 0
    %2435 = vmatpush1.bf16.msra.mxu0 0
    %2436 = vmatprep.subr.bf16.mxu0 0
    %2437 = vmatpush1.bf16.msra.mxu0 0
    %2438 = vmatprep.subr.bf16.mxu0 0
    %2439 = vmatpush1.bf16.msra.mxu0 0
    %2440 = vmatprep.subr.bf16.mxu0 0
    %2441 = vmatpush1.bf16.msra.mxu0 0
    %2442 = vmatprep.subr.bf16.mxu0 0
    %2443 = vmatpush1.bf16.msra.mxu0 0
    %2444 = vmatprep.subr.bf16.mxu0 0
    %2445 = vmatpush1.bf16.msra.mxu0 0
    %2446 = vmatprep.subr.bf16.mxu0 0
    %2447 = vmatpush1.bf16.msra.mxu0 0
    %2448 = vmatprep.subr.bf16.mxu0 0
    %2449 = vmatpush1.bf16.msra.mxu0 0
    %2450 = vmatprep.subr.bf16.mxu0 0
    %2451 = vmatpush1.bf16.msra.mxu0 0
    %2452 = vmatprep.subr.bf16.mxu0 0
    %2453 = vmatpush1.bf16.msra.mxu0 0
    %2454 = vmatprep.subr.bf16.mxu0 0
    %2455 = vmatpush1.bf16.msra.mxu0 0
    %2456 = vmatprep.mubr.bf16.mxu0 0
    %2457 = vmatmul.mubr.bf16.gmra.mrb[0].mxu0 %v2416
    %v2458 = vpop.f32.mrb[0].mxu0
    %v2459 = vadd.f32 %v2402, %v2458
    %v2460 = vpop.f32.mrb[0].mxu0
    %v2461 = vpop.f32.mrb[0].mxu0
    %v2462 = vadd.f32 %v2402, %v2461
    %v2463 = vpop.f32.mrb[0].mxu0
    %2464 = vmatprep.mubr.bf16.mxu0 0
    %2465 = vmatmul.mubr.bf16.gmra.mrb[0].mxu0 %v2419
    %v2466 = vpop.f32.mrb[0].mxu0
    %v2467 = vadd.f32 %v2402, %v2466
    %v2468 = vpop.f32.mrb[0].mxu0
    %v2469 = vpop.f32.mrb[0].mxu0
    %v2470 = vadd.f32 %v2402, %v2469
    %v2471 = vpop.f32.mrb[0].mxu0
    %2472 = vmatprep.mubr.bf16.mxu0 0
    %2473 = vmatmul.mubr.bf16.gmra.mrb[0].mxu0 %v2422
    %v2474 = vpop.f32.mrb[0].mxu0
    %v2475 = vadd.f32 %v2402, %v2474
    %v2476 = vpop.f32.mrb[0].mxu0
    %v2477 = vpop.f32.mrb[0].mxu0
    %v2478 = vadd.f32 %v2402, %v2477
    %v2479 = vpop.f32.mrb[0].mxu0
    %2480 = vdwg.mxu0
    %v2481 = vld [vmem:[%s2275 + $0x3] sm:$0x1]
    %v2482 = vld [vmem:[%s2275 + $0x4] sm:$0x1]
    %v2483 = vsel %vm506, %v2459, 0.0
    %2484 = vadd.xlane.f32.xlu0 %v2483
    %v2485 = vpop.xlane.xlu0 %2484
    %v2486 = vsel %vm506, %v2462, 0.0
    %2487 = vadd.xlane.f32.xlu0 %v2486
    %v2488 = vpop.xlane.xlu0 %2487
    %v2489 = vsel %vm506, %v2467, 0.0
    %2490 = vadd.xlane.f32.xlu0 %v2489
    %v2491 = vpop.xlane.xlu0 %2490
    %v2492 = vsel %vm506, %v2470, 0.0
    %2493 = vadd.xlane.f32.xlu0 %v2492
    %v2494 = vpop.xlane.xlu0 %2493
    %v2495 = vsel %vm506, %v2475, 0.0
    %2496 = vadd.xlane.f32.xlu0 %v2495
    %v2497 = vpop.xlane.xlu0 %2496
    %v2498 = vsel %vm506, %v2478, 0.0
    %2499 = vadd.xlane.f32.xlu0 %v2498
    %v2500 = vpop.xlane.xlu0 %2499
    %v2501 = vmul.f32 %v2485, %v654
    %v2502 = vmul.f32 %v2488, %v654
    %v2503 = vmul.f32 %v2491, %v654
    %v2504 = vmul.f32 %v2494, %v654
    %v2505 = vmul.f32 %v2497, %v654
    %v2506 = vmul.f32 %v2500, %v654
    %v2507 = vsub.f32 %v2459, %v2501
    %v2508 = vsub.f32 %v2462, %v2502
    %v2509 = vsub.f32 %v2467, %v2503
    %v2510 = vsub.f32 %v2470, %v2504
    %v2511 = vsub.f32 %v2475, %v2505
    %v2512 = vsub.f32 %v2478, %v2506
    %v2513 = vmul.f32 %v2507, %v2507
    %v2514 = vmul.f32 %v2508, %v2508
    %v2515 = vmul.f32 %v2509, %v2509
    %v2516 = vmul.f32 %v2510, %v2510
    %v2517 = vmul.f32 %v2511, %v2511
    %v2518 = vmul.f32 %v2512, %v2512
    %v2519 = vsel %vm506, %v2513, 0.0
    %2520 = vadd.xlane.f32.xlu0 %v2519
    %v2521 = vpop.xlane.xlu0 %2520
    %v2522 = vsel %vm506, %v2514, 0.0
    %2523 = vadd.xlane.f32.xlu0 %v2522
    %v2524 = vpop.xlane.xlu0 %2523
    %v2525 = vsel %vm506, %v2515, 0.0
    %2526 = vadd.xlane.f32.xlu0 %v2525
    %v2527 = vpop.xlane.xlu0 %2526
    %v2528 = vsel %vm506, %v2516, 0.0
    %2529 = vadd.xlane.f32.xlu0 %v2528
    %v2530 = vpop.xlane.xlu0 %2529
    %v2531 = vsel %vm506, %v2517, 0.0
    %2532 = vadd.xlane.f32.xlu0 %v2531
    %v2533 = vpop.xlane.xlu0 %2532
    %v2534 = vsel %vm506, %v2518, 0.0
    %2535 = vadd.xlane.f32.xlu0 %v2534
    %v2536 = vpop.xlane.xlu0 %2535
    %v2537 = vmul.f32 %v2521, %v654
    %v2538 = vmul.f32 %v2524, %v654
    %v2539 = vmul.f32 %v2527, %v654
    %v2540 = vmul.f32 %v2530, %v654
    %v2541 = vmul.f32 %v2533, %v654
    %v2542 = vmul.f32 %v2536, %v654
    %v2543 = vadd.f32 %v2537, 1e-05
    %v2544 = vadd.f32 %v2538, 1e-05
    %v2545 = vadd.f32 %v2539, 1e-05
    %v2546 = vadd.f32 %v2540, 1e-05
    %v2547 = vadd.f32 %v2541, 1e-05
    %v2548 = vadd.f32 %v2542, 1e-05
    %v2549 = vrsqrt.pop %v2543
    %v2550 = vrsqrt.pop %v2544
    %v2551 = vrsqrt.pop %v2545
    %v2552 = vrsqrt.pop %v2546
    %v2553 = vrsqrt.pop %v2547
    %v2554 = vrsqrt.pop %v2548
    %v2555 = vmul.f32 %v2507, %v2549
    %v2556 = vmul.f32 %v2508, %v2550
    %v2557 = vmul.f32 %v2509, %v2551
    %v2558 = vmul.f32 %v2510, %v2552
    %v2559 = vmul.f32 %v2511, %v2553
    %v2560 = vmul.f32 %v2512, %v2554
    %v2561 = vlaneseq
    %v2562 = vshrl.u32 %v2561, 7
    %v2563 = vsub.s32 0, %v2562
    %v2564 = vrot.slane %v2481, %v2563
    %v2565 = vmul.f32 %v2555, %v2564
    %v2566 = vmul.f32 %v2556, %v2564
    %v2567 = vmul.f32 %v2557, %v2564
    %v2568 = vmul.f32 %v2558, %v2564
    %v2569 = vmul.f32 %v2559, %v2564
    %v2570 = vmul.f32 %v2560, %v2564
    %v2571 = vlaneseq
    %v2572 = vshrl.u32 %v2571, 7
    %v2573 = vsub.s32 0, %v2572
    %v2574 = vrot.slane %v2482, %v2573
    %v2575 = vadd.f32 %v2565, %v2574
    %v2576 = vadd.f32 %v2566, %v2574
    %v2577 = vadd.f32 %v2567, %v2574
    %v2578 = vadd.f32 %v2568, %v2574
    %v2579 = vadd.f32 %v2569, %v2574
    %v2580 = vadd.f32 %v2570, %v2574
    %2581 = vmatprep.subr.mxu0 0.0
    %2582 = vmatpush1.msra.mxu0 %v2575
    %2583 = vmatprep.subr.mxu0 0.0
    %2584 = vmatpush1.msra.mxu0 %v2576
    %2585 = vmatprep.subr.mxu0 0.0
    %2586 = vmatpush1.msra.mxu0 %v2577
    %2587 = vmatprep.subr.mxu0 0.0
    %2588 = vmatpush1.msra.mxu0 %v2578
    %2589 = vmatprep.subr.mxu0 0.0
    %2590 = vmatpush1.msra.mxu0 %v2579
    %2591 = vmatprep.subr.mxu0 0.0
    %2592 = vmatpush1.msra.mxu0 %v2580
    %2593 = vmatprep.subr.mxu0 0.0
    %2594 = vmatpush1.msra.mxu0 0.0
    %2595 = vmatprep.subr.mxu0 0.0
    %2596 = vmatpush1.msra.mxu0 0.0
    %2597 = vmatprep.subr.mxu0 0.0
    %2598 = vmatpush1.msra.mxu0 0.0
    %2599 = vmatprep.subr.mxu0 0.0
    %2600 = vmatpush1.msra.mxu0 0.0
    %2601 = vmatprep.subr.mxu0 0.0
    %2602 = vmatpush1.msra.mxu0 0.0
    %2603 = vmatprep.subr.mxu0 0.0
    %2604 = vmatpush1.msra.mxu0 0.0
    %2605 = vmatprep.subr.mxu0 0.0
    %2606 = vmatpush1.msra.mxu0 0.0
    %2607 = vmatprep.subr.mxu0 0.0
    %2608 = vmatpush1.msra.mxu0 0.0
    %2609 = vmatprep.subr.mxu0 0.0
    %2610 = vmatpush1.msra.mxu0 0.0
    %2611 = vmatprep.subr.mxu0 0.0
    %2612 = vmatpush1.msra.mxu0 0.0
    %2613 = vmatprep.subr.mxu0 0.0
    %2614 = vmatpush1.msra.mxu0 0.0
    %2615 = vmatprep.subr.mxu0 0.0
    %2616 = vmatpush1.msra.mxu0 0.0
    %2617 = vmatprep.subr.mxu0 0.0
    %2618 = vmatpush1.msra.mxu0 0.0
    %2619 = vmatprep.subr.mxu0 0.0
    %2620 = vmatpush1.msra.mxu0 0.0
    %2621 = vmatprep.subr.mxu0 0.0
    %2622 = vmatpush1.msra.mxu0 0.0
    %2623 = vmatprep.subr.mxu0 0.0
    %2624 = vmatpush1.msra.mxu0 0.0
    %2625 = vmatprep.subr.mxu0 0.0
    %2626 = vmatpush1.msra.mxu0 0.0
    %2627 = vmatprep.subr.mxu0 0.0
    %2628 = vmatpush1.msra.mxu0 0.0
    %2629 = vmatprep.subr.mxu0 0.0
    %2630 = vmatpush1.msra.mxu0 0.0
    %2631 = vmatprep.subr.mxu0 0.0
    %2632 = vmatpush1.msra.mxu0 0.0
    %2633 = vmatprep.subr.mxu0 0.0
    %2634 = vmatpush1.msra.mxu0 0.0
    %2635 = vmatprep.subr.mxu0 0.0
    %2636 = vmatpush1.msra.mxu0 0.0
    %2637 = vmatprep.subr.mxu0 0.0
    %2638 = vmatpush1.msra.mxu0 0.0
    %2639 = vmatprep.subr.mxu0 0.0
    %2640 = vmatpush1.msra.mxu0 0.0
    %2641 = vmatprep.subr.mxu0 0.0
    %2642 = vmatpush1.msra.mxu0 0.0
    %2643 = vmatprep.subr.mxu0 0.0
    %2644 = vmatpush1.msra.mxu0 0.0
    %2645 = vmatprep.mubr.f32.mxu0 0.0
    %2646 = vmatmul.mubr.f32.gmra.mrb[0].mxu0 %v1445
    %v2647 = vpop.f32.mrb[0].mxu0
    %v2648 = vadd.f32 0.0, %v2647
    %v2649 = vpop.f32.mrb[0].mxu0
    %2650 = vmatprep.mubr.f32.mxu0 0.0
    %2651 = vmatmul.mubr.f32.gmra.mrb[0].mxu0 %v1448
    %v2652 = vpop.f32.mrb[0].mxu0
    %v2653 = vadd.f32 0.0, %v2652
    %v2654 = vpop.f32.mrb[0].mxu0
    %2655 = vmatprep.mubr.f32.mxu0 0.0
    %2656 = vmatmul.mubr.f32.gmra.mrb[0].mxu0 %v1451
    %v2657 = vpop.f32.mrb[0].mxu0
    %v2658 = vadd.f32 0.0, %v2657
    %v2659 = vpop.f32.mrb[0].mxu0
    %2660 = vdwg.mxu0
    %s2661 = scalar_lea.vmem %s27, 192
    %v2662 = vld [vmem:[%s2661] sm:$0xf]
    %v2663 = vld [vmem:[%s2661 + $0x4] sm:$0xf]
    %v2664 = vld [vmem:[%s2661 + $0x8] sm:$0xf]
    %v2665 = vld [vmem:[%s2661 + $0xc] sm:$0xf]
    %v2666 = vpack.c.bf16 %v1905, %v1904
    %v2667 = vpack.c.bf16 %v1906, %v1906
    %s2668 = scalar_lea.vmem %s27, 208
    %v2669 = vld [vmem:[%s2668] sm:$0xf]
    %v2670 = vld [vmem:[%s2668 + $0x4] sm:$0xf]
    %v2671 = vld [vmem:[%s2668 + $0x8] sm:$0xf]
    %v2672 = vld [vmem:[%s2668 + $0xc] sm:$0xf]
    %v2673 = vpack.c.bf16 %v2653, %v2648
    %v2674 = vpack.c.bf16 %v2658, %v2658
    %v2679 = vunpack.c.l.b16 %v2669
    %v2680 = vunpack.c.l.b16 %v2670
    %v2681 = vunpack.c.l.b16 %v2671
    %v2682 = vunpack.c.l.b16 %v2672
    %v2683 = vpack.c.b16 %v2680, %v2679
    %v2684 = vpack.c.b16 %v2682, %v2681
    %v2688 = vsel %vm506, %v2673, 0
    %v2691 = vsel %vm506, %v2674, 0
    %2693 = vmatprep.subr.bf16.mxu0 0
    %2694 = vmatpush1.bf16.msra.mxu0 %v2683
    %2695 = vmatprep.subr.bf16.mxu0 0
    %2696 = vmatpush1.bf16.msra.mxu0 %v2684
    %2697 = vmatprep.subr.bf16.mxu0 0
    %2698 = vmatpush1.bf16.msra.mxu0 0
    %2699 = vmatprep.subr.bf16.mxu0 0
    %2700 = vmatpush1.bf16.msra.mxu0 0
    %2701 = vmatprep.subr.bf16.mxu0 0
    %2702 = vmatpush1.bf16.msra.mxu0 0
    %2703 = vmatprep.subr.bf16.mxu0 0
    %2704 = vmatpush1.bf16.msra.mxu0 0
    %2705 = vmatprep.subr.bf16.mxu0 0
    %2706 = vmatpush1.bf16.msra.mxu0 0
    %2707 = vmatprep.subr.bf16.mxu0 0
    %2708 = vmatpush1.bf16.msra.mxu0 0
    %2709 = vmatprep.subr.bf16.mxu0 0
    %2710 = vmatpush1.bf16.msra.mxu0 0
    %2711 = vmatprep.subr.bf16.mxu0 0
    %2712 = vmatpush1.bf16.msra.mxu0 0
    %2713 = vmatprep.subr.bf16.mxu0 0
    %2714 = vmatpush1.bf16.msra.mxu0 0
    %2715 = vmatprep.subr.bf16.mxu0 0
    %2716 = vmatpush1.bf16.msra.mxu0 0
    %2717 = vmatprep.subr.bf16.mxu0 0
    %2718 = vmatpush1.bf16.msra.mxu0 0
    %2719 = vmatprep.subr.bf16.mxu0 0
    %2720 = vmatpush1.bf16.msra.mxu0 0
    %2721 = vmatprep.subr.bf16.mxu0 0
    %2722 = vmatpush1.bf16.msra.mxu0 0
    %2723 = vmatprep.subr.bf16.mxu0 0
    %2724 = vmatpush1.bf16.msra.mxu0 0
    %2725 = vmatprep.mubr.bf16.mxu0 0
    %2726 = vmatmul.mubr.bf16.gmra.mrb[0].mxu0 %v2688
    %v2727 = vpop.f32.mrb[0].mxu0
    %v2728 = vadd.f32 0.0, %v2727
    %v2729 = vpop.f32.mrb[0].mxu0
    %v2730 = vpop.f32.mrb[0].mxu0
    %v2731 = vadd.f32 0.0, %v2730
    %v2732 = vpop.f32.mrb[0].mxu0
    %2733 = vmatprep.mubr.bf16.mxu0 0
    %2734 = vmatmul.mubr.bf16.gmra.mrb[0].mxu0 %v2691
    %v2735 = vpop.f32.mrb[0].mxu0
    %v2736 = vadd.f32 0.0, %v2735
    %v2737 = vpop.f32.mrb[0].mxu0
    %v2738 = vpop.f32.mrb[0].mxu0
    %v2739 = vpop.f32.mrb[0].mxu0
    %2740 = vdwg.mxu0
    %v2745 = vunpack.c.l.b16 %v2662
    %v2746 = vunpack.c.l.b16 %v2663
    %v2747 = vunpack.c.l.b16 %v2664
    %v2748 = vunpack.c.l.b16 %v2665
    %v2749 = vpack.c.b16 %v2746, %v2745
    %v2750 = vpack.c.b16 %v2748, %v2747
    %v2754 = vsel %vm506, %v2666, 0
    %v2757 = vsel %vm506, %v2667, 0
    %2759 = vmatprep.subr.bf16.mxu0 0
    %2760 = vmatpush1.bf16.msra.mxu0 %v2749
    %2761 = vmatprep.subr.bf16.mxu0 0
    %2762 = vmatpush1.bf16.msra.mxu0 %v2750
    %2763 = vmatprep.subr.bf16.mxu0 0
    %2764 = vmatpush1.bf16.msra.mxu0 0
    %2765 = vmatprep.subr.bf16.mxu0 0
    %2766 = vmatpush1.bf16.msra.mxu0 0
    %2767 = vmatprep.subr.bf16.mxu0 0
    %2768 = vmatpush1.bf16.msra.mxu0 0
    %2769 = vmatprep.subr.bf16.mxu0 0
    %2770 = vmatpush1.bf16.msra.mxu0 0
    %2771 = vmatprep.subr.bf16.mxu0 0
    %2772 = vmatpush1.bf16.msra.mxu0 0
    %2773 = vmatprep.subr.bf16.mxu0 0
    %2774 = vmatpush1.bf16.msra.mxu0 0
    %2775 = vmatprep.subr.bf16.mxu0 0
    %2776 = vmatpush1.bf16.msra.mxu0 0
    %2777 = vmatprep.subr.bf16.mxu0 0
    %2778 = vmatpush1.bf16.msra.mxu0 0
    %2779 = vmatprep.subr.bf16.mxu0 0
    %2780 = vmatpush1.bf16.msra.mxu0 0
    %2781 = vmatprep.subr.bf16.mxu0 0
    %2782 = vmatpush1.bf16.msra.mxu0 0
    %2783 = vmatprep.subr.bf16.mxu0 0
    %2784 = vmatpush1.bf16.msra.mxu0 0
    %2785 = vmatprep.subr.bf16.mxu0 0
    %2786 = vmatpush1.bf16.msra.mxu0 0
    %2787 = vmatprep.subr.bf16.mxu0 0
    %2788 = vmatpush1.bf16.msra.mxu0 0
    %2789 = vmatprep.subr.bf16.mxu0 0
    %2790 = vmatpush1.bf16.msra.mxu0 0
    %2791 = vmatprep.mubr.bf16.mxu0 0
    %2792 = vmatmul.mubr.bf16.gmra.mrb[0].mxu0 %v2754
    %v2793 = vpop.f32.mrb[0].mxu0
    %v2794 = vadd.f32 %v2728, %v2793
    %v2795 = vpop.f32.mrb[0].mxu0
    %v2796 = vpop.f32.mrb[0].mxu0
    %v2797 = vadd.f32 %v2731, %v2796
    %v2798 = vpop.f32.mrb[0].mxu0
    %2799 = vmatprep.mubr.bf16.mxu0 0
    %2800 = vmatmul.mubr.bf16.gmra.mrb[0].mxu0 %v2757
    %v2801 = vpop.f32.mrb[0].mxu0
    %v2802 = vadd.f32 %v2736, %v2801
    %v2803 = vpop.f32.mrb[0].mxu0
    %v2804 = vpop.f32.mrb[0].mxu0
    %v2805 = vpop.f32.mrb[0].mxu0
    %2806 = vdwg.mxu0
    %v2807 = vld [vmem:[%s2275 + $0x5] sm:$0x1]
    %v2808 = vlaneseq
    %v2809 = vshrl.u32 %v2808, 7
    %v2810 = vsub.s32 0, %v2809
    %v2811 = vrot.slane %v2807, %v2810
    %v2812 = vadd.f32 %v2794, %v2811
    %v2813 = vadd.f32 %v2797, %v2811
    %v2814 = vadd.f32 %v2802, %v2811
    %v2815 = vmax.f32 %v2812, 0.0
    %v2816 = vmax.f32 %v2813, 0.0
    %v2817 = vmax.f32 %v2814, 0.0
    %s2818 = scalar_lea.vmem %s27, 224
    %v2819 = vld [vmem:[%s2818] sm:$0xf]
    %v2820 = vld [vmem:[%s2818 + $0x4] sm:$0xf]
    %v2821 = vld [vmem:[%s2818 + $0x8] sm:$0xf]
    %v2822 = vld [vmem:[%s2818 + $0xc] sm:$0xf]
    %v2823 = vpack.c.bf16 %v2816, %v2815
    %v2824 = vpack.c.bf16 %v2817, %v2817
    %v2825 = vld [vmem:[%s2275 + $0x6] sm:$0x1]
    %v2826 = vlaneseq
    %v2827 = vshrl.u32 %v2826, 7
    %v2828 = vsub.s32 0, %v2827
    %v2829 = vrot.slane %v2825, %v2828
    %v2834 = vunpack.c.l.b16 %v2819
    %v2835 = vunpack.c.l.b16 %v2820
    %v2836 = vunpack.c.l.b16 %v2821
    %v2837 = vunpack.c.l.b16 %v2822
    %v2838 = vpack.c.b16 %v2835, %v2834
    %v2839 = vpack.c.b16 %v2837, %v2836
    %v2843 = vsel %vm506, %v2823, 0
    %v2846 = vsel %vm506, %v2824, 0
    %2848 = vmatprep.subr.bf16.mxu0 0
    %2849 = vmatpush1.bf16.msra.mxu0 %v2838
    %2850 = vmatprep.subr.bf16.mxu0 0
    %2851 = vmatpush1.bf16.msra.mxu0 %v2839
    %2852 = vmatprep.subr.bf16.mxu0 0
    %2853 = vmatpush1.bf16.msra.mxu0 0
    %2854 = vmatprep.subr.bf16.mxu0 0
    %2855 = vmatpush1.bf16.msra.mxu0 0
    %2856 = vmatprep.subr.bf16.mxu0 0
    %2857 = vmatpush1.bf16.msra.mxu0 0
    %2858 = vmatprep.subr.bf16.mxu0 0
    %2859 = vmatpush1.bf16.msra.mxu0 0
    %2860 = vmatprep.subr.bf16.mxu0 0
    %2861 = vmatpush1.bf16.msra.mxu0 0
    %2862 = vmatprep.subr.bf16.mxu0 0
    %2863 = vmatpush1.bf16.msra.mxu0 0
    %2864 = vmatprep.subr.bf16.mxu0 0
    %2865 = vmatpush1.bf16.msra.mxu0 0
    %2866 = vmatprep.subr.bf16.mxu0 0
    %2867 = vmatpush1.bf16.msra.mxu0 0
    %2868 = vmatprep.subr.bf16.mxu0 0
    %2869 = vmatpush1.bf16.msra.mxu0 0
    %2870 = vmatprep.subr.bf16.mxu0 0
    %2871 = vmatpush1.bf16.msra.mxu0 0
    %2872 = vmatprep.subr.bf16.mxu0 0
    %2873 = vmatpush1.bf16.msra.mxu0 0
    %2874 = vmatprep.subr.bf16.mxu0 0
    %2875 = vmatpush1.bf16.msra.mxu0 0
    %2876 = vmatprep.subr.bf16.mxu0 0
    %2877 = vmatpush1.bf16.msra.mxu0 0
    %2878 = vmatprep.subr.bf16.mxu0 0
    %2879 = vmatpush1.bf16.msra.mxu0 0
    %2880 = vmatprep.mubr.bf16.mxu0 0
    %2881 = vmatmul.mubr.bf16.gmra.mrb[0].mxu0 %v2843
    %v2882 = vpop.f32.mrb[0].mxu0
    %v2883 = vadd.f32 %v2829, %v2882
    %v2884 = vpop.f32.mrb[0].mxu0
    %v2885 = vpop.f32.mrb[0].mxu0
    %v2886 = vadd.f32 %v2829, %v2885
    %v2887 = vpop.f32.mrb[0].mxu0
    %2888 = vmatprep.mubr.bf16.mxu0 0
    %2889 = vmatmul.mubr.bf16.gmra.mrb[0].mxu0 %v2846
    %v2890 = vpop.f32.mrb[0].mxu0
    %v2891 = vadd.f32 %v2829, %v2890
    %v2892 = vpop.f32.mrb[0].mxu0
    %v2893 = vpop.f32.mrb[0].mxu0
    %v2894 = vpop.f32.mrb[0].mxu0
    %2895 = vdwg.mxu0
    %v2896 = vmax.f32 %v2883, 0.0
    %v2897 = vmax.f32 %v2886, 0.0
    %v2898 = vmax.f32 %v2891, 0.0
    %s2899 = scalar_lea.vmem %s27, 240
    %v2900 = vld [vmem:[%s2899] sm:$0xf]
    %v2901 = vld [vmem:[%s2899 + $0x4] sm:$0xf]
    %v2902 = vld [vmem:[%s2899 + $0x8] sm:$0xf]
    %v2903 = vld [vmem:[%s2899 + $0xc] sm:$0xf]
    %v2904 = vpack.c.bf16 %v2897, %v2896
    %v2905 = vpack.c.bf16 %v2898, %v2898
    %v2906 = vld [vmem:[%s2275 + $0x7] sm:$0x1]
    %v2907 = vlaneseq
    %v2908 = vshrl.u32 %v2907, 7
    %v2909 = vsub.s32 0, %v2908
    %v2910 = vrot.slane %v2906, %v2909
    %v2915 = vunpack.c.l.b16 %v2900
    %v2916 = vunpack.c.l.b16 %v2901
    %v2917 = vunpack.c.l.b16 %v2902
    %v2918 = vunpack.c.l.b16 %v2903
    %v2919 = vpack.c.b16 %v2916, %v2915
    %v2920 = vpack.c.b16 %v2918, %v2917
    %v2924 = vsel %vm506, %v2904, 0
    %v2927 = vsel %vm506, %v2905, 0
    %2929 = vmatprep.subr.bf16.mxu0 0
    %2930 = vmatpush1.bf16.msra.mxu0 %v2919
    %2931 = vmatprep.subr.bf16.mxu0 0
    %2932 = vmatpush1.bf16.msra.mxu0 %v2920
    %2933 = vmatprep.subr.bf16.mxu0 0
    %2934 = vmatpush1.bf16.msra.mxu0 0
    %2935 = vmatprep.subr.bf16.mxu0 0
    %2936 = vmatpush1.bf16.msra.mxu0 0
    %2937 = vmatprep.subr.bf16.mxu0 0
    %2938 = vmatpush1.bf16.msra.mxu0 0
    %2939 = vmatprep.subr.bf16.mxu0 0
    %2940 = vmatpush1.bf16.msra.mxu0 0
    %2941 = vmatprep.subr.bf16.mxu0 0
    %2942 = vmatpush1.bf16.msra.mxu0 0
    %2943 = vmatprep.subr.bf16.mxu0 0
    %2944 = vmatpush1.bf16.msra.mxu0 0
    %2945 = vmatprep.subr.bf16.mxu0 0
    %2946 = vmatpush1.bf16.msra.mxu0 0
    %2947 = vmatprep.subr.bf16.mxu0 0
    %2948 = vmatpush1.bf16.msra.mxu0 0
    %2949 = vmatprep.subr.bf16.mxu0 0
    %2950 = vmatpush1.bf16.msra.mxu0 0
    %2951 = vmatprep.subr.bf16.mxu0 0
    %2952 = vmatpush1.bf16.msra.mxu0 0
    %2953 = vmatprep.subr.bf16.mxu0 0
    %2954 = vmatpush1.bf16.msra.mxu0 0
    %2955 = vmatprep.subr.bf16.mxu0 0
    %2956 = vmatpush1.bf16.msra.mxu0 0
    %2957 = vmatprep.subr.bf16.mxu0 0
    %2958 = vmatpush1.bf16.msra.mxu0 0
    %2959 = vmatprep.subr.bf16.mxu0 0
    %2960 = vmatpush1.bf16.msra.mxu0 0
    %2961 = vmatprep.mubr.bf16.mxu0 0
    %2962 = vmatmul.mubr.bf16.gmra.mrb[0].mxu0 %v2924
    %v2963 = vpop.f32.mrb[0].mxu0
    %v2964 = vadd.f32 %v2910, %v2963
    %v2965 = vpop.f32.mrb[0].mxu0
    %v2966 = vpop.f32.mrb[0].mxu0
    %v2967 = vadd.f32 %v2910, %v2966
    %v2968 = vpop.f32.mrb[0].mxu0
    %2969 = vmatprep.mubr.bf16.mxu0 0
    %2970 = vmatmul.mubr.bf16.gmra.mrb[0].mxu0 %v2927
    %v2971 = vpop.f32.mrb[0].mxu0
    %v2972 = vadd.f32 %v2910, %v2971
    %v2973 = vpop.f32.mrb[0].mxu0
    %v2974 = vpop.f32.mrb[0].mxu0
    %v2975 = vpop.f32.mrb[0].mxu0
    %2976 = vdwg.mxu0
    %v2977 = vld [vmem:[%s2275 + $0x8] sm:$0x1]
    %v2978 = vld [vmem:[%s2275 + $0x9] sm:$0x1]
    %v2979 = vsel %vm506, %v2964, 0.0
    %2980 = vadd.xlane.f32.xlu0 %v2979
    %v2981 = vpop.xlane.xlu0 %2980
    %v2982 = vsel %vm506, %v2967, 0.0
    %2983 = vadd.xlane.f32.xlu0 %v2982
    %v2984 = vpop.xlane.xlu0 %2983
    %v2985 = vsel %vm650, %v2972, 0.0
    %2986 = vadd.xlane.f32.xlu0 %v2985
    %v2987 = vpop.xlane.xlu0 %2986
    %v2988 = vmul.f32 %v2981, %v654
    %v2989 = vmul.f32 %v2984, %v654
    %v2990 = vmul.f32 %v2987, %v654
    %v2991 = vsub.f32 %v2964, %v2988
    %v2992 = vsub.f32 %v2967, %v2989
    %v2993 = vsub.f32 %v2972, %v2990
    %v2994 = vmul.f32 %v2991, %v2991
    %v2995 = vmul.f32 %v2992, %v2992
    %v2996 = vmul.f32 %v2993, %v2993
    %v2997 = vsel %vm506, %v2994, 0.0
    %2998 = vadd.xlane.f32.xlu0 %v2997
    %v2999 = vpop.xlane.xlu0 %2998
    %v3000 = vsel %vm506, %v2995, 0.0
    %3001 = vadd.xlane.f32.xlu0 %v3000
    %v3002 = vpop.xlane.xlu0 %3001
    %v3003 = vsel %vm650, %v2996, 0.0
    %3004 = vadd.xlane.f32.xlu0 %v3003
    %v3005 = vpop.xlane.xlu0 %3004
    %v3006 = vmul.f32 %v2999, %v654
    %v3007 = vmul.f32 %v3002, %v654
    %v3008 = vmul.f32 %v3005, %v654
    %v3009 = vadd.f32 %v3006, 1e-05
    %v3010 = vadd.f32 %v3007, 1e-05
    %v3011 = vadd.f32 %v3008, 1e-05
    %v3012 = vrsqrt.pop %v3009
    %v3013 = vrsqrt.pop %v3010
    %v3014 = vrsqrt.pop %v3011
    %v3015 = vmul.f32 %v2991, %v3012
    %v3016 = vmul.f32 %v2992, %v3013
    %v3017 = vmul.f32 %v2993, %v3014
    %v3018 = vlaneseq
    %v3019 = vshrl.u32 %v3018, 7
    %v3020 = vsub.s32 0, %v3019
    %v3021 = vrot.slane %v2977, %v3020
    %v3022 = vmul.f32 %v3015, %v3021
    %v3023 = vmul.f32 %v3016, %v3021
    %v3024 = vmul.f32 %v3017, %v3021
    %v3025 = vlaneseq
    %v3026 = vshrl.u32 %v3025, 7
    %v3027 = vsub.s32 0, %v3026
    %v3028 = vrot.slane %v2978, %v3027
    %v3029 = vadd.f32 %v3022, %v3028
    %v3030 = vadd.f32 %v3023, %v3028
    %v3031 = vadd.f32 %v3024, %v3028
    %v3032 = vadd.f32 %v1904, %v3029
    %v3033 = vadd.f32 %v1905, %v3030
    %v3034 = vadd.f32 %v1906, %v3031
    %v3035 = vld [vmem:[#allocation4] sm:$0xff]
    %v3036 = vld [vmem:[#allocation4 + $0x8] sm:$0xff]
    %v3037 = vld [vmem:[#allocation4 + $0x10] sm:$0xff]
    %v3039 = vsel %vm720, %v3035, 0
    %v3042 = vsel %vm720, %v3036, 0
    %v3045 = vsel %vm720, %v3037, 0
    %v3048 = vsel %vm757, %v3034, 0
    %3050 = vmatprep.subr.mxu0 0.0
    %3051 = vmatpush1.msra.mxu0 %v3032
    %3052 = vmatprep.subr.mxu0 0.0
    %3053 = vmatpush1.msra.mxu0 %v3033
    %3054 = vmatprep.subr.mxu0 0.0
    %3055 = vmatpush1.msra.mxu0 %v3048
    %3056 = vmatprep.subr.mxu0 0.0
    %3057 = vmatpush1.msra.mxu0 0.0
    %3058 = vmatprep.subr.mxu0 0.0
    %3059 = vmatpush1.msra.mxu0 0.0
    %3060 = vmatprep.subr.mxu0 0.0
    %3061 = vmatpush1.msra.mxu0 0.0
    %3062 = vmatprep.subr.mxu0 0.0
    %3063 = vmatpush1.msra.mxu0 0.0
    %3064 = vmatprep.subr.mxu0 0.0
    %3065 = vmatpush1.msra.mxu0 0.0
    %3066 = vmatprep.subr.mxu0 0.0
    %3067 = vmatpush1.msra.mxu0 0.0
    %3068 = vmatprep.subr.mxu0 0.0
    %3069 = vmatpush1.msra.mxu0 0.0
    %3070 = vmatprep.subr.mxu0 0.0
    %3071 = vmatpush1.msra.mxu0 0.0
    %3072 = vmatprep.subr.mxu0 0.0
    %3073 = vmatpush1.msra.mxu0 0.0
    %3074 = vmatprep.subr.mxu0 0.0
    %3075 = vmatpush1.msra.mxu0 0.0
    %3076 = vmatprep.subr.mxu0 0.0
    %3077 = vmatpush1.msra.mxu0 0.0
    %3078 = vmatprep.subr.mxu0 0.0
    %3079 = vmatpush1.msra.mxu0 0.0
    %3080 = vmatprep.subr.mxu0 0.0
    %3081 = vmatpush1.msra.mxu0 0.0
    %3082 = vmatprep.subr.mxu0 0.0
    %3083 = vmatpush1.msra.mxu0 0.0
    %3084 = vmatprep.subr.mxu0 0.0
    %3085 = vmatpush1.msra.mxu0 0.0
    %3086 = vmatprep.subr.mxu0 0.0
    %3087 = vmatpush1.msra.mxu0 0.0
    %3088 = vmatprep.subr.mxu0 0.0
    %3089 = vmatpush1.msra.mxu0 0.0
    %3090 = vmatprep.subr.mxu0 0.0
    %3091 = vmatpush1.msra.mxu0 0.0
    %3092 = vmatprep.subr.mxu0 0.0
    %3093 = vmatpush1.msra.mxu0 0.0
    %3094 = vmatprep.subr.mxu0 0.0
    %3095 = vmatpush1.msra.mxu0 0.0
    %3096 = vmatprep.subr.mxu0 0.0
    %3097 = vmatpush1.msra.mxu0 0.0
    %3098 = vmatprep.subr.mxu0 0.0
    %3099 = vmatpush1.msra.mxu0 0.0
    %3100 = vmatprep.subr.mxu0 0.0
    %3101 = vmatpush1.msra.mxu0 0.0
    %3102 = vmatprep.subr.mxu0 0.0
    %3103 = vmatpush1.msra.mxu0 0.0
    %3104 = vmatprep.subr.mxu0 0.0
    %3105 = vmatpush1.msra.mxu0 0.0
    %3106 = vmatprep.subr.mxu0 0.0
    %3107 = vmatpush1.msra.mxu0 0.0
    %3108 = vmatprep.subr.mxu0 0.0
    %3109 = vmatpush1.msra.mxu0 0.0
    %3110 = vmatprep.subr.mxu0 0.0
    %3111 = vmatpush1.msra.mxu0 0.0
    %3112 = vmatprep.subr.mxu0 0.0
    %3113 = vmatpush1.msra.mxu0 0.0
    %3114 = vmatprep.mubr.f32.mxu0 0.0
    %3115 = vmatmul.mubr.f32.gmra.mrb[0].mxu0 %v3039
    %v3116 = vpop.f32.mrb[0].mxu0
    %v3117 = vadd.f32 0.0, %v3116
    %v3118 = vpop.f32.mrb[0].mxu0
    %3119 = vmatprep.mubr.f32.mxu0 0.0
    %3120 = vmatmul.mubr.f32.gmra.mrb[0].mxu0 %v3042
    %v3121 = vpop.f32.mrb[0].mxu0
    %v3122 = vadd.f32 0.0, %v3121
    %v3123 = vpop.f32.mrb[0].mxu0
    %3124 = vmatprep.mubr.f32.mxu0 0.0
    %3125 = vmatmul.mubr.f32.gmra.mrb[0].mxu0 %v3045
    %v3126 = vpop.f32.mrb[0].mxu0
    %v3127 = vadd.f32 0.0, %v3126
    %v3128 = vpop.f32.mrb[0].mxu0
    %3129 = vdwg.mxu0
    %v3130 = vld [vmem:[#allocation10] sm:$0xff]
    %v3131 = vld [vmem:[#allocation10 + $0x8] sm:$0xff]
    %v3132 = vld [vmem:[#allocation7] sm:$0xff]
    %v3133 = vld [vmem:[#allocation7 + $0x8] sm:$0xff]
    %v3134 = vld [vmem:[#allocation22] sm:$0x1]
    %v3135 = vld [vmem:[#allocation22 + $0x1] sm:$0x1]
    %v3136 = vld [vmem:[#allocation24] sm:$0x1]
    %v3137 = vld [vmem:[#allocation24 + $0x1] sm:$0x1]
    %v3138 = vld [vmem:[#allocation19] sm:$0xf]
    %v3139 = vld [vmem:[#allocation19 + $0x4] sm:$0xf]
    %v3140 = vld [vmem:[#allocation19 + $0x8] sm:$0xf]
    %v3141 = vld [vmem:[#allocation19 + $0xc] sm:$0xf]
    %v3142 = vld [vmem:[#allocation19 + $0x10] sm:$0xf]
    %v3143 = vld [vmem:[#allocation19 + $0x14] sm:$0xf]
    %v3144 = vld [vmem:[#allocation19 + $0x18] sm:$0xf]
    %v3145 = vld [vmem:[#allocation19 + $0x1c] sm:$0xf]
    %v3146 = vld [vmem:[#allocation22 + $0x2] sm:$0x1]
    %v3147 = vld [vmem:[#allocation21] sm:$0xf]
    %v3148 = vld [vmem:[#allocation21 + $0x4] sm:$0xf]
    %v3149 = vld [vmem:[#allocation21 + $0x8] sm:$0xf]
    %v3150 = vld [vmem:[#allocation21 + $0xc] sm:$0xf]
    %v3151 = vld [vmem:[#allocation22 + $0x3] sm:$0x1]
    %s3152 = scalar_lea.vmem [#allocation21], 16
    %v3153 = vld [vmem:[%s3152] sm:$0xf]
    %v3154 = vld [vmem:[%s3152 + $0x4] sm:$0xf]
    %v3155 = vld [vmem:[%s3152 + $0x8] sm:$0xf]
    %v3156 = vld [vmem:[%s3152 + $0xc] sm:$0xf]
    %v3157 = vld [vmem:[#allocation22 + $0x4] sm:$0x1]
    %s3158 = scalar_lea.vmem [#allocation19], 32
    %v3159 = vld [vmem:[%s3158] sm:$0xf]
    %v3160 = vld [vmem:[%s3158 + $0x4] sm:$0xf]
    %v3161 = vld [vmem:[%s3158 + $0x8] sm:$0xf]
    %v3162 = vld [vmem:[%s3158 + $0xc] sm:$0xf]
    %v3163 = vld [vmem:[%s3158 + $0x10] sm:$0xf]
    %v3164 = vld [vmem:[%s3158 + $0x14] sm:$0xf]
    %v3165 = vld [vmem:[%s3158 + $0x18] sm:$0xf]
    %v3166 = vld [vmem:[%s3158 + $0x1c] sm:$0xf]
    %v3167 = vld [vmem:[#allocation22 + $0x5] sm:$0x1]
    %v3168 = vld [vmem:[#allocation22 + $0x6] sm:$0x1]
    %v3169 = vld [vmem:[#allocation22 + $0x7] sm:$0x1]
    %s3170 = scalar_lea.vmem [#allocation19], 64
    %v3171 = vld [vmem:[%s3170] sm:$0xf]
    %v3172 = vld [vmem:[%s3170 + $0x4] sm:$0xf]
    %v3173 = vld [vmem:[%s3170 + $0x8] sm:$0xf]
    %v3174 = vld [vmem:[%s3170 + $0xc] sm:$0xf]
    %v3175 = vld [vmem:[%s3170 + $0x10] sm:$0xf]
    %v3176 = vld [vmem:[%s3170 + $0x14] sm:$0xf]
    %v3177 = vld [vmem:[%s3170 + $0x18] sm:$0xf]
    %v3178 = vld [vmem:[%s3170 + $0x1c] sm:$0xf]
    %v3179 = vld [vmem:[#allocation22 + $0x8] sm:$0x1]
    %s3180 = scalar_lea.vmem [#allocation19], 96
    %v3181 = vld [vmem:[%s3180] sm:$0xf]
    %v3182 = vld [vmem:[%s3180 + $0x4] sm:$0xf]
    %v3183 = vld [vmem:[%s3180 + $0x8] sm:$0xf]
    %v3184 = vld [vmem:[%s3180 + $0xc] sm:$0xf]
    %v3185 = vld [vmem:[%s3180 + $0x10] sm:$0xf]
    %v3186 = vld [vmem:[%s3180 + $0x14] sm:$0xf]
    %v3187 = vld [vmem:[%s3180 + $0x18] sm:$0xf]
    %v3188 = vld [vmem:[%s3180 + $0x1c] sm:$0xf]
    %v3189 = vld [vmem:[#allocation22 + $0x9] sm:$0x1]
    %vm3190 = vcmask 523264
    %v3191 = vsel %vm3190, %v3130, 0.0
    %3192 = vadd.xlane.f32.xlu0 %v3191
    %v3193 = vpop.xlane.xlu0 %3192
    %v3194 = vsel %vm3190, %v3131, 0.0
    %3195 = vadd.xlane.f32.xlu0 %v3194
    %v3196 = vpop.xlane.xlu0 %3195
    %v3197 = vrcp.pop 64.0
    %v3198 = vmul.f32 %v3193, %v3197
    %v3199 = vmul.f32 %v3196, %v3197
    %v3200 = vsub.f32 %v3130, %v3198
    %v3201 = vsub.f32 %v3131, %v3199
    %v3202 = vmul.f32 %v3200, %v3200
    %v3203 = vmul.f32 %v3201, %v3201
    %v3204 = vsel %vm3190, %v3202, 0.0
    %3205 = vadd.xlane.f32.xlu0 %v3204
    %v3206 = vpop.xlane.xlu0 %3205
    %v3207 = vsel %vm3190, %v3203, 0.0
    %3208 = vadd.xlane.f32.xlu0 %v3207
    %v3209 = vpop.xlane.xlu0 %3208
    %v3210 = vmul.f32 %v3206, %v3197
    %v3211 = vmul.f32 %v3209, %v3197
    %v3212 = vadd.f32 %v3210, 1e-05
    %v3213 = vadd.f32 %v3211, 1e-05
    %v3214 = vrsqrt.pop %v3212
    %v3215 = vrsqrt.pop %v3213
    %v3216 = vmul.f32 %v3200, %v3214
    %v3217 = vmul.f32 %v3201, %v3215
    %v3218 = vlaneseq
    %v3219 = vshrl.u32 %v3218, 7
    %v3220 = vsub.s32 0, %v3219
    %v3221 = vrot.slane %v3134, %v3220
    %v3222 = vmul.f32 %v3216, %v3221
    %v3223 = vmul.f32 %v3217, %v3221
    %v3224 = vlaneseq
    %v3225 = vshrl.u32 %v3224, 7
    %v3226 = vsub.s32 0, %v3225
    %v3227 = vrot.slane %v3135, %v3226
    %v3228 = vadd.f32 %v3222, %v3227
    %v3229 = vadd.f32 %v3223, %v3227
    %v3230 = vsel %vm506, %v3117, 0.0
    %3231 = vadd.xlane.f32.xlu0 %v3230
    %v3232 = vpop.xlane.xlu0 %3231
    %v3233 = vsel %vm506, %v3122, 0.0
    %3234 = vadd.xlane.f32.xlu0 %v3233
    %v3235 = vpop.xlane.xlu0 %3234
    %v3236 = vsel %vm506, %v3127, 0.0
    %3237 = vadd.xlane.f32.xlu0 %v3236
    %v3238 = vpop.xlane.xlu0 %3237
    %v3239 = vmul.f32 %v3232, %v654
    %v3240 = vmul.f32 %v3235, %v654
    %v3241 = vmul.f32 %v3238, %v654
    %v3242 = vsub.f32 %v3117, %v3239
    %v3243 = vsub.f32 %v3122, %v3240
    %v3244 = vsub.f32 %v3127, %v3241
    %v3245 = vmul.f32 %v3242, %v3242
    %v3246 = vmul.f32 %v3243, %v3243
    %v3247 = vmul.f32 %v3244, %v3244
    %v3248 = vsel %vm506, %v3245, 0.0
    %3249 = vadd.xlane.f32.xlu0 %v3248
    %v3250 = vpop.xlane.xlu0 %3249
    %v3251 = vsel %vm506, %v3246, 0.0
    %3252 = vadd.xlane.f32.xlu0 %v3251
    %v3253 = vpop.xlane.xlu0 %3252
    %v3254 = vsel %vm506, %v3247, 0.0
    %3255 = vadd.xlane.f32.xlu0 %v3254
    %v3256 = vpop.xlane.xlu0 %3255
    %v3257 = vmul.f32 %v3250, %v654
    %v3258 = vmul.f32 %v3253, %v654
    %v3259 = vmul.f32 %v3256, %v654
    %v3260 = vadd.f32 %v3257, 1e-05
    %v3261 = vadd.f32 %v3258, 1e-05
    %v3262 = vadd.f32 %v3259, 1e-05
    %v3263 = vrsqrt.pop %v3260
    %v3264 = vrsqrt.pop %v3261
    %v3265 = vrsqrt.pop %v3262
    %v3266 = vmul.f32 %v3242, %v3263
    %v3267 = vmul.f32 %v3243, %v3264
    %v3268 = vmul.f32 %v3244, %v3265
    %v3269 = vlaneseq
    %v3270 = vshrl.u32 %v3269, 7
    %v3271 = vsub.s32 0, %v3270
    %v3272 = vrot.slane %v3136, %v3271
    %v3273 = vmul.f32 %v3266, %v3272
    %v3274 = vmul.f32 %v3267, %v3272
    %v3275 = vmul.f32 %v3268, %v3272
    %v3276 = vlaneseq
    %v3277 = vshrl.u32 %v3276, 7
    %v3278 = vsub.s32 0, %v3277
    %v3279 = vrot.slane %v3137, %v3278
    %v3280 = vadd.f32 %v3273, %v3279
    %v3281 = vadd.f32 %v3274, %v3279
    %v3282 = vadd.f32 %v3275, %v3279
    %v3283 = vpack.c.bf16 %v3229, %v3228
    %v3284 = vlaneseq
    %v3285 = vshrl.u32 %v3284, 7
    %v3286 = vsub.s32 0, %v3285
    %v3287 = vrot.slane %v3146, %v3286
    %v3296 = vunpack.c.l.b16 %v3138
    %v3297 = vunpack.c.l.b16 %v3139
    %v3298 = vunpack.c.l.b16 %v3140
    %v3299 = vunpack.c.l.b16 %v3141
    %v3300 = vunpack.c.l.b16 %v3142
    %v3301 = vunpack.c.l.b16 %v3143
    %v3302 = vunpack.c.l.b16 %v3144
    %v3303 = vunpack.c.l.b16 %v3145
    %v3304 = vpack.c.b16 %v3297, %v3296
    %v3305 = vpack.c.b16 %v3299, %v3298
    %v3306 = vpack.c.b16 %v3301, %v3300
    %v3307 = vpack.c.b16 %v3303, %v3302
    %v3313 = vsel %vm3190, %v3283, 0
    %3315 = vmatprep.subr.bf16.mxu0 0
    %3316 = vmatpush1.bf16.msra.mxu0 %v3304
    %3317 = vmatprep.subr.bf16.mxu0 0
    %3318 = vmatpush1.bf16.msra.mxu0 %v3305
    %3319 = vmatprep.subr.bf16.mxu0 0
    %3320 = vmatpush1.bf16.msra.mxu0 %v3306
    %3321 = vmatprep.subr.bf16.mxu0 0
    %3322 = vmatpush1.bf16.msra.mxu0 %v3307
    %3323 = vmatprep.subr.bf16.mxu0 0
    %3324 = vmatpush1.bf16.msra.mxu0 0
    %3325 = vmatprep.subr.bf16.mxu0 0
    %3326 = vmatpush1.bf16.msra.mxu0 0
    %3327 = vmatprep.subr.bf16.mxu0 0
    %3328 = vmatpush1.bf16.msra.mxu0 0
    %3329 = vmatprep.subr.bf16.mxu0 0
    %3330 = vmatpush1.bf16.msra.mxu0 0
    %3331 = vmatprep.subr.bf16.mxu0 0
    %3332 = vmatpush1.bf16.msra.mxu0 0
    %3333 = vmatprep.subr.bf16.mxu0 0
    %3334 = vmatpush1.bf16.msra.mxu0 0
    %3335 = vmatprep.subr.bf16.mxu0 0
    %3336 = vmatpush1.bf16.msra.mxu0 0
    %3337 = vmatprep.subr.bf16.mxu0 0
    %3338 = vmatpush1.bf16.msra.mxu0 0
    %3339 = vmatprep.subr.bf16.mxu0 0
    %3340 = vmatpush1.bf16.msra.mxu0 0
    %3341 = vmatprep.subr.bf16.mxu0 0
    %3342 = vmatpush1.bf16.msra.mxu0 0
    %3343 = vmatprep.subr.bf16.mxu0 0
    %3344 = vmatpush1.bf16.msra.mxu0 0
    %3345 = vmatprep.subr.bf16.mxu0 0
    %3346 = vmatpush1.bf16.msra.mxu0 0
    %3347 = vmatprep.mubr.bf16.mxu0 0
    %3348 = vmatmul.mubr.bf16.gmra.mrb[0].mxu0 %v3313
    %v3349 = vpop.f32.mrb[0].mxu0
    %v3350 = vadd.f32 %v3287, %v3349
    %v3351 = vpop.f32.mrb[0].mxu0
    %v3352 = vpop.f32.mrb[0].mxu0
    %v3353 = vadd.f32 %v3287, %v3352
    %v3354 = vpop.f32.mrb[0].mxu0
    %3355 = vdwg.mxu0
    %v3356 = vmul.f32 %v3350, 0.125
    %v3357 = vmul.f32 %v3353, 0.125
    %v3358 = vpack.c.bf16 %v3281, %v3280
    %v3359 = vpack.c.bf16 %v3282, %v3282
    %v3360 = vlaneseq
    %v3361 = vshrl.u32 %v3360, 7
    %v3362 = vsub.s32 0, %v3361
    %v3363 = vrot.slane %v3151, %v3362
    %v3368 = vunpack.c.l.b16 %v3147
    %v3369 = vunpack.c.l.b16 %v3148
    %v3370 = vunpack.c.l.b16 %v3149
    %v3371 = vunpack.c.l.b16 %v3150
    %v3372 = vpack.c.b16 %v3369, %v3368
    %v3373 = vpack.c.b16 %v3371, %v3370
    %v3377 = vsel %vm506, %v3358, 0
    %v3380 = vsel %vm506, %v3359, 0
    %3382 = vmatprep.subr.bf16.mxu0 0
    %3383 = vmatpush1.bf16.msra.mxu0 %v3372
    %3384 = vmatprep.subr.bf16.mxu0 0
    %3385 = vmatpush1.bf16.msra.mxu0 %v3373
    %3386 = vmatprep.subr.bf16.mxu0 0
    %3387 = vmatpush1.bf16.msra.mxu0 0
    %3388 = vmatprep.subr.bf16.mxu0 0
    %3389 = vmatpush1.bf16.msra.mxu0 0
    %3390 = vmatprep.subr.bf16.mxu0 0
    %3391 = vmatpush1.bf16.msra.mxu0 0
    %3392 = vmatprep.subr.bf16.mxu0 0
    %3393 = vmatpush1.bf16.msra.mxu0 0
    %3394 = vmatprep.subr.bf16.mxu0 0
    %3395 = vmatpush1.bf16.msra.mxu0 0
    %3396 = vmatprep.subr.bf16.mxu0 0
    %3397 = vmatpush1.bf16.msra.mxu0 0
    %3398 = vmatprep.subr.bf16.mxu0 0
    %3399 = vmatpush1.bf16.msra.mxu0 0
    %3400 = vmatprep.subr.bf16.mxu0 0
    %3401 = vmatpush1.bf16.msra.mxu0 0
    %3402 = vmatprep.subr.bf16.mxu0 0
    %3403 = vmatpush1.bf16.msra.mxu0 0
    %3404 = vmatprep.subr.bf16.mxu0 0
    %3405 = vmatpush1.bf16.msra.mxu0 0
    %3406 = vmatprep.subr.bf16.mxu0 0
    %3407 = vmatpush1.bf16.msra.mxu0 0
    %3408 = vmatprep.subr.bf16.mxu0 0
    %3409 = vmatpush1.bf16.msra.mxu0 0
    %3410 = vmatprep.subr.bf16.mxu0 0
    %3411 = vmatpush1.bf16.msra.mxu0 0
    %3412 = vmatprep.subr.bf16.mxu0 0
    %3413 = vmatpush1.bf16.msra.mxu0 0
    %3414 = vmatprep.mubr.bf16.mxu0 0
    %3415 = vmatmul.mubr.bf16.gmra.mrb[0].mxu0 %v3377
    %v3416 = vpop.f32.mrb[0].mxu0
    %v3417 = vadd.f32 %v3363, %v3416
    %v3418 = vpop.f32.mrb[0].mxu0
    %v3419 = vpop.f32.mrb[0].mxu0
    %v3420 = vadd.f32 %v3363, %v3419
    %v3421 = vpop.f32.mrb[0].mxu0
    %3422 = vmatprep.mubr.bf16.mxu0 0
    %3423 = vmatmul.mubr.bf16.gmra.mrb[0].mxu0 %v3380
    %v3424 = vpop.f32.mrb[0].mxu0
    %v3425 = vadd.f32 %v3363, %v3424
    %v3426 = vpop.f32.mrb[0].mxu0
    %v3427 = vpop.f32.mrb[0].mxu0
    %v3428 = vpop.f32.mrb[0].mxu0
    %3429 = vdwg.mxu0
    %v3430 = vlaneseq
    %v3431 = vshrl.u32 %v3430, 7
    %v3432 = vsub.s32 0, %v3431
    %v3433 = vrot.slane %v3157, %v3432
    %v3438 = vunpack.c.l.b16 %v3153
    %v3439 = vunpack.c.l.b16 %v3154
    %v3440 = vunpack.c.l.b16 %v3155
    %v3441 = vunpack.c.l.b16 %v3156
    %v3442 = vpack.c.b16 %v3439, %v3438
    %v3443 = vpack.c.b16 %v3441, %v3440
    %3446 = vmatprep.subr.bf16.mxu0 0
    %3447 = vmatpush1.bf16.msra.mxu0 %v3442
    %3448 = vmatprep.subr.bf16.mxu0 0
    %3449 = vmatpush1.bf16.msra.mxu0 %v3443
    %3450 = vmatprep.subr.bf16.mxu0 0
    %3451 = vmatpush1.bf16.msra.mxu0 0
    %3452 = vmatprep.subr.bf16.mxu0 0
    %3453 = vmatpush1.bf16.msra.mxu0 0
    %3454 = vmatprep.subr.bf16.mxu0 0
    %3455 = vmatpush1.bf16.msra.mxu0 0
    %3456 = vmatprep.subr.bf16.mxu0 0
    %3457 = vmatpush1.bf16.msra.mxu0 0
    %3458 = vmatprep.subr.bf16.mxu0 0
    %3459 = vmatpush1.bf16.msra.mxu0 0
    %3460 = vmatprep.subr.bf16.mxu0 0
    %3461 = vmatpush1.bf16.msra.mxu0 0
    %3462 = vmatprep.subr.bf16.mxu0 0
    %3463 = vmatpush1.bf16.msra.mxu0 0
    %3464 = vmatprep.subr.bf16.mxu0 0
    %3465 = vmatpush1.bf16.msra.mxu0 0
    %3466 = vmatprep.subr.bf16.mxu0 0
    %3467 = vmatpush1.bf16.msra.mxu0 0
    %3468 = vmatprep.subr.bf16.mxu0 0
    %3469 = vmatpush1.bf16.msra.mxu0 0
    %3470 = vmatprep.subr.bf16.mxu0 0
    %3471 = vmatpush1.bf16.msra.mxu0 0
    %3472 = vmatprep.subr.bf16.mxu0 0
    %3473 = vmatpush1.bf16.msra.mxu0 0
    %3474 = vmatprep.subr.bf16.mxu0 0
    %3475 = vmatpush1.bf16.msra.mxu0 0
    %3476 = vmatprep.subr.bf16.mxu0 0
    %3477 = vmatpush1.bf16.msra.mxu0 0
    %3478 = vmatprep.mubr.bf16.mxu0 0
    %3479 = vmatmul.mubr.bf16.gmra.mrb[0].mxu0 %v3377
    %v3480 = vpop.f32.mrb[0].mxu0
    %v3481 = vadd.f32 %v3433, %v3480
    %v3482 = vpop.f32.mrb[0].mxu0
    %v3483 = vpop.f32.mrb[0].mxu0
    %v3484 = vadd.f32 %v3433, %v3483
    %v3485 = vpop.f32.mrb[0].mxu0
    %3486 = vmatprep.mubr.bf16.mxu0 0
    %3487 = vmatmul.mubr.bf16.gmra.mrb[0].mxu0 %v3380
    %v3488 = vpop.f32.mrb[0].mxu0
    %v3489 = vadd.f32 %v3433, %v3488
    %v3490 = vpop.f32.mrb[0].mxu0
    %v3491 = vpop.f32.mrb[0].mxu0
    %v3492 = vpop.f32.mrb[0].mxu0
    %3493 = vdwg.mxu0
    %v3495 = vsel %vm3190, %v3356, 0
    %v3498 = vsel %vm3190, %v3357, 0
    %v3501 = vsel %vm3190, %v3417, 0
    %v3504 = vsel %vm3190, %v3420, 0
    %v3507 = vsel %vm3190, %v3425, 0
    %3509 = vmatprep.subr.mxu0 0.0
    %3510 = vmatpush1.xpose.msra.mxu0 %v3501
    %3511 = vmatprep.subr.mxu0 0.0
    %3512 = vmatpush1.xpose.msra.mxu0 %v3504
    %3513 = vmatprep.subr.mxu0 0.0
    %3514 = vmatpush1.xpose.msra.mxu0 %v3507
    %3515 = vmatprep.subr.mxu0 0.0
    %3516 = vmatpush1.xpose.msra.mxu0 0.0
    %3517 = vmatprep.subr.mxu0 0.0
    %3518 = vmatpush1.xpose.msra.mxu0 0.0
    %3519 = vmatprep.subr.mxu0 0.0
    %3520 = vmatpush1.xpose.msra.mxu0 0.0
    %3521 = vmatprep.subr.mxu0 0.0
    %3522 = vmatpush1.xpose.msra.mxu0 0.0
    %3523 = vmatprep.subr.mxu0 0.0
    %3524 = vmatpush1.xpose.msra.mxu0 0.0
    %3525 = vmatprep.subr.mxu0 0.0
    %3526 = vmatpush1.xpose.msra.mxu0 0.0
    %3527 = vmatprep.subr.mxu0 0.0
    %3528 = vmatpush1.xpose.msra.mxu0 0.0
    %3529 = vmatprep.subr.mxu0 0.0
    %3530 = vmatpush1.xpose.msra.mxu0 0.0
    %3531 = vmatprep.subr.mxu0 0.0
    %3532 = vmatpush1.xpose.msra.mxu0 0.0
    %3533 = vmatprep.subr.mxu0 0.0
    %3534 = vmatpush1.xpose.msra.mxu0 0.0
    %3535 = vmatprep.subr.mxu0 0.0
    %3536 = vmatpush1.xpose.msra.mxu0 0.0
    %3537 = vmatprep.subr.mxu0 0.0
    %3538 = vmatpush1.xpose.msra.mxu0 0.0
    %3539 = vmatprep.subr.mxu0 0.0
    %3540 = vmatpush1.xpose.msra.mxu0 0.0
    %3541 = vmatprep.subr.mxu0 0.0
    %3542 = vmatpush1.xpose.msra.mxu0 0.0
    %3543 = vmatprep.subr.mxu0 0.0
    %3544 = vmatpush1.xpose.msra.mxu0 0.0
    %3545 = vmatprep.subr.mxu0 0.0
    %3546 = vmatpush1.xpose.msra.mxu0 0.0
    %3547 = vmatprep.subr.mxu0 0.0
    %3548 = vmatpush1.xpose.msra.mxu0 0.0
    %3549 = vmatprep.subr.mxu0 0.0
    %3550 = vmatpush1.xpose.msra.mxu0 0.0
    %3551 = vmatprep.subr.mxu0 0.0
    %3552 = vmatpush1.xpose.msra.mxu0 0.0
    %3553 = vmatprep.subr.mxu0 0.0
    %3554 = vmatpush1.xpose.msra.mxu0 0.0
    %3555 = vmatprep.subr.mxu0 0.0
    %3556 = vmatpush1.xpose.msra.mxu0 0.0
    %3557 = vmatprep.subr.mxu0 0.0
    %3558 = vmatpush1.xpose.msra.mxu0 0.0
    %3559 = vmatprep.subr.mxu0 0.0
    %3560 = vmatpush1.xpose.msra.mxu0 0.0
    %3561 = vmatprep.subr.mxu0 0.0
    %3562 = vmatpush1.xpose.msra.mxu0 0.0
    %3563 = vmatprep.subr.mxu0 0.0
    %3564 = vmatpush1.xpose.msra.mxu0 0.0
    %3565 = vmatprep.subr.mxu0 0.0
    %3566 = vmatpush1.xpose.msra.mxu0 0.0
    %3567 = vmatprep.subr.mxu0 0.0
    %3568 = vmatpush1.xpose.msra.mxu0 0.0
    %3569 = vmatprep.subr.mxu0 0.0
    %3570 = vmatpush1.xpose.msra.mxu0 0.0
    %3571 = vmatprep.subr.mxu0 0.0
    %3572 = vmatpush1.xpose.msra.mxu0 0.0
    %3573 = vmatprep.mubr.f32.mxu0 0.0
    %3574 = vmatmul.mubr.f32.gmra.mrb[0].mxu0 %v3495
    %v3575 = vpop.f32.mrb[0].mxu0
    %v3576 = vadd.f32 0.0, %v3575
    %v3577 = vpop.f32.mrb[0].mxu0
    %3578 = vmatprep.mubr.f32.mxu0 0.0
    %3579 = vmatmul.mubr.f32.gmra.mrb[0].mxu0 %v3498
    %v3580 = vpop.f32.mrb[0].mxu0
    %v3581 = vadd.f32 0.0, %v3580
    %v3582 = vpop.f32.mrb[0].mxu0
    %3583 = vdwg.mxu0
    %vm3584 = vcmp.gt.f32.partialorder %v3132, 0.0
    %vm3585 = vcmp.gt.f32.partialorder %v3133, 0.0
    %v3586 = vsel %vm3584, %v3576, -1e+30
    %v3587 = vsel %vm3585, %v3581, -1e+30
    %vm3588 = vcmask 195584
    %v3589 = vsel %vm3588, %v3586, -inf
    %3590 = vmax.xlane.f32.xlu0 %v3589
    %v3591 = vpop.xlane.xlu0 %3590
    %v3592 = vsel %vm3588, %v3587, -inf
    %3593 = vmax.xlane.f32.xlu0 %v3592
    %v3594 = vpop.xlane.xlu0 %3593
    %v3595 = vsub.f32 %v3586, %v3591
    %v3596 = vsub.f32 %v3587, %v3594
    %v3597 = vmul.f32 %v3595, 1.442695
    %v3598 = vpow.pop %v3597
    %v3599 = vmul.f32 %v3596, 1.442695
    %v3600 = vpow.pop %v3599
    %v3601 = vmul.f32 %v3598, %v3132
    %v3602 = vmul.f32 %v3600, %v3133
    %v3603 = vsel %vm3588, %v3601, 0.0
    %3604 = vadd.xlane.f32.xlu0 %v3603
    %v3605 = vpop.xlane.xlu0 %3604
    %v3606 = vsel %vm3588, %v3602, 0.0
    %3607 = vadd.xlane.f32.xlu0 %v3606
    %v3608 = vpop.xlane.xlu0 %3607
    %v3609 = vmax.f32 %v3605, 1e-30
    %v3610 = vmax.f32 %v3608, 1e-30
    %v3611 = vrcp.pop %v3609
    %v3612 = vmul.f32 %v3601, %v3611
    %v3613 = vrcp.pop %v3610
    %v3614 = vmul.f32 %v3602, %v3613
    %v3616 = vsel %vm3588, %v3612, 0
    %v3619 = vsel %vm3588, %v3614, 0
    %3621 = vmatprep.subr.mxu0 0.0
    %3622 = vmatpush1.msra.mxu0 %v3481
    %3623 = vmatprep.subr.mxu0 0.0
    %3624 = vmatpush1.msra.mxu0 %v3484
    %3625 = vmatprep.subr.mxu0 0.0
    %3626 = vmatpush1.msra.mxu0 %v3489
    %3627 = vmatprep.subr.mxu0 0.0
    %3628 = vmatpush1.msra.mxu0 0.0
    %3629 = vmatprep.subr.mxu0 0.0
    %3630 = vmatpush1.msra.mxu0 0.0
    %3631 = vmatprep.subr.mxu0 0.0
    %3632 = vmatpush1.msra.mxu0 0.0
    %3633 = vmatprep.subr.mxu0 0.0
    %3634 = vmatpush1.msra.mxu0 0.0
    %3635 = vmatprep.subr.mxu0 0.0
    %3636 = vmatpush1.msra.mxu0 0.0
    %3637 = vmatprep.subr.mxu0 0.0
    %3638 = vmatpush1.msra.mxu0 0.0
    %3639 = vmatprep.subr.mxu0 0.0
    %3640 = vmatpush1.msra.mxu0 0.0
    %3641 = vmatprep.subr.mxu0 0.0
    %3642 = vmatpush1.msra.mxu0 0.0
    %3643 = vmatprep.subr.mxu0 0.0
    %3644 = vmatpush1.msra.mxu0 0.0
    %3645 = vmatprep.subr.mxu0 0.0
    %3646 = vmatpush1.msra.mxu0 0.0
    %3647 = vmatprep.subr.mxu0 0.0
    %3648 = vmatpush1.msra.mxu0 0.0
    %3649 = vmatprep.subr.mxu0 0.0
    %3650 = vmatpush1.msra.mxu0 0.0
    %3651 = vmatprep.subr.mxu0 0.0
    %3652 = vmatpush1.msra.mxu0 0.0
    %3653 = vmatprep.subr.mxu0 0.0
    %3654 = vmatpush1.msra.mxu0 0.0
    %3655 = vmatprep.subr.mxu0 0.0
    %3656 = vmatpush1.msra.mxu0 0.0
    %3657 = vmatprep.subr.mxu0 0.0
    %3658 = vmatpush1.msra.mxu0 0.0
    %3659 = vmatprep.subr.mxu0 0.0
    %3660 = vmatpush1.msra.mxu0 0.0
    %3661 = vmatprep.subr.mxu0 0.0
    %3662 = vmatpush1.msra.mxu0 0.0
    %3663 = vmatprep.subr.mxu0 0.0
    %3664 = vmatpush1.msra.mxu0 0.0
    %3665 = vmatprep.subr.mxu0 0.0
    %3666 = vmatpush1.msra.mxu0 0.0
    %3667 = vmatprep.subr.mxu0 0.0
    %3668 = vmatpush1.msra.mxu0 0.0
    %3669 = vmatprep.subr.mxu0 0.0
    %3670 = vmatpush1.msra.mxu0 0.0
    %3671 = vmatprep.subr.mxu0 0.0
    %3672 = vmatpush1.msra.mxu0 0.0
    %3673 = vmatprep.subr.mxu0 0.0
    %3674 = vmatpush1.msra.mxu0 0.0
    %3675 = vmatprep.subr.mxu0 0.0
    %3676 = vmatpush1.msra.mxu0 0.0
    %3677 = vmatprep.subr.mxu0 0.0
    %3678 = vmatpush1.msra.mxu0 0.0
    %3679 = vmatprep.subr.mxu0 0.0
    %3680 = vmatpush1.msra.mxu0 0.0
    %3681 = vmatprep.subr.mxu0 0.0
    %3682 = vmatpush1.msra.mxu0 0.0
    %3683 = vmatprep.subr.mxu0 0.0
    %3684 = vmatpush1.msra.mxu0 0.0
    %3685 = vmatprep.mubr.f32.mxu0 0.0
    %3686 = vmatmul.mubr.f32.gmra.mrb[0].mxu0 %v3616
    %v3687 = vpop.f32.mrb[0].mxu0
    %v3688 = vadd.f32 0.0, %v3687
    %v3689 = vpop.f32.mrb[0].mxu0
    %3690 = vmatprep.mubr.f32.mxu0 0.0
    %3691 = vmatmul.mubr.f32.gmra.mrb[0].mxu0 %v3619
    %v3692 = vpop.f32.mrb[0].mxu0
    %v3693 = vadd.f32 0.0, %v3692
    %v3694 = vpop.f32.mrb[0].mxu0
    %3695 = vdwg.mxu0
    %v3696 = vpack.c.bf16 %v3693, %v3688
    %v3697 = vlaneseq
    %v3698 = vshrl.u32 %v3697, 7
    %v3699 = vsub.s32 0, %v3698
    %v3700 = vrot.slane %v3167, %v3699
    %v3709 = vunpack.c.l.b16 %v3159
    %v3710 = vunpack.c.l.b16 %v3160
    %v3711 = vunpack.c.l.b16 %v3161
    %v3712 = vunpack.c.l.b16 %v3162
    %v3713 = vunpack.c.l.b16 %v3163
    %v3714 = vunpack.c.l.b16 %v3164
    %v3715 = vunpack.c.l.b16 %v3165
    %v3716 = vunpack.c.l.b16 %v3166
    %v3717 = vpack.c.b16 %v3710, %v3709
    %v3718 = vpack.c.b16 %v3712, %v3711
    %v3719 = vpack.c.b16 %v3714, %v3713
    %v3720 = vpack.c.b16 %v3716, %v3715
    %v3726 = vsel %vm3190, %v3696, 0
    %3728 = vmatprep.subr.bf16.mxu0 0
    %3729 = vmatpush1.bf16.msra.mxu0 %v3717
    %3730 = vmatprep.subr.bf16.mxu0 0
    %3731 = vmatpush1.bf16.msra.mxu0 %v3718
    %3732 = vmatprep.subr.bf16.mxu0 0
    %3733 = vmatpush1.bf16.msra.mxu0 %v3719
    %3734 = vmatprep.subr.bf16.mxu0 0
    %3735 = vmatpush1.bf16.msra.mxu0 %v3720
    %3736 = vmatprep.subr.bf16.mxu0 0
    %3737 = vmatpush1.bf16.msra.mxu0 0
    %3738 = vmatprep.subr.bf16.mxu0 0
    %3739 = vmatpush1.bf16.msra.mxu0 0
    %3740 = vmatprep.subr.bf16.mxu0 0
    %3741 = vmatpush1.bf16.msra.mxu0 0
    %3742 = vmatprep.subr.bf16.mxu0 0
    %3743 = vmatpush1.bf16.msra.mxu0 0
    %3744 = vmatprep.subr.bf16.mxu0 0
    %3745 = vmatpush1.bf16.msra.mxu0 0
    %3746 = vmatprep.subr.bf16.mxu0 0
    %3747 = vmatpush1.bf16.msra.mxu0 0
    %3748 = vmatprep.subr.bf16.mxu0 0
    %3749 = vmatpush1.bf16.msra.mxu0 0
    %3750 = vmatprep.subr.bf16.mxu0 0
    %3751 = vmatpush1.bf16.msra.mxu0 0
    %3752 = vmatprep.subr.bf16.mxu0 0
    %3753 = vmatpush1.bf16.msra.mxu0 0
    %3754 = vmatprep.subr.bf16.mxu0 0
    %3755 = vmatpush1.bf16.msra.mxu0 0
    %3756 = vmatprep.subr.bf16.mxu0 0
    %3757 = vmatpush1.bf16.msra.mxu0 0
    %3758 = vmatprep.subr.bf16.mxu0 0
    %3759 = vmatpush1.bf16.msra.mxu0 0
    %3760 = vmatprep.mubr.bf16.mxu0 0
    %3761 = vmatmul.mubr.bf16.gmra.mrb[0].mxu0 %v3726
    %v3762 = vpop.f32.mrb[0].mxu0
    %v3763 = vadd.f32 %v3700, %v3762
    %v3764 = vpop.f32.mrb[0].mxu0
    %v3765 = vpop.f32.mrb[0].mxu0
    %v3766 = vadd.f32 %v3700, %v3765
    %v3767 = vpop.f32.mrb[0].mxu0
    %3768 = vdwg.mxu0
    %v3769 = vadd.f32 %v3130, %v3763
    %v3770 = vadd.f32 %v3131, %v3766
    %v3771 = vsel %vm3190, %v3769, 0.0
    %3772 = vadd.xlane.f32.xlu0 %v3771
    %v3773 = vpop.xlane.xlu0 %3772
    %v3774 = vsel %vm3190, %v3770, 0.0
    %3775 = vadd.xlane.f32.xlu0 %v3774
    %v3776 = vpop.xlane.xlu0 %3775
    %v3777 = vmul.f32 %v3773, %v3197
    %v3778 = vmul.f32 %v3776, %v3197
    %v3779 = vsub.f32 %v3769, %v3777
    %v3780 = vsub.f32 %v3770, %v3778
    %v3781 = vmul.f32 %v3779, %v3779
    %v3782 = vmul.f32 %v3780, %v3780
    %v3783 = vsel %vm3190, %v3781, 0.0
    %3784 = vadd.xlane.f32.xlu0 %v3783
    %v3785 = vpop.xlane.xlu0 %3784
    %v3786 = vsel %vm3190, %v3782, 0.0
    %3787 = vadd.xlane.f32.xlu0 %v3786
    %v3788 = vpop.xlane.xlu0 %3787
    %v3789 = vmul.f32 %v3785, %v3197
    %v3790 = vmul.f32 %v3788, %v3197
    %v3791 = vadd.f32 %v3789, 1e-05
    %v3792 = vadd.f32 %v3790, 1e-05
    %v3793 = vrsqrt.pop %v3791
    %v3794 = vrsqrt.pop %v3792
    %v3795 = vmul.f32 %v3779, %v3793
    %v3796 = vmul.f32 %v3780, %v3794
    %v3797 = vlaneseq
    %v3798 = vshrl.u32 %v3797, 7
    %v3799 = vsub.s32 0, %v3798
    %v3800 = vrot.slane %v3168, %v3799
    %v3801 = vmul.f32 %v3795, %v3800
    %v3802 = vmul.f32 %v3796, %v3800
    %v3803 = vlaneseq
    %v3804 = vshrl.u32 %v3803, 7
    %v3805 = vsub.s32 0, %v3804
    %v3806 = vrot.slane %v3169, %v3805
    %v3807 = vadd.f32 %v3801, %v3806
    %v3808 = vadd.f32 %v3802, %v3806
    %v3809 = vpack.c.bf16 %v3808, %v3807
    %v3810 = vlaneseq
    %v3811 = vshrl.u32 %v3810, 7
    %v3812 = vsub.s32 0, %v3811
    %v3813 = vrot.slane %v3179, %v3812
    %v3822 = vunpack.c.l.b16 %v3171
    %v3823 = vunpack.c.l.b16 %v3172
    %v3824 = vunpack.c.l.b16 %v3173
    %v3825 = vunpack.c.l.b16 %v3174
    %v3826 = vunpack.c.l.b16 %v3175
    %v3827 = vunpack.c.l.b16 %v3176
    %v3828 = vunpack.c.l.b16 %v3177
    %v3829 = vunpack.c.l.b16 %v3178
    %v3830 = vpack.c.b16 %v3823, %v3822
    %v3831 = vpack.c.b16 %v3825, %v3824
    %v3832 = vpack.c.b16 %v3827, %v3826
    %v3833 = vpack.c.b16 %v3829, %v3828
    %v3839 = vsel %vm3190, %v3809, 0
    %3841 = vmatprep.subr.bf16.mxu0 0
    %3842 = vmatpush1.bf16.msra.mxu0 %v3830
    %3843 = vmatprep.subr.bf16.mxu0 0
    %3844 = vmatpush1.bf16.msra.mxu0 %v3831
    %3845 = vmatprep.subr.bf16.mxu0 0
    %3846 = vmatpush1.bf16.msra.mxu0 %v3832
    %3847 = vmatprep.subr.bf16.mxu0 0
    %3848 = vmatpush1.bf16.msra.mxu0 %v3833
    %3849 = vmatprep.subr.bf16.mxu0 0
    %3850 = vmatpush1.bf16.msra.mxu0 0
    %3851 = vmatprep.subr.bf16.mxu0 0
    %3852 = vmatpush1.bf16.msra.mxu0 0
    %3853 = vmatprep.subr.bf16.mxu0 0
    %3854 = vmatpush1.bf16.msra.mxu0 0
    %3855 = vmatprep.subr.bf16.mxu0 0
    %3856 = vmatpush1.bf16.msra.mxu0 0
    %3857 = vmatprep.subr.bf16.mxu0 0
    %3858 = vmatpush1.bf16.msra.mxu0 0
    %3859 = vmatprep.subr.bf16.mxu0 0
    %3860 = vmatpush1.bf16.msra.mxu0 0
    %3861 = vmatprep.subr.bf16.mxu0 0
    %3862 = vmatpush1.bf16.msra.mxu0 0
    %3863 = vmatprep.subr.bf16.mxu0 0
    %3864 = vmatpush1.bf16.msra.mxu0 0
    %3865 = vmatprep.subr.bf16.mxu0 0
    %3866 = vmatpush1.bf16.msra.mxu0 0
    %3867 = vmatprep.subr.bf16.mxu0 0
    %3868 = vmatpush1.bf16.msra.mxu0 0
    %3869 = vmatprep.subr.bf16.mxu0 0
    %3870 = vmatpush1.bf16.msra.mxu0 0
    %3871 = vmatprep.subr.bf16.mxu0 0
    %3872 = vmatpush1.bf16.msra.mxu0 0
    %3873 = vmatprep.mubr.bf16.mxu0 0
    %3874 = vmatmul.mubr.bf16.gmra.mrb[0].mxu0 %v3839
    %v3875 = vpop.f32.mrb[0].mxu0
    %v3876 = vadd.f32 %v3813, %v3875
    %v3877 = vpop.f32.mrb[0].mxu0
    %v3878 = vpop.f32.mrb[0].mxu0
    %v3879 = vadd.f32 %v3813, %v3878
    %v3880 = vpop.f32.mrb[0].mxu0
    %3881 = vdwg.mxu0
    %v3882 = vmul.f32 %v3876, %v3876
    %v3883 = vmul.f32 %v3879, %v3879
    %v3884 = vmul.f32 %v3876, %v3882
    %v3885 = vmul.f32 %v3879, %v3883
    %v3886 = vmul.f32 %v3884, 0.044715
    %v3887 = vmul.f32 %v3885, 0.044715
    %v3888 = vadd.f32 %v3876, %v3886
    %v3889 = vadd.f32 %v3879, %v3887
    %v3890 = vmul.f32 %v3888, 0.7978846
    %v3891 = vmul.f32 %v3889, 0.7978846
    %v3892 = vtanh.pop %v3890
    %v3893 = vtanh.pop %v3891
    %v3894 = vadd.f32 %v3892, 1.0
    %v3895 = vadd.f32 %v3893, 1.0
    %v3896 = vmul.f32 %v3894, 0.5
    %v3897 = vmul.f32 %v3895, 0.5
    %v3898 = vmul.f32 %v3876, %v3896
    %v3899 = vmul.f32 %v3879, %v3897
    %v3900 = vpack.c.bf16 %v3899, %v3898
    %v3901 = vlaneseq
    %v3902 = vshrl.u32 %v3901, 7
    %v3903 = vsub.s32 0, %v3902
    %v3904 = vrot.slane %v3189, %v3903
    %v3913 = vunpack.c.l.b16 %v3181
    %v3914 = vunpack.c.l.b16 %v3182
    %v3915 = vunpack.c.l.b16 %v3183
    %v3916 = vunpack.c.l.b16 %v3184
    %v3917 = vunpack.c.l.b16 %v3185
    %v3918 = vunpack.c.l.b16 %v3186
    %v3919 = vunpack.c.l.b16 %v3187
    %v3920 = vunpack.c.l.b16 %v3188
    %v3921 = vpack.c.b16 %v3914, %v3913
    %v3922 = vpack.c.b16 %v3916, %v3915
    %v3923 = vpack.c.b16 %v3918, %v3917
    %v3924 = vpack.c.b16 %v3920, %v3919
    %v3930 = vsel %vm3190, %v3900, 0
    %3932 = vmatprep.subr.bf16.mxu0 0
    %3933 = vmatpush1.bf16.msra.mxu0 %v3921
    %3934 = vmatprep.subr.bf16.mxu0 0
    %3935 = vmatpush1.bf16.msra.mxu0 %v3922
    %3936 = vmatprep.subr.bf16.mxu0 0
    %3937 = vmatpush1.bf16.msra.mxu0 %v3923
    %3938 = vmatprep.subr.bf16.mxu0 0
    %3939 = vmatpush1.bf16.msra.mxu0 %v3924
    %3940 = vmatprep.subr.bf16.mxu0 0
    %3941 = vmatpush1.bf16.msra.mxu0 0
    %3942 = vmatprep.subr.bf16.mxu0 0
    %3943 = vmatpush1.bf16.msra.mxu0 0
    %3944 = vmatprep.subr.bf16.mxu0 0
    %3945 = vmatpush1.bf16.msra.mxu0 0
    %3946 = vmatprep.subr.bf16.mxu0 0
    %3947 = vmatpush1.bf16.msra.mxu0 0
    %3948 = vmatprep.subr.bf16.mxu0 0
    %3949 = vmatpush1.bf16.msra.mxu0 0
    %3950 = vmatprep.subr.bf16.mxu0 0
    %3951 = vmatpush1.bf16.msra.mxu0 0
    %3952 = vmatprep.subr.bf16.mxu0 0
    %3953 = vmatpush1.bf16.msra.mxu0 0
    %3954 = vmatprep.subr.bf16.mxu0 0
    %3955 = vmatpush1.bf16.msra.mxu0 0
    %3956 = vmatprep.subr.bf16.mxu0 0
    %3957 = vmatpush1.bf16.msra.mxu0 0
    %3958 = vmatprep.subr.bf16.mxu0 0
    %3959 = vmatpush1.bf16.msra.mxu0 0
    %3960 = vmatprep.subr.bf16.mxu0 0
    %3961 = vmatpush1.bf16.msra.mxu0 0
    %3962 = vmatprep.subr.bf16.mxu0 0
    %3963 = vmatpush1.bf16.msra.mxu0 0
    %3964 = vmatprep.mubr.bf16.mxu0 0
    %3965 = vmatmul.mubr.bf16.gmra.mrb[0].mxu0 %v3930
    %v3966 = vpop.f32.mrb[0].mxu0
    %v3967 = vadd.f32 %v3904, %v3966
    %v3968 = vpop.f32.mrb[0].mxu0
    %v3969 = vpop.f32.mrb[0].mxu0
    %v3970 = vadd.f32 %v3904, %v3969
    %v3971 = vpop.f32.mrb[0].mxu0
    %3972 = vdwg.mxu0
    %v3973 = vadd.f32 %v3769, %v3967
    %v3974 = vadd.f32 %v3770, %v3970
    %v3975 = vld [vmem:[#allocation9] sm:$0xff]
    %v3976 = vld [vmem:[#allocation9 + $0x8] sm:$0xff]
    %v3977 = vld [vmem:[#allocation25] sm:$0x1]
    %v3978 = vld [vmem:[#allocation25 + $0x1] sm:$0x1]
    %v3979 = vld [vmem:[#allocation25 + $0x2] sm:$0x1]
    %v3980 = vld [vmem:[#allocation25 + $0x3] sm:$0x1]
    %v3981 = vld [vmem:[%s47] sm:$0xf]
    %v3982 = vld [vmem:[%s47 + $0x4] sm:$0xf]
    %v3983 = vld [vmem:[%s47 + $0x8] sm:$0xf]
    %v3984 = vld [vmem:[%s47 + $0xc] sm:$0xf]
    %v3985 = vld [vmem:[%s47 + $0x10] sm:$0xf]
    %v3986 = vld [vmem:[%s47 + $0x14] sm:$0xf]
    %v3987 = vld [vmem:[%s47 + $0x18] sm:$0xf]
    %v3988 = vld [vmem:[%s47 + $0x1c] sm:$0xf]
    %v3989 = vld [vmem:[#allocation25 + $0x4] sm:$0x1]
    %s3990 = scalar_lea.vmem %s47, 32
    %v3991 = vld [vmem:[%s3990] sm:$0xf]
    %v3992 = vld [vmem:[%s3990 + $0x4] sm:$0xf]
    %v3993 = vld [vmem:[%s3990 + $0x8] sm:$0xf]
    %v3994 = vld [vmem:[%s3990 + $0xc] sm:$0xf]
    %v3995 = vld [vmem:[%s3990 + $0x10] sm:$0xf]
    %v3996 = vld [vmem:[%s3990 + $0x14] sm:$0xf]
    %v3997 = vld [vmem:[%s3990 + $0x18] sm:$0xf]
    %v3998 = vld [vmem:[%s3990 + $0x1c] sm:$0xf]
    %v3999 = vld [vmem:[#allocation25 + $0x5] sm:$0x1]
    %s4000 = scalar_lea.vmem %s47, 64
    %v4001 = vld [vmem:[%s4000] sm:$0xf]
    %v4002 = vld [vmem:[%s4000 + $0x4] sm:$0xf]
    %v4003 = vld [vmem:[%s4000 + $0x8] sm:$0xf]
    %v4004 = vld [vmem:[%s4000 + $0xc] sm:$0xf]
    %v4005 = vld [vmem:[%s4000 + $0x10] sm:$0xf]
    %v4006 = vld [vmem:[%s4000 + $0x14] sm:$0xf]
    %v4007 = vld [vmem:[%s4000 + $0x18] sm:$0xf]
    %v4008 = vld [vmem:[%s4000 + $0x1c] sm:$0xf]
    %v4009 = vld [vmem:[#allocation25 + $0x6] sm:$0x1]
    %s4010 = scalar_lea.vmem %s47, 96
    %v4011 = vld [vmem:[%s4010] sm:$0xf]
    %v4012 = vld [vmem:[%s4010 + $0x4] sm:$0xf]
    %v4013 = vld [vmem:[%s4010 + $0x8] sm:$0xf]
    %v4014 = vld [vmem:[%s4010 + $0xc] sm:$0xf]
    %v4015 = vld [vmem:[%s4010 + $0x10] sm:$0xf]
    %v4016 = vld [vmem:[%s4010 + $0x14] sm:$0xf]
    %v4017 = vld [vmem:[%s4010 + $0x18] sm:$0xf]
    %v4018 = vld [vmem:[%s4010 + $0x1c] sm:$0xf]
    %v4019 = vld [vmem:[#allocation25 + $0x7] sm:$0x1]
    %v4020 = vld [vmem:[#allocation25 + $0x8] sm:$0x1]
    %v4021 = vld [vmem:[#allocation25 + $0x9] sm:$0x1]
    %s4022 = scalar_lea.vmem %s47, 128
    %v4023 = vld [vmem:[%s4022] sm:$0xf]
    %v4024 = vld [vmem:[%s4022 + $0x4] sm:$0xf]
    %v4025 = vld [vmem:[%s4022 + $0x8] sm:$0xf]
    %v4026 = vld [vmem:[%s4022 + $0xc] sm:$0xf]
    %v4027 = vld [vmem:[%s4022 + $0x10] sm:$0xf]
    %v4028 = vld [vmem:[%s4022 + $0x14] sm:$0xf]
    %v4029 = vld [vmem:[%s4022 + $0x18] sm:$0xf]
    %v4030 = vld [vmem:[%s4022 + $0x1c] sm:$0xf]
    %v4031 = vld [vmem:[#allocation25 + $0xa] sm:$0x1]
    %s4032 = scalar_lea.vmem %s47, 160
    %v4033 = vld [vmem:[%s4032] sm:$0xf]
    %v4034 = vld [vmem:[%s4032 + $0x4] sm:$0xf]
    %v4035 = vld [vmem:[%s4032 + $0x8] sm:$0xf]
    %v4036 = vld [vmem:[%s4032 + $0xc] sm:$0xf]
    %v4037 = vld [vmem:[%s4032 + $0x10] sm:$0xf]
    %v4038 = vld [vmem:[%s4032 + $0x14] sm:$0xf]
    %v4039 = vld [vmem:[%s4032 + $0x18] sm:$0xf]
    %v4040 = vld [vmem:[%s4032 + $0x1c] sm:$0xf]
    %v4041 = vld [vmem:[#allocation25 + $0xb] sm:$0x1]
    %v4042 = vsel %vm3190, %v3973, 0.0
    %4043 = vadd.xlane.f32.xlu0 %v4042
    %v4044 = vpop.xlane.xlu0 %4043
    %v4045 = vsel %vm3190, %v3974, 0.0
    %4046 = vadd.xlane.f32.xlu0 %v4045
    %v4047 = vpop.xlane.xlu0 %4046
    %v4048 = vmul.f32 %v4044, %v3197
    %v4049 = vmul.f32 %v4047, %v3197
    %v4050 = vsub.f32 %v3973, %v4048
    %v4051 = vsub.f32 %v3974, %v4049
    %v4052 = vmul.f32 %v4050, %v4050
    %v4053 = vmul.f32 %v4051, %v4051
    %v4054 = vsel %vm3190, %v4052, 0.0
    %4055 = vadd.xlane.f32.xlu0 %v4054
    %v4056 = vpop.xlane.xlu0 %4055
    %v4057 = vsel %vm3190, %v4053, 0.0
    %4058 = vadd.xlane.f32.xlu0 %v4057
    %v4059 = vpop.xlane.xlu0 %4058
    %v4060 = vmul.f32 %v4056, %v3197
    %v4061 = vmul.f32 %v4059, %v3197
    %v4062 = vadd.f32 %v4060, 1e-05
    %v4063 = vadd.f32 %v4061, 1e-05
    %v4064 = vrsqrt.pop %v4062
    %v4065 = vrsqrt.pop %v4063
    %v4066 = vmul.f32 %v4050, %v4064
    %v4067 = vmul.f32 %v4051, %v4065
    %v4068 = vlaneseq
    %v4069 = vshrl.u32 %v4068, 7
    %v4070 = vsub.s32 0, %v4069
    %v4071 = vrot.slane %v3977, %v4070
    %v4072 = vmul.f32 %v4066, %v4071
    %v4073 = vmul.f32 %v4067, %v4071
    %v4074 = vlaneseq
    %v4075 = vshrl.u32 %v4074, 7
    %v4076 = vsub.s32 0, %v4075
    %v4077 = vrot.slane %v3978, %v4076
    %v4078 = vadd.f32 %v4072, %v4077
    %v4079 = vadd.f32 %v4073, %v4077
    %v4080 = vlaneseq
    %v4081 = vshrl.u32 %v4080, 7
    %v4082 = vsub.s32 0, %v4081
    %v4083 = vrot.slane %v3979, %v4082
    %v4084 = vmul.f32 %v4066, %v4083
    %v4085 = vmul.f32 %v4067, %v4083
    %v4086 = vlaneseq
    %v4087 = vshrl.u32 %v4086, 7
    %v4088 = vsub.s32 0, %v4087
    %v4089 = vrot.slane %v3980, %v4088
    %v4090 = vadd.f32 %v4084, %v4089
    %v4091 = vadd.f32 %v4085, %v4089
    %v4092 = vpack.c.bf16 %v4079, %v4078
    %v4093 = vlaneseq
    %v4094 = vshrl.u32 %v4093, 7
    %v4095 = vsub.s32 0, %v4094
    %v4096 = vrot.slane %v3989, %v4095
    %v4105 = vunpack.c.l.b16 %v3981
    %v4106 = vunpack.c.l.b16 %v3982
    %v4107 = vunpack.c.l.b16 %v3983
    %v4108 = vunpack.c.l.b16 %v3984
    %v4109 = vunpack.c.l.b16 %v3985
    %v4110 = vunpack.c.l.b16 %v3986
    %v4111 = vunpack.c.l.b16 %v3987
    %v4112 = vunpack.c.l.b16 %v3988
    %v4113 = vpack.c.b16 %v4106, %v4105
    %v4114 = vpack.c.b16 %v4108, %v4107
    %v4115 = vpack.c.b16 %v4110, %v4109
    %v4116 = vpack.c.b16 %v4112, %v4111
    %v4122 = vsel %vm3190, %v4092, 0
    %4124 = vmatprep.subr.bf16.mxu0 0
    %4125 = vmatpush1.bf16.msra.mxu0 %v4113
    %4126 = vmatprep.subr.bf16.mxu0 0
    %4127 = vmatpush1.bf16.msra.mxu0 %v4114
    %4128 = vmatprep.subr.bf16.mxu0 0
    %4129 = vmatpush1.bf16.msra.mxu0 %v4115
    %4130 = vmatprep.subr.bf16.mxu0 0
    %4131 = vmatpush1.bf16.msra.mxu0 %v4116
    %4132 = vmatprep.subr.bf16.mxu0 0
    %4133 = vmatpush1.bf16.msra.mxu0 0
    %4134 = vmatprep.subr.bf16.mxu0 0
    %4135 = vmatpush1.bf16.msra.mxu0 0
    %4136 = vmatprep.subr.bf16.mxu0 0
    %4137 = vmatpush1.bf16.msra.mxu0 0
    %4138 = vmatprep.subr.bf16.mxu0 0
    %4139 = vmatpush1.bf16.msra.mxu0 0
    %4140 = vmatprep.subr.bf16.mxu0 0
    %4141 = vmatpush1.bf16.msra.mxu0 0
    %4142 = vmatprep.subr.bf16.mxu0 0
    %4143 = vmatpush1.bf16.msra.mxu0 0
    %4144 = vmatprep.subr.bf16.mxu0 0
    %4145 = vmatpush1.bf16.msra.mxu0 0
    %4146 = vmatprep.subr.bf16.mxu0 0
    %4147 = vmatpush1.bf16.msra.mxu0 0
    %4148 = vmatprep.subr.bf16.mxu0 0
    %4149 = vmatpush1.bf16.msra.mxu0 0
    %4150 = vmatprep.subr.bf16.mxu0 0
    %4151 = vmatpush1.bf16.msra.mxu0 0
    %4152 = vmatprep.subr.bf16.mxu0 0
    %4153 = vmatpush1.bf16.msra.mxu0 0
    %4154 = vmatprep.subr.bf16.mxu0 0
    %4155 = vmatpush1.bf16.msra.mxu0 0
    %4156 = vmatprep.mubr.bf16.mxu0 0
    %4157 = vmatmul.mubr.bf16.gmra.mrb[0].mxu0 %v4122
    %v4158 = vpop.f32.mrb[0].mxu0
    %v4159 = vadd.f32 %v4096, %v4158
    %v4160 = vpop.f32.mrb[0].mxu0
    %v4161 = vpop.f32.mrb[0].mxu0
    %v4162 = vadd.f32 %v4096, %v4161
    %v4163 = vpop.f32.mrb[0].mxu0
    %4164 = vdwg.mxu0
    %v4165 = vmul.f32 %v4159, 0.125
    %v4166 = vmul.f32 %v4162, 0.125
    %v4167 = vpack.c.bf16 %v4091, %v4090
    %v4168 = vlaneseq
    %v4169 = vshrl.u32 %v4168, 7
    %v4170 = vsub.s32 0, %v4169
    %v4171 = vrot.slane %v3999, %v4170
    %v4180 = vunpack.c.l.b16 %v3991
    %v4181 = vunpack.c.l.b16 %v3992
    %v4182 = vunpack.c.l.b16 %v3993
    %v4183 = vunpack.c.l.b16 %v3994
    %v4184 = vunpack.c.l.b16 %v3995
    %v4185 = vunpack.c.l.b16 %v3996
    %v4186 = vunpack.c.l.b16 %v3997
    %v4187 = vunpack.c.l.b16 %v3998
    %v4188 = vpack.c.b16 %v4181, %v4180
    %v4189 = vpack.c.b16 %v4183, %v4182
    %v4190 = vpack.c.b16 %v4185, %v4184
    %v4191 = vpack.c.b16 %v4187, %v4186
    %v4197 = vsel %vm3190, %v4167, 0
    %4199 = vmatprep.subr.bf16.mxu0 0
    %4200 = vmatpush1.bf16.msra.mxu0 %v4188
    %4201 = vmatprep.subr.bf16.mxu0 0
    %4202 = vmatpush1.bf16.msra.mxu0 %v4189
    %4203 = vmatprep.subr.bf16.mxu0 0
    %4204 = vmatpush1.bf16.msra.mxu0 %v4190
    %4205 = vmatprep.subr.bf16.mxu0 0
    %4206 = vmatpush1.bf16.msra.mxu0 %v4191
    %4207 = vmatprep.subr.bf16.mxu0 0
    %4208 = vmatpush1.bf16.msra.mxu0 0
    %4209 = vmatprep.subr.bf16.mxu0 0
    %4210 = vmatpush1.bf16.msra.mxu0 0
    %4211 = vmatprep.subr.bf16.mxu0 0
    %4212 = vmatpush1.bf16.msra.mxu0 0
    %4213 = vmatprep.subr.bf16.mxu0 0
    %4214 = vmatpush1.bf16.msra.mxu0 0
    %4215 = vmatprep.subr.bf16.mxu0 0
    %4216 = vmatpush1.bf16.msra.mxu0 0
    %4217 = vmatprep.subr.bf16.mxu0 0
    %4218 = vmatpush1.bf16.msra.mxu0 0
    %4219 = vmatprep.subr.bf16.mxu0 0
    %4220 = vmatpush1.bf16.msra.mxu0 0
    %4221 = vmatprep.subr.bf16.mxu0 0
    %4222 = vmatpush1.bf16.msra.mxu0 0
    %4223 = vmatprep.subr.bf16.mxu0 0
    %4224 = vmatpush1.bf16.msra.mxu0 0
    %4225 = vmatprep.subr.bf16.mxu0 0
    %4226 = vmatpush1.bf16.msra.mxu0 0
    %4227 = vmatprep.subr.bf16.mxu0 0
    %4228 = vmatpush1.bf16.msra.mxu0 0
    %4229 = vmatprep.subr.bf16.mxu0 0
    %4230 = vmatpush1.bf16.msra.mxu0 0
    %4231 = vmatprep.mubr.bf16.mxu0 0
    %4232 = vmatmul.mubr.bf16.gmra.mrb[0].mxu0 %v4197
    %v4233 = vpop.f32.mrb[0].mxu0
    %v4234 = vadd.f32 %v4171, %v4233
    %v4235 = vpop.f32.mrb[0].mxu0
    %v4236 = vpop.f32.mrb[0].mxu0
    %v4237 = vadd.f32 %v4171, %v4236
    %v4238 = vpop.f32.mrb[0].mxu0
    %4239 = vdwg.mxu0
    %v4240 = vlaneseq
    %v4241 = vshrl.u32 %v4240, 7
    %v4242 = vsub.s32 0, %v4241
    %v4243 = vrot.slane %v4009, %v4242
    %v4252 = vunpack.c.l.b16 %v4001
    %v4253 = vunpack.c.l.b16 %v4002
    %v4254 = vunpack.c.l.b16 %v4003
    %v4255 = vunpack.c.l.b16 %v4004
    %v4256 = vunpack.c.l.b16 %v4005
    %v4257 = vunpack.c.l.b16 %v4006
    %v4258 = vunpack.c.l.b16 %v4007
    %v4259 = vunpack.c.l.b16 %v4008
    %v4260 = vpack.c.b16 %v4253, %v4252
    %v4261 = vpack.c.b16 %v4255, %v4254
    %v4262 = vpack.c.b16 %v4257, %v4256
    %v4263 = vpack.c.b16 %v4259, %v4258
    %4268 = vmatprep.subr.bf16.mxu0 0
    %4269 = vmatpush1.bf16.msra.mxu0 %v4260
    %4270 = vmatprep.subr.bf16.mxu0 0
    %4271 = vmatpush1.bf16.msra.mxu0 %v4261
    %4272 = vmatprep.subr.bf16.mxu0 0
    %4273 = vmatpush1.bf16.msra.mxu0 %v4262
    %4274 = vmatprep.subr.bf16.mxu0 0
    %4275 = vmatpush1.bf16.msra.mxu0 %v4263
    %4276 = vmatprep.subr.bf16.mxu0 0
    %4277 = vmatpush1.bf16.msra.mxu0 0
    %4278 = vmatprep.subr.bf16.mxu0 0
    %4279 = vmatpush1.bf16.msra.mxu0 0
    %4280 = vmatprep.subr.bf16.mxu0 0
    %4281 = vmatpush1.bf16.msra.mxu0 0
    %4282 = vmatprep.subr.bf16.mxu0 0
    %4283 = vmatpush1.bf16.msra.mxu0 0
    %4284 = vmatprep.subr.bf16.mxu0 0
    %4285 = vmatpush1.bf16.msra.mxu0 0
    %4286 = vmatprep.subr.bf16.mxu0 0
    %4287 = vmatpush1.bf16.msra.mxu0 0
    %4288 = vmatprep.subr.bf16.mxu0 0
    %4289 = vmatpush1.bf16.msra.mxu0 0
    %4290 = vmatprep.subr.bf16.mxu0 0
    %4291 = vmatpush1.bf16.msra.mxu0 0
    %4292 = vmatprep.subr.bf16.mxu0 0
    %4293 = vmatpush1.bf16.msra.mxu0 0
    %4294 = vmatprep.subr.bf16.mxu0 0
    %4295 = vmatpush1.bf16.msra.mxu0 0
    %4296 = vmatprep.subr.bf16.mxu0 0
    %4297 = vmatpush1.bf16.msra.mxu0 0
    %4298 = vmatprep.subr.bf16.mxu0 0
    %4299 = vmatpush1.bf16.msra.mxu0 0
    %4300 = vmatprep.mubr.bf16.mxu0 0
    %4301 = vmatmul.mubr.bf16.gmra.mrb[0].mxu0 %v4197
    %v4302 = vpop.f32.mrb[0].mxu0
    %v4303 = vadd.f32 %v4243, %v4302
    %v4304 = vpop.f32.mrb[0].mxu0
    %v4305 = vpop.f32.mrb[0].mxu0
    %v4306 = vadd.f32 %v4243, %v4305
    %v4307 = vpop.f32.mrb[0].mxu0
    %4308 = vdwg.mxu0
    %v4310 = vsel %vm3190, %v4165, 0
    %v4313 = vsel %vm3190, %v4166, 0
    %v4316 = vsel %vm3190, %v4234, 0
    %v4319 = vsel %vm3190, %v4237, 0
    %4321 = vmatprep.subr.mxu0 0.0
    %4322 = vmatpush1.xpose.msra.mxu0 %v4316
    %4323 = vmatprep.subr.mxu0 0.0
    %4324 = vmatpush1.xpose.msra.mxu0 %v4319
    %4325 = vmatprep.subr.mxu0 0.0
    %4326 = vmatpush1.xpose.msra.mxu0 0.0
    %4327 = vmatprep.subr.mxu0 0.0
    %4328 = vmatpush1.xpose.msra.mxu0 0.0
    %4329 = vmatprep.subr.mxu0 0.0
    %4330 = vmatpush1.xpose.msra.mxu0 0.0
    %4331 = vmatprep.subr.mxu0 0.0
    %4332 = vmatpush1.xpose.msra.mxu0 0.0
    %4333 = vmatprep.subr.mxu0 0.0
    %4334 = vmatpush1.xpose.msra.mxu0 0.0
    %4335 = vmatprep.subr.mxu0 0.0
    %4336 = vmatpush1.xpose.msra.mxu0 0.0
    %4337 = vmatprep.subr.mxu0 0.0
    %4338 = vmatpush1.xpose.msra.mxu0 0.0
    %4339 = vmatprep.subr.mxu0 0.0
    %4340 = vmatpush1.xpose.msra.mxu0 0.0
    %4341 = vmatprep.subr.mxu0 0.0
    %4342 = vmatpush1.xpose.msra.mxu0 0.0
    %4343 = vmatprep.subr.mxu0 0.0
    %4344 = vmatpush1.xpose.msra.mxu0 0.0
    %4345 = vmatprep.subr.mxu0 0.0
    %4346 = vmatpush1.xpose.msra.mxu0 0.0
    %4347 = vmatprep.subr.mxu0 0.0
    %4348 = vmatpush1.xpose.msra.mxu0 0.0
    %4349 = vmatprep.subr.mxu0 0.0
    %4350 = vmatpush1.xpose.msra.mxu0 0.0
    %4351 = vmatprep.subr.mxu0 0.0
    %4352 = vmatpush1.xpose.msra.mxu0 0.0
    %4353 = vmatprep.subr.mxu0 0.0
    %4354 = vmatpush1.xpose.msra.mxu0 0.0
    %4355 = vmatprep.subr.mxu0 0.0
    %4356 = vmatpush1.xpose.msra.mxu0 0.0
    %4357 = vmatprep.subr.mxu0 0.0
    %4358 = vmatpush1.xpose.msra.mxu0 0.0
    %4359 = vmatprep.subr.mxu0 0.0
    %4360 = vmatpush1.xpose.msra.mxu0 0.0
    %4361 = vmatprep.subr.mxu0 0.0
    %4362 = vmatpush1.xpose.msra.mxu0 0.0
    %4363 = vmatprep.subr.mxu0 0.0
    %4364 = vmatpush1.xpose.msra.mxu0 0.0
    %4365 = vmatprep.subr.mxu0 0.0
    %4366 = vmatpush1.xpose.msra.mxu0 0.0
    %4367 = vmatprep.subr.mxu0 0.0
    %4368 = vmatpush1.xpose.msra.mxu0 0.0
    %4369 = vmatprep.subr.mxu0 0.0
    %4370 = vmatpush1.xpose.msra.mxu0 0.0
    %4371 = vmatprep.subr.mxu0 0.0
    %4372 = vmatpush1.xpose.msra.mxu0 0.0
    %4373 = vmatprep.subr.mxu0 0.0
    %4374 = vmatpush1.xpose.msra.mxu0 0.0
    %4375 = vmatprep.subr.mxu0 0.0
    %4376 = vmatpush1.xpose.msra.mxu0 0.0
    %4377 = vmatprep.subr.mxu0 0.0
    %4378 = vmatpush1.xpose.msra.mxu0 0.0
    %4379 = vmatprep.subr.mxu0 0.0
    %4380 = vmatpush1.xpose.msra.mxu0 0.0
    %4381 = vmatprep.subr.mxu0 0.0
    %4382 = vmatpush1.xpose.msra.mxu0 0.0
    %4383 = vmatprep.subr.mxu0 0.0
    %4384 = vmatpush1.xpose.msra.mxu0 0.0
    %4385 = vmatprep.mubr.f32.mxu0 0.0
    %4386 = vmatmul.mubr.f32.gmra.mrb[0].mxu0 %v4310
    %v4387 = vpop.f32.mrb[0].mxu0
    %v4388 = vadd.f32 0.0, %v4387
    %v4389 = vpop.f32.mrb[0].mxu0
    %4390 = vmatprep.mubr.f32.mxu0 0.0
    %4391 = vmatmul.mubr.f32.gmra.mrb[0].mxu0 %v4313
    %v4392 = vpop.f32.mrb[0].mxu0
    %v4393 = vadd.f32 0.0, %v4392
    %v4394 = vpop.f32.mrb[0].mxu0
    %4395 = vdwg.mxu0
    %vm4396 = vcmp.gt.f32.partialorder %v3975, 0.0
    %vm4397 = vcmp.gt.f32.partialorder %v3976, 0.0
    %v4398 = vsel %vm4396, %v4388, -1e+30
    %v4399 = vsel %vm4397, %v4393, -1e+30
    %vm4400 = vcmask 130048
    %v4401 = vsel %vm4400, %v4398, -inf
    %4402 = vmax.xlane.f32.xlu0 %v4401
    %v4403 = vpop.xlane.xlu0 %4402
    %v4404 = vsel %vm4400, %v4399, -inf
    %4405 = vmax.xlane.f32.xlu0 %v4404
    %v4406 = vpop.xlane.xlu0 %4405
    %v4407 = vsub.f32 %v4398, %v4403
    %v4408 = vsub.f32 %v4399, %v4406
    %v4409 = vmul.f32 %v4407, 1.442695
    %v4410 = vpow.pop %v4409
    %v4411 = vmul.f32 %v4408, 1.442695
    %v4412 = vpow.pop %v4411
    %v4413 = vmul.f32 %v4410, %v3975
    %v4414 = vmul.f32 %v4412, %v3976
    %v4415 = vsel %vm4400, %v4413, 0.0
    %4416 = vadd.xlane.f32.xlu0 %v4415
    %v4417 = vpop.xlane.xlu0 %4416
    %v4418 = vsel %vm4400, %v4414, 0.0
    %4419 = vadd.xlane.f32.xlu0 %v4418
    %v4420 = vpop.xlane.xlu0 %4419
    %v4421 = vmax.f32 %v4417, 1e-30
    %v4422 = vmax.f32 %v4420, 1e-30
    %v4423 = vrcp.pop %v4421
    %v4424 = vmul.f32 %v4413, %v4423
    %v4425 = vrcp.pop %v4422
    %v4426 = vmul.f32 %v4414, %v4425
    %v4428 = vsel %vm4400, %v4424, 0
    %v4431 = vsel %vm4400, %v4426, 0
    %4433 = vmatprep.subr.mxu0 0.0
    %4434 = vmatpush1.msra.mxu0 %v4303
    %4435 = vmatprep.subr.mxu0 0.0
    %4436 = vmatpush1.msra.mxu0 %v4306
    %4437 = vmatprep.subr.mxu0 0.0
    %4438 = vmatpush1.msra.mxu0 0.0
    %4439 = vmatprep.subr.mxu0 0.0
    %4440 = vmatpush1.msra.mxu0 0.0
    %4441 = vmatprep.subr.mxu0 0.0
    %4442 = vmatpush1.msra.mxu0 0.0
    %4443 = vmatprep.subr.mxu0 0.0
    %4444 = vmatpush1.msra.mxu0 0.0
    %4445 = vmatprep.subr.mxu0 0.0
    %4446 = vmatpush1.msra.mxu0 0.0
    %4447 = vmatprep.subr.mxu0 0.0
    %4448 = vmatpush1.msra.mxu0 0.0
    %4449 = vmatprep.subr.mxu0 0.0
    %4450 = vmatpush1.msra.mxu0 0.0
    %4451 = vmatprep.subr.mxu0 0.0
    %4452 = vmatpush1.msra.mxu0 0.0
    %4453 = vmatprep.subr.mxu0 0.0
    %4454 = vmatpush1.msra.mxu0 0.0
    %4455 = vmatprep.subr.mxu0 0.0
    %4456 = vmatpush1.msra.mxu0 0.0
    %4457 = vmatprep.subr.mxu0 0.0
    %4458 = vmatpush1.msra.mxu0 0.0
    %4459 = vmatprep.subr.mxu0 0.0
    %4460 = vmatpush1.msra.mxu0 0.0
    %4461 = vmatprep.subr.mxu0 0.0
    %4462 = vmatpush1.msra.mxu0 0.0
    %4463 = vmatprep.subr.mxu0 0.0
    %4464 = vmatpush1.msra.mxu0 0.0
    %4465 = vmatprep.subr.mxu0 0.0
    %4466 = vmatpush1.msra.mxu0 0.0
    %4467 = vmatprep.subr.mxu0 0.0
    %4468 = vmatpush1.msra.mxu0 0.0
    %4469 = vmatprep.subr.mxu0 0.0
    %4470 = vmatpush1.msra.mxu0 0.0
    %4471 = vmatprep.subr.mxu0 0.0
    %4472 = vmatpush1.msra.mxu0 0.0
    %4473 = vmatprep.subr.mxu0 0.0
    %4474 = vmatpush1.msra.mxu0 0.0
    %4475 = vmatprep.subr.mxu0 0.0
    %4476 = vmatpush1.msra.mxu0 0.0
    %4477 = vmatprep.subr.mxu0 0.0
    %4478 = vmatpush1.msra.mxu0 0.0
    %4479 = vmatprep.subr.mxu0 0.0
    %4480 = vmatpush1.msra.mxu0 0.0
    %4481 = vmatprep.subr.mxu0 0.0
    %4482 = vmatpush1.msra.mxu0 0.0
    %4483 = vmatprep.subr.mxu0 0.0
    %4484 = vmatpush1.msra.mxu0 0.0
    %4485 = vmatprep.subr.mxu0 0.0
    %4486 = vmatpush1.msra.mxu0 0.0
    %4487 = vmatprep.subr.mxu0 0.0
    %4488 = vmatpush1.msra.mxu0 0.0
    %4489 = vmatprep.subr.mxu0 0.0
    %4490 = vmatpush1.msra.mxu0 0.0
    %4491 = vmatprep.subr.mxu0 0.0
    %4492 = vmatpush1.msra.mxu0 0.0
    %4493 = vmatprep.subr.mxu0 0.0
    %4494 = vmatpush1.msra.mxu0 0.0
    %4495 = vmatprep.subr.mxu0 0.0
    %4496 = vmatpush1.msra.mxu0 0.0
    %4497 = vmatprep.mubr.f32.mxu0 0.0
    %4498 = vmatmul.mubr.f32.gmra.mrb[0].mxu0 %v4428
    %v4499 = vpop.f32.mrb[0].mxu0
    %v4500 = vadd.f32 0.0, %v4499
    %v4501 = vpop.f32.mrb[0].mxu0
    %4502 = vmatprep.mubr.f32.mxu0 0.0
    %4503 = vmatmul.mubr.f32.gmra.mrb[0].mxu0 %v4431
    %v4504 = vpop.f32.mrb[0].mxu0
    %v4505 = vadd.f32 0.0, %v4504
    %v4506 = vpop.f32.mrb[0].mxu0
    %4507 = vdwg.mxu0
    %v4508 = vpack.c.bf16 %v4505, %v4500
    %v4509 = vlaneseq
    %v4510 = vshrl.u32 %v4509, 7
    %v4511 = vsub.s32 0, %v4510
    %v4512 = vrot.slane %v4019, %v4511
    %v4521 = vunpack.c.l.b16 %v4011
    %v4522 = vunpack.c.l.b16 %v4012
    %v4523 = vunpack.c.l.b16 %v4013
    %v4524 = vunpack.c.l.b16 %v4014
    %v4525 = vunpack.c.l.b16 %v4015
    %v4526 = vunpack.c.l.b16 %v4016
    %v4527 = vunpack.c.l.b16 %v4017
    %v4528 = vunpack.c.l.b16 %v4018
    %v4529 = vpack.c.b16 %v4522, %v4521
    %v4530 = vpack.c.b16 %v4524, %v4523
    %v4531 = vpack.c.b16 %v4526, %v4525
    %v4532 = vpack.c.b16 %v4528, %v4527
    %v4538 = vsel %vm3190, %v4508, 0
    %4540 = vmatprep.subr.bf16.mxu0 0
    %4541 = vmatpush1.bf16.msra.mxu0 %v4529
    %4542 = vmatprep.subr.bf16.mxu0 0
    %4543 = vmatpush1.bf16.msra.mxu0 %v4530
    %4544 = vmatprep.subr.bf16.mxu0 0
    %4545 = vmatpush1.bf16.msra.mxu0 %v4531
    %4546 = vmatprep.subr.bf16.mxu0 0
    %4547 = vmatpush1.bf16.msra.mxu0 %v4532
    %4548 = vmatprep.subr.bf16.mxu0 0
    %4549 = vmatpush1.bf16.msra.mxu0 0
    %4550 = vmatprep.subr.bf16.mxu0 0
    %4551 = vmatpush1.bf16.msra.mxu0 0
    %4552 = vmatprep.subr.bf16.mxu0 0
    %4553 = vmatpush1.bf16.msra.mxu0 0
    %4554 = vmatprep.subr.bf16.mxu0 0
    %4555 = vmatpush1.bf16.msra.mxu0 0
    %4556 = vmatprep.subr.bf16.mxu0 0
    %4557 = vmatpush1.bf16.msra.mxu0 0
    %4558 = vmatprep.subr.bf16.mxu0 0
    %4559 = vmatpush1.bf16.msra.mxu0 0
    %4560 = vmatprep.subr.bf16.mxu0 0
    %4561 = vmatpush1.bf16.msra.mxu0 0
    %4562 = vmatprep.subr.bf16.mxu0 0
    %4563 = vmatpush1.bf16.msra.mxu0 0
    %4564 = vmatprep.subr.bf16.mxu0 0
    %4565 = vmatpush1.bf16.msra.mxu0 0
    %4566 = vmatprep.subr.bf16.mxu0 0
    %4567 = vmatpush1.bf16.msra.mxu0 0
    %4568 = vmatprep.subr.bf16.mxu0 0
    %4569 = vmatpush1.bf16.msra.mxu0 0
    %4570 = vmatprep.subr.bf16.mxu0 0
    %4571 = vmatpush1.bf16.msra.mxu0 0
    %4572 = vmatprep.mubr.bf16.mxu0 0
    %4573 = vmatmul.mubr.bf16.gmra.mrb[0].mxu0 %v4538
    %v4574 = vpop.f32.mrb[0].mxu0
    %v4575 = vadd.f32 %v4512, %v4574
    %v4576 = vpop.f32.mrb[0].mxu0
    %v4577 = vpop.f32.mrb[0].mxu0
    %v4578 = vadd.f32 %v4512, %v4577
    %v4579 = vpop.f32.mrb[0].mxu0
    %4580 = vdwg.mxu0
    %v4581 = vadd.f32 %v3973, %v4575
    %v4582 = vadd.f32 %v3974, %v4578
    %v4583 = vsel %vm3190, %v4581, 0.0
    %4584 = vadd.xlane.f32.xlu0 %v4583
    %v4585 = vpop.xlane.xlu0 %4584
    %v4586 = vsel %vm3190, %v4582, 0.0
    %4587 = vadd.xlane.f32.xlu0 %v4586
    %v4588 = vpop.xlane.xlu0 %4587
    %v4589 = vmul.f32 %v4585, %v3197
    %v4590 = vmul.f32 %v4588, %v3197
    %v4591 = vsub.f32 %v4581, %v4589
    %v4592 = vsub.f32 %v4582, %v4590
    %v4593 = vmul.f32 %v4591, %v4591
    %v4594 = vmul.f32 %v4592, %v4592
    %v4595 = vsel %vm3190, %v4593, 0.0
    %4596 = vadd.xlane.f32.xlu0 %v4595
    %v4597 = vpop.xlane.xlu0 %4596
    %v4598 = vsel %vm3190, %v4594, 0.0
    %4599 = vadd.xlane.f32.xlu0 %v4598
    %v4600 = vpop.xlane.xlu0 %4599
    %v4601 = vmul.f32 %v4597, %v3197
    %v4602 = vmul.f32 %v4600, %v3197
    %v4603 = vadd.f32 %v4601, 1e-05
    %v4604 = vadd.f32 %v4602, 1e-05
    %v4605 = vrsqrt.pop %v4603
    %v4606 = vrsqrt.pop %v4604
    %v4607 = vmul.f32 %v4591, %v4605
    %v4608 = vmul.f32 %v4592, %v4606
    %v4609 = vlaneseq
    %v4610 = vshrl.u32 %v4609, 7
    %v4611 = vsub.s32 0, %v4610
    %v4612 = vrot.slane %v4020, %v4611
    %v4613 = vmul.f32 %v4607, %v4612
    %v4614 = vmul.f32 %v4608, %v4612
    %v4615 = vlaneseq
    %v4616 = vshrl.u32 %v4615, 7
    %v4617 = vsub.s32 0, %v4616
    %v4618 = vrot.slane %v4021, %v4617
    %v4619 = vadd.f32 %v4613, %v4618
    %v4620 = vadd.f32 %v4614, %v4618
    %v4621 = vpack.c.bf16 %v4620, %v4619
    %v4622 = vlaneseq
    %v4623 = vshrl.u32 %v4622, 7
    %v4624 = vsub.s32 0, %v4623
    %v4625 = vrot.slane %v4031, %v4624
    %v4634 = vunpack.c.l.b16 %v4023
    %v4635 = vunpack.c.l.b16 %v4024
    %v4636 = vunpack.c.l.b16 %v4025
    %v4637 = vunpack.c.l.b16 %v4026
    %v4638 = vunpack.c.l.b16 %v4027
    %v4639 = vunpack.c.l.b16 %v4028
    %v4640 = vunpack.c.l.b16 %v4029
    %v4641 = vunpack.c.l.b16 %v4030
    %v4642 = vpack.c.b16 %v4635, %v4634
    %v4643 = vpack.c.b16 %v4637, %v4636
    %v4644 = vpack.c.b16 %v4639, %v4638
    %v4645 = vpack.c.b16 %v4641, %v4640
    %v4651 = vsel %vm3190, %v4621, 0
    %4653 = vmatprep.subr.bf16.mxu0 0
    %4654 = vmatpush1.bf16.msra.mxu0 %v4642
    %4655 = vmatprep.subr.bf16.mxu0 0
    %4656 = vmatpush1.bf16.msra.mxu0 %v4643
    %4657 = vmatprep.subr.bf16.mxu0 0
    %4658 = vmatpush1.bf16.msra.mxu0 %v4644
    %4659 = vmatprep.subr.bf16.mxu0 0
    %4660 = vmatpush1.bf16.msra.mxu0 %v4645
    %4661 = vmatprep.subr.bf16.mxu0 0
    %4662 = vmatpush1.bf16.msra.mxu0 0
    %4663 = vmatprep.subr.bf16.mxu0 0
    %4664 = vmatpush1.bf16.msra.mxu0 0
    %4665 = vmatprep.subr.bf16.mxu0 0
    %4666 = vmatpush1.bf16.msra.mxu0 0
    %4667 = vmatprep.subr.bf16.mxu0 0
    %4668 = vmatpush1.bf16.msra.mxu0 0
    %4669 = vmatprep.subr.bf16.mxu0 0
    %4670 = vmatpush1.bf16.msra.mxu0 0
    %4671 = vmatprep.subr.bf16.mxu0 0
    %4672 = vmatpush1.bf16.msra.mxu0 0
    %4673 = vmatprep.subr.bf16.mxu0 0
    %4674 = vmatpush1.bf16.msra.mxu0 0
    %4675 = vmatprep.subr.bf16.mxu0 0
    %4676 = vmatpush1.bf16.msra.mxu0 0
    %4677 = vmatprep.subr.bf16.mxu0 0
    %4678 = vmatpush1.bf16.msra.mxu0 0
    %4679 = vmatprep.subr.bf16.mxu0 0
    %4680 = vmatpush1.bf16.msra.mxu0 0
    %4681 = vmatprep.subr.bf16.mxu0 0
    %4682 = vmatpush1.bf16.msra.mxu0 0
    %4683 = vmatprep.subr.bf16.mxu0 0
    %4684 = vmatpush1.bf16.msra.mxu0 0
    %4685 = vmatprep.mubr.bf16.mxu0 0
    %4686 = vmatmul.mubr.bf16.gmra.mrb[0].mxu0 %v4651
    %v4687 = vpop.f32.mrb[0].mxu0
    %v4688 = vadd.f32 %v4625, %v4687
    %v4689 = vpop.f32.mrb[0].mxu0
    %v4690 = vpop.f32.mrb[0].mxu0
    %v4691 = vadd.f32 %v4625, %v4690
    %v4692 = vpop.f32.mrb[0].mxu0
    %4693 = vdwg.mxu0
    %v4694 = vmul.f32 %v4688, %v4688
    %v4695 = vmul.f32 %v4691, %v4691
    %v4696 = vmul.f32 %v4688, %v4694
    %v4697 = vmul.f32 %v4691, %v4695
    %v4698 = vmul.f32 %v4696, 0.044715
    %v4699 = vmul.f32 %v4697, 0.044715
    %v4700 = vadd.f32 %v4688, %v4698
    %v4701 = vadd.f32 %v4691, %v4699
    %v4702 = vmul.f32 %v4700, 0.7978846
    %v4703 = vmul.f32 %v4701, 0.7978846
    %v4704 = vtanh.pop %v4702
    %v4705 = vtanh.pop %v4703
    %v4706 = vadd.f32 %v4704, 1.0
    %v4707 = vadd.f32 %v4705, 1.0
    %v4708 = vmul.f32 %v4706, 0.5
    %v4709 = vmul.f32 %v4707, 0.5
    %v4710 = vmul.f32 %v4688, %v4708
    %v4711 = vmul.f32 %v4691, %v4709
    %v4712 = vpack.c.bf16 %v4711, %v4710
    %v4713 = vlaneseq
    %v4714 = vshrl.u32 %v4713, 7
    %v4715 = vsub.s32 0, %v4714
    %v4716 = vrot.slane %v4041, %v4715
    %v4725 = vunpack.c.l.b16 %v4033
    %v4726 = vunpack.c.l.b16 %v4034
    %v4727 = vunpack.c.l.b16 %v4035
    %v4728 = vunpack.c.l.b16 %v4036
    %v4729 = vunpack.c.l.b16 %v4037
    %v4730 = vunpack.c.l.b16 %v4038
    %v4731 = vunpack.c.l.b16 %v4039
    %v4732 = vunpack.c.l.b16 %v4040
    %v4733 = vpack.c.b16 %v4726, %v4725
    %v4734 = vpack.c.b16 %v4728, %v4727
    %v4735 = vpack.c.b16 %v4730, %v4729
    %v4736 = vpack.c.b16 %v4732, %v4731
    %v4742 = vsel %vm3190, %v4712, 0
    %4744 = vmatprep.subr.bf16.mxu0 0
    %4745 = vmatpush1.bf16.msra.mxu0 %v4733
    %4746 = vmatprep.subr.bf16.mxu0 0
    %4747 = vmatpush1.bf16.msra.mxu0 %v4734
    %4748 = vmatprep.subr.bf16.mxu0 0
    %4749 = vmatpush1.bf16.msra.mxu0 %v4735
    %4750 = vmatprep.subr.bf16.mxu0 0
    %4751 = vmatpush1.bf16.msra.mxu0 %v4736
    %4752 = vmatprep.subr.bf16.mxu0 0
    %4753 = vmatpush1.bf16.msra.mxu0 0
    %4754 = vmatprep.subr.bf16.mxu0 0
    %4755 = vmatpush1.bf16.msra.mxu0 0
    %4756 = vmatprep.subr.bf16.mxu0 0
    %4757 = vmatpush1.bf16.msra.mxu0 0
    %4758 = vmatprep.subr.bf16.mxu0 0
    %4759 = vmatpush1.bf16.msra.mxu0 0
    %4760 = vmatprep.subr.bf16.mxu0 0
    %4761 = vmatpush1.bf16.msra.mxu0 0
    %4762 = vmatprep.subr.bf16.mxu0 0
    %4763 = vmatpush1.bf16.msra.mxu0 0
    %4764 = vmatprep.subr.bf16.mxu0 0
    %4765 = vmatpush1.bf16.msra.mxu0 0
    %4766 = vmatprep.subr.bf16.mxu0 0
    %4767 = vmatpush1.bf16.msra.mxu0 0
    %4768 = vmatprep.subr.bf16.mxu0 0
    %4769 = vmatpush1.bf16.msra.mxu0 0
    %4770 = vmatprep.subr.bf16.mxu0 0
    %4771 = vmatpush1.bf16.msra.mxu0 0
    %4772 = vmatprep.subr.bf16.mxu0 0
    %4773 = vmatpush1.bf16.msra.mxu0 0
    %4774 = vmatprep.subr.bf16.mxu0 0
    %4775 = vmatpush1.bf16.msra.mxu0 0
    %4776 = vmatprep.mubr.bf16.mxu0 0
    %4777 = vmatmul.mubr.bf16.gmra.mrb[0].mxu0 %v4742
    %v4778 = vpop.f32.mrb[0].mxu0
    %v4779 = vadd.f32 %v4716, %v4778
    %v4780 = vpop.f32.mrb[0].mxu0
    %v4781 = vpop.f32.mrb[0].mxu0
    %v4782 = vadd.f32 %v4716, %v4781
    %v4783 = vpop.f32.mrb[0].mxu0
    %4784 = vdwg.mxu0
    %v4785 = vadd.f32 %v4581, %v4779
    %v4786 = vadd.f32 %v4582, %v4782
    %v4787 = vld [vmem:[%s17] sm:$0xff]
    %v4788 = vld [vmem:[%s17 + $0x8] sm:$0xff]
    %v4789 = vld [vmem:[%s17 + $0x10] sm:$0xff]
    %v4790 = vld [vmem:[%s61] sm:$0x1]
    %v4791 = vld [vmem:[%s61 + $0x1] sm:$0x1]
    %v4792 = vld [vmem:[#allocation30] sm:$0x1]
    %v4793 = vld [vmem:[#allocation30 + $0x1] sm:$0x1]
    %v4794 = vld [vmem:[#allocation27] sm:$0xf]
    %v4795 = vld [vmem:[#allocation27 + $0x4] sm:$0xf]
    %v4796 = vld [vmem:[#allocation27 + $0x8] sm:$0xf]
    %v4797 = vld [vmem:[#allocation27 + $0xc] sm:$0xf]
    %v4798 = vld [vmem:[#allocation30 + $0x2] sm:$0x1]
    %v4799 = vld [vmem:[#allocation28] sm:$0xf]
    %v4800 = vld [vmem:[#allocation28 + $0x4] sm:$0xf]
    %v4801 = vld [vmem:[#allocation28 + $0x8] sm:$0xf]
    %v4802 = vld [vmem:[#allocation28 + $0xc] sm:$0xf]
    %v4803 = vld [vmem:[#allocation28 + $0x10] sm:$0xf]
    %v4804 = vld [vmem:[#allocation28 + $0x14] sm:$0xf]
    %v4805 = vld [vmem:[#allocation28 + $0x18] sm:$0xf]
    %v4806 = vld [vmem:[#allocation28 + $0x1c] sm:$0xf]
    %v4807 = vld [vmem:[#allocation30 + $0x3] sm:$0x1]
    %s4808 = scalar_lea.vmem [#allocation28], 32
    %v4809 = vld [vmem:[%s4808] sm:$0xf]
    %v4810 = vld [vmem:[%s4808 + $0x4] sm:$0xf]
    %v4811 = vld [vmem:[%s4808 + $0x8] sm:$0xf]
    %v4812 = vld [vmem:[%s4808 + $0xc] sm:$0xf]
    %v4813 = vld [vmem:[%s4808 + $0x10] sm:$0xf]
    %v4814 = vld [vmem:[%s4808 + $0x14] sm:$0xf]
    %v4815 = vld [vmem:[%s4808 + $0x18] sm:$0xf]
    %v4816 = vld [vmem:[%s4808 + $0x1c] sm:$0xf]
    %v4817 = vld [vmem:[#allocation30 + $0x4] sm:$0x1]
    %v4818 = vld [vmem:[%s55] sm:$0xf]
    %v4819 = vld [vmem:[%s55 + $0x4] sm:$0xf]
    %v4820 = vld [vmem:[%s55 + $0x8] sm:$0xf]
    %v4821 = vld [vmem:[%s55 + $0xc] sm:$0xf]
    %v4822 = vld [vmem:[%s55 + $0x10] sm:$0xf]
    %v4823 = vld [vmem:[%s55 + $0x14] sm:$0xf]
    %v4824 = vld [vmem:[%s55 + $0x18] sm:$0xf]
    %v4825 = vld [vmem:[%s55 + $0x1c] sm:$0xf]
    %v4826 = vld [vmem:[%s61 + $0x2] sm:$0x1]
    %v4827 = vld [vmem:[%s61 + $0x3] sm:$0x1]
    %v4828 = vld [vmem:[%s61 + $0x4] sm:$0x1]
    %v4829 = vld [vmem:[%s57] sm:$0xf]
    %v4830 = vld [vmem:[%s57 + $0x4] sm:$0xf]
    %v4831 = vld [vmem:[%s57 + $0x8] sm:$0xf]
    %v4832 = vld [vmem:[%s57 + $0xc] sm:$0xf]
    %v4833 = vld [vmem:[%s61 + $0x5] sm:$0x1]
    %s4834 = scalar_lea.vmem %s57, 16
    %v4835 = vld [vmem:[%s4834] sm:$0xf]
    %v4836 = vld [vmem:[%s4834 + $0x4] sm:$0xf]
    %v4837 = vld [vmem:[%s4834 + $0x8] sm:$0xf]
    %v4838 = vld [vmem:[%s4834 + $0xc] sm:$0xf]
    %v4839 = vld [vmem:[%s61 + $0x6] sm:$0x1]
    %v4840 = vlaneseq
    %v4841 = vshrl.u32 %v4840, 7
    %v4842 = vsub.s32 0, %v4841
    %v4843 = vrot.slane %v4790, %v4842
    %v4844 = vmul.f32 %v3266, %v4843
    %v4845 = vmul.f32 %v3267, %v4843
    %v4846 = vmul.f32 %v3268, %v4843
    %v4847 = vlaneseq
    %v4848 = vshrl.u32 %v4847, 7
    %v4849 = vsub.s32 0, %v4848
    %v4850 = vrot.slane %v4791, %v4849
    %v4851 = vadd.f32 %v4844, %v4850
    %v4852 = vadd.f32 %v4845, %v4850
    %v4853 = vadd.f32 %v4846, %v4850
    %v4854 = vsel %vm3190, %v4785, 0.0
    %4855 = vadd.xlane.f32.xlu0 %v4854
    %v4856 = vpop.xlane.xlu0 %4855
    %v4857 = vsel %vm3190, %v4786, 0.0
    %4858 = vadd.xlane.f32.xlu0 %v4857
    %v4859 = vpop.xlane.xlu0 %4858
    %v4860 = vmul.f32 %v4856, %v3197
    %v4861 = vmul.f32 %v4859, %v3197
    %v4862 = vsub.f32 %v4785, %v4860
    %v4863 = vsub.f32 %v4786, %v4861
    %v4864 = vmul.f32 %v4862, %v4862
    %v4865 = vmul.f32 %v4863, %v4863
    %v4866 = vsel %vm3190, %v4864, 0.0
    %4867 = vadd.xlane.f32.xlu0 %v4866
    %v4868 = vpop.xlane.xlu0 %4867
    %v4869 = vsel %vm3190, %v4865, 0.0
    %4870 = vadd.xlane.f32.xlu0 %v4869
    %v4871 = vpop.xlane.xlu0 %4870
    %v4872 = vmul.f32 %v4868, %v3197
    %v4873 = vmul.f32 %v4871, %v3197
    %v4874 = vadd.f32 %v4872, 1e-05
    %v4875 = vadd.f32 %v4873, 1e-05
    %v4876 = vrsqrt.pop %v4874
    %v4877 = vrsqrt.pop %v4875
    %v4878 = vmul.f32 %v4862, %v4876
    %v4879 = vmul.f32 %v4863, %v4877
    %v4880 = vlaneseq
    %v4881 = vshrl.u32 %v4880, 7
    %v4882 = vsub.s32 0, %v4881
    %v4883 = vrot.slane %v4792, %v4882
    %v4884 = vmul.f32 %v4878, %v4883
    %v4885 = vmul.f32 %v4879, %v4883
    %v4886 = vlaneseq
    %v4887 = vshrl.u32 %v4886, 7
    %v4888 = vsub.s32 0, %v4887
    %v4889 = vrot.slane %v4793, %v4888
    %v4890 = vadd.f32 %v4884, %v4889
    %v4891 = vadd.f32 %v4885, %v4889
    %v4892 = vpack.c.bf16 %v4852, %v4851
    %v4893 = vpack.c.bf16 %v4853, %v4853
    %v4894 = vlaneseq
    %v4895 = vshrl.u32 %v4894, 7
    %v4896 = vsub.s32 0, %v4895
    %v4897 = vrot.slane %v4798, %v4896
    %v4902 = vunpack.c.l.b16 %v4794
    %v4903 = vunpack.c.l.b16 %v4795
    %v4904 = vunpack.c.l.b16 %v4796
    %v4905 = vunpack.c.l.b16 %v4797
    %v4906 = vpack.c.b16 %v4903, %v4902
    %v4907 = vpack.c.b16 %v4905, %v4904
    %v4911 = vsel %vm506, %v4892, 0
    %v4914 = vsel %vm506, %v4893, 0
    %4916 = vmatprep.subr.bf16.mxu0 0
    %4917 = vmatpush1.bf16.msra.mxu0 %v4906
    %4918 = vmatprep.subr.bf16.mxu0 0
    %4919 = vmatpush1.bf16.msra.mxu0 %v4907
    %4920 = vmatprep.subr.bf16.mxu0 0
    %4921 = vmatpush1.bf16.msra.mxu0 0
    %4922 = vmatprep.subr.bf16.mxu0 0
    %4923 = vmatpush1.bf16.msra.mxu0 0
    %4924 = vmatprep.subr.bf16.mxu0 0
    %4925 = vmatpush1.bf16.msra.mxu0 0
    %4926 = vmatprep.subr.bf16.mxu0 0
    %4927 = vmatpush1.bf16.msra.mxu0 0
    %4928 = vmatprep.subr.bf16.mxu0 0
    %4929 = vmatpush1.bf16.msra.mxu0 0
    %4930 = vmatprep.subr.bf16.mxu0 0
    %4931 = vmatpush1.bf16.msra.mxu0 0
    %4932 = vmatprep.subr.bf16.mxu0 0
    %4933 = vmatpush1.bf16.msra.mxu0 0
    %4934 = vmatprep.subr.bf16.mxu0 0
    %4935 = vmatpush1.bf16.msra.mxu0 0
    %4936 = vmatprep.subr.bf16.mxu0 0
    %4937 = vmatpush1.bf16.msra.mxu0 0
    %4938 = vmatprep.subr.bf16.mxu0 0
    %4939 = vmatpush1.bf16.msra.mxu0 0
    %4940 = vmatprep.subr.bf16.mxu0 0
    %4941 = vmatpush1.bf16.msra.mxu0 0
    %4942 = vmatprep.subr.bf16.mxu0 0
    %4943 = vmatpush1.bf16.msra.mxu0 0
    %4944 = vmatprep.subr.bf16.mxu0 0
    %4945 = vmatpush1.bf16.msra.mxu0 0
    %4946 = vmatprep.subr.bf16.mxu0 0
    %4947 = vmatpush1.bf16.msra.mxu0 0
    %4948 = vmatprep.mubr.bf16.mxu0 0
    %4949 = vmatmul.mubr.bf16.gmra.mrb[0].mxu0 %v4911
    %v4950 = vpop.f32.mrb[0].mxu0
    %v4951 = vadd.f32 %v4897, %v4950
    %v4952 = vpop.f32.mrb[0].mxu0
    %v4953 = vpop.f32.mrb[0].mxu0
    %v4954 = vadd.f32 %v4897, %v4953
    %v4955 = vpop.f32.mrb[0].mxu0
    %4956 = vmatprep.mubr.bf16.mxu0 0
    %4957 = vmatmul.mubr.bf16.gmra.mrb[0].mxu0 %v4914
    %v4958 = vpop.f32.mrb[0].mxu0
    %v4959 = vadd.f32 %v4897, %v4958
    %v4960 = vpop.f32.mrb[0].mxu0
    %v4961 = vpop.f32.mrb[0].mxu0
    %v4962 = vpop.f32.mrb[0].mxu0
    %4963 = vdwg.mxu0
    %v4964 = vmul.f32 %v4951, 0.125
    %v4965 = vmul.f32 %v4954, 0.125
    %v4966 = vmul.f32 %v4959, 0.125
    %v4967 = vpack.c.bf16 %v4891, %v4890
    %v4968 = vlaneseq
    %v4969 = vshrl.u32 %v4968, 7
    %v4970 = vsub.s32 0, %v4969
    %v4971 = vrot.slane %v4807, %v4970
    %v4980 = vunpack.c.l.b16 %v4799
    %v4981 = vunpack.c.l.b16 %v4800
    %v4982 = vunpack.c.l.b16 %v4801
    %v4983 = vunpack.c.l.b16 %v4802
    %v4984 = vunpack.c.l.b16 %v4803
    %v4985 = vunpack.c.l.b16 %v4804
    %v4986 = vunpack.c.l.b16 %v4805
    %v4987 = vunpack.c.l.b16 %v4806
    %v4988 = vpack.c.b16 %v4981, %v4980
    %v4989 = vpack.c.b16 %v4983, %v4982
    %v4990 = vpack.c.b16 %v4985, %v4984
    %v4991 = vpack.c.b16 %v4987, %v4986
    %v4997 = vsel %vm3190, %v4967, 0
    %4999 = vmatprep.subr.bf16.mxu0 0
    %5000 = vmatpush1.bf16.msra.mxu0 %v4988
    %5001 = vmatprep.subr.bf16.mxu0 0
    %5002 = vmatpush1.bf16.msra.mxu0 %v4989
    %5003 = vmatprep.subr.bf16.mxu0 0
    %5004 = vmatpush1.bf16.msra.mxu0 %v4990
    %5005 = vmatprep.subr.bf16.mxu0 0
    %5006 = vmatpush1.bf16.msra.mxu0 %v4991
    %5007 = vmatprep.subr.bf16.mxu0 0
    %5008 = vmatpush1.bf16.msra.mxu0 0
    %5009 = vmatprep.subr.bf16.mxu0 0
    %5010 = vmatpush1.bf16.msra.mxu0 0
    %5011 = vmatprep.subr.bf16.mxu0 0
    %5012 = vmatpush1.bf16.msra.mxu0 0
    %5013 = vmatprep.subr.bf16.mxu0 0
    %5014 = vmatpush1.bf16.msra.mxu0 0
    %5015 = vmatprep.subr.bf16.mxu0 0
    %5016 = vmatpush1.bf16.msra.mxu0 0
    %5017 = vmatprep.subr.bf16.mxu0 0
    %5018 = vmatpush1.bf16.msra.mxu0 0
    %5019 = vmatprep.subr.bf16.mxu0 0
    %5020 = vmatpush1.bf16.msra.mxu0 0
    %5021 = vmatprep.subr.bf16.mxu0 0
    %5022 = vmatpush1.bf16.msra.mxu0 0
    %5023 = vmatprep.subr.bf16.mxu0 0
    %5024 = vmatpush1.bf16.msra.mxu0 0
    %5025 = vmatprep.subr.bf16.mxu0 0
    %5026 = vmatpush1.bf16.msra.mxu0 0
    %5027 = vmatprep.subr.bf16.mxu0 0
    %5028 = vmatpush1.bf16.msra.mxu0 0
    %5029 = vmatprep.subr.bf16.mxu0 0
    %5030 = vmatpush1.bf16.msra.mxu0 0
    %5031 = vmatprep.mubr.bf16.mxu0 0
    %5032 = vmatmul.mubr.bf16.gmra.mrb[0].mxu0 %v4997
    %v5033 = vpop.f32.mrb[0].mxu0
    %v5034 = vadd.f32 %v4971, %v5033
    %v5035 = vpop.f32.mrb[0].mxu0
    %v5036 = vpop.f32.mrb[0].mxu0
    %v5037 = vadd.f32 %v4971, %v5036
    %v5038 = vpop.f32.mrb[0].mxu0
    %5039 = vdwg.mxu0
    %v5040 = vlaneseq
    %v5041 = vshrl.u32 %v5040, 7
    %v5042 = vsub.s32 0, %v5041
    %v5043 = vrot.slane %v4817, %v5042
    %v5052 = vunpack.c.l.b16 %v4809
    %v5053 = vunpack.c.l.b16 %v4810
    %v5054 = vunpack.c.l.b16 %v4811
    %v5055 = vunpack.c.l.b16 %v4812
    %v5056 = vunpack.c.l.b16 %v4813
    %v5057 = vunpack.c.l.b16 %v4814
    %v5058 = vunpack.c.l.b16 %v4815
    %v5059 = vunpack.c.l.b16 %v4816
    %v5060 = vpack.c.b16 %v5053, %v5052
    %v5061 = vpack.c.b16 %v5055, %v5054
    %v5062 = vpack.c.b16 %v5057, %v5056
    %v5063 = vpack.c.b16 %v5059, %v5058
    %5068 = vmatprep.subr.bf16.mxu0 0
    %5069 = vmatpush1.bf16.msra.mxu0 %v5060
    %5070 = vmatprep.subr.bf16.mxu0 0
    %5071 = vmatpush1.bf16.msra.mxu0 %v5061
    %5072 = vmatprep.subr.bf16.mxu0 0
    %5073 = vmatpush1.bf16.msra.mxu0 %v5062
    %5074 = vmatprep.subr.bf16.mxu0 0
    %5075 = vmatpush1.bf16.msra.mxu0 %v5063
    %5076 = vmatprep.subr.bf16.mxu0 0
    %5077 = vmatpush1.bf16.msra.mxu0 0
    %5078 = vmatprep.subr.bf16.mxu0 0
    %5079 = vmatpush1.bf16.msra.mxu0 0
    %5080 = vmatprep.subr.bf16.mxu0 0
    %5081 = vmatpush1.bf16.msra.mxu0 0
    %5082 = vmatprep.subr.bf16.mxu0 0
    %5083 = vmatpush1.bf16.msra.mxu0 0
    %5084 = vmatprep.subr.bf16.mxu0 0
    %5085 = vmatpush1.bf16.msra.mxu0 0
    %5086 = vmatprep.subr.bf16.mxu0 0
    %5087 = vmatpush1.bf16.msra.mxu0 0
    %5088 = vmatprep.subr.bf16.mxu0 0
    %5089 = vmatpush1.bf16.msra.mxu0 0
    %5090 = vmatprep.subr.bf16.mxu0 0
    %5091 = vmatpush1.bf16.msra.mxu0 0
    %5092 = vmatprep.subr.bf16.mxu0 0
    %5093 = vmatpush1.bf16.msra.mxu0 0
    %5094 = vmatprep.subr.bf16.mxu0 0
    %5095 = vmatpush1.bf16.msra.mxu0 0
    %5096 = vmatprep.subr.bf16.mxu0 0
    %5097 = vmatpush1.bf16.msra.mxu0 0
    %5098 = vmatprep.subr.bf16.mxu0 0
    %5099 = vmatpush1.bf16.msra.mxu0 0
    %5100 = vmatprep.mubr.bf16.mxu0 0
    %5101 = vmatmul.mubr.bf16.gmra.mrb[0].mxu0 %v4997
    %v5102 = vpop.f32.mrb[0].mxu0
    %v5103 = vadd.f32 %v5043, %v5102
    %v5104 = vpop.f32.mrb[0].mxu0
    %v5105 = vpop.f32.mrb[0].mxu0
    %v5106 = vadd.f32 %v5043, %v5105
    %v5107 = vpop.f32.mrb[0].mxu0
    %5108 = vdwg.mxu0
    %v5110 = vsel %vm3190, %v4964, 0
    %v5113 = vsel %vm3190, %v4965, 0
    %v5116 = vsel %vm3190, %v4966, 0
    %v5119 = vsel %vm3190, %v5034, 0
    %v5122 = vsel %vm3190, %v5037, 0
    %5124 = vmatprep.subr.mxu0 0.0
    %5125 = vmatpush1.xpose.msra.mxu0 %v5119
    %5126 = vmatprep.subr.mxu0 0.0
    %5127 = vmatpush1.xpose.msra.mxu0 %v5122
    %5128 = vmatprep.subr.mxu0 0.0
    %5129 = vmatpush1.xpose.msra.mxu0 0.0
    %5130 = vmatprep.subr.mxu0 0.0
    %5131 = vmatpush1.xpose.msra.mxu0 0.0
    %5132 = vmatprep.subr.mxu0 0.0
    %5133 = vmatpush1.xpose.msra.mxu0 0.0
    %5134 = vmatprep.subr.mxu0 0.0
    %5135 = vmatpush1.xpose.msra.mxu0 0.0
    %5136 = vmatprep.subr.mxu0 0.0
    %5137 = vmatpush1.xpose.msra.mxu0 0.0
    %5138 = vmatprep.subr.mxu0 0.0
    %5139 = vmatpush1.xpose.msra.mxu0 0.0
    %5140 = vmatprep.subr.mxu0 0.0
    %5141 = vmatpush1.xpose.msra.mxu0 0.0
    %5142 = vmatprep.subr.mxu0 0.0
    %5143 = vmatpush1.xpose.msra.mxu0 0.0
    %5144 = vmatprep.subr.mxu0 0.0
    %5145 = vmatpush1.xpose.msra.mxu0 0.0
    %5146 = vmatprep.subr.mxu0 0.0
    %5147 = vmatpush1.xpose.msra.mxu0 0.0
    %5148 = vmatprep.subr.mxu0 0.0
    %5149 = vmatpush1.xpose.msra.mxu0 0.0
    %5150 = vmatprep.subr.mxu0 0.0
    %5151 = vmatpush1.xpose.msra.mxu0 0.0
    %5152 = vmatprep.subr.mxu0 0.0
    %5153 = vmatpush1.xpose.msra.mxu0 0.0
    %5154 = vmatprep.subr.mxu0 0.0
    %5155 = vmatpush1.xpose.msra.mxu0 0.0
    %5156 = vmatprep.subr.mxu0 0.0
    %5157 = vmatpush1.xpose.msra.mxu0 0.0
    %5158 = vmatprep.subr.mxu0 0.0
    %5159 = vmatpush1.xpose.msra.mxu0 0.0
    %5160 = vmatprep.subr.mxu0 0.0
    %5161 = vmatpush1.xpose.msra.mxu0 0.0
    %5162 = vmatprep.subr.mxu0 0.0
    %5163 = vmatpush1.xpose.msra.mxu0 0.0
    %5164 = vmatprep.subr.mxu0 0.0
    %5165 = vmatpush1.xpose.msra.mxu0 0.0
    %5166 = vmatprep.subr.mxu0 0.0
    %5167 = vmatpush1.xpose.msra.mxu0 0.0
    %5168 = vmatprep.subr.mxu0 0.0
    %5169 = vmatpush1.xpose.msra.mxu0 0.0
    %5170 = vmatprep.subr.mxu0 0.0
    %5171 = vmatpush1.xpose.msra.mxu0 0.0
    %5172 = vmatprep.subr.mxu0 0.0
    %5173 = vmatpush1.xpose.msra.mxu0 0.0
    %5174 = vmatprep.subr.mxu0 0.0
    %5175 = vmatpush1.xpose.msra.mxu0 0.0
    %5176 = vmatprep.subr.mxu0 0.0
    %5177 = vmatpush1.xpose.msra.mxu0 0.0
    %5178 = vmatprep.subr.mxu0 0.0
    %5179 = vmatpush1.xpose.msra.mxu0 0.0
    %5180 = vmatprep.subr.mxu0 0.0
    %5181 = vmatpush1.xpose.msra.mxu0 0.0
    %5182 = vmatprep.subr.mxu0 0.0
    %5183 = vmatpush1.xpose.msra.mxu0 0.0
    %5184 = vmatprep.subr.mxu0 0.0
    %5185 = vmatpush1.xpose.msra.mxu0 0.0
    %5186 = vmatprep.subr.mxu0 0.0
    %5187 = vmatpush1.xpose.msra.mxu0 0.0
    %5188 = vmatprep.mubr.f32.mxu0 0.0
    %5189 = vmatmul.mubr.f32.gmra.mrb[0].mxu0 %v5110
    %v5190 = vpop.f32.mrb[0].mxu0
    %v5191 = vadd.f32 0.0, %v5190
    %v5192 = vpop.f32.mrb[0].mxu0
    %5193 = vmatprep.mubr.f32.mxu0 0.0
    %5194 = vmatmul.mubr.f32.gmra.mrb[0].mxu0 %v5113
    %v5195 = vpop.f32.mrb[0].mxu0
    %v5196 = vadd.f32 0.0, %v5195
    %v5197 = vpop.f32.mrb[0].mxu0
    %5198 = vmatprep.mubr.f32.mxu0 0.0
    %5199 = vmatmul.mubr.f32.gmra.mrb[0].mxu0 %v5116
    %v5200 = vpop.f32.mrb[0].mxu0
    %v5201 = vadd.f32 0.0, %v5200
    %v5202 = vpop.f32.mrb[0].mxu0
    %5203 = vdwg.mxu0
    %vm5204 = vcmp.gt.f32.partialorder %v4787, 0.0
    %vm5205 = vcmp.gt.f32.partialorder %v4788, 0.0
    %vm5206 = vcmp.gt.f32.partialorder %v4789, 0.0
    %v5207 = vsel %vm5204, %v5191, -1e+30
    %v5208 = vsel %vm5205, %v5196, -1e+30
    %v5209 = vsel %vm5206, %v5201, -1e+30
    %v5210 = vsel %vm4400, %v5207, -inf
    %5211 = vmax.xlane.f32.xlu0 %v5210
    %v5212 = vpop.xlane.xlu0 %5211
    %v5213 = vsel %vm4400, %v5208, -inf
    %5214 = vmax.xlane.f32.xlu0 %v5213
    %v5215 = vpop.xlane.xlu0 %5214
    %v5216 = vsel %vm4400, %v5209, -inf
    %5217 = vmax.xlane.f32.xlu0 %v5216
    %v5218 = vpop.xlane.xlu0 %5217
    %v5219 = vsub.f32 %v5207, %v5212
    %v5220 = vsub.f32 %v5208, %v5215
    %v5221 = vsub.f32 %v5209, %v5218
    %v5222 = vmul.f32 %v5219, 1.442695
    %v5223 = vpow.pop %v5222
    %v5224 = vmul.f32 %v5220, 1.442695
    %v5225 = vpow.pop %v5224
    %v5226 = vmul.f32 %v5221, 1.442695
    %v5227 = vpow.pop %v5226
    %v5228 = vmul.f32 %v5223, %v4787
    %v5229 = vmul.f32 %v5225, %v4788
    %v5230 = vmul.f32 %v5227, %v4789
    %v5231 = vsel %vm4400, %v5228, 0.0
    %5232 = vadd.xlane.f32.xlu0 %v5231
    %v5233 = vpop.xlane.xlu0 %5232
    %v5234 = vsel %vm4400, %v5229, 0.0
    %5235 = vadd.xlane.f32.xlu0 %v5234
    %v5236 = vpop.xlane.xlu0 %5235
    %v5237 = vsel %vm4400, %v5230, 0.0
    %5238 = vadd.xlane.f32.xlu0 %v5237
    %v5239 = vpop.xlane.xlu0 %5238
    %v5240 = vmax.f32 %v5233, 1e-30
    %v5241 = vmax.f32 %v5236, 1e-30
    %v5242 = vmax.f32 %v5239, 1e-30
    %v5243 = vrcp.pop %v5240
    %v5244 = vmul.f32 %v5228, %v5243
    %v5245 = vrcp.pop %v5241
    %v5246 = vmul.f32 %v5229, %v5245
    %v5247 = vrcp.pop %v5242
    %v5248 = vmul.f32 %v5230, %v5247
    %v5250 = vsel %vm4400, %v5244, 0
    %v5253 = vsel %vm4400, %v5246, 0
    %v5256 = vsel %vm4400, %v5248, 0
    %5258 = vmatprep.subr.mxu0 0.0
    %5259 = vmatpush1.msra.mxu0 %v5103
    %5260 = vmatprep.subr.mxu0 0.0
    %5261 = vmatpush1.msra.mxu0 %v5106
    %5262 = vmatprep.subr.mxu0 0.0
    %5263 = vmatpush1.msra.mxu0 0.0
    %5264 = vmatprep.subr.mxu0 0.0
    %5265 = vmatpush1.msra.mxu0 0.0
    %5266 = vmatprep.subr.mxu0 0.0
    %5267 = vmatpush1.msra.mxu0 0.0
    %5268 = vmatprep.subr.mxu0 0.0
    %5269 = vmatpush1.msra.mxu0 0.0
    %5270 = vmatprep.subr.mxu0 0.0
    %5271 = vmatpush1.msra.mxu0 0.0
    %5272 = vmatprep.subr.mxu0 0.0
    %5273 = vmatpush1.msra.mxu0 0.0
    %5274 = vmatprep.subr.mxu0 0.0
    %5275 = vmatpush1.msra.mxu0 0.0
    %5276 = vmatprep.subr.mxu0 0.0
    %5277 = vmatpush1.msra.mxu0 0.0
    %5278 = vmatprep.subr.mxu0 0.0
    %5279 = vmatpush1.msra.mxu0 0.0
    %5280 = vmatprep.subr.mxu0 0.0
    %5281 = vmatpush1.msra.mxu0 0.0
    %5282 = vmatprep.subr.mxu0 0.0
    %5283 = vmatpush1.msra.mxu0 0.0
    %5284 = vmatprep.subr.mxu0 0.0
    %5285 = vmatpush1.msra.mxu0 0.0
    %5286 = vmatprep.subr.mxu0 0.0
    %5287 = vmatpush1.msra.mxu0 0.0
    %5288 = vmatprep.subr.mxu0 0.0
    %5289 = vmatpush1.msra.mxu0 0.0
    %5290 = vmatprep.subr.mxu0 0.0
    %5291 = vmatpush1.msra.mxu0 0.0
    %5292 = vmatprep.subr.mxu0 0.0
    %5293 = vmatpush1.msra.mxu0 0.0
    %5294 = vmatprep.subr.mxu0 0.0
    %5295 = vmatpush1.msra.mxu0 0.0
    %5296 = vmatprep.subr.mxu0 0.0
    %5297 = vmatpush1.msra.mxu0 0.0
    %5298 = vmatprep.subr.mxu0 0.0
    %5299 = vmatpush1.msra.mxu0 0.0
    %5300 = vmatprep.subr.mxu0 0.0
    %5301 = vmatpush1.msra.mxu0 0.0
    %5302 = vmatprep.subr.mxu0 0.0
    %5303 = vmatpush1.msra.mxu0 0.0
    %5304 = vmatprep.subr.mxu0 0.0
    %5305 = vmatpush1.msra.mxu0 0.0
    %5306 = vmatprep.subr.mxu0 0.0
    %5307 = vmatpush1.msra.mxu0 0.0
    %5308 = vmatprep.subr.mxu0 0.0
    %5309 = vmatpush1.msra.mxu0 0.0
    %5310 = vmatprep.subr.mxu0 0.0
    %5311 = vmatpush1.msra.mxu0 0.0
    %5312 = vmatprep.subr.mxu0 0.0
    %5313 = vmatpush1.msra.mxu0 0.0
    %5314 = vmatprep.subr.mxu0 0.0
    %5315 = vmatpush1.msra.mxu0 0.0
    %5316 = vmatprep.subr.mxu0 0.0
    %5317 = vmatpush1.msra.mxu0 0.0
    %5318 = vmatprep.subr.mxu0 0.0
    %5319 = vmatpush1.msra.mxu0 0.0
    %5320 = vmatprep.subr.mxu0 0.0
    %5321 = vmatpush1.msra.mxu0 0.0
    %5322 = vmatprep.mubr.f32.mxu0 0.0
    %5323 = vmatmul.mubr.f32.gmra.mrb[0].mxu0 %v5250
    %v5324 = vpop.f32.mrb[0].mxu0
    %v5325 = vadd.f32 0.0, %v5324
    %v5326 = vpop.f32.mrb[0].mxu0
    %5327 = vmatprep.mubr.f32.mxu0 0.0
    %5328 = vmatmul.mubr.f32.gmra.mrb[0].mxu0 %v5253
    %v5329 = vpop.f32.mrb[0].mxu0
    %v5330 = vadd.f32 0.0, %v5329
    %v5331 = vpop.f32.mrb[0].mxu0
    %5332 = vmatprep.mubr.f32.mxu0 0.0
    %5333 = vmatmul.mubr.f32.gmra.mrb[0].mxu0 %v5256
    %v5334 = vpop.f32.mrb[0].mxu0
    %v5335 = vadd.f32 0.0, %v5334
    %v5336 = vpop.f32.mrb[0].mxu0
    %5337 = vdwg.mxu0
    %v5338 = vpack.c.bf16 %v5330, %v5325
    %v5339 = vpack.c.bf16 %v5335, %v5335
    %v5340 = vlaneseq
    %v5341 = vshrl.u32 %v5340, 7
    %v5342 = vsub.s32 0, %v5341
    %v5343 = vrot.slane %v4826, %v5342
    %v5352 = vunpack.c.l.b16 %v4818
    %v5353 = vunpack.c.l.b16 %v4819
    %v5354 = vunpack.c.l.b16 %v4820
    %v5355 = vunpack.c.l.b16 %v4821
    %v5356 = vunpack.c.l.b16 %v4822
    %v5357 = vunpack.c.l.b16 %v4823
    %v5358 = vunpack.c.l.b16 %v4824
    %v5359 = vunpack.c.l.b16 %v4825
    %v5360 = vpack.c.b16 %v5353, %v5352
    %v5361 = vpack.c.b16 %v5355, %v5354
    %v5362 = vpack.c.b16 %v5357, %v5356
    %v5363 = vpack.c.b16 %v5359, %v5358
    %v5369 = vsel %vm3190, %v5338, 0
    %v5372 = vsel %vm3190, %v5339, 0
    %5374 = vmatprep.subr.bf16.mxu0 0
    %5375 = vmatpush1.bf16.msra.mxu0 %v5360
    %5376 = vmatprep.subr.bf16.mxu0 0
    %5377 = vmatpush1.bf16.msra.mxu0 %v5361
    %5378 = vmatprep.subr.bf16.mxu0 0
    %5379 = vmatpush1.bf16.msra.mxu0 %v5362
    %5380 = vmatprep.subr.bf16.mxu0 0
    %5381 = vmatpush1.bf16.msra.mxu0 %v5363
    %5382 = vmatprep.subr.bf16.mxu0 0
    %5383 = vmatpush1.bf16.msra.mxu0 0
    %5384 = vmatprep.subr.bf16.mxu0 0
    %5385 = vmatpush1.bf16.msra.mxu0 0
    %5386 = vmatprep.subr.bf16.mxu0 0
    %5387 = vmatpush1.bf16.msra.mxu0 0
    %5388 = vmatprep.subr.bf16.mxu0 0
    %5389 = vmatpush1.bf16.msra.mxu0 0
    %5390 = vmatprep.subr.bf16.mxu0 0
    %5391 = vmatpush1.bf16.msra.mxu0 0
    %5392 = vmatprep.subr.bf16.mxu0 0
    %5393 = vmatpush1.bf16.msra.mxu0 0
    %5394 = vmatprep.subr.bf16.mxu0 0
    %5395 = vmatpush1.bf16.msra.mxu0 0
    %5396 = vmatprep.subr.bf16.mxu0 0
    %5397 = vmatpush1.bf16.msra.mxu0 0
    %5398 = vmatprep.subr.bf16.mxu0 0
    %5399 = vmatpush1.bf16.msra.mxu0 0
    %5400 = vmatprep.subr.bf16.mxu0 0
    %5401 = vmatpush1.bf16.msra.mxu0 0
    %5402 = vmatprep.subr.bf16.mxu0 0
    %5403 = vmatpush1.bf16.msra.mxu0 0
    %5404 = vmatprep.subr.bf16.mxu0 0
    %5405 = vmatpush1.bf16.msra.mxu0 0
    %5406 = vmatprep.mubr.bf16.mxu0 0
    %5407 = vmatmul.mubr.bf16.gmra.mrb[0].mxu0 %v5369
    %v5408 = vpop.f32.mrb[0].mxu0
    %v5409 = vadd.f32 %v5343, %v5408
    %v5410 = vpop.f32.mrb[0].mxu0
    %v5411 = vpop.f32.mrb[0].mxu0
    %v5412 = vadd.f32 %v5343, %v5411
    %v5413 = vpop.f32.mrb[0].mxu0
    %5414 = vmatprep.mubr.bf16.mxu0 0
    %5415 = vmatmul.mubr.bf16.gmra.mrb[0].mxu0 %v5372
    %v5416 = vpop.f32.mrb[0].mxu0
    %v5417 = vadd.f32 %v5343, %v5416
    %v5418 = vpop.f32.mrb[0].mxu0
    %v5419 = vpop.f32.mrb[0].mxu0
    %v5420 = vpop.f32.mrb[0].mxu0
    %5421 = vdwg.mxu0
    %v5422 = vsel %vm506, %v5409, 0.0
    %5423 = vadd.xlane.f32.xlu0 %v5422
    %v5424 = vpop.xlane.xlu0 %5423
    %v5425 = vsel %vm506, %v5412, 0.0
    %5426 = vadd.xlane.f32.xlu0 %v5425
    %v5427 = vpop.xlane.xlu0 %5426
    %v5428 = vsel %vm506, %v5417, 0.0
    %5429 = vadd.xlane.f32.xlu0 %v5428
    %v5430 = vpop.xlane.xlu0 %5429
    %v5431 = vmul.f32 %v5424, %v654
    %v5432 = vmul.f32 %v5427, %v654
    %v5433 = vmul.f32 %v5430, %v654
    %v5434 = vsub.f32 %v5409, %v5431
    %v5435 = vsub.f32 %v5412, %v5432
    %v5436 = vsub.f32 %v5417, %v5433
    %v5437 = vmul.f32 %v5434, %v5434
    %v5438 = vmul.f32 %v5435, %v5435
    %v5439 = vmul.f32 %v5436, %v5436
    %v5440 = vsel %vm506, %v5437, 0.0
    %5441 = vadd.xlane.f32.xlu0 %v5440
    %v5442 = vpop.xlane.xlu0 %5441
    %v5443 = vsel %vm506, %v5438, 0.0
    %5444 = vadd.xlane.f32.xlu0 %v5443
    %v5445 = vpop.xlane.xlu0 %5444
    %v5446 = vsel %vm506, %v5439, 0.0
    %5447 = vadd.xlane.f32.xlu0 %v5446
    %v5448 = vpop.xlane.xlu0 %5447
    %v5449 = vmul.f32 %v5442, %v654
    %v5450 = vmul.f32 %v5445, %v654
    %v5451 = vmul.f32 %v5448, %v654
    %v5452 = vadd.f32 %v5449, 1e-05
    %v5453 = vadd.f32 %v5450, 1e-05
    %v5454 = vadd.f32 %v5451, 1e-05
    %v5455 = vrsqrt.pop %v5452
    %v5456 = vrsqrt.pop %v5453
    %v5457 = vrsqrt.pop %v5454
    %v5458 = vmul.f32 %v5434, %v5455
    %v5459 = vmul.f32 %v5435, %v5456
    %v5460 = vmul.f32 %v5436, %v5457
    %v5461 = vlaneseq
    %v5462 = vshrl.u32 %v5461, 7
    %v5463 = vsub.s32 0, %v5462
    %v5464 = vrot.slane %v4827, %v5463
    %v5465 = vmul.f32 %v5458, %v5464
    %v5466 = vmul.f32 %v5459, %v5464
    %v5467 = vmul.f32 %v5460, %v5464
    %v5468 = vlaneseq
    %v5469 = vshrl.u32 %v5468, 7
    %v5470 = vsub.s32 0, %v5469
    %v5471 = vrot.slane %v4828, %v5470
    %v5472 = vadd.f32 %v5465, %v5471
    %v5473 = vadd.f32 %v5466, %v5471
    %v5474 = vadd.f32 %v5467, %v5471
    %v5475 = vpack.c.bf16 %v5473, %v5472
    %v5476 = vpack.c.bf16 %v5474, %v5474
    %v5477 = vlaneseq
    %v5478 = vshrl.u32 %v5477, 7
    %v5479 = vsub.s32 0, %v5478
    %v5480 = vrot.slane %v4833, %v5479
    %v5485 = vunpack.c.l.b16 %v4829
    %v5486 = vunpack.c.l.b16 %v4830
    %v5487 = vunpack.c.l.b16 %v4831
    %v5488 = vunpack.c.l.b16 %v4832
    %v5489 = vpack.c.b16 %v5486, %v5485
    %v5490 = vpack.c.b16 %v5488, %v5487
    %v5494 = vsel %vm506, %v5475, 0
    %v5497 = vsel %vm506, %v5476, 0
    %5499 = vmatprep.subr.bf16.mxu0 0
    %5500 = vmatpush1.bf16.msra.mxu0 %v5489
    %5501 = vmatprep.subr.bf16.mxu0 0
    %5502 = vmatpush1.bf16.msra.mxu0 %v5490
    %5503 = vmatprep.subr.bf16.mxu0 0
    %5504 = vmatpush1.bf16.msra.mxu0 0
    %5505 = vmatprep.subr.bf16.mxu0 0
    %5506 = vmatpush1.bf16.msra.mxu0 0
    %5507 = vmatprep.subr.bf16.mxu0 0
    %5508 = vmatpush1.bf16.msra.mxu0 0
    %5509 = vmatprep.subr.bf16.mxu0 0
    %5510 = vmatpush1.bf16.msra.mxu0 0
    %5511 = vmatprep.subr.bf16.mxu0 0
    %5512 = vmatpush1.bf16.msra.mxu0 0
    %5513 = vmatprep.subr.bf16.mxu0 0
    %5514 = vmatpush1.bf16.msra.mxu0 0
    %5515 = vmatprep.subr.bf16.mxu0 0
    %5516 = vmatpush1.bf16.msra.mxu0 0
    %5517 = vmatprep.subr.bf16.mxu0 0
    %5518 = vmatpush1.bf16.msra.mxu0 0
    %5519 = vmatprep.subr.bf16.mxu0 0
    %5520 = vmatpush1.bf16.msra.mxu0 0
    %5521 = vmatprep.subr.bf16.mxu0 0
    %5522 = vmatpush1.bf16.msra.mxu0 0
    %5523 = vmatprep.subr.bf16.mxu0 0
    %5524 = vmatpush1.bf16.msra.mxu0 0
    %5525 = vmatprep.subr.bf16.mxu0 0
    %5526 = vmatpush1.bf16.msra.mxu0 0
    %5527 = vmatprep.subr.bf16.mxu0 0
    %5528 = vmatpush1.bf16.msra.mxu0 0
    %5529 = vmatprep.subr.bf16.mxu0 0
    %5530 = vmatpush1.bf16.msra.mxu0 0
    %5531 = vmatprep.mubr.bf16.mxu0 0
    %5532 = vmatmul.mubr.bf16.gmra.mrb[0].mxu0 %v5494
    %v5533 = vpop.f32.mrb[0].mxu0
    %v5534 = vadd.f32 %v5480, %v5533
    %v5535 = vpop.f32.mrb[0].mxu0
    %v5536 = vpop.f32.mrb[0].mxu0
    %v5537 = vadd.f32 %v5480, %v5536
    %v5538 = vpop.f32.mrb[0].mxu0
    %5539 = vmatprep.mubr.bf16.mxu0 0
    %5540 = vmatmul.mubr.bf16.gmra.mrb[0].mxu0 %v5497
    %v5541 = vpop.f32.mrb[0].mxu0
    %v5542 = vadd.f32 %v5480, %v5541
    %v5543 = vpop.f32.mrb[0].mxu0
    %v5544 = vpop.f32.mrb[0].mxu0
    %v5545 = vpop.f32.mrb[0].mxu0
    %5546 = vdwg.mxu0
    %v5547 = vmul.f32 %v5534, %v5534
    %v5548 = vmul.f32 %v5537, %v5537
    %v5549 = vmul.f32 %v5542, %v5542
    %v5550 = vmul.f32 %v5534, %v5547
    %v5551 = vmul.f32 %v5537, %v5548
    %v5552 = vmul.f32 %v5542, %v5549
    %v5553 = vmul.f32 %v5550, 0.044715
    %v5554 = vmul.f32 %v5551, 0.044715
    %v5555 = vmul.f32 %v5552, 0.044715
    %v5556 = vadd.f32 %v5534, %v5553
    %v5557 = vadd.f32 %v5537, %v5554
    %v5558 = vadd.f32 %v5542, %v5555
    %v5559 = vmul.f32 %v5556, 0.7978846
    %v5560 = vmul.f32 %v5557, 0.7978846
    %v5561 = vmul.f32 %v5558, 0.7978846
    %v5562 = vtanh.pop %v5559
    %v5563 = vtanh.pop %v5560
    %v5564 = vtanh.pop %v5561
    %v5565 = vadd.f32 %v5562, 1.0
    %v5566 = vadd.f32 %v5563, 1.0
    %v5567 = vadd.f32 %v5564, 1.0
    %v5568 = vmul.f32 %v5565, 0.5
    %v5569 = vmul.f32 %v5566, 0.5
    %v5570 = vmul.f32 %v5567, 0.5
    %v5571 = vmul.f32 %v5534, %v5568
    %v5572 = vmul.f32 %v5537, %v5569
    %v5573 = vmul.f32 %v5542, %v5570
    %v5574 = vpack.c.bf16 %v5572, %v5571
    %v5575 = vpack.c.bf16 %v5573, %v5573
    %v5576 = vlaneseq
    %v5577 = vshrl.u32 %v5576, 7
    %v5578 = vsub.s32 0, %v5577
    %v5579 = vrot.slane %v4839, %v5578
    %v5584 = vunpack.c.l.b16 %v4835
    %v5585 = vunpack.c.l.b16 %v4836
    %v5586 = vunpack.c.l.b16 %v4837
    %v5587 = vunpack.c.l.b16 %v4838
    %v5588 = vpack.c.b16 %v5585, %v5584
    %v5589 = vpack.c.b16 %v5587, %v5586
    %v5593 = vsel %vm506, %v5574, 0
    %v5596 = vsel %vm506, %v5575, 0
    %5598 = vmatprep.subr.bf16.mxu0 0
    %5599 = vmatpush1.bf16.msra.mxu0 %v5588
    %5600 = vmatprep.subr.bf16.mxu0 0
    %5601 = vmatpush1.bf16.msra.mxu0 %v5589
    %5602 = vmatprep.subr.bf16.mxu0 0
    %5603 = vmatpush1.bf16.msra.mxu0 0
    %5604 = vmatprep.subr.bf16.mxu0 0
    %5605 = vmatpush1.bf16.msra.mxu0 0
    %5606 = vmatprep.subr.bf16.mxu0 0
    %5607 = vmatpush1.bf16.msra.mxu0 0
    %5608 = vmatprep.subr.bf16.mxu0 0
    %5609 = vmatpush1.bf16.msra.mxu0 0
    %5610 = vmatprep.subr.bf16.mxu0 0
    %5611 = vmatpush1.bf16.msra.mxu0 0
    %5612 = vmatprep.subr.bf16.mxu0 0
    %5613 = vmatpush1.bf16.msra.mxu0 0
    %5614 = vmatprep.subr.bf16.mxu0 0
    %5615 = vmatpush1.bf16.msra.mxu0 0
    %5616 = vmatprep.subr.bf16.mxu0 0
    %5617 = vmatpush1.bf16.msra.mxu0 0
    %5618 = vmatprep.subr.bf16.mxu0 0
    %5619 = vmatpush1.bf16.msra.mxu0 0
    %5620 = vmatprep.subr.bf16.mxu0 0
    %5621 = vmatpush1.bf16.msra.mxu0 0
    %5622 = vmatprep.subr.bf16.mxu0 0
    %5623 = vmatpush1.bf16.msra.mxu0 0
    %5624 = vmatprep.subr.bf16.mxu0 0
    %5625 = vmatpush1.bf16.msra.mxu0 0
    %5626 = vmatprep.subr.bf16.mxu0 0
    %5627 = vmatpush1.bf16.msra.mxu0 0
    %5628 = vmatprep.subr.bf16.mxu0 0
    %5629 = vmatpush1.bf16.msra.mxu0 0
    %5630 = vmatprep.mubr.bf16.mxu0 0
    %5631 = vmatmul.mubr.bf16.gmra.mrb[0].mxu0 %v5593
    %v5632 = vpop.f32.mrb[0].mxu0
    %v5633 = vadd.f32 %v5579, %v5632
    %v5634 = vpop.f32.mrb[0].mxu0
    %v5635 = vpop.f32.mrb[0].mxu0
    %v5636 = vadd.f32 %v5579, %v5635
    %v5637 = vpop.f32.mrb[0].mxu0
    %5638 = vmatprep.mubr.bf16.mxu0 0
    %5639 = vmatmul.mubr.bf16.gmra.mrb[0].mxu0 %v5596
    %v5640 = vpop.f32.mrb[0].mxu0
    %v5641 = vadd.f32 %v5579, %v5640
    %v5642 = vpop.f32.mrb[0].mxu0
    %v5643 = vpop.f32.mrb[0].mxu0
    %v5644 = vpop.f32.mrb[0].mxu0
    %5645 = vdwg.mxu0
    %v5646 = vadd.f32 %v5409, %v5633
    %v5647 = vadd.f32 %v5412, %v5636
    %v5648 = vadd.f32 %v5417, %v5641
    %s5649 = scalar_lea.vmem %s57, 32
    %v5650 = vld [vmem:[%s5649] sm:$0xf]
    %v5651 = vld [vmem:[%s5649 + $0x4] sm:$0xf]
    %v5652 = vld [vmem:[%s5649 + $0x8] sm:$0xf]
    %v5653 = vld [vmem:[%s5649 + $0xc] sm:$0xf]
    %v5654 = vpack.c.bf16 %v5647, %v5646
    %v5655 = vpack.c.bf16 %v5648, %v5648
    %v5656 = vld [vmem:[%s61 + $0x7] sm:$0x1]
    %v5657 = vlaneseq
    %v5658 = vshrl.u32 %v5657, 7
    %v5659 = vsub.s32 0, %v5658
    %v5660 = vrot.slane %v5656, %v5659
    %v5665 = vunpack.c.l.b16 %v5650
    %v5666 = vunpack.c.l.b16 %v5651
    %v5667 = vunpack.c.l.b16 %v5652
    %v5668 = vunpack.c.l.b16 %v5653
    %v5669 = vpack.c.b16 %v5666, %v5665
    %v5670 = vpack.c.b16 %v5668, %v5667
    %v5674 = vsel %vm506, %v5654, 0
    %v5677 = vsel %vm506, %v5655, 0
    %5679 = vmatprep.subr.bf16.mxu0 0
    %5680 = vmatpush1.bf16.msra.mxu0 %v5669
    %5681 = vmatprep.subr.bf16.mxu0 0
    %5682 = vmatpush1.bf16.msra.mxu0 %v5670
    %5683 = vmatprep.subr.bf16.mxu0 0
    %5684 = vmatpush1.bf16.msra.mxu0 0
    %5685 = vmatprep.subr.bf16.mxu0 0
    %5686 = vmatpush1.bf16.msra.mxu0 0
    %5687 = vmatprep.subr.bf16.mxu0 0
    %5688 = vmatpush1.bf16.msra.mxu0 0
    %5689 = vmatprep.subr.bf16.mxu0 0
    %5690 = vmatpush1.bf16.msra.mxu0 0
    %5691 = vmatprep.subr.bf16.mxu0 0
    %5692 = vmatpush1.bf16.msra.mxu0 0
    %5693 = vmatprep.subr.bf16.mxu0 0
    %5694 = vmatpush1.bf16.msra.mxu0 0
    %5695 = vmatprep.subr.bf16.mxu0 0
    %5696 = vmatpush1.bf16.msra.mxu0 0
    %5697 = vmatprep.subr.bf16.mxu0 0
    %5698 = vmatpush1.bf16.msra.mxu0 0
    %5699 = vmatprep.subr.bf16.mxu0 0
    %5700 = vmatpush1.bf16.msra.mxu0 0
    %5701 = vmatprep.subr.bf16.mxu0 0
    %5702 = vmatpush1.bf16.msra.mxu0 0
    %5703 = vmatprep.subr.bf16.mxu0 0
    %5704 = vmatpush1.bf16.msra.mxu0 0
    %5705 = vmatprep.subr.bf16.mxu0 0
    %5706 = vmatpush1.bf16.msra.mxu0 0
    %5707 = vmatprep.subr.bf16.mxu0 0
    %5708 = vmatpush1.bf16.msra.mxu0 0
    %5709 = vmatprep.subr.bf16.mxu0 0
    %5710 = vmatpush1.bf16.msra.mxu0 0
    %5711 = vmatprep.mubr.bf16.mxu0 0
    %5712 = vmatmul.mubr.bf16.gmra.mrb[0].mxu0 %v5674
    %v5713 = vpop.f32.mrb[0].mxu0
    %v5714 = vadd.f32 %v5660, %v5713
    %v5715 = vpop.f32.mrb[0].mxu0
    %v5716 = vpop.f32.mrb[0].mxu0
    %v5717 = vadd.f32 %v5660, %v5716
    %v5718 = vpop.f32.mrb[0].mxu0
    %5719 = vmatprep.mubr.bf16.mxu0 0
    %5720 = vmatmul.mubr.bf16.gmra.mrb[0].mxu0 %v5677
    %v5721 = vpop.f32.mrb[0].mxu0
    %v5722 = vadd.f32 %v5660, %v5721
    %v5723 = vpop.f32.mrb[0].mxu0
    %v5724 = vpop.f32.mrb[0].mxu0
    %v5725 = vpop.f32.mrb[0].mxu0
    %5726 = vdwg.mxu0
    %v5727 = vld [vmem:[#allocation6] sm:$0xff]
    %v5728 = vld [vmem:[#allocation6 + $0x8] sm:$0xff]
    %v5729 = vld [vmem:[#allocation6 + $0x10] sm:$0x3f]
    %v5731 = vsel %vm3588, %v5727, 0
    %v5734 = vsel %vm3588, %v5728, 0
    %v5737 = vsel %vm3588, %v5729, 0
    %5739 = vmatprep.subr.mxu0 0.0
    %5740 = vmatpush1.msra.mxu0 %v5714
    %5741 = vmatprep.subr.mxu0 0.0
    %5742 = vmatpush1.msra.mxu0 %v5717
    %5743 = vmatprep.subr.mxu0 0.0
    %5744 = vmatpush1.msra.mxu0 %v5722
    %5745 = vmatprep.subr.mxu0 0.0
    %5746 = vmatpush1.msra.mxu0 0.0
    %5747 = vmatprep.subr.mxu0 0.0
    %5748 = vmatpush1.msra.mxu0 0.0
    %5749 = vmatprep.subr.mxu0 0.0
    %5750 = vmatpush1.msra.mxu0 0.0
    %5751 = vmatprep.subr.mxu0 0.0
    %5752 = vmatpush1.msra.mxu0 0.0
    %5753 = vmatprep.subr.mxu0 0.0
    %5754 = vmatpush1.msra.mxu0 0.0
    %5755 = vmatprep.subr.mxu0 0.0
    %5756 = vmatpush1.msra.mxu0 0.0
    %5757 = vmatprep.subr.mxu0 0.0
    %5758 = vmatpush1.msra.mxu0 0.0
    %5759 = vmatprep.subr.mxu0 0.0
    %5760 = vmatpush1.msra.mxu0 0.0
    %5761 = vmatprep.subr.mxu0 0.0
    %5762 = vmatpush1.msra.mxu0 0.0
    %5763 = vmatprep.subr.mxu0 0.0
    %5764 = vmatpush1.msra.mxu0 0.0
    %5765 = vmatprep.subr.mxu0 0.0
    %5766 = vmatpush1.msra.mxu0 0.0
    %5767 = vmatprep.subr.mxu0 0.0
    %5768 = vmatpush1.msra.mxu0 0.0
    %5769 = vmatprep.subr.mxu0 0.0
    %5770 = vmatpush1.msra.mxu0 0.0
    %5771 = vmatprep.subr.mxu0 0.0
    %5772 = vmatpush1.msra.mxu0 0.0
    %5773 = vmatprep.subr.mxu0 0.0
    %5774 = vmatpush1.msra.mxu0 0.0
    %5775 = vmatprep.subr.mxu0 0.0
    %5776 = vmatpush1.msra.mxu0 0.0
    %5777 = vmatprep.subr.mxu0 0.0
    %5778 = vmatpush1.msra.mxu0 0.0
    %5779 = vmatprep.subr.mxu0 0.0
    %5780 = vmatpush1.msra.mxu0 0.0
    %5781 = vmatprep.subr.mxu0 0.0
    %5782 = vmatpush1.msra.mxu0 0.0
    %5783 = vmatprep.subr.mxu0 0.0
    %5784 = vmatpush1.msra.mxu0 0.0
    %5785 = vmatprep.subr.mxu0 0.0
    %5786 = vmatpush1.msra.mxu0 0.0
    %5787 = vmatprep.subr.mxu0 0.0
    %5788 = vmatpush1.msra.mxu0 0.0
    %5789 = vmatprep.subr.mxu0 0.0
    %5790 = vmatpush1.msra.mxu0 0.0
    %5791 = vmatprep.subr.mxu0 0.0
    %5792 = vmatpush1.msra.mxu0 0.0
    %5793 = vmatprep.subr.mxu0 0.0
    %5794 = vmatpush1.msra.mxu0 0.0
    %5795 = vmatprep.subr.mxu0 0.0
    %5796 = vmatpush1.msra.mxu0 0.0
    %5797 = vmatprep.subr.mxu0 0.0
    %5798 = vmatpush1.msra.mxu0 0.0
    %5799 = vmatprep.subr.mxu0 0.0
    %5800 = vmatpush1.msra.mxu0 0.0
    %5801 = vmatprep.subr.mxu0 0.0
    %5802 = vmatpush1.msra.mxu0 0.0
    %5803 = vmatprep.mubr.f32.mxu0 0.0
    %5804 = vmatmul.mubr.f32.gmra.mrb[0].mxu0 %v5731
    %v5805 = vpop.f32.mrb[0].mxu0
    %v5806 = vadd.f32 %v3032, %v5805
    %v5807 = vpop.f32.mrb[0].mxu0
    %5808 = vmatprep.mubr.f32.mxu0 0.0
    %5809 = vmatmul.mubr.f32.gmra.mrb[0].mxu0 %v5734
    %v5810 = vpop.f32.mrb[0].mxu0
    %v5811 = vadd.f32 %v3033, %v5810
    %v5812 = vpop.f32.mrb[0].mxu0
    %5813 = vmatprep.mubr.f32.mxu0 0.0
    %5814 = vmatmul.mubr.f32.gmra.mrb[0].mxu0 %v5737
    %v5815 = vpop.f32.mrb[0].mxu0
    %v5816 = vadd.f32 %v3034, %v5815
    %v5817 = vpop.f32.mrb[0].mxu0
    %5818 = vdwg.mxu0
    %v5820 = vsel %vm757, %v5816, 0
    %5822 = vmatprep.subr.mxu0 0.0
    %5823 = vmatpush1.msra.mxu0 %v5806
    %5824 = vmatprep.subr.mxu0 0.0
    %5825 = vmatpush1.msra.mxu0 %v5811
    %5826 = vmatprep.subr.mxu0 0.0
    %5827 = vmatpush1.msra.mxu0 %v5820
    %5828 = vmatprep.subr.mxu0 0.0
    %5829 = vmatpush1.msra.mxu0 0.0
    %5830 = vmatprep.subr.mxu0 0.0
    %5831 = vmatpush1.msra.mxu0 0.0
    %5832 = vmatprep.subr.mxu0 0.0
    %5833 = vmatpush1.msra.mxu0 0.0
    %5834 = vmatprep.subr.mxu0 0.0
    %5835 = vmatpush1.msra.mxu0 0.0
    %5836 = vmatprep.subr.mxu0 0.0
    %5837 = vmatpush1.msra.mxu0 0.0
    %5838 = vmatprep.subr.mxu0 0.0
    %5839 = vmatpush1.msra.mxu0 0.0
    %5840 = vmatprep.subr.mxu0 0.0
    %5841 = vmatpush1.msra.mxu0 0.0
    %5842 = vmatprep.subr.mxu0 0.0
    %5843 = vmatpush1.msra.mxu0 0.0
    %5844 = vmatprep.subr.mxu0 0.0
    %5845 = vmatpush1.msra.mxu0 0.0
    %5846 = vmatprep.subr.mxu0 0.0
    %5847 = vmatpush1.msra.mxu0 0.0
    %5848 = vmatprep.subr.mxu0 0.0
    %5849 = vmatpush1.msra.mxu0 0.0
    %5850 = vmatprep.subr.mxu0 0.0
    %5851 = vmatpush1.msra.mxu0 0.0
    %5852 = vmatprep.subr.mxu0 0.0
    %5853 = vmatpush1.msra.mxu0 0.0
    %5854 = vmatprep.subr.mxu0 0.0
    %5855 = vmatpush1.msra.mxu0 0.0
    %5856 = vmatprep.subr.mxu0 0.0
    %5857 = vmatpush1.msra.mxu0 0.0
    %5858 = vmatprep.subr.mxu0 0.0
    %5859 = vmatpush1.msra.mxu0 0.0
    %5860 = vmatprep.subr.mxu0 0.0
    %5861 = vmatpush1.msra.mxu0 0.0
    %5862 = vmatprep.subr.mxu0 0.0
    %5863 = vmatpush1.msra.mxu0 0.0
    %5864 = vmatprep.subr.mxu0 0.0
    %5865 = vmatpush1.msra.mxu0 0.0
    %5866 = vmatprep.subr.mxu0 0.0
    %5867 = vmatpush1.msra.mxu0 0.0
    %5868 = vmatprep.subr.mxu0 0.0
    %5869 = vmatpush1.msra.mxu0 0.0
    %5870 = vmatprep.subr.mxu0 0.0
    %5871 = vmatpush1.msra.mxu0 0.0
    %5872 = vmatprep.subr.mxu0 0.0
    %5873 = vmatpush1.msra.mxu0 0.0
    %5874 = vmatprep.subr.mxu0 0.0
    %5875 = vmatpush1.msra.mxu0 0.0
    %5876 = vmatprep.subr.mxu0 0.0
    %5877 = vmatpush1.msra.mxu0 0.0
    %5878 = vmatprep.subr.mxu0 0.0
    %5879 = vmatpush1.msra.mxu0 0.0
    %5880 = vmatprep.subr.mxu0 0.0
    %5881 = vmatpush1.msra.mxu0 0.0
    %5882 = vmatprep.subr.mxu0 0.0
    %5883 = vmatpush1.msra.mxu0 0.0
    %5884 = vmatprep.subr.mxu0 0.0
    %5885 = vmatpush1.msra.mxu0 0.0
    %5886 = vmatprep.mubr.f32.mxu0 0.0
    %5887 = vmatmul.mubr.f32.gmra.mrb[0].mxu0 %v722
    %v5888 = vpop.f32.mrb[0].mxu0
    %v5889 = vadd.f32 0.0, %v5888
    %v5890 = vpop.f32.mrb[0].mxu0
    %5891 = vmatprep.mubr.f32.mxu0 0.0
    %5892 = vmatmul.mubr.f32.gmra.mrb[0].mxu0 %v725
    %v5893 = vpop.f32.mrb[0].mxu0
    %v5894 = vadd.f32 0.0, %v5893
    %v5895 = vpop.f32.mrb[0].mxu0
    %5896 = vmatprep.mubr.f32.mxu0 0.0
    %5897 = vmatmul.mubr.f32.gmra.mrb[0].mxu0 %v728
    %v5898 = vpop.f32.mrb[0].mxu0
    %v5899 = vadd.f32 0.0, %v5898
    %v5900 = vpop.f32.mrb[0].mxu0
    %5901 = vmatprep.mubr.f32.mxu0 0.0
    %5902 = vmatmul.mubr.f32.gmra.mrb[0].mxu0 %v731
    %v5903 = vpop.f32.mrb[0].mxu0
    %v5904 = vadd.f32 0.0, %v5903
    %v5905 = vpop.f32.mrb[0].mxu0
    %5906 = vmatprep.mubr.f32.mxu0 0.0
    %5907 = vmatmul.mubr.f32.gmra.mrb[0].mxu0 %v734
    %v5908 = vpop.f32.mrb[0].mxu0
    %v5909 = vadd.f32 0.0, %v5908
    %v5910 = vpop.f32.mrb[0].mxu0
    %5911 = vmatprep.mubr.f32.mxu0 0.0
    %5912 = vmatmul.mubr.f32.gmra.mrb[0].mxu0 %v737
    %v5913 = vpop.f32.mrb[0].mxu0
    %v5914 = vadd.f32 0.0, %v5913
    %v5915 = vpop.f32.mrb[0].mxu0
    %5916 = vmatprep.mubr.f32.mxu0 0.0
    %5917 = vmatmul.mubr.f32.gmra.mrb[0].mxu0 %v740
    %v5918 = vpop.f32.mrb[0].mxu0
    %v5919 = vadd.f32 0.0, %v5918
    %v5920 = vpop.f32.mrb[0].mxu0
    %5921 = vmatprep.mubr.f32.mxu0 0.0
    %5922 = vmatmul.mubr.f32.gmra.mrb[0].mxu0 %v743
    %v5923 = vpop.f32.mrb[0].mxu0
    %v5924 = vadd.f32 0.0, %v5923
    %v5925 = vpop.f32.mrb[0].mxu0
    %5926 = vmatprep.mubr.f32.mxu0 0.0
    %5927 = vmatmul.mubr.f32.gmra.mrb[0].mxu0 %v746
    %v5928 = vpop.f32.mrb[0].mxu0
    %v5929 = vadd.f32 0.0, %v5928
    %v5930 = vpop.f32.mrb[0].mxu0
    %5931 = vmatprep.mubr.f32.mxu0 0.0
    %5932 = vmatmul.mubr.f32.gmra.mrb[0].mxu0 %v749
    %v5933 = vpop.f32.mrb[0].mxu0
    %v5934 = vadd.f32 0.0, %v5933
    %v5935 = vpop.f32.mrb[0].mxu0
    %5936 = vmatprep.mubr.f32.mxu0 0.0
    %5937 = vmatmul.mubr.f32.gmra.mrb[0].mxu0 %v752
    %v5938 = vpop.f32.mrb[0].mxu0
    %v5939 = vadd.f32 0.0, %v5938
    %v5940 = vpop.f32.mrb[0].mxu0
    %5941 = vmatprep.mubr.f32.mxu0 0.0
    %5942 = vmatmul.mubr.f32.gmra.mrb[0].mxu0 %v755
    %v5943 = vpop.f32.mrb[0].mxu0
    %v5944 = vadd.f32 0.0, %v5943
    %v5945 = vpop.f32.mrb[0].mxu0
    %5946 = vdwg.mxu0
    %v5947 = vld [vmem:[#allocation16] sm:$0xf]
    %v5948 = vld [vmem:[#allocation16 + $0x4] sm:$0xf]
    %v5949 = vld [vmem:[#allocation16 + $0x8] sm:$0xf]
    %v5950 = vld [vmem:[#allocation16 + $0xc] sm:$0xf]
    %v5951 = vpack.c.bf16 %v5894, %v5889
    %v5952 = vpack.c.bf16 %v5904, %v5899
    %v5953 = vpack.c.bf16 %v5914, %v5909
    %s5954 = scalar_lea.vmem [#allocation16], 16
    %v5955 = vld [vmem:[%s5954] sm:$0xf]
    %v5956 = vld [vmem:[%s5954 + $0x4] sm:$0xf]
    %v5957 = vld [vmem:[%s5954 + $0x8] sm:$0xf]
    %v5958 = vld [vmem:[%s5954 + $0xc] sm:$0xf]
    %v5959 = vpack.c.bf16 %v5924, %v5919
    %v5960 = vpack.c.bf16 %v5934, %v5929
    %v5961 = vpack.c.bf16 %v5944, %v5939
    %v5966 = vunpack.c.l.b16 %v5955
    %v5967 = vunpack.c.l.b16 %v5956
    %v5968 = vunpack.c.l.b16 %v5957
    %v5969 = vunpack.c.l.b16 %v5958
    %v5970 = vpack.c.b16 %v5967, %v5966
    %v5971 = vpack.c.b16 %v5969, %v5968
    %v5975 = vsel %vm506, %v5959, 0
    %v5978 = vsel %vm506, %v5960, 0
    %v5981 = vsel %vm506, %v5961, 0
    %5983 = vmatprep.subr.bf16.mxu0 0
    %5984 = vmatpush1.bf16.msra.mxu0 %v5970
    %5985 = vmatprep.subr.bf16.mxu0 0
    %5986 = vmatpush1.bf16.msra.mxu0 %v5971
    %5987 = vmatprep.subr.bf16.mxu0 0
    %5988 = vmatpush1.bf16.msra.mxu0 0
    %5989 = vmatprep.subr.bf16.mxu0 0
    %5990 = vmatpush1.bf16.msra.mxu0 0
    %5991 = vmatprep.subr.bf16.mxu0 0
    %5992 = vmatpush1.bf16.msra.mxu0 0
    %5993 = vmatprep.subr.bf16.mxu0 0
    %5994 = vmatpush1.bf16.msra.mxu0 0
    %5995 = vmatprep.subr.bf16.mxu0 0
    %5996 = vmatpush1.bf16.msra.mxu0 0
    %5997 = vmatprep.subr.bf16.mxu0 0
    %5998 = vmatpush1.bf16.msra.mxu0 0
    %5999 = vmatprep.subr.bf16.mxu0 0
    %6000 = vmatpush1.bf16.msra.mxu0 0
    %6001 = vmatprep.subr.bf16.mxu0 0
    %6002 = vmatpush1.bf16.msra.mxu0 0
    %6003 = vmatprep.subr.bf16.mxu0 0
    %6004 = vmatpush1.bf16.msra.mxu0 0
    %6005 = vmatprep.subr.bf16.mxu0 0
    %6006 = vmatpush1.bf16.msra.mxu0 0
    %6007 = vmatprep.subr.bf16.mxu0 0
    %6008 = vmatpush1.bf16.msra.mxu0 0
    %6009 = vmatprep.subr.bf16.mxu0 0
    %6010 = vmatpush1.bf16.msra.mxu0 0
    %6011 = vmatprep.subr.bf16.mxu0 0
    %6012 = vmatpush1.bf16.msra.mxu0 0
    %6013 = vmatprep.subr.bf16.mxu0 0
    %6014 = vmatpush1.bf16.msra.mxu0 0
    %6015 = vmatprep.mubr.bf16.mxu0 0
    %6016 = vmatmul.mubr.bf16.gmra.mrb[0].mxu0 %v5975
    %v6017 = vpop.f32.mrb[0].mxu0
    %v6018 = vadd.f32 0.0, %v6017
    %v6019 = vpop.f32.mrb[0].mxu0
    %v6020 = vpop.f32.mrb[0].mxu0
    %v6021 = vadd.f32 0.0, %v6020
    %v6022 = vpop.f32.mrb[0].mxu0
    %6023 = vmatprep.mubr.bf16.mxu0 0
    %6024 = vmatmul.mubr.bf16.gmra.mrb[0].mxu0 %v5978
    %v6025 = vpop.f32.mrb[0].mxu0
    %v6026 = vadd.f32 0.0, %v6025
    %v6027 = vpop.f32.mrb[0].mxu0
    %v6028 = vpop.f32.mrb[0].mxu0
    %v6029 = vadd.f32 0.0, %v6028
    %v6030 = vpop.f32.mrb[0].mxu0
    %6031 = vmatprep.mubr.bf16.mxu0 0
    %6032 = vmatmul.mubr.bf16.gmra.mrb[0].mxu0 %v5981
    %v6033 = vpop.f32.mrb[0].mxu0
    %v6034 = vadd.f32 0.0, %v6033
    %v6035 = vpop.f32.mrb[0].mxu0
    %v6036 = vpop.f32.mrb[0].mxu0
    %v6037 = vadd.f32 0.0, %v6036
    %v6038 = vpop.f32.mrb[0].mxu0
    %6039 = vdwg.mxu0
    %v6044 = vunpack.c.l.b16 %v5947
    %v6045 = vunpack.c.l.b16 %v5948
    %v6046 = vunpack.c.l.b16 %v5949
    %v6047 = vunpack.c.l.b16 %v5950
    %v6048 = vpack.c.b16 %v6045, %v6044
    %v6049 = vpack.c.b16 %v6047, %v6046
    %v6053 = vsel %vm506, %v5951, 0
    %v6056 = vsel %vm506, %v5952, 0
    %v6059 = vsel %vm506, %v5953, 0
    %6061 = vmatprep.subr.bf16.mxu0 0
    %6062 = vmatpush1.bf16.msra.mxu0 %v6048
    %6063 = vmatprep.subr.bf16.mxu0 0
    %6064 = vmatpush1.bf16.msra.mxu0 %v6049
    %6065 = vmatprep.subr.bf16.mxu0 0
    %6066 = vmatpush1.bf16.msra.mxu0 0
    %6067 = vmatprep.subr.bf16.mxu0 0
    %6068 = vmatpush1.bf16.msra.mxu0 0
    %6069 = vmatprep.subr.bf16.mxu0 0
    %6070 = vmatpush1.bf16.msra.mxu0 0
    %6071 = vmatprep.subr.bf16.mxu0 0
    %6072 = vmatpush1.bf16.msra.mxu0 0
    %6073 = vmatprep.subr.bf16.mxu0 0
    %6074 = vmatpush1.bf16.msra.mxu0 0
    %6075 = vmatprep.subr.bf16.mxu0 0
    %6076 = vmatpush1.bf16.msra.mxu0 0
    %6077 = vmatprep.subr.bf16.mxu0 0
    %6078 = vmatpush1.bf16.msra.mxu0 0
    %6079 = vmatprep.subr.bf16.mxu0 0
    %6080 = vmatpush1.bf16.msra.mxu0 0
    %6081 = vmatprep.subr.bf16.mxu0 0
    %6082 = vmatpush1.bf16.msra.mxu0 0
    %6083 = vmatprep.subr.bf16.mxu0 0
    %6084 = vmatpush1.bf16.msra.mxu0 0
    %6085 = vmatprep.subr.bf16.mxu0 0
    %6086 = vmatpush1.bf16.msra.mxu0 0
    %6087 = vmatprep.subr.bf16.mxu0 0
    %6088 = vmatpush1.bf16.msra.mxu0 0
    %6089 = vmatprep.subr.bf16.mxu0 0
    %6090 = vmatpush1.bf16.msra.mxu0 0
    %6091 = vmatprep.subr.bf16.mxu0 0
    %6092 = vmatpush1.bf16.msra.mxu0 0
    %6093 = vmatprep.mubr.bf16.mxu0 0
    %6094 = vmatmul.mubr.bf16.gmra.mrb[0].mxu0 %v6053
    %v6095 = vpop.f32.mrb[0].mxu0
    %v6096 = vadd.f32 %v6018, %v6095
    %v6097 = vpop.f32.mrb[0].mxu0
    %v6098 = vpop.f32.mrb[0].mxu0
    %v6099 = vadd.f32 %v6021, %v6098
    %v6100 = vpop.f32.mrb[0].mxu0
    %6101 = vmatprep.mubr.bf16.mxu0 0
    %6102 = vmatmul.mubr.bf16.gmra.mrb[0].mxu0 %v6056
    %v6103 = vpop.f32.mrb[0].mxu0
    %v6104 = vadd.f32 %v6026, %v6103
    %v6105 = vpop.f32.mrb[0].mxu0
    %v6106 = vpop.f32.mrb[0].mxu0
    %v6107 = vadd.f32 %v6029, %v6106
    %v6108 = vpop.f32.mrb[0].mxu0
    %6109 = vmatprep.mubr.bf16.mxu0 0
    %6110 = vmatmul.mubr.bf16.gmra.mrb[0].mxu0 %v6059
    %v6111 = vpop.f32.mrb[0].mxu0
    %v6112 = vadd.f32 %v6034, %v6111
    %v6113 = vpop.f32.mrb[0].mxu0
    %v6114 = vpop.f32.mrb[0].mxu0
    %v6115 = vadd.f32 %v6037, %v6114
    %v6116 = vpop.f32.mrb[0].mxu0
    %6117 = vdwg.mxu0
    %v6118 = vld [vmem:[#allocation18] sm:$0x1]
    %v6120 = vsel %vm1071, %v6118, 0
    %6122 = vmatprep.subr.bf16.mxu0 0
    %6123 = vmatpush1.bf16.msra.mxu0 %v6120
    %6124 = vmatprep.subr.bf16.mxu0 0
    %6125 = vmatpush1.bf16.msra.mxu0 0
    %6126 = vmatprep.subr.bf16.mxu0 0
    %6127 = vmatpush1.bf16.msra.mxu0 0
    %6128 = vmatprep.subr.bf16.mxu0 0
    %6129 = vmatpush1.bf16.msra.mxu0 0
    %6130 = vmatprep.subr.bf16.mxu0 0
    %6131 = vmatpush1.bf16.msra.mxu0 0
    %6132 = vmatprep.subr.bf16.mxu0 0
    %6133 = vmatpush1.bf16.msra.mxu0 0
    %6134 = vmatprep.subr.bf16.mxu0 0
    %6135 = vmatpush1.bf16.msra.mxu0 0
    %6136 = vmatprep.subr.bf16.mxu0 0
    %6137 = vmatpush1.bf16.msra.mxu0 0
    %6138 = vmatprep.subr.bf16.mxu0 0
    %6139 = vmatpush1.bf16.msra.mxu0 0
    %6140 = vmatprep.subr.bf16.mxu0 0
    %6141 = vmatpush1.bf16.msra.mxu0 0
    %6142 = vmatprep.subr.bf16.mxu0 0
    %6143 = vmatpush1.bf16.msra.mxu0 0
    %6144 = vmatprep.subr.bf16.mxu0 0
    %6145 = vmatpush1.bf16.msra.mxu0 0
    %6146 = vmatprep.subr.bf16.mxu0 0
    %6147 = vmatpush1.bf16.msra.mxu0 0
    %6148 = vmatprep.subr.bf16.mxu0 0
    %6149 = vmatpush1.bf16.msra.mxu0 0
    %6150 = vmatprep.subr.bf16.mxu0 0
    %6151 = vmatpush1.bf16.msra.mxu0 0
    %6152 = vmatprep.subr.bf16.mxu0 0
    %6153 = vmatpush1.bf16.msra.mxu0 0
    %6154 = vmatprep.mubr.bf16.mxu0 0
    %6155 = vmatmul.mubr.bf16.gmra.mrb[0].mxu0 %v1063
    %v6156 = vpop.f32.mrb[0].mxu0
    %v6157 = vadd.f32 0.0, %v6156
    %v6158 = vpop.f32.mrb[0].mxu0
    %v6159 = vpop.f32.mrb[0].mxu0
    %v6160 = vadd.f32 0.0, %v6159
    %v6161 = vpop.f32.mrb[0].mxu0
    %6162 = vmatprep.mubr.bf16.mxu0 0
    %6163 = vmatmul.mubr.bf16.gmra.mrb[0].mxu0 %v1066
    %v6164 = vpop.f32.mrb[0].mxu0
    %v6165 = vadd.f32 0.0, %v6164
    %v6166 = vpop.f32.mrb[0].mxu0
    %v6167 = vpop.f32.mrb[0].mxu0
    %v6168 = vadd.f32 0.0, %v6167
    %v6169 = vpop.f32.mrb[0].mxu0
    %6170 = vmatprep.mubr.bf16.mxu0 0
    %6171 = vmatmul.mubr.bf16.gmra.mrb[0].mxu0 %v1069
    %v6172 = vpop.f32.mrb[0].mxu0
    %v6173 = vadd.f32 0.0, %v6172
    %v6174 = vpop.f32.mrb[0].mxu0
    %v6175 = vpop.f32.mrb[0].mxu0
    %v6176 = vadd.f32 0.0, %v6175
    %v6177 = vpop.f32.mrb[0].mxu0
    %6178 = vdwg.mxu0
    %v6179 = vadd.f32 %v6096, %v6157
    %v6180 = vadd.f32 %v6099, %v6160
    %v6181 = vadd.f32 %v6104, %v6165
    %v6182 = vadd.f32 %v6107, %v6168
    %v6183 = vadd.f32 %v6112, %v6173
    %v6184 = vadd.f32 %v6115, %v6176
    %v6185 = vld [vmem:[%s37] sm:$0x1]
    %v6186 = vlaneseq
    %v6187 = vshrl.u32 %v6186, 7
    %v6188 = vsub.s32 0, %v6187
    %v6189 = vrot.slane %v6185, %v6188
    %v6190 = vadd.f32 %v6179, %v6189
    %v6191 = vadd.f32 %v6180, %v6189
    %v6192 = vadd.f32 %v6181, %v6189
    %v6193 = vadd.f32 %v6182, %v6189
    %v6194 = vadd.f32 %v6183, %v6189
    %v6195 = vadd.f32 %v6184, %v6189
    %v6196 = vmax.f32 %v6190, 0.0
    %v6197 = vmax.f32 %v6191, 0.0
    %v6198 = vmax.f32 %v6192, 0.0
    %v6199 = vmax.f32 %v6193, 0.0
    %v6200 = vmax.f32 %v6194, 0.0
    %v6201 = vmax.f32 %v6195, 0.0
    %s6202 = scalar_lea.vmem [#allocation16], 32
    %v6203 = vld [vmem:[%s6202] sm:$0xf]
    %v6204 = vld [vmem:[%s6202 + $0x4] sm:$0xf]
    %v6205 = vld [vmem:[%s6202 + $0x8] sm:$0xf]
    %v6206 = vld [vmem:[%s6202 + $0xc] sm:$0xf]
    %v6207 = vpack.c.bf16 %v6197, %v6196
    %v6208 = vpack.c.bf16 %v6199, %v6198
    %v6209 = vpack.c.bf16 %v6201, %v6200
    %v6210 = vld [vmem:[%s37 + $0x1] sm:$0x1]
    %v6211 = vlaneseq
    %v6212 = vshrl.u32 %v6211, 7
    %v6213 = vsub.s32 0, %v6212
    %v6214 = vrot.slane %v6210, %v6213
    %v6219 = vunpack.c.l.b16 %v6203
    %v6220 = vunpack.c.l.b16 %v6204
    %v6221 = vunpack.c.l.b16 %v6205
    %v6222 = vunpack.c.l.b16 %v6206
    %v6223 = vpack.c.b16 %v6220, %v6219
    %v6224 = vpack.c.b16 %v6222, %v6221
    %v6228 = vsel %vm506, %v6207, 0
    %v6231 = vsel %vm506, %v6208, 0
    %v6234 = vsel %vm506, %v6209, 0
    %6236 = vmatprep.subr.bf16.mxu0 0
    %6237 = vmatpush1.bf16.msra.mxu0 %v6223
    %6238 = vmatprep.subr.bf16.mxu0 0
    %6239 = vmatpush1.bf16.msra.mxu0 %v6224
    %6240 = vmatprep.subr.bf16.mxu0 0
    %6241 = vmatpush1.bf16.msra.mxu0 0
    %6242 = vmatprep.subr.bf16.mxu0 0
    %6243 = vmatpush1.bf16.msra.mxu0 0
    %6244 = vmatprep.subr.bf16.mxu0 0
    %6245 = vmatpush1.bf16.msra.mxu0 0
    %6246 = vmatprep.subr.bf16.mxu0 0
    %6247 = vmatpush1.bf16.msra.mxu0 0
    %6248 = vmatprep.subr.bf16.mxu0 0
    %6249 = vmatpush1.bf16.msra.mxu0 0
    %6250 = vmatprep.subr.bf16.mxu0 0
    %6251 = vmatpush1.bf16.msra.mxu0 0
    %6252 = vmatprep.subr.bf16.mxu0 0
    %6253 = vmatpush1.bf16.msra.mxu0 0
    %6254 = vmatprep.subr.bf16.mxu0 0
    %6255 = vmatpush1.bf16.msra.mxu0 0
    %6256 = vmatprep.subr.bf16.mxu0 0
    %6257 = vmatpush1.bf16.msra.mxu0 0
    %6258 = vmatprep.subr.bf16.mxu0 0
    %6259 = vmatpush1.bf16.msra.mxu0 0
    %6260 = vmatprep.subr.bf16.mxu0 0
    %6261 = vmatpush1.bf16.msra.mxu0 0
    %6262 = vmatprep.subr.bf16.mxu0 0
    %6263 = vmatpush1.bf16.msra.mxu0 0
    %6264 = vmatprep.subr.bf16.mxu0 0
    %6265 = vmatpush1.bf16.msra.mxu0 0
    %6266 = vmatprep.subr.bf16.mxu0 0
    %6267 = vmatpush1.bf16.msra.mxu0 0
    %6268 = vmatprep.mubr.bf16.mxu0 0
    %6269 = vmatmul.mubr.bf16.gmra.mrb[0].mxu0 %v6228
    %v6270 = vpop.f32.mrb[0].mxu0
    %v6271 = vadd.f32 %v6214, %v6270
    %v6272 = vpop.f32.mrb[0].mxu0
    %v6273 = vpop.f32.mrb[0].mxu0
    %v6274 = vadd.f32 %v6214, %v6273
    %v6275 = vpop.f32.mrb[0].mxu0
    %6276 = vmatprep.mubr.bf16.mxu0 0
    %6277 = vmatmul.mubr.bf16.gmra.mrb[0].mxu0 %v6231
    %v6278 = vpop.f32.mrb[0].mxu0
    %v6279 = vadd.f32 %v6214, %v6278
    %v6280 = vpop.f32.mrb[0].mxu0
    %v6281 = vpop.f32.mrb[0].mxu0
    %v6282 = vadd.f32 %v6214, %v6281
    %v6283 = vpop.f32.mrb[0].mxu0
    %6284 = vmatprep.mubr.bf16.mxu0 0
    %6285 = vmatmul.mubr.bf16.gmra.mrb[0].mxu0 %v6234
    %v6286 = vpop.f32.mrb[0].mxu0
    %v6287 = vadd.f32 %v6214, %v6286
    %v6288 = vpop.f32.mrb[0].mxu0
    %v6289 = vpop.f32.mrb[0].mxu0
    %v6290 = vadd.f32 %v6214, %v6289
    %v6291 = vpop.f32.mrb[0].mxu0
    %6292 = vdwg.mxu0
    %v6293 = vmax.f32 %v6271, 0.0
    %v6294 = vmax.f32 %v6274, 0.0
    %v6295 = vmax.f32 %v6279, 0.0
    %v6296 = vmax.f32 %v6282, 0.0
    %v6297 = vmax.f32 %v6287, 0.0
    %v6298 = vmax.f32 %v6290, 0.0
    %s6299 = scalar_lea.vmem [#allocation16], 48
    %v6300 = vld [vmem:[%s6299] sm:$0xf]
    %v6301 = vld [vmem:[%s6299 + $0x4] sm:$0xf]
    %v6302 = vld [vmem:[%s6299 + $0x8] sm:$0xf]
    %v6303 = vld [vmem:[%s6299 + $0xc] sm:$0xf]
    %v6304 = vpack.c.bf16 %v6294, %v6293
    %v6305 = vpack.c.bf16 %v6296, %v6295
    %v6306 = vpack.c.bf16 %v6298, %v6297
    %v6307 = vld [vmem:[%s37 + $0x2] sm:$0x1]
    %v6308 = vlaneseq
    %v6309 = vshrl.u32 %v6308, 7
    %v6310 = vsub.s32 0, %v6309
    %v6311 = vrot.slane %v6307, %v6310
    %v6316 = vunpack.c.l.b16 %v6300
    %v6317 = vunpack.c.l.b16 %v6301
    %v6318 = vunpack.c.l.b16 %v6302
    %v6319 = vunpack.c.l.b16 %v6303
    %v6320 = vpack.c.b16 %v6317, %v6316
    %v6321 = vpack.c.b16 %v6319, %v6318
    %v6325 = vsel %vm506, %v6304, 0
    %v6328 = vsel %vm506, %v6305, 0
    %v6331 = vsel %vm506, %v6306, 0
    %6333 = vmatprep.subr.bf16.mxu0 0
    %6334 = vmatpush1.bf16.msra.mxu0 %v6320
    %6335 = vmatprep.subr.bf16.mxu0 0
    %6336 = vmatpush1.bf16.msra.mxu0 %v6321
    %6337 = vmatprep.subr.bf16.mxu0 0
    %6338 = vmatpush1.bf16.msra.mxu0 0
    %6339 = vmatprep.subr.bf16.mxu0 0
    %6340 = vmatpush1.bf16.msra.mxu0 0
    %6341 = vmatprep.subr.bf16.mxu0 0
    %6342 = vmatpush1.bf16.msra.mxu0 0
    %6343 = vmatprep.subr.bf16.mxu0 0
    %6344 = vmatpush1.bf16.msra.mxu0 0
    %6345 = vmatprep.subr.bf16.mxu0 0
    %6346 = vmatpush1.bf16.msra.mxu0 0
    %6347 = vmatprep.subr.bf16.mxu0 0
    %6348 = vmatpush1.bf16.msra.mxu0 0
    %6349 = vmatprep.subr.bf16.mxu0 0
    %6350 = vmatpush1.bf16.msra.mxu0 0
    %6351 = vmatprep.subr.bf16.mxu0 0
    %6352 = vmatpush1.bf16.msra.mxu0 0
    %6353 = vmatprep.subr.bf16.mxu0 0
    %6354 = vmatpush1.bf16.msra.mxu0 0
    %6355 = vmatprep.subr.bf16.mxu0 0
    %6356 = vmatpush1.bf16.msra.mxu0 0
    %6357 = vmatprep.subr.bf16.mxu0 0
    %6358 = vmatpush1.bf16.msra.mxu0 0
    %6359 = vmatprep.subr.bf16.mxu0 0
    %6360 = vmatpush1.bf16.msra.mxu0 0
    %6361 = vmatprep.subr.bf16.mxu0 0
    %6362 = vmatpush1.bf16.msra.mxu0 0
    %6363 = vmatprep.subr.bf16.mxu0 0
    %6364 = vmatpush1.bf16.msra.mxu0 0
    %6365 = vmatprep.mubr.bf16.mxu0 0
    %6366 = vmatmul.mubr.bf16.gmra.mrb[0].mxu0 %v6325
    %v6367 = vpop.f32.mrb[0].mxu0
    %v6368 = vadd.f32 %v6311, %v6367
    %v6369 = vpop.f32.mrb[0].mxu0
    %v6370 = vpop.f32.mrb[0].mxu0
    %v6371 = vadd.f32 %v6311, %v6370
    %v6372 = vpop.f32.mrb[0].mxu0
    %6373 = vmatprep.mubr.bf16.mxu0 0
    %6374 = vmatmul.mubr.bf16.gmra.mrb[0].mxu0 %v6328
    %v6375 = vpop.f32.mrb[0].mxu0
    %v6376 = vadd.f32 %v6311, %v6375
    %v6377 = vpop.f32.mrb[0].mxu0
    %v6378 = vpop.f32.mrb[0].mxu0
    %v6379 = vadd.f32 %v6311, %v6378
    %v6380 = vpop.f32.mrb[0].mxu0
    %6381 = vmatprep.mubr.bf16.mxu0 0
    %6382 = vmatmul.mubr.bf16.gmra.mrb[0].mxu0 %v6331
    %v6383 = vpop.f32.mrb[0].mxu0
    %v6384 = vadd.f32 %v6311, %v6383
    %v6385 = vpop.f32.mrb[0].mxu0
    %v6386 = vpop.f32.mrb[0].mxu0
    %v6387 = vadd.f32 %v6311, %v6386
    %v6388 = vpop.f32.mrb[0].mxu0
    %6389 = vdwg.mxu0
    %v6390 = vld [vmem:[%s37 + $0x3] sm:$0x1]
    %v6391 = vld [vmem:[%s37 + $0x4] sm:$0x1]
    %v6392 = vsel %vm506, %v6368, 0.0
    %6393 = vadd.xlane.f32.xlu0 %v6392
    %v6394 = vpop.xlane.xlu0 %6393
    %v6395 = vsel %vm506, %v6371, 0.0
    %6396 = vadd.xlane.f32.xlu0 %v6395
    %v6397 = vpop.xlane.xlu0 %6396
    %v6398 = vsel %vm506, %v6376, 0.0
    %6399 = vadd.xlane.f32.xlu0 %v6398
    %v6400 = vpop.xlane.xlu0 %6399
    %v6401 = vsel %vm506, %v6379, 0.0
    %6402 = vadd.xlane.f32.xlu0 %v6401
    %v6403 = vpop.xlane.xlu0 %6402
    %v6404 = vsel %vm506, %v6384, 0.0
    %6405 = vadd.xlane.f32.xlu0 %v6404
    %v6406 = vpop.xlane.xlu0 %6405
    %v6407 = vsel %vm506, %v6387, 0.0
    %6408 = vadd.xlane.f32.xlu0 %v6407
    %v6409 = vpop.xlane.xlu0 %6408
    %v6410 = vmul.f32 %v6394, %v654
    %v6411 = vmul.f32 %v6397, %v654
    %v6412 = vmul.f32 %v6400, %v654
    %v6413 = vmul.f32 %v6403, %v654
    %v6414 = vmul.f32 %v6406, %v654
    %v6415 = vmul.f32 %v6409, %v654
    %v6416 = vsub.f32 %v6368, %v6410
    %v6417 = vsub.f32 %v6371, %v6411
    %v6418 = vsub.f32 %v6376, %v6412
    %v6419 = vsub.f32 %v6379, %v6413
    %v6420 = vsub.f32 %v6384, %v6414
    %v6421 = vsub.f32 %v6387, %v6415
    %v6422 = vmul.f32 %v6416, %v6416
    %v6423 = vmul.f32 %v6417, %v6417
    %v6424 = vmul.f32 %v6418, %v6418
    %v6425 = vmul.f32 %v6419, %v6419
    %v6426 = vmul.f32 %v6420, %v6420
    %v6427 = vmul.f32 %v6421, %v6421
    %v6428 = vsel %vm506, %v6422, 0.0
    %6429 = vadd.xlane.f32.xlu0 %v6428
    %v6430 = vpop.xlane.xlu0 %6429
    %v6431 = vsel %vm506, %v6423, 0.0
    %6432 = vadd.xlane.f32.xlu0 %v6431
    %v6433 = vpop.xlane.xlu0 %6432
    %v6434 = vsel %vm506, %v6424, 0.0
    %6435 = vadd.xlane.f32.xlu0 %v6434
    %v6436 = vpop.xlane.xlu0 %6435
    %v6437 = vsel %vm506, %v6425, 0.0
    %6438 = vadd.xlane.f32.xlu0 %v6437
    %v6439 = vpop.xlane.xlu0 %6438
    %v6440 = vsel %vm506, %v6426, 0.0
    %6441 = vadd.xlane.f32.xlu0 %v6440
    %v6442 = vpop.xlane.xlu0 %6441
    %v6443 = vsel %vm506, %v6427, 0.0
    %6444 = vadd.xlane.f32.xlu0 %v6443
    %v6445 = vpop.xlane.xlu0 %6444
    %v6446 = vmul.f32 %v6430, %v654
    %v6447 = vmul.f32 %v6433, %v654
    %v6448 = vmul.f32 %v6436, %v654
    %v6449 = vmul.f32 %v6439, %v654
    %v6450 = vmul.f32 %v6442, %v654
    %v6451 = vmul.f32 %v6445, %v654
    %v6452 = vadd.f32 %v6446, 1e-05
    %v6453 = vadd.f32 %v6447, 1e-05
    %v6454 = vadd.f32 %v6448, 1e-05
    %v6455 = vadd.f32 %v6449, 1e-05
    %v6456 = vadd.f32 %v6450, 1e-05
    %v6457 = vadd.f32 %v6451, 1e-05
    %v6458 = vrsqrt.pop %v6452
    %v6459 = vrsqrt.pop %v6453
    %v6460 = vrsqrt.pop %v6454
    %v6461 = vrsqrt.pop %v6455
    %v6462 = vrsqrt.pop %v6456
    %v6463 = vrsqrt.pop %v6457
    %v6464 = vmul.f32 %v6416, %v6458
    %v6465 = vmul.f32 %v6417, %v6459
    %v6466 = vmul.f32 %v6418, %v6460
    %v6467 = vmul.f32 %v6419, %v6461
    %v6468 = vmul.f32 %v6420, %v6462
    %v6469 = vmul.f32 %v6421, %v6463
    %v6470 = vlaneseq
    %v6471 = vshrl.u32 %v6470, 7
    %v6472 = vsub.s32 0, %v6471
    %v6473 = vrot.slane %v6390, %v6472
    %v6474 = vmul.f32 %v6464, %v6473
    %v6475 = vmul.f32 %v6465, %v6473
    %v6476 = vmul.f32 %v6466, %v6473
    %v6477 = vmul.f32 %v6467, %v6473
    %v6478 = vmul.f32 %v6468, %v6473
    %v6479 = vmul.f32 %v6469, %v6473
    %v6480 = vlaneseq
    %v6481 = vshrl.u32 %v6480, 7
    %v6482 = vsub.s32 0, %v6481
    %v6483 = vrot.slane %v6391, %v6482
    %v6484 = vadd.f32 %v6474, %v6483
    %v6485 = vadd.f32 %v6475, %v6483
    %v6486 = vadd.f32 %v6476, %v6483
    %v6487 = vadd.f32 %v6477, %v6483
    %v6488 = vadd.f32 %v6478, %v6483
    %v6489 = vadd.f32 %v6479, %v6483
    %6490 = vmatprep.subr.mxu0 0.0
    %6491 = vmatpush1.msra.mxu0 %v6484
    %6492 = vmatprep.subr.mxu0 0.0
    %6493 = vmatpush1.msra.mxu0 %v6485
    %6494 = vmatprep.subr.mxu0 0.0
    %6495 = vmatpush1.msra.mxu0 %v6486
    %6496 = vmatprep.subr.mxu0 0.0
    %6497 = vmatpush1.msra.mxu0 %v6487
    %6498 = vmatprep.subr.mxu0 0.0
    %6499 = vmatpush1.msra.mxu0 %v6488
    %6500 = vmatprep.subr.mxu0 0.0
    %6501 = vmatpush1.msra.mxu0 %v6489
    %6502 = vmatprep.subr.mxu0 0.0
    %6503 = vmatpush1.msra.mxu0 0.0
    %6504 = vmatprep.subr.mxu0 0.0
    %6505 = vmatpush1.msra.mxu0 0.0
    %6506 = vmatprep.subr.mxu0 0.0
    %6507 = vmatpush1.msra.mxu0 0.0
    %6508 = vmatprep.subr.mxu0 0.0
    %6509 = vmatpush1.msra.mxu0 0.0
    %6510 = vmatprep.subr.mxu0 0.0
    %6511 = vmatpush1.msra.mxu0 0.0
    %6512 = vmatprep.subr.mxu0 0.0
    %6513 = vmatpush1.msra.mxu0 0.0
    %6514 = vmatprep.subr.mxu0 0.0
    %6515 = vmatpush1.msra.mxu0 0.0
    %6516 = vmatprep.subr.mxu0 0.0
    %6517 = vmatpush1.msra.mxu0 0.0
    %6518 = vmatprep.subr.mxu0 0.0
    %6519 = vmatpush1.msra.mxu0 0.0
    %6520 = vmatprep.subr.mxu0 0.0
    %6521 = vmatpush1.msra.mxu0 0.0
    %6522 = vmatprep.subr.mxu0 0.0
    %6523 = vmatpush1.msra.mxu0 0.0
    %6524 = vmatprep.subr.mxu0 0.0
    %6525 = vmatpush1.msra.mxu0 0.0
    %6526 = vmatprep.subr.mxu0 0.0
    %6527 = vmatpush1.msra.mxu0 0.0
    %6528 = vmatprep.subr.mxu0 0.0
    %6529 = vmatpush1.msra.mxu0 0.0
    %6530 = vmatprep.subr.mxu0 0.0
    %6531 = vmatpush1.msra.mxu0 0.0
    %6532 = vmatprep.subr.mxu0 0.0
    %6533 = vmatpush1.msra.mxu0 0.0
    %6534 = vmatprep.subr.mxu0 0.0
    %6535 = vmatpush1.msra.mxu0 0.0
    %6536 = vmatprep.subr.mxu0 0.0
    %6537 = vmatpush1.msra.mxu0 0.0
    %6538 = vmatprep.subr.mxu0 0.0
    %6539 = vmatpush1.msra.mxu0 0.0
    %6540 = vmatprep.subr.mxu0 0.0
    %6541 = vmatpush1.msra.mxu0 0.0
    %6542 = vmatprep.subr.mxu0 0.0
    %6543 = vmatpush1.msra.mxu0 0.0
    %6544 = vmatprep.subr.mxu0 0.0
    %6545 = vmatpush1.msra.mxu0 0.0
    %6546 = vmatprep.subr.mxu0 0.0
    %6547 = vmatpush1.msra.mxu0 0.0
    %6548 = vmatprep.subr.mxu0 0.0
    %6549 = vmatpush1.msra.mxu0 0.0
    %6550 = vmatprep.subr.mxu0 0.0
    %6551 = vmatpush1.msra.mxu0 0.0
    %6552 = vmatprep.subr.mxu0 0.0
    %6553 = vmatpush1.msra.mxu0 0.0
    %6554 = vmatprep.mubr.f32.mxu0 0.0
    %6555 = vmatmul.mubr.f32.gmra.mrb[0].mxu0 %v1445
    %v6556 = vpop.f32.mrb[0].mxu0
    %v6557 = vadd.f32 0.0, %v6556
    %v6558 = vpop.f32.mrb[0].mxu0
    %6559 = vmatprep.mubr.f32.mxu0 0.0
    %6560 = vmatmul.mubr.f32.gmra.mrb[0].mxu0 %v1448
    %v6561 = vpop.f32.mrb[0].mxu0
    %v6562 = vadd.f32 0.0, %v6561
    %v6563 = vpop.f32.mrb[0].mxu0
    %6564 = vmatprep.mubr.f32.mxu0 0.0
    %6565 = vmatmul.mubr.f32.gmra.mrb[0].mxu0 %v1451
    %v6566 = vpop.f32.mrb[0].mxu0
    %v6567 = vadd.f32 0.0, %v6566
    %v6568 = vpop.f32.mrb[0].mxu0
    %6569 = vdwg.mxu0
    %s6570 = scalar_lea.vmem [#allocation16], 64
    %v6571 = vld [vmem:[%s6570] sm:$0xf]
    %v6572 = vld [vmem:[%s6570 + $0x4] sm:$0xf]
    %v6573 = vld [vmem:[%s6570 + $0x8] sm:$0xf]
    %v6574 = vld [vmem:[%s6570 + $0xc] sm:$0xf]
    %v6575 = vpack.c.bf16 %v5811, %v5806
    %v6576 = vpack.c.bf16 %v5816, %v5816
    %s6577 = scalar_lea.vmem [#allocation16], 80
    %v6578 = vld [vmem:[%s6577] sm:$0xf]
    %v6579 = vld [vmem:[%s6577 + $0x4] sm:$0xf]
    %v6580 = vld [vmem:[%s6577 + $0x8] sm:$0xf]
    %v6581 = vld [vmem:[%s6577 + $0xc] sm:$0xf]
    %v6582 = vpack.c.bf16 %v6562, %v6557
    %v6583 = vpack.c.bf16 %v6567, %v6567
    %v6588 = vunpack.c.l.b16 %v6578
    %v6589 = vunpack.c.l.b16 %v6579
    %v6590 = vunpack.c.l.b16 %v6580
    %v6591 = vunpack.c.l.b16 %v6581
    %v6592 = vpack.c.b16 %v6589, %v6588
    %v6593 = vpack.c.b16 %v6591, %v6590
    %v6597 = vsel %vm506, %v6582, 0
    %v6600 = vsel %vm506, %v6583, 0
    %6602 = vmatprep.subr.bf16.mxu0 0
    %6603 = vmatpush1.bf16.msra.mxu0 %v6592
    %6604 = vmatprep.subr.bf16.mxu0 0
    %6605 = vmatpush1.bf16.msra.mxu0 %v6593
    %6606 = vmatprep.subr.bf16.mxu0 0
    %6607 = vmatpush1.bf16.msra.mxu0 0
    %6608 = vmatprep.subr.bf16.mxu0 0
    %6609 = vmatpush1.bf16.msra.mxu0 0
    %6610 = vmatprep.subr.bf16.mxu0 0
    %6611 = vmatpush1.bf16.msra.mxu0 0
    %6612 = vmatprep.subr.bf16.mxu0 0
    %6613 = vmatpush1.bf16.msra.mxu0 0
    %6614 = vmatprep.subr.bf16.mxu0 0
    %6615 = vmatpush1.bf16.msra.mxu0 0
    %6616 = vmatprep.subr.bf16.mxu0 0
    %6617 = vmatpush1.bf16.msra.mxu0 0
    %6618 = vmatprep.subr.bf16.mxu0 0
    %6619 = vmatpush1.bf16.msra.mxu0 0
    %6620 = vmatprep.subr.bf16.mxu0 0
    %6621 = vmatpush1.bf16.msra.mxu0 0
    %6622 = vmatprep.subr.bf16.mxu0 0
    %6623 = vmatpush1.bf16.msra.mxu0 0
    %6624 = vmatprep.subr.bf16.mxu0 0
    %6625 = vmatpush1.bf16.msra.mxu0 0
    %6626 = vmatprep.subr.bf16.mxu0 0
    %6627 = vmatpush1.bf16.msra.mxu0 0
    %6628 = vmatprep.subr.bf16.mxu0 0
    %6629 = vmatpush1.bf16.msra.mxu0 0
    %6630 = vmatprep.subr.bf16.mxu0 0
    %6631 = vmatpush1.bf16.msra.mxu0 0
    %6632 = vmatprep.subr.bf16.mxu0 0
    %6633 = vmatpush1.bf16.msra.mxu0 0
    %6634 = vmatprep.mubr.bf16.mxu0 0
    %6635 = vmatmul.mubr.bf16.gmra.mrb[0].mxu0 %v6597
    %v6636 = vpop.f32.mrb[0].mxu0
    %v6637 = vadd.f32 0.0, %v6636
    %v6638 = vpop.f32.mrb[0].mxu0
    %v6639 = vpop.f32.mrb[0].mxu0
    %v6640 = vadd.f32 0.0, %v6639
    %v6641 = vpop.f32.mrb[0].mxu0
    %6642 = vmatprep.mubr.bf16.mxu0 0
    %6643 = vmatmul.mubr.bf16.gmra.mrb[0].mxu0 %v6600
    %v6644 = vpop.f32.mrb[0].mxu0
    %v6645 = vadd.f32 0.0, %v6644
    %v6646 = vpop.f32.mrb[0].mxu0
    %v6647 = vpop.f32.mrb[0].mxu0
    %v6648 = vpop.f32.mrb[0].mxu0
    %6649 = vdwg.mxu0
    %v6654 = vunpack.c.l.b16 %v6571
    %v6655 = vunpack.c.l.b16 %v6572
    %v6656 = vunpack.c.l.b16 %v6573
    %v6657 = vunpack.c.l.b16 %v6574
    %v6658 = vpack.c.b16 %v6655, %v6654
    %v6659 = vpack.c.b16 %v6657, %v6656
    %v6663 = vsel %vm506, %v6575, 0
    %v6666 = vsel %vm506, %v6576, 0
    %6668 = vmatprep.subr.bf16.mxu0 0
    %6669 = vmatpush1.bf16.msra.mxu0 %v6658
    %6670 = vmatprep.subr.bf16.mxu0 0
    %6671 = vmatpush1.bf16.msra.mxu0 %v6659
    %6672 = vmatprep.subr.bf16.mxu0 0
    %6673 = vmatpush1.bf16.msra.mxu0 0
    %6674 = vmatprep.subr.bf16.mxu0 0
    %6675 = vmatpush1.bf16.msra.mxu0 0
    %6676 = vmatprep.subr.bf16.mxu0 0
    %6677 = vmatpush1.bf16.msra.mxu0 0
    %6678 = vmatprep.subr.bf16.mxu0 0
    %6679 = vmatpush1.bf16.msra.mxu0 0
    %6680 = vmatprep.subr.bf16.mxu0 0
    %6681 = vmatpush1.bf16.msra.mxu0 0
    %6682 = vmatprep.subr.bf16.mxu0 0
    %6683 = vmatpush1.bf16.msra.mxu0 0
    %6684 = vmatprep.subr.bf16.mxu0 0
    %6685 = vmatpush1.bf16.msra.mxu0 0
    %6686 = vmatprep.subr.bf16.mxu0 0
    %6687 = vmatpush1.bf16.msra.mxu0 0
    %6688 = vmatprep.subr.bf16.mxu0 0
    %6689 = vmatpush1.bf16.msra.mxu0 0
    %6690 = vmatprep.subr.bf16.mxu0 0
    %6691 = vmatpush1.bf16.msra.mxu0 0
    %6692 = vmatprep.subr.bf16.mxu0 0
    %6693 = vmatpush1.bf16.msra.mxu0 0
    %6694 = vmatprep.subr.bf16.mxu0 0
    %6695 = vmatpush1.bf16.msra.mxu0 0
    %6696 = vmatprep.subr.bf16.mxu0 0
    %6697 = vmatpush1.bf16.msra.mxu0 0
    %6698 = vmatprep.subr.bf16.mxu0 0
    %6699 = vmatpush1.bf16.msra.mxu0 0
    %6700 = vmatprep.mubr.bf16.mxu0 0
    %6701 = vmatmul.mubr.bf16.gmra.mrb[0].mxu0 %v6663
    %v6702 = vpop.f32.mrb[0].mxu0
    %v6703 = vadd.f32 %v6637, %v6702
    %v6704 = vpop.f32.mrb[0].mxu0
    %v6705 = vpop.f32.mrb[0].mxu0
    %v6706 = vadd.f32 %v6640, %v6705
    %v6707 = vpop.f32.mrb[0].mxu0
    %6708 = vmatprep.mubr.bf16.mxu0 0
    %6709 = vmatmul.mubr.bf16.gmra.mrb[0].mxu0 %v6666
    %v6710 = vpop.f32.mrb[0].mxu0
    %v6711 = vadd.f32 %v6645, %v6710
    %v6712 = vpop.f32.mrb[0].mxu0
    %v6713 = vpop.f32.mrb[0].mxu0
    %v6714 = vpop.f32.mrb[0].mxu0
    %6715 = vdwg.mxu0
    %v6716 = vld [vmem:[%s37 + $0x5] sm:$0x1]
    %v6717 = vlaneseq
    %v6718 = vshrl.u32 %v6717, 7
    %v6719 = vsub.s32 0, %v6718
    %v6720 = vrot.slane %v6716, %v6719
    %v6721 = vadd.f32 %v6703, %v6720
    %v6722 = vadd.f32 %v6706, %v6720
    %v6723 = vadd.f32 %v6711, %v6720
    %v6724 = vmax.f32 %v6721, 0.0
    %v6725 = vmax.f32 %v6722, 0.0
    %v6726 = vmax.f32 %v6723, 0.0
    %s6727 = scalar_lea.vmem [#allocation16], 96
    %v6728 = vld [vmem:[%s6727] sm:$0xf]
    %v6729 = vld [vmem:[%s6727 + $0x4] sm:$0xf]
    %v6730 = vld [vmem:[%s6727 + $0x8] sm:$0xf]
    %v6731 = vld [vmem:[%s6727 + $0xc] sm:$0xf]
    %v6732 = vpack.c.bf16 %v6725, %v6724
    %v6733 = vpack.c.bf16 %v6726, %v6726
    %v6734 = vld [vmem:[%s37 + $0x6] sm:$0x1]
    %v6735 = vlaneseq
    %v6736 = vshrl.u32 %v6735, 7
    %v6737 = vsub.s32 0, %v6736
    %v6738 = vrot.slane %v6734, %v6737
    %v6743 = vunpack.c.l.b16 %v6728
    %v6744 = vunpack.c.l.b16 %v6729
    %v6745 = vunpack.c.l.b16 %v6730
    %v6746 = vunpack.c.l.b16 %v6731
    %v6747 = vpack.c.b16 %v6744, %v6743
    %v6748 = vpack.c.b16 %v6746, %v6745
    %v6752 = vsel %vm506, %v6732, 0
    %v6755 = vsel %vm506, %v6733, 0
    %6757 = vmatprep.subr.bf16.mxu0 0
    %6758 = vmatpush1.bf16.msra.mxu0 %v6747
    %6759 = vmatprep.subr.bf16.mxu0 0
    %6760 = vmatpush1.bf16.msra.mxu0 %v6748
    %6761 = vmatprep.subr.bf16.mxu0 0
    %6762 = vmatpush1.bf16.msra.mxu0 0
    %6763 = vmatprep.subr.bf16.mxu0 0
    %6764 = vmatpush1.bf16.msra.mxu0 0
    %6765 = vmatprep.subr.bf16.mxu0 0
    %6766 = vmatpush1.bf16.msra.mxu0 0
    %6767 = vmatprep.subr.bf16.mxu0 0
    %6768 = vmatpush1.bf16.msra.mxu0 0
    %6769 = vmatprep.subr.bf16.mxu0 0
    %6770 = vmatpush1.bf16.msra.mxu0 0
    %6771 = vmatprep.subr.bf16.mxu0 0
    %6772 = vmatpush1.bf16.msra.mxu0 0
    %6773 = vmatprep.subr.bf16.mxu0 0
    %6774 = vmatpush1.bf16.msra.mxu0 0
    %6775 = vmatprep.subr.bf16.mxu0 0
    %6776 = vmatpush1.bf16.msra.mxu0 0
    %6777 = vmatprep.subr.bf16.mxu0 0
    %6778 = vmatpush1.bf16.msra.mxu0 0
    %6779 = vmatprep.subr.bf16.mxu0 0
    %6780 = vmatpush1.bf16.msra.mxu0 0
    %6781 = vmatprep.subr.bf16.mxu0 0
    %6782 = vmatpush1.bf16.msra.mxu0 0
    %6783 = vmatprep.subr.bf16.mxu0 0
    %6784 = vmatpush1.bf16.msra.mxu0 0
    %6785 = vmatprep.subr.bf16.mxu0 0
    %6786 = vmatpush1.bf16.msra.mxu0 0
    %6787 = vmatprep.subr.bf16.mxu0 0
    %6788 = vmatpush1.bf16.msra.mxu0 0
    %6789 = vmatprep.mubr.bf16.mxu0 0
    %6790 = vmatmul.mubr.bf16.gmra.mrb[0].mxu0 %v6752
    %v6791 = vpop.f32.mrb[0].mxu0
    %v6792 = vadd.f32 %v6738, %v6791
    %v6793 = vpop.f32.mrb[0].mxu0
    %v6794 = vpop.f32.mrb[0].mxu0
    %v6795 = vadd.f32 %v6738, %v6794
    %v6796 = vpop.f32.mrb[0].mxu0
    %6797 = vmatprep.mubr.bf16.mxu0 0
    %6798 = vmatmul.mubr.bf16.gmra.mrb[0].mxu0 %v6755
    %v6799 = vpop.f32.mrb[0].mxu0
    %v6800 = vadd.f32 %v6738, %v6799
    %v6801 = vpop.f32.mrb[0].mxu0
    %v6802 = vpop.f32.mrb[0].mxu0
    %v6803 = vpop.f32.mrb[0].mxu0
    %6804 = vdwg.mxu0
    %v6805 = vmax.f32 %v6792, 0.0
    %v6806 = vmax.f32 %v6795, 0.0
    %v6807 = vmax.f32 %v6800, 0.0
    %s6808 = scalar_lea.vmem [#allocation16], 112
    %v6809 = vld [vmem:[%s6808] sm:$0xf]
    %v6810 = vld [vmem:[%s6808 + $0x4] sm:$0xf]
    %v6811 = vld [vmem:[%s6808 + $0x8] sm:$0xf]
    %v6812 = vld [vmem:[%s6808 + $0xc] sm:$0xf]
    %v6813 = vpack.c.bf16 %v6806, %v6805
    %v6814 = vpack.c.bf16 %v6807, %v6807
    %v6815 = vld [vmem:[%s37 + $0x7] sm:$0x1]
    %v6816 = vlaneseq
    %v6817 = vshrl.u32 %v6816, 7
    %v6818 = vsub.s32 0, %v6817
    %v6819 = vrot.slane %v6815, %v6818
    %v6824 = vunpack.c.l.b16 %v6809
    %v6825 = vunpack.c.l.b16 %v6810
    %v6826 = vunpack.c.l.b16 %v6811
    %v6827 = vunpack.c.l.b16 %v6812
    %v6828 = vpack.c.b16 %v6825, %v6824
    %v6829 = vpack.c.b16 %v6827, %v6826
    %v6833 = vsel %vm506, %v6813, 0
    %v6836 = vsel %vm506, %v6814, 0
    %6838 = vmatprep.subr.bf16.mxu0 0
    %6839 = vmatpush1.bf16.msra.mxu0 %v6828
    %6840 = vmatprep.subr.bf16.mxu0 0
    %6841 = vmatpush1.bf16.msra.mxu0 %v6829
    %6842 = vmatprep.subr.bf16.mxu0 0
    %6843 = vmatpush1.bf16.msra.mxu0 0
    %6844 = vmatprep.subr.bf16.mxu0 0
    %6845 = vmatpush1.bf16.msra.mxu0 0
    %6846 = vmatprep.subr.bf16.mxu0 0
    %6847 = vmatpush1.bf16.msra.mxu0 0
    %6848 = vmatprep.subr.bf16.mxu0 0
    %6849 = vmatpush1.bf16.msra.mxu0 0
    %6850 = vmatprep.subr.bf16.mxu0 0
    %6851 = vmatpush1.bf16.msra.mxu0 0
    %6852 = vmatprep.subr.bf16.mxu0 0
    %6853 = vmatpush1.bf16.msra.mxu0 0
    %6854 = vmatprep.subr.bf16.mxu0 0
    %6855 = vmatpush1.bf16.msra.mxu0 0
    %6856 = vmatprep.subr.bf16.mxu0 0
    %6857 = vmatpush1.bf16.msra.mxu0 0
    %6858 = vmatprep.subr.bf16.mxu0 0
    %6859 = vmatpush1.bf16.msra.mxu0 0
    %6860 = vmatprep.subr.bf16.mxu0 0
    %6861 = vmatpush1.bf16.msra.mxu0 0
    %6862 = vmatprep.subr.bf16.mxu0 0
    %6863 = vmatpush1.bf16.msra.mxu0 0
    %6864 = vmatprep.subr.bf16.mxu0 0
    %6865 = vmatpush1.bf16.msra.mxu0 0
    %6866 = vmatprep.subr.bf16.mxu0 0
    %6867 = vmatpush1.bf16.msra.mxu0 0
    %6868 = vmatprep.subr.bf16.mxu0 0
    %6869 = vmatpush1.bf16.msra.mxu0 0
    %6870 = vmatprep.mubr.bf16.mxu0 0
    %6871 = vmatmul.mubr.bf16.gmra.mrb[0].mxu0 %v6833
    %v6872 = vpop.f32.mrb[0].mxu0
    %v6873 = vadd.f32 %v6819, %v6872
    %v6874 = vpop.f32.mrb[0].mxu0
    %v6875 = vpop.f32.mrb[0].mxu0
    %v6876 = vadd.f32 %v6819, %v6875
    %v6877 = vpop.f32.mrb[0].mxu0
    %6878 = vmatprep.mubr.bf16.mxu0 0
    %6879 = vmatmul.mubr.bf16.gmra.mrb[0].mxu0 %v6836
    %v6880 = vpop.f32.mrb[0].mxu0
    %v6881 = vadd.f32 %v6819, %v6880
    %v6882 = vpop.f32.mrb[0].mxu0
    %v6883 = vpop.f32.mrb[0].mxu0
    %v6884 = vpop.f32.mrb[0].mxu0
    %6885 = vdwg.mxu0
    %v6886 = vld [vmem:[%s37 + $0x8] sm:$0x1]
    %v6887 = vld [vmem:[%s37 + $0x9] sm:$0x1]
    %v6888 = vsel %vm506, %v6873, 0.0
    %6889 = vadd.xlane.f32.xlu0 %v6888
    %v6890 = vpop.xlane.xlu0 %6889
    %v6891 = vsel %vm506, %v6876, 0.0
    %6892 = vadd.xlane.f32.xlu0 %v6891
    %v6893 = vpop.xlane.xlu0 %6892
    %v6894 = vsel %vm650, %v6881, 0.0
    %6895 = vadd.xlane.f32.xlu0 %v6894
    %v6896 = vpop.xlane.xlu0 %6895
    %v6897 = vmul.f32 %v6890, %v654
    %v6898 = vmul.f32 %v6893, %v654
    %v6899 = vmul.f32 %v6896, %v654
    %v6900 = vsub.f32 %v6873, %v6897
    %v6901 = vsub.f32 %v6876, %v6898
    %v6902 = vsub.f32 %v6881, %v6899
    %v6903 = vmul.f32 %v6900, %v6900
    %v6904 = vmul.f32 %v6901, %v6901
    %v6905 = vmul.f32 %v6902, %v6902
    %v6906 = vsel %vm506, %v6903, 0.0
    %6907 = vadd.xlane.f32.xlu0 %v6906
    %v6908 = vpop.xlane.xlu0 %6907
    %v6909 = vsel %vm506, %v6904, 0.0
    %6910 = vadd.xlane.f32.xlu0 %v6909
    %v6911 = vpop.xlane.xlu0 %6910
    %v6912 = vsel %vm650, %v6905, 0.0
    %6913 = vadd.xlane.f32.xlu0 %v6912
    %v6914 = vpop.xlane.xlu0 %6913
    %v6915 = vmul.f32 %v6908, %v654
    %v6916 = vmul.f32 %v6911, %v654
    %v6917 = vmul.f32 %v6914, %v654
    %v6918 = vadd.f32 %v6915, 1e-05
    %v6919 = vadd.f32 %v6916, 1e-05
    %v6920 = vadd.f32 %v6917, 1e-05
    %v6921 = vrsqrt.pop %v6918
    %v6922 = vrsqrt.pop %v6919
    %v6923 = vrsqrt.pop %v6920
    %v6924 = vmul.f32 %v6900, %v6921
    %v6925 = vmul.f32 %v6901, %v6922
    %v6926 = vmul.f32 %v6902, %v6923
    %v6927 = vlaneseq
    %v6928 = vshrl.u32 %v6927, 7
    %v6929 = vsub.s32 0, %v6928
    %v6930 = vrot.slane %v6886, %v6929
    %v6931 = vmul.f32 %v6924, %v6930
    %v6932 = vmul.f32 %v6925, %v6930
    %v6933 = vmul.f32 %v6926, %v6930
    %v6934 = vlaneseq
    %v6935 = vshrl.u32 %v6934, 7
    %v6936 = vsub.s32 0, %v6935
    %v6937 = vrot.slane %v6887, %v6936
    %v6938 = vadd.f32 %v6931, %v6937
    %v6939 = vadd.f32 %v6932, %v6937
    %v6940 = vadd.f32 %v6933, %v6937
    %v6941 = vadd.f32 %v5806, %v6938
    %v6942 = vadd.f32 %v5811, %v6939
    %v6943 = vadd.f32 %v5816, %v6940
    %v6945 = vsel %vm757, %v6943, 0
    %6947 = vmatprep.subr.mxu0 0.0
    %6948 = vmatpush1.msra.mxu0 %v6941
    %6949 = vmatprep.subr.mxu0 0.0
    %6950 = vmatpush1.msra.mxu0 %v6942
    %6951 = vmatprep.subr.mxu0 0.0
    %6952 = vmatpush1.msra.mxu0 %v6945
    %6953 = vmatprep.subr.mxu0 0.0
    %6954 = vmatpush1.msra.mxu0 0.0
    %6955 = vmatprep.subr.mxu0 0.0
    %6956 = vmatpush1.msra.mxu0 0.0
    %6957 = vmatprep.subr.mxu0 0.0
    %6958 = vmatpush1.msra.mxu0 0.0
    %6959 = vmatprep.subr.mxu0 0.0
    %6960 = vmatpush1.msra.mxu0 0.0
    %6961 = vmatprep.subr.mxu0 0.0
    %6962 = vmatpush1.msra.mxu0 0.0
    %6963 = vmatprep.subr.mxu0 0.0
    %6964 = vmatpush1.msra.mxu0 0.0
    %6965 = vmatprep.subr.mxu0 0.0
    %6966 = vmatpush1.msra.mxu0 0.0
    %6967 = vmatprep.subr.mxu0 0.0
    %6968 = vmatpush1.msra.mxu0 0.0
    %6969 = vmatprep.subr.mxu0 0.0
    %6970 = vmatpush1.msra.mxu0 0.0
    %6971 = vmatprep.subr.mxu0 0.0
    %6972 = vmatpush1.msra.mxu0 0.0
    %6973 = vmatprep.subr.mxu0 0.0
    %6974 = vmatpush1.msra.mxu0 0.0
    %6975 = vmatprep.subr.mxu0 0.0
    %6976 = vmatpush1.msra.mxu0 0.0
    %6977 = vmatprep.subr.mxu0 0.0
    %6978 = vmatpush1.msra.mxu0 0.0
    %6979 = vmatprep.subr.mxu0 0.0
    %6980 = vmatpush1.msra.mxu0 0.0
    %6981 = vmatprep.subr.mxu0 0.0
    %6982 = vmatpush1.msra.mxu0 0.0
    %6983 = vmatprep.subr.mxu0 0.0
    %6984 = vmatpush1.msra.mxu0 0.0
    %6985 = vmatprep.subr.mxu0 0.0
    %6986 = vmatpush1.msra.mxu0 0.0
    %6987 = vmatprep.subr.mxu0 0.0
    %6988 = vmatpush1.msra.mxu0 0.0
    %6989 = vmatprep.subr.mxu0 0.0
    %6990 = vmatpush1.msra.mxu0 0.0
    %6991 = vmatprep.subr.mxu0 0.0
    %6992 = vmatpush1.msra.mxu0 0.0
    %6993 = vmatprep.subr.mxu0 0.0
    %6994 = vmatpush1.msra.mxu0 0.0
    %6995 = vmatprep.subr.mxu0 0.0
    %6996 = vmatpush1.msra.mxu0 0.0
    %6997 = vmatprep.subr.mxu0 0.0
    %6998 = vmatpush1.msra.mxu0 0.0
    %6999 = vmatprep.subr.mxu0 0.0
    %7000 = vmatpush1.msra.mxu0 0.0
    %7001 = vmatprep.subr.mxu0 0.0
    %7002 = vmatpush1.msra.mxu0 0.0
    %7003 = vmatprep.subr.mxu0 0.0
    %7004 = vmatpush1.msra.mxu0 0.0
    %7005 = vmatprep.subr.mxu0 0.0
    %7006 = vmatpush1.msra.mxu0 0.0
    %7007 = vmatprep.subr.mxu0 0.0
    %7008 = vmatpush1.msra.mxu0 0.0
    %7009 = vmatprep.subr.mxu0 0.0
    %7010 = vmatpush1.msra.mxu0 0.0
    %7011 = vmatprep.mubr.f32.mxu0 0.0
    %7012 = vmatmul.mubr.f32.gmra.mrb[0].mxu0 %v722
    %v7013 = vpop.f32.mrb[0].mxu0
    %v7014 = vadd.f32 0.0, %v7013
    %v7015 = vpop.f32.mrb[0].mxu0
    %7016 = vmatprep.mubr.f32.mxu0 0.0
    %7017 = vmatmul.mubr.f32.gmra.mrb[0].mxu0 %v725
    %v7018 = vpop.f32.mrb[0].mxu0
    %v7019 = vadd.f32 0.0, %v7018
    %v7020 = vpop.f32.mrb[0].mxu0
    %7021 = vmatprep.mubr.f32.mxu0 0.0
    %7022 = vmatmul.mubr.f32.gmra.mrb[0].mxu0 %v728
    %v7023 = vpop.f32.mrb[0].mxu0
    %v7024 = vadd.f32 0.0, %v7023
    %v7025 = vpop.f32.mrb[0].mxu0
    %7026 = vmatprep.mubr.f32.mxu0 0.0
    %7027 = vmatmul.mubr.f32.gmra.mrb[0].mxu0 %v731
    %v7028 = vpop.f32.mrb[0].mxu0
    %v7029 = vadd.f32 0.0, %v7028
    %v7030 = vpop.f32.mrb[0].mxu0
    %7031 = vmatprep.mubr.f32.mxu0 0.0
    %7032 = vmatmul.mubr.f32.gmra.mrb[0].mxu0 %v734
    %v7033 = vpop.f32.mrb[0].mxu0
    %v7034 = vadd.f32 0.0, %v7033
    %v7035 = vpop.f32.mrb[0].mxu0
    %7036 = vmatprep.mubr.f32.mxu0 0.0
    %7037 = vmatmul.mubr.f32.gmra.mrb[0].mxu0 %v737
    %v7038 = vpop.f32.mrb[0].mxu0
    %v7039 = vadd.f32 0.0, %v7038
    %v7040 = vpop.f32.mrb[0].mxu0
    %7041 = vmatprep.mubr.f32.mxu0 0.0
    %7042 = vmatmul.mubr.f32.gmra.mrb[0].mxu0 %v740
    %v7043 = vpop.f32.mrb[0].mxu0
    %v7044 = vadd.f32 0.0, %v7043
    %v7045 = vpop.f32.mrb[0].mxu0
    %7046 = vmatprep.mubr.f32.mxu0 0.0
    %7047 = vmatmul.mubr.f32.gmra.mrb[0].mxu0 %v743
    %v7048 = vpop.f32.mrb[0].mxu0
    %v7049 = vadd.f32 0.0, %v7048
    %v7050 = vpop.f32.mrb[0].mxu0
    %7051 = vmatprep.mubr.f32.mxu0 0.0
    %7052 = vmatmul.mubr.f32.gmra.mrb[0].mxu0 %v746
    %v7053 = vpop.f32.mrb[0].mxu0
    %v7054 = vadd.f32 0.0, %v7053
    %v7055 = vpop.f32.mrb[0].mxu0
    %7056 = vmatprep.mubr.f32.mxu0 0.0
    %7057 = vmatmul.mubr.f32.gmra.mrb[0].mxu0 %v749
    %v7058 = vpop.f32.mrb[0].mxu0
    %v7059 = vadd.f32 0.0, %v7058
    %v7060 = vpop.f32.mrb[0].mxu0
    %7061 = vmatprep.mubr.f32.mxu0 0.0
    %7062 = vmatmul.mubr.f32.gmra.mrb[0].mxu0 %v752
    %v7063 = vpop.f32.mrb[0].mxu0
    %v7064 = vadd.f32 0.0, %v7063
    %v7065 = vpop.f32.mrb[0].mxu0
    %7066 = vmatprep.mubr.f32.mxu0 0.0
    %7067 = vmatmul.mubr.f32.gmra.mrb[0].mxu0 %v755
    %v7068 = vpop.f32.mrb[0].mxu0
    %v7069 = vadd.f32 0.0, %v7068
    %v7070 = vpop.f32.mrb[0].mxu0
    %7071 = vdwg.mxu0
    %s7072 = scalar_lea.vmem [#allocation16], 128
    %v7073 = vld [vmem:[%s7072] sm:$0xf]
    %v7074 = vld [vmem:[%s7072 + $0x4] sm:$0xf]
    %v7075 = vld [vmem:[%s7072 + $0x8] sm:$0xf]
    %v7076 = vld [vmem:[%s7072 + $0xc] sm:$0xf]
    %v7077 = vpack.c.bf16 %v7019, %v7014
    %v7078 = vpack.c.bf16 %v7029, %v7024
    %v7079 = vpack.c.bf16 %v7039, %v7034
    %s7080 = scalar_lea.vmem [#allocation16], 144
    %v7081 = vld [vmem:[%s7080] sm:$0xf]
    %v7082 = vld [vmem:[%s7080 + $0x4] sm:$0xf]
    %v7083 = vld [vmem:[%s7080 + $0x8] sm:$0xf]
    %v7084 = vld [vmem:[%s7080 + $0xc] sm:$0xf]
    %v7085 = vpack.c.bf16 %v7049, %v7044
    %v7086 = vpack.c.bf16 %v7059, %v7054
    %v7087 = vpack.c.bf16 %v7069, %v7064
    %v7092 = vunpack.c.l.b16 %v7081
    %v7093 = vunpack.c.l.b16 %v7082
    %v7094 = vunpack.c.l.b16 %v7083
    %v7095 = vunpack.c.l.b16 %v7084
    %v7096 = vpack.c.b16 %v7093, %v7092
    %v7097 = vpack.c.b16 %v7095, %v7094
    %v7101 = vsel %vm506, %v7085, 0
    %v7104 = vsel %vm506, %v7086, 0
    %v7107 = vsel %vm506, %v7087, 0
    %7109 = vmatprep.subr.bf16.mxu0 0
    %7110 = vmatpush1.bf16.msra.mxu0 %v7096
    %7111 = vmatprep.subr.bf16.mxu0 0
    %7112 = vmatpush1.bf16.msra.mxu0 %v7097
    %7113 = vmatprep.subr.bf16.mxu0 0
    %7114 = vmatpush1.bf16.msra.mxu0 0
    %7115 = vmatprep.subr.bf16.mxu0 0
    %7116 = vmatpush1.bf16.msra.mxu0 0
    %7117 = vmatprep.subr.bf16.mxu0 0
    %7118 = vmatpush1.bf16.msra.mxu0 0
    %7119 = vmatprep.subr.bf16.mxu0 0
    %7120 = vmatpush1.bf16.msra.mxu0 0
    %7121 = vmatprep.subr.bf16.mxu0 0
    %7122 = vmatpush1.bf16.msra.mxu0 0
    %7123 = vmatprep.subr.bf16.mxu0 0
    %7124 = vmatpush1.bf16.msra.mxu0 0
    %7125 = vmatprep.subr.bf16.mxu0 0
    %7126 = vmatpush1.bf16.msra.mxu0 0
    %7127 = vmatprep.subr.bf16.mxu0 0
    %7128 = vmatpush1.bf16.msra.mxu0 0
    %7129 = vmatprep.subr.bf16.mxu0 0
    %7130 = vmatpush1.bf16.msra.mxu0 0
    %7131 = vmatprep.subr.bf16.mxu0 0
    %7132 = vmatpush1.bf16.msra.mxu0 0
    %7133 = vmatprep.subr.bf16.mxu0 0
    %7134 = vmatpush1.bf16.msra.mxu0 0
    %7135 = vmatprep.subr.bf16.mxu0 0
    %7136 = vmatpush1.bf16.msra.mxu0 0
    %7137 = vmatprep.subr.bf16.mxu0 0
    %7138 = vmatpush1.bf16.msra.mxu0 0
    %7139 = vmatprep.subr.bf16.mxu0 0
    %7140 = vmatpush1.bf16.msra.mxu0 0
    %7141 = vmatprep.mubr.bf16.mxu0 0
    %7142 = vmatmul.mubr.bf16.gmra.mrb[0].mxu0 %v7101
    %v7143 = vpop.f32.mrb[0].mxu0
    %v7144 = vadd.f32 0.0, %v7143
    %v7145 = vpop.f32.mrb[0].mxu0
    %v7146 = vpop.f32.mrb[0].mxu0
    %v7147 = vadd.f32 0.0, %v7146
    %v7148 = vpop.f32.mrb[0].mxu0
    %7149 = vmatprep.mubr.bf16.mxu0 0
    %7150 = vmatmul.mubr.bf16.gmra.mrb[0].mxu0 %v7104
    %v7151 = vpop.f32.mrb[0].mxu0
    %v7152 = vadd.f32 0.0, %v7151
    %v7153 = vpop.f32.mrb[0].mxu0
    %v7154 = vpop.f32.mrb[0].mxu0
    %v7155 = vadd.f32 0.0, %v7154
    %v7156 = vpop.f32.mrb[0].mxu0
    %7157 = vmatprep.mubr.bf16.mxu0 0
    %7158 = vmatmul.mubr.bf16.gmra.mrb[0].mxu0 %v7107
    %v7159 = vpop.f32.mrb[0].mxu0
    %v7160 = vadd.f32 0.0, %v7159
    %v7161 = vpop.f32.mrb[0].mxu0
    %v7162 = vpop.f32.mrb[0].mxu0
    %v7163 = vadd.f32 0.0, %v7162
    %v7164 = vpop.f32.mrb[0].mxu0
    %7165 = vdwg.mxu0
    %v7170 = vunpack.c.l.b16 %v7073
    %v7171 = vunpack.c.l.b16 %v7074
    %v7172 = vunpack.c.l.b16 %v7075
    %v7173 = vunpack.c.l.b16 %v7076
    %v7174 = vpack.c.b16 %v7171, %v7170
    %v7175 = vpack.c.b16 %v7173, %v7172
    %v7179 = vsel %vm506, %v7077, 0
    %v7182 = vsel %vm506, %v7078, 0
    %v7185 = vsel %vm506, %v7079, 0
    %7187 = vmatprep.subr.bf16.mxu0 0
    %7188 = vmatpush1.bf16.msra.mxu0 %v7174
    %7189 = vmatprep.subr.bf16.mxu0 0
    %7190 = vmatpush1.bf16.msra.mxu0 %v7175
    %7191 = vmatprep.subr.bf16.mxu0 0
    %7192 = vmatpush1.bf16.msra.mxu0 0
    %7193 = vmatprep.subr.bf16.mxu0 0
    %7194 = vmatpush1.bf16.msra.mxu0 0
    %7195 = vmatprep.subr.bf16.mxu0 0
    %7196 = vmatpush1.bf16.msra.mxu0 0
    %7197 = vmatprep.subr.bf16.mxu0 0
    %7198 = vmatpush1.bf16.msra.mxu0 0
    %7199 = vmatprep.subr.bf16.mxu0 0
    %7200 = vmatpush1.bf16.msra.mxu0 0
    %7201 = vmatprep.subr.bf16.mxu0 0
    %7202 = vmatpush1.bf16.msra.mxu0 0
    %7203 = vmatprep.subr.bf16.mxu0 0
    %7204 = vmatpush1.bf16.msra.mxu0 0
    %7205 = vmatprep.subr.bf16.mxu0 0
    %7206 = vmatpush1.bf16.msra.mxu0 0
    %7207 = vmatprep.subr.bf16.mxu0 0
    %7208 = vmatpush1.bf16.msra.mxu0 0
    %7209 = vmatprep.subr.bf16.mxu0 0
    %7210 = vmatpush1.bf16.msra.mxu0 0
    %7211 = vmatprep.subr.bf16.mxu0 0
    %7212 = vmatpush1.bf16.msra.mxu0 0
    %7213 = vmatprep.subr.bf16.mxu0 0
    %7214 = vmatpush1.bf16.msra.mxu0 0
    %7215 = vmatprep.subr.bf16.mxu0 0
    %7216 = vmatpush1.bf16.msra.mxu0 0
    %7217 = vmatprep.subr.bf16.mxu0 0
    %7218 = vmatpush1.bf16.msra.mxu0 0
    %7219 = vmatprep.mubr.bf16.mxu0 0
    %7220 = vmatmul.mubr.bf16.gmra.mrb[0].mxu0 %v7179
    %v7221 = vpop.f32.mrb[0].mxu0
    %v7222 = vadd.f32 %v7144, %v7221
    %v7223 = vpop.f32.mrb[0].mxu0
    %v7224 = vpop.f32.mrb[0].mxu0
    %v7225 = vadd.f32 %v7147, %v7224
    %v7226 = vpop.f32.mrb[0].mxu0
    %7227 = vmatprep.mubr.bf16.mxu0 0
    %7228 = vmatmul.mubr.bf16.gmra.mrb[0].mxu0 %v7182
    %v7229 = vpop.f32.mrb[0].mxu0
    %v7230 = vadd.f32 %v7152, %v7229
    %v7231 = vpop.f32.mrb[0].mxu0
    %v7232 = vpop.f32.mrb[0].mxu0
    %v7233 = vadd.f32 %v7155, %v7232
    %v7234 = vpop.f32.mrb[0].mxu0
    %7235 = vmatprep.mubr.bf16.mxu0 0
    %7236 = vmatmul.mubr.bf16.gmra.mrb[0].mxu0 %v7185
    %v7237 = vpop.f32.mrb[0].mxu0
    %v7238 = vadd.f32 %v7160, %v7237
    %v7239 = vpop.f32.mrb[0].mxu0
    %v7240 = vpop.f32.mrb[0].mxu0
    %v7241 = vadd.f32 %v7163, %v7240
    %v7242 = vpop.f32.mrb[0].mxu0
    %7243 = vdwg.mxu0
    %s7244 = scalar_lea.vmem [#allocation18], 1
    %v7245 = vld [vmem:[%s7244] sm:$0x1]
    %v7247 = vsel %vm1071, %v7245, 0
    %7249 = vmatprep.subr.bf16.mxu0 0
    %7250 = vmatpush1.bf16.msra.mxu0 %v7247
    %7251 = vmatprep.subr.bf16.mxu0 0
    %7252 = vmatpush1.bf16.msra.mxu0 0
    %7253 = vmatprep.subr.bf16.mxu0 0
    %7254 = vmatpush1.bf16.msra.mxu0 0
    %7255 = vmatprep.subr.bf16.mxu0 0
    %7256 = vmatpush1.bf16.msra.mxu0 0
    %7257 = vmatprep.subr.bf16.mxu0 0
    %7258 = vmatpush1.bf16.msra.mxu0 0
    %7259 = vmatprep.subr.bf16.mxu0 0
    %7260 = vmatpush1.bf16.msra.mxu0 0
    %7261 = vmatprep.subr.bf16.mxu0 0
    %7262 = vmatpush1.bf16.msra.mxu0 0
    %7263 = vmatprep.subr.bf16.mxu0 0
    %7264 = vmatpush1.bf16.msra.mxu0 0
    %7265 = vmatprep.subr.bf16.mxu0 0
    %7266 = vmatpush1.bf16.msra.mxu0 0
    %7267 = vmatprep.subr.bf16.mxu0 0
    %7268 = vmatpush1.bf16.msra.mxu0 0
    %7269 = vmatprep.subr.bf16.mxu0 0
    %7270 = vmatpush1.bf16.msra.mxu0 0
    %7271 = vmatprep.subr.bf16.mxu0 0
    %7272 = vmatpush1.bf16.msra.mxu0 0
    %7273 = vmatprep.subr.bf16.mxu0 0
    %7274 = vmatpush1.bf16.msra.mxu0 0
    %7275 = vmatprep.subr.bf16.mxu0 0
    %7276 = vmatpush1.bf16.msra.mxu0 0
    %7277 = vmatprep.subr.bf16.mxu0 0
    %7278 = vmatpush1.bf16.msra.mxu0 0
    %7279 = vmatprep.subr.bf16.mxu0 0
    %7280 = vmatpush1.bf16.msra.mxu0 0
    %7281 = vmatprep.mubr.bf16.mxu0 0
    %7282 = vmatmul.mubr.bf16.gmra.mrb[0].mxu0 %v1063
    %v7283 = vpop.f32.mrb[0].mxu0
    %v7284 = vadd.f32 0.0, %v7283
    %v7285 = vpop.f32.mrb[0].mxu0
    %v7286 = vpop.f32.mrb[0].mxu0
    %v7287 = vadd.f32 0.0, %v7286
    %v7288 = vpop.f32.mrb[0].mxu0
    %7289 = vmatprep.mubr.bf16.mxu0 0
    %7290 = vmatmul.mubr.bf16.gmra.mrb[0].mxu0 %v1066
    %v7291 = vpop.f32.mrb[0].mxu0
    %v7292 = vadd.f32 0.0, %v7291
    %v7293 = vpop.f32.mrb[0].mxu0
    %v7294 = vpop.f32.mrb[0].mxu0
    %v7295 = vadd.f32 0.0, %v7294
    %v7296 = vpop.f32.mrb[0].mxu0
    %7297 = vmatprep.mubr.bf16.mxu0 0
    %7298 = vmatmul.mubr.bf16.gmra.mrb[0].mxu0 %v1069
    %v7299 = vpop.f32.mrb[0].mxu0
    %v7300 = vadd.f32 0.0, %v7299
    %v7301 = vpop.f32.mrb[0].mxu0
    %v7302 = vpop.f32.mrb[0].mxu0
    %v7303 = vadd.f32 0.0, %v7302
    %v7304 = vpop.f32.mrb[0].mxu0
    %7305 = vdwg.mxu0
    %v7306 = vadd.f32 %v7222, %v7284
    %v7307 = vadd.f32 %v7225, %v7287
    %v7308 = vadd.f32 %v7230, %v7292
    %v7309 = vadd.f32 %v7233, %v7295
    %v7310 = vadd.f32 %v7238, %v7300
    %v7311 = vadd.f32 %v7241, %v7303
    %s7312 = scalar_lea.vmem %s37, 16
    %v7313 = vld [vmem:[%s7312] sm:$0x1]
    %v7314 = vlaneseq
    %v7315 = vshrl.u32 %v7314, 7
    %v7316 = vsub.s32 0, %v7315
    %v7317 = vrot.slane %v7313, %v7316
    %v7318 = vadd.f32 %v7306, %v7317
    %v7319 = vadd.f32 %v7307, %v7317
    %v7320 = vadd.f32 %v7308, %v7317
    %v7321 = vadd.f32 %v7309, %v7317
    %v7322 = vadd.f32 %v7310, %v7317
    %v7323 = vadd.f32 %v7311, %v7317
    %v7324 = vmax.f32 %v7318, 0.0
    %v7325 = vmax.f32 %v7319, 0.0
    %v7326 = vmax.f32 %v7320, 0.0
    %v7327 = vmax.f32 %v7321, 0.0
    %v7328 = vmax.f32 %v7322, 0.0
    %v7329 = vmax.f32 %v7323, 0.0
    %s7330 = scalar_lea.vmem [#allocation16], 160
    %v7331 = vld [vmem:[%s7330] sm:$0xf]
    %v7332 = vld [vmem:[%s7330 + $0x4] sm:$0xf]
    %v7333 = vld [vmem:[%s7330 + $0x8] sm:$0xf]
    %v7334 = vld [vmem:[%s7330 + $0xc] sm:$0xf]
    %v7335 = vpack.c.bf16 %v7325, %v7324
    %v7336 = vpack.c.bf16 %v7327, %v7326
    %v7337 = vpack.c.bf16 %v7329, %v7328
    %v7338 = vld [vmem:[%s7312 + $0x1] sm:$0x1]
    %v7339 = vlaneseq
    %v7340 = vshrl.u32 %v7339, 7
    %v7341 = vsub.s32 0, %v7340
    %v7342 = vrot.slane %v7338, %v7341
    %v7347 = vunpack.c.l.b16 %v7331
    %v7348 = vunpack.c.l.b16 %v7332
    %v7349 = vunpack.c.l.b16 %v7333
    %v7350 = vunpack.c.l.b16 %v7334
    %v7351 = vpack.c.b16 %v7348, %v7347
    %v7352 = vpack.c.b16 %v7350, %v7349
    %v7356 = vsel %vm506, %v7335, 0
    %v7359 = vsel %vm506, %v7336, 0
    %v7362 = vsel %vm506, %v7337, 0
    %7364 = vmatprep.subr.bf16.mxu0 0
    %7365 = vmatpush1.bf16.msra.mxu0 %v7351
    %7366 = vmatprep.subr.bf16.mxu0 0
    %7367 = vmatpush1.bf16.msra.mxu0 %v7352
    %7368 = vmatprep.subr.bf16.mxu0 0
    %7369 = vmatpush1.bf16.msra.mxu0 0
    %7370 = vmatprep.subr.bf16.mxu0 0
    %7371 = vmatpush1.bf16.msra.mxu0 0
    %7372 = vmatprep.subr.bf16.mxu0 0
    %7373 = vmatpush1.bf16.msra.mxu0 0
    %7374 = vmatprep.subr.bf16.mxu0 0
    %7375 = vmatpush1.bf16.msra.mxu0 0
    %7376 = vmatprep.subr.bf16.mxu0 0
    %7377 = vmatpush1.bf16.msra.mxu0 0
    %7378 = vmatprep.subr.bf16.mxu0 0
    %7379 = vmatpush1.bf16.msra.mxu0 0
    %7380 = vmatprep.subr.bf16.mxu0 0
    %7381 = vmatpush1.bf16.msra.mxu0 0
    %7382 = vmatprep.subr.bf16.mxu0 0
    %7383 = vmatpush1.bf16.msra.mxu0 0
    %7384 = vmatprep.subr.bf16.mxu0 0
    %7385 = vmatpush1.bf16.msra.mxu0 0
    %7386 = vmatprep.subr.bf16.mxu0 0
    %7387 = vmatpush1.bf16.msra.mxu0 0
    %7388 = vmatprep.subr.bf16.mxu0 0
    %7389 = vmatpush1.bf16.msra.mxu0 0
    %7390 = vmatprep.subr.bf16.mxu0 0
    %7391 = vmatpush1.bf16.msra.mxu0 0
    %7392 = vmatprep.subr.bf16.mxu0 0
    %7393 = vmatpush1.bf16.msra.mxu0 0
    %7394 = vmatprep.subr.bf16.mxu0 0
    %7395 = vmatpush1.bf16.msra.mxu0 0
    %7396 = vmatprep.mubr.bf16.mxu0 0
    %7397 = vmatmul.mubr.bf16.gmra.mrb[0].mxu0 %v7356
    %v7398 = vpop.f32.mrb[0].mxu0
    %v7399 = vadd.f32 %v7342, %v7398
    %v7400 = vpop.f32.mrb[0].mxu0
    %v7401 = vpop.f32.mrb[0].mxu0
    %v7402 = vadd.f32 %v7342, %v7401
    %v7403 = vpop.f32.mrb[0].mxu0
    %7404 = vmatprep.mubr.bf16.mxu0 0
    %7405 = vmatmul.mubr.bf16.gmra.mrb[0].mxu0 %v7359
    %v7406 = vpop.f32.mrb[0].mxu0
    %v7407 = vadd.f32 %v7342, %v7406
    %v7408 = vpop.f32.mrb[0].mxu0
    %v7409 = vpop.f32.mrb[0].mxu0
    %v7410 = vadd.f32 %v7342, %v7409
    %v7411 = vpop.f32.mrb[0].mxu0
    %7412 = vmatprep.mubr.bf16.mxu0 0
    %7413 = vmatmul.mubr.bf16.gmra.mrb[0].mxu0 %v7362
    %v7414 = vpop.f32.mrb[0].mxu0
    %v7415 = vadd.f32 %v7342, %v7414
    %v7416 = vpop.f32.mrb[0].mxu0
    %v7417 = vpop.f32.mrb[0].mxu0
    %v7418 = vadd.f32 %v7342, %v7417
    %v7419 = vpop.f32.mrb[0].mxu0
    %7420 = vdwg.mxu0
    %v7421 = vmax.f32 %v7399, 0.0
    %v7422 = vmax.f32 %v7402, 0.0
    %v7423 = vmax.f32 %v7407, 0.0
    %v7424 = vmax.f32 %v7410, 0.0
    %v7425 = vmax.f32 %v7415, 0.0
    %v7426 = vmax.f32 %v7418, 0.0
    %s7427 = scalar_lea.vmem [#allocation16], 176
    %v7428 = vld [vmem:[%s7427] sm:$0xf]
    %v7429 = vld [vmem:[%s7427 + $0x4] sm:$0xf]
    %v7430 = vld [vmem:[%s7427 + $0x8] sm:$0xf]
    %v7431 = vld [vmem:[%s7427 + $0xc] sm:$0xf]
    %v7432 = vpack.c.bf16 %v7422, %v7421
    %v7433 = vpack.c.bf16 %v7424, %v7423
    %v7434 = vpack.c.bf16 %v7426, %v7425
    %v7435 = vld [vmem:[%s7312 + $0x2] sm:$0x1]
    %v7436 = vlaneseq
    %v7437 = vshrl.u32 %v7436, 7
    %v7438 = vsub.s32 0, %v7437
    %v7439 = vrot.slane %v7435, %v7438
    %v7444 = vunpack.c.l.b16 %v7428
    %v7445 = vunpack.c.l.b16 %v7429
    %v7446 = vunpack.c.l.b16 %v7430
    %v7447 = vunpack.c.l.b16 %v7431
    %v7448 = vpack.c.b16 %v7445, %v7444
    %v7449 = vpack.c.b16 %v7447, %v7446
    %v7453 = vsel %vm506, %v7432, 0
    %v7456 = vsel %vm506, %v7433, 0
    %v7459 = vsel %vm506, %v7434, 0
    %7461 = vmatprep.subr.bf16.mxu0 0
    %7462 = vmatpush1.bf16.msra.mxu0 %v7448
    %7463 = vmatprep.subr.bf16.mxu0 0
    %7464 = vmatpush1.bf16.msra.mxu0 %v7449
    %7465 = vmatprep.subr.bf16.mxu0 0
    %7466 = vmatpush1.bf16.msra.mxu0 0
    %7467 = vmatprep.subr.bf16.mxu0 0
    %7468 = vmatpush1.bf16.msra.mxu0 0
    %7469 = vmatprep.subr.bf16.mxu0 0
    %7470 = vmatpush1.bf16.msra.mxu0 0
    %7471 = vmatprep.subr.bf16.mxu0 0
    %7472 = vmatpush1.bf16.msra.mxu0 0
    %7473 = vmatprep.subr.bf16.mxu0 0
    %7474 = vmatpush1.bf16.msra.mxu0 0
    %7475 = vmatprep.subr.bf16.mxu0 0
    %7476 = vmatpush1.bf16.msra.mxu0 0
    %7477 = vmatprep.subr.bf16.mxu0 0
    %7478 = vmatpush1.bf16.msra.mxu0 0
    %7479 = vmatprep.subr.bf16.mxu0 0
    %7480 = vmatpush1.bf16.msra.mxu0 0
    %7481 = vmatprep.subr.bf16.mxu0 0
    %7482 = vmatpush1.bf16.msra.mxu0 0
    %7483 = vmatprep.subr.bf16.mxu0 0
    %7484 = vmatpush1.bf16.msra.mxu0 0
    %7485 = vmatprep.subr.bf16.mxu0 0
    %7486 = vmatpush1.bf16.msra.mxu0 0
    %7487 = vmatprep.subr.bf16.mxu0 0
    %7488 = vmatpush1.bf16.msra.mxu0 0
    %7489 = vmatprep.subr.bf16.mxu0 0
    %7490 = vmatpush1.bf16.msra.mxu0 0
    %7491 = vmatprep.subr.bf16.mxu0 0
    %7492 = vmatpush1.bf16.msra.mxu0 0
    %7493 = vmatprep.mubr.bf16.mxu0 0
    %7494 = vmatmul.mubr.bf16.gmra.mrb[0].mxu0 %v7453
    %v7495 = vpop.f32.mrb[0].mxu0
    %v7496 = vadd.f32 %v7439, %v7495
    %v7497 = vpop.f32.mrb[0].mxu0
    %v7498 = vpop.f32.mrb[0].mxu0
    %v7499 = vadd.f32 %v7439, %v7498
    %v7500 = vpop.f32.mrb[0].mxu0
    %7501 = vmatprep.mubr.bf16.mxu0 0
    %7502 = vmatmul.mubr.bf16.gmra.mrb[0].mxu0 %v7456
    %v7503 = vpop.f32.mrb[0].mxu0
    %v7504 = vadd.f32 %v7439, %v7503
    %v7505 = vpop.f32.mrb[0].mxu0
    %v7506 = vpop.f32.mrb[0].mxu0
    %v7507 = vadd.f32 %v7439, %v7506
    %v7508 = vpop.f32.mrb[0].mxu0
    %7509 = vmatprep.mubr.bf16.mxu0 0
    %7510 = vmatmul.mubr.bf16.gmra.mrb[0].mxu0 %v7459
    %v7511 = vpop.f32.mrb[0].mxu0
    %v7512 = vadd.f32 %v7439, %v7511
    %v7513 = vpop.f32.mrb[0].mxu0
    %v7514 = vpop.f32.mrb[0].mxu0
    %v7515 = vadd.f32 %v7439, %v7514
    %v7516 = vpop.f32.mrb[0].mxu0
    %7517 = vdwg.mxu0
    %v7518 = vld [vmem:[%s7312 + $0x3] sm:$0x1]
    %v7519 = vld [vmem:[%s7312 + $0x4] sm:$0x1]
    %v7520 = vsel %vm506, %v7496, 0.0
    %7521 = vadd.xlane.f32.xlu0 %v7520
    %v7522 = vpop.xlane.xlu0 %7521
    %v7523 = vsel %vm506, %v7499, 0.0
    %7524 = vadd.xlane.f32.xlu0 %v7523
    %v7525 = vpop.xlane.xlu0 %7524
    %v7526 = vsel %vm506, %v7504, 0.0
    %7527 = vadd.xlane.f32.xlu0 %v7526
    %v7528 = vpop.xlane.xlu0 %7527
    %v7529 = vsel %vm506, %v7507, 0.0
    %7530 = vadd.xlane.f32.xlu0 %v7529
    %v7531 = vpop.xlane.xlu0 %7530
    %v7532 = vsel %vm506, %v7512, 0.0
    %7533 = vadd.xlane.f32.xlu0 %v7532
    %v7534 = vpop.xlane.xlu0 %7533
    %v7535 = vsel %vm506, %v7515, 0.0
    %7536 = vadd.xlane.f32.xlu0 %v7535
    %v7537 = vpop.xlane.xlu0 %7536
    %v7538 = vmul.f32 %v7522, %v654
    %v7539 = vmul.f32 %v7525, %v654
    %v7540 = vmul.f32 %v7528, %v654
    %v7541 = vmul.f32 %v7531, %v654
    %v7542 = vmul.f32 %v7534, %v654
    %v7543 = vmul.f32 %v7537, %v654
    %v7544 = vsub.f32 %v7496, %v7538
    %v7545 = vsub.f32 %v7499, %v7539
    %v7546 = vsub.f32 %v7504, %v7540
    %v7547 = vsub.f32 %v7507, %v7541
    %v7548 = vsub.f32 %v7512, %v7542
    %v7549 = vsub.f32 %v7515, %v7543
    %v7550 = vmul.f32 %v7544, %v7544
    %v7551 = vmul.f32 %v7545, %v7545
    %v7552 = vmul.f32 %v7546, %v7546
    %v7553 = vmul.f32 %v7547, %v7547
    %v7554 = vmul.f32 %v7548, %v7548
    %v7555 = vmul.f32 %v7549, %v7549
    %v7556 = vsel %vm506, %v7550, 0.0
    %7557 = vadd.xlane.f32.xlu0 %v7556
    %v7558 = vpop.xlane.xlu0 %7557
    %v7559 = vsel %vm506, %v7551, 0.0
    %7560 = vadd.xlane.f32.xlu0 %v7559
    %v7561 = vpop.xlane.xlu0 %7560
    %v7562 = vsel %vm506, %v7552, 0.0
    %7563 = vadd.xlane.f32.xlu0 %v7562
    %v7564 = vpop.xlane.xlu0 %7563
    %v7565 = vsel %vm506, %v7553, 0.0
    %7566 = vadd.xlane.f32.xlu0 %v7565
    %v7567 = vpop.xlane.xlu0 %7566
    %v7568 = vsel %vm506, %v7554, 0.0
    %7569 = vadd.xlane.f32.xlu0 %v7568
    %v7570 = vpop.xlane.xlu0 %7569
    %v7571 = vsel %vm506, %v7555, 0.0
    %7572 = vadd.xlane.f32.xlu0 %v7571
    %v7573 = vpop.xlane.xlu0 %7572
    %v7574 = vmul.f32 %v7558, %v654
    %v7575 = vmul.f32 %v7561, %v654
    %v7576 = vmul.f32 %v7564, %v654
    %v7577 = vmul.f32 %v7567, %v654
    %v7578 = vmul.f32 %v7570, %v654
    %v7579 = vmul.f32 %v7573, %v654
    %v7580 = vadd.f32 %v7574, 1e-05
    %v7581 = vadd.f32 %v7575, 1e-05
    %v7582 = vadd.f32 %v7576, 1e-05
    %v7583 = vadd.f32 %v7577, 1e-05
    %v7584 = vadd.f32 %v7578, 1e-05
    %v7585 = vadd.f32 %v7579, 1e-05
    %v7586 = vrsqrt.pop %v7580
    %v7587 = vrsqrt.pop %v7581
    %v7588 = vrsqrt.pop %v7582
    %v7589 = vrsqrt.pop %v7583
    %v7590 = vrsqrt.pop %v7584
    %v7591 = vrsqrt.pop %v7585
    %v7592 = vmul.f32 %v7544, %v7586
    %v7593 = vmul.f32 %v7545, %v7587
    %v7594 = vmul.f32 %v7546, %v7588
    %v7595 = vmul.f32 %v7547, %v7589
    %v7596 = vmul.f32 %v7548, %v7590
    %v7597 = vmul.f32 %v7549, %v7591
    %v7598 = vlaneseq
    %v7599 = vshrl.u32 %v7598, 7
    %v7600 = vsub.s32 0, %v7599
    %v7601 = vrot.slane %v7518, %v7600
    %v7602 = vmul.f32 %v7592, %v7601
    %v7603 = vmul.f32 %v7593, %v7601
    %v7604 = vmul.f32 %v7594, %v7601
    %v7605 = vmul.f32 %v7595, %v7601
    %v7606 = vmul.f32 %v7596, %v7601
    %v7607 = vmul.f32 %v7597, %v7601
    %v7608 = vlaneseq
    %v7609 = vshrl.u32 %v7608, 7
    %v7610 = vsub.s32 0, %v7609
    %v7611 = vrot.slane %v7519, %v7610
    %v7612 = vadd.f32 %v7602, %v7611
    %v7613 = vadd.f32 %v7603, %v7611
    %v7614 = vadd.f32 %v7604, %v7611
    %v7615 = vadd.f32 %v7605, %v7611
    %v7616 = vadd.f32 %v7606, %v7611
    %v7617 = vadd.f32 %v7607, %v7611
    %7618 = vmatprep.subr.mxu0 0.0
    %7619 = vmatpush1.msra.mxu0 %v7612
    %7620 = vmatprep.subr.mxu0 0.0
    %7621 = vmatpush1.msra.mxu0 %v7613
    %7622 = vmatprep.subr.mxu0 0.0
    %7623 = vmatpush1.msra.mxu0 %v7614
    %7624 = vmatprep.subr.mxu0 0.0
    %7625 = vmatpush1.msra.mxu0 %v7615
    %7626 = vmatprep.subr.mxu0 0.0
    %7627 = vmatpush1.msra.mxu0 %v7616
    %7628 = vmatprep.subr.mxu0 0.0
    %7629 = vmatpush1.msra.mxu0 %v7617
    %7630 = vmatprep.subr.mxu0 0.0
    %7631 = vmatpush1.msra.mxu0 0.0
    %7632 = vmatprep.subr.mxu0 0.0
    %7633 = vmatpush1.msra.mxu0 0.0
    %7634 = vmatprep.subr.mxu0 0.0
    %7635 = vmatpush1.msra.mxu0 0.0
    %7636 = vmatprep.subr.mxu0 0.0
    %7637 = vmatpush1.msra.mxu0 0.0
    %7638 = vmatprep.subr.mxu0 0.0
    %7639 = vmatpush1.msra.mxu0 0.0
    %7640 = vmatprep.subr.mxu0 0.0
    %7641 = vmatpush1.msra.mxu0 0.0
    %7642 = vmatprep.subr.mxu0 0.0
    %7643 = vmatpush1.msra.mxu0 0.0
    %7644 = vmatprep.subr.mxu0 0.0
    %7645 = vmatpush1.msra.mxu0 0.0
    %7646 = vmatprep.subr.mxu0 0.0
    %7647 = vmatpush1.msra.mxu0 0.0
    %7648 = vmatprep.subr.mxu0 0.0
    %7649 = vmatpush1.msra.mxu0 0.0
    %7650 = vmatprep.subr.mxu0 0.0
    %7651 = vmatpush1.msra.mxu0 0.0
    %7652 = vmatprep.subr.mxu0 0.0
    %7653 = vmatpush1.msra.mxu0 0.0
    %7654 = vmatprep.subr.mxu0 0.0
    %7655 = vmatpush1.msra.mxu0 0.0
    %7656 = vmatprep.subr.mxu0 0.0
    %7657 = vmatpush1.msra.mxu0 0.0
    %7658 = vmatprep.subr.mxu0 0.0
    %7659 = vmatpush1.msra.mxu0 0.0
    %7660 = vmatprep.subr.mxu0 0.0
    %7661 = vmatpush1.msra.mxu0 0.0
    %7662 = vmatprep.subr.mxu0 0.0
    %7663 = vmatpush1.msra.mxu0 0.0
    %7664 = vmatprep.subr.mxu0 0.0
    %7665 = vmatpush1.msra.mxu0 0.0
    %7666 = vmatprep.subr.mxu0 0.0
    %7667 = vmatpush1.msra.mxu0 0.0
    %7668 = vmatprep.subr.mxu0 0.0
    %7669 = vmatpush1.msra.mxu0 0.0
    %7670 = vmatprep.subr.mxu0 0.0
    %7671 = vmatpush1.msra.mxu0 0.0
    %7672 = vmatprep.subr.mxu0 0.0
    %7673 = vmatpush1.msra.mxu0 0.0
    %7674 = vmatprep.subr.mxu0 0.0
    %7675 = vmatpush1.msra.mxu0 0.0
    %7676 = vmatprep.subr.mxu0 0.0
    %7677 = vmatpush1.msra.mxu0 0.0
    %7678 = vmatprep.subr.mxu0 0.0
    %7679 = vmatpush1.msra.mxu0 0.0
    %7680 = vmatprep.subr.mxu0 0.0
    %7681 = vmatpush1.msra.mxu0 0.0
    %7682 = vmatprep.mubr.f32.mxu0 0.0
    %7683 = vmatmul.mubr.f32.gmra.mrb[0].mxu0 %v1445
    %v7684 = vpop.f32.mrb[0].mxu0
    %v7685 = vadd.f32 0.0, %v7684
    %v7686 = vpop.f32.mrb[0].mxu0
    %7687 = vmatprep.mubr.f32.mxu0 0.0
    %7688 = vmatmul.mubr.f32.gmra.mrb[0].mxu0 %v1448
    %v7689 = vpop.f32.mrb[0].mxu0
    %v7690 = vadd.f32 0.0, %v7689
    %v7691 = vpop.f32.mrb[0].mxu0
    %7692 = vmatprep.mubr.f32.mxu0 0.0
    %7693 = vmatmul.mubr.f32.gmra.mrb[0].mxu0 %v1451
    %v7694 = vpop.f32.mrb[0].mxu0
    %v7695 = vadd.f32 0.0, %v7694
    %v7696 = vpop.f32.mrb[0].mxu0
    %7697 = vdwg.mxu0
    %s7698 = scalar_lea.vmem [#allocation16], 192
    %v7699 = vld [vmem:[%s7698] sm:$0xf]
    %v7700 = vld [vmem:[%s7698 + $0x4] sm:$0xf]
    %v7701 = vld [vmem:[%s7698 + $0x8] sm:$0xf]
    %v7702 = vld [vmem:[%s7698 + $0xc] sm:$0xf]
    %v7703 = vpack.c.bf16 %v6942, %v6941
    %v7704 = vpack.c.bf16 %v6943, %v6943
    %s7705 = scalar_lea.vmem [#allocation16], 208
    %v7706 = vld [vmem:[%s7705] sm:$0xf]
    %v7707 = vld [vmem:[%s7705 + $0x4] sm:$0xf]
    %v7708 = vld [vmem:[%s7705 + $0x8] sm:$0xf]
    %v7709 = vld [vmem:[%s7705 + $0xc] sm:$0xf]
    %v7710 = vpack.c.bf16 %v7690, %v7685
    %v7711 = vpack.c.bf16 %v7695, %v7695
    %v7716 = vunpack.c.l.b16 %v7706
    %v7717 = vunpack.c.l.b16 %v7707
    %v7718 = vunpack.c.l.b16 %v7708
    %v7719 = vunpack.c.l.b16 %v7709
    %v7720 = vpack.c.b16 %v7717, %v7716
    %v7721 = vpack.c.b16 %v7719, %v7718
    %v7725 = vsel %vm506, %v7710, 0
    %v7728 = vsel %vm506, %v7711, 0
    %7730 = vmatprep.subr.bf16.mxu0 0
    %7731 = vmatpush1.bf16.msra.mxu0 %v7720
    %7732 = vmatprep.subr.bf16.mxu0 0
    %7733 = vmatpush1.bf16.msra.mxu0 %v7721
    %7734 = vmatprep.subr.bf16.mxu0 0
    %7735 = vmatpush1.bf16.msra.mxu0 0
    %7736 = vmatprep.subr.bf16.mxu0 0
    %7737 = vmatpush1.bf16.msra.mxu0 0
    %7738 = vmatprep.subr.bf16.mxu0 0
    %7739 = vmatpush1.bf16.msra.mxu0 0
    %7740 = vmatprep.subr.bf16.mxu0 0
    %7741 = vmatpush1.bf16.msra.mxu0 0
    %7742 = vmatprep.subr.bf16.mxu0 0
    %7743 = vmatpush1.bf16.msra.mxu0 0
    %7744 = vmatprep.subr.bf16.mxu0 0
    %7745 = vmatpush1.bf16.msra.mxu0 0
    %7746 = vmatprep.subr.bf16.mxu0 0
    %7747 = vmatpush1.bf16.msra.mxu0 0
    %7748 = vmatprep.subr.bf16.mxu0 0
    %7749 = vmatpush1.bf16.msra.mxu0 0
    %7750 = vmatprep.subr.bf16.mxu0 0
    %7751 = vmatpush1.bf16.msra.mxu0 0
    %7752 = vmatprep.subr.bf16.mxu0 0
    %7753 = vmatpush1.bf16.msra.mxu0 0
    %7754 = vmatprep.subr.bf16.mxu0 0
    %7755 = vmatpush1.bf16.msra.mxu0 0
    %7756 = vmatprep.subr.bf16.mxu0 0
    %7757 = vmatpush1.bf16.msra.mxu0 0
    %7758 = vmatprep.subr.bf16.mxu0 0
    %7759 = vmatpush1.bf16.msra.mxu0 0
    %7760 = vmatprep.subr.bf16.mxu0 0
    %7761 = vmatpush1.bf16.msra.mxu0 0
    %7762 = vmatprep.mubr.bf16.mxu0 0
    %7763 = vmatmul.mubr.bf16.gmra.mrb[0].mxu0 %v7725
    %v7764 = vpop.f32.mrb[0].mxu0
    %v7765 = vadd.f32 0.0, %v7764
    %v7766 = vpop.f32.mrb[0].mxu0
    %v7767 = vpop.f32.mrb[0].mxu0
    %v7768 = vadd.f32 0.0, %v7767
    %v7769 = vpop.f32.mrb[0].mxu0
    %7770 = vmatprep.mubr.bf16.mxu0 0
    %7771 = vmatmul.mubr.bf16.gmra.mrb[0].mxu0 %v7728
    %v7772 = vpop.f32.mrb[0].mxu0
    %v7773 = vadd.f32 0.0, %v7772
    %v7774 = vpop.f32.mrb[0].mxu0
    %v7775 = vpop.f32.mrb[0].mxu0
    %v7776 = vpop.f32.mrb[0].mxu0
    %7777 = vdwg.mxu0
    %v7782 = vunpack.c.l.b16 %v7699
    %v7783 = vunpack.c.l.b16 %v7700
    %v7784 = vunpack.c.l.b16 %v7701
    %v7785 = vunpack.c.l.b16 %v7702
    %v7786 = vpack.c.b16 %v7783, %v7782
    %v7787 = vpack.c.b16 %v7785, %v7784
    %v7791 = vsel %vm506, %v7703, 0
    %v7794 = vsel %vm506, %v7704, 0
    %7796 = vmatprep.subr.bf16.mxu0 0
    %7797 = vmatpush1.bf16.msra.mxu0 %v7786
    %7798 = vmatprep.subr.bf16.mxu0 0
    %7799 = vmatpush1.bf16.msra.mxu0 %v7787
    %7800 = vmatprep.subr.bf16.mxu0 0
    %7801 = vmatpush1.bf16.msra.mxu0 0
    %7802 = vmatprep.subr.bf16.mxu0 0
    %7803 = vmatpush1.bf16.msra.mxu0 0
    %7804 = vmatprep.subr.bf16.mxu0 0
    %7805 = vmatpush1.bf16.msra.mxu0 0
    %7806 = vmatprep.subr.bf16.mxu0 0
    %7807 = vmatpush1.bf16.msra.mxu0 0
    %7808 = vmatprep.subr.bf16.mxu0 0
    %7809 = vmatpush1.bf16.msra.mxu0 0
    %7810 = vmatprep.subr.bf16.mxu0 0
    %7811 = vmatpush1.bf16.msra.mxu0 0
    %7812 = vmatprep.subr.bf16.mxu0 0
    %7813 = vmatpush1.bf16.msra.mxu0 0
    %7814 = vmatprep.subr.bf16.mxu0 0
    %7815 = vmatpush1.bf16.msra.mxu0 0
    %7816 = vmatprep.subr.bf16.mxu0 0
    %7817 = vmatpush1.bf16.msra.mxu0 0
    %7818 = vmatprep.subr.bf16.mxu0 0
    %7819 = vmatpush1.bf16.msra.mxu0 0
    %7820 = vmatprep.subr.bf16.mxu0 0
    %7821 = vmatpush1.bf16.msra.mxu0 0
    %7822 = vmatprep.subr.bf16.mxu0 0
    %7823 = vmatpush1.bf16.msra.mxu0 0
    %7824 = vmatprep.subr.bf16.mxu0 0
    %7825 = vmatpush1.bf16.msra.mxu0 0
    %7826 = vmatprep.subr.bf16.mxu0 0
    %7827 = vmatpush1.bf16.msra.mxu0 0
    %7828 = vmatprep.mubr.bf16.mxu0 0
    %7829 = vmatmul.mubr.bf16.gmra.mrb[0].mxu0 %v7791
    %v7830 = vpop.f32.mrb[0].mxu0
    %v7831 = vadd.f32 %v7765, %v7830
    %v7832 = vpop.f32.mrb[0].mxu0
    %v7833 = vpop.f32.mrb[0].mxu0
    %v7834 = vadd.f32 %v7768, %v7833
    %v7835 = vpop.f32.mrb[0].mxu0
    %7836 = vmatprep.mubr.bf16.mxu0 0
    %7837 = vmatmul.mubr.bf16.gmra.mrb[0].mxu0 %v7794
    %v7838 = vpop.f32.mrb[0].mxu0
    %v7839 = vadd.f32 %v7773, %v7838
    %v7840 = vpop.f32.mrb[0].mxu0
    %v7841 = vpop.f32.mrb[0].mxu0
    %v7842 = vpop.f32.mrb[0].mxu0
    %7843 = vdwg.mxu0
    %v7844 = vld [vmem:[%s7312 + $0x5] sm:$0x1]
    %v7845 = vlaneseq
    %v7846 = vshrl.u32 %v7845, 7
    %v7847 = vsub.s32 0, %v7846
    %v7848 = vrot.slane %v7844, %v7847
    %v7849 = vadd.f32 %v7831, %v7848
    %v7850 = vadd.f32 %v7834, %v7848
    %v7851 = vadd.f32 %v7839, %v7848
    %v7852 = vmax.f32 %v7849, 0.0
    %v7853 = vmax.f32 %v7850, 0.0
    %v7854 = vmax.f32 %v7851, 0.0
    %s7855 = scalar_lea.vmem [#allocation16], 224
    %v7856 = vld [vmem:[%s7855] sm:$0xf]
    %v7857 = vld [vmem:[%s7855 + $0x4] sm:$0xf]
    %v7858 = vld [vmem:[%s7855 + $0x8] sm:$0xf]
    %v7859 = vld [vmem:[%s7855 + $0xc] sm:$0xf]
    %v7860 = vpack.c.bf16 %v7853, %v7852
    %v7861 = vpack.c.bf16 %v7854, %v7854
    %v7862 = vld [vmem:[%s7312 + $0x6] sm:$0x1]
    %v7863 = vlaneseq
    %v7864 = vshrl.u32 %v7863, 7
    %v7865 = vsub.s32 0, %v7864
    %v7866 = vrot.slane %v7862, %v7865
    %v7871 = vunpack.c.l.b16 %v7856
    %v7872 = vunpack.c.l.b16 %v7857
    %v7873 = vunpack.c.l.b16 %v7858
    %v7874 = vunpack.c.l.b16 %v7859
    %v7875 = vpack.c.b16 %v7872, %v7871
    %v7876 = vpack.c.b16 %v7874, %v7873
    %v7880 = vsel %vm506, %v7860, 0
    %v7883 = vsel %vm506, %v7861, 0
    %7885 = vmatprep.subr.bf16.mxu0 0
    %7886 = vmatpush1.bf16.msra.mxu0 %v7875
    %7887 = vmatprep.subr.bf16.mxu0 0
    %7888 = vmatpush1.bf16.msra.mxu0 %v7876
    %7889 = vmatprep.subr.bf16.mxu0 0
    %7890 = vmatpush1.bf16.msra.mxu0 0
    %7891 = vmatprep.subr.bf16.mxu0 0
    %7892 = vmatpush1.bf16.msra.mxu0 0
    %7893 = vmatprep.subr.bf16.mxu0 0
    %7894 = vmatpush1.bf16.msra.mxu0 0
    %7895 = vmatprep.subr.bf16.mxu0 0
    %7896 = vmatpush1.bf16.msra.mxu0 0
    %7897 = vmatprep.subr.bf16.mxu0 0
    %7898 = vmatpush1.bf16.msra.mxu0 0
    %7899 = vmatprep.subr.bf16.mxu0 0
    %7900 = vmatpush1.bf16.msra.mxu0 0
    %7901 = vmatprep.subr.bf16.mxu0 0
    %7902 = vmatpush1.bf16.msra.mxu0 0
    %7903 = vmatprep.subr.bf16.mxu0 0
    %7904 = vmatpush1.bf16.msra.mxu0 0
    %7905 = vmatprep.subr.bf16.mxu0 0
    %7906 = vmatpush1.bf16.msra.mxu0 0
    %7907 = vmatprep.subr.bf16.mxu0 0
    %7908 = vmatpush1.bf16.msra.mxu0 0
    %7909 = vmatprep.subr.bf16.mxu0 0
    %7910 = vmatpush1.bf16.msra.mxu0 0
    %7911 = vmatprep.subr.bf16.mxu0 0
    %7912 = vmatpush1.bf16.msra.mxu0 0
    %7913 = vmatprep.subr.bf16.mxu0 0
    %7914 = vmatpush1.bf16.msra.mxu0 0
    %7915 = vmatprep.subr.bf16.mxu0 0
    %7916 = vmatpush1.bf16.msra.mxu0 0
    %7917 = vmatprep.mubr.bf16.mxu0 0
    %7918 = vmatmul.mubr.bf16.gmra.mrb[0].mxu0 %v7880
    %v7919 = vpop.f32.mrb[0].mxu0
    %v7920 = vadd.f32 %v7866, %v7919
    %v7921 = vpop.f32.mrb[0].mxu0
    %v7922 = vpop.f32.mrb[0].mxu0
    %v7923 = vadd.f32 %v7866, %v7922
    %v7924 = vpop.f32.mrb[0].mxu0
    %7925 = vmatprep.mubr.bf16.mxu0 0
    %7926 = vmatmul.mubr.bf16.gmra.mrb[0].mxu0 %v7883
    %v7927 = vpop.f32.mrb[0].mxu0
    %v7928 = vadd.f32 %v7866, %v7927
    %v7929 = vpop.f32.mrb[0].mxu0
    %v7930 = vpop.f32.mrb[0].mxu0
    %v7931 = vpop.f32.mrb[0].mxu0
    %7932 = vdwg.mxu0
    %v7933 = vmax.f32 %v7920, 0.0
    %v7934 = vmax.f32 %v7923, 0.0
    %v7935 = vmax.f32 %v7928, 0.0
    %s7936 = scalar_lea.vmem [#allocation16], 240
    %v7937 = vld [vmem:[%s7936] sm:$0xf]
    %v7938 = vld [vmem:[%s7936 + $0x4] sm:$0xf]
    %v7939 = vld [vmem:[%s7936 + $0x8] sm:$0xf]
    %v7940 = vld [vmem:[%s7936 + $0xc] sm:$0xf]
    %v7941 = vpack.c.bf16 %v7934, %v7933
    %v7942 = vpack.c.bf16 %v7935, %v7935
    %v7943 = vld [vmem:[%s7312 + $0x7] sm:$0x1]
    %v7944 = vlaneseq
    %v7945 = vshrl.u32 %v7944, 7
    %v7946 = vsub.s32 0, %v7945
    %v7947 = vrot.slane %v7943, %v7946
    %v7952 = vunpack.c.l.b16 %v7937
    %v7953 = vunpack.c.l.b16 %v7938
    %v7954 = vunpack.c.l.b16 %v7939
    %v7955 = vunpack.c.l.b16 %v7940
    %v7956 = vpack.c.b16 %v7953, %v7952
    %v7957 = vpack.c.b16 %v7955, %v7954
    %v7961 = vsel %vm506, %v7941, 0
    %v7964 = vsel %vm506, %v7942, 0
    %7966 = vmatprep.subr.bf16.mxu0 0
    %7967 = vmatpush1.bf16.msra.mxu0 %v7956
    %7968 = vmatprep.subr.bf16.mxu0 0
    %7969 = vmatpush1.bf16.msra.mxu0 %v7957
    %7970 = vmatprep.subr.bf16.mxu0 0
    %7971 = vmatpush1.bf16.msra.mxu0 0
    %7972 = vmatprep.subr.bf16.mxu0 0
    %7973 = vmatpush1.bf16.msra.mxu0 0
    %7974 = vmatprep.subr.bf16.mxu0 0
    %7975 = vmatpush1.bf16.msra.mxu0 0
    %7976 = vmatprep.subr.bf16.mxu0 0
    %7977 = vmatpush1.bf16.msra.mxu0 0
    %7978 = vmatprep.subr.bf16.mxu0 0
    %7979 = vmatpush1.bf16.msra.mxu0 0
    %7980 = vmatprep.subr.bf16.mxu0 0
    %7981 = vmatpush1.bf16.msra.mxu0 0
    %7982 = vmatprep.subr.bf16.mxu0 0
    %7983 = vmatpush1.bf16.msra.mxu0 0
    %7984 = vmatprep.subr.bf16.mxu0 0
    %7985 = vmatpush1.bf16.msra.mxu0 0
    %7986 = vmatprep.subr.bf16.mxu0 0
    %7987 = vmatpush1.bf16.msra.mxu0 0
    %7988 = vmatprep.subr.bf16.mxu0 0
    %7989 = vmatpush1.bf16.msra.mxu0 0
    %7990 = vmatprep.subr.bf16.mxu0 0
    %7991 = vmatpush1.bf16.msra.mxu0 0
    %7992 = vmatprep.subr.bf16.mxu0 0
    %7993 = vmatpush1.bf16.msra.mxu0 0
    %7994 = vmatprep.subr.bf16.mxu0 0
    %7995 = vmatpush1.bf16.msra.mxu0 0
    %7996 = vmatprep.subr.bf16.mxu0 0
    %7997 = vmatpush1.bf16.msra.mxu0 0
    %7998 = vmatprep.mubr.bf16.mxu0 0
    %7999 = vmatmul.mubr.bf16.gmra.mrb[0].mxu0 %v7961
    %v8000 = vpop.f32.mrb[0].mxu0
    %v8001 = vadd.f32 %v7947, %v8000
    %v8002 = vpop.f32.mrb[0].mxu0
    %v8003 = vpop.f32.mrb[0].mxu0
    %v8004 = vadd.f32 %v7947, %v8003
    %v8005 = vpop.f32.mrb[0].mxu0
    %8006 = vmatprep.mubr.bf16.mxu0 0
    %8007 = vmatmul.mubr.bf16.gmra.mrb[0].mxu0 %v7964
    %v8008 = vpop.f32.mrb[0].mxu0
    %v8009 = vadd.f32 %v7947, %v8008
    %v8010 = vpop.f32.mrb[0].mxu0
    %v8011 = vpop.f32.mrb[0].mxu0
    %v8012 = vpop.f32.mrb[0].mxu0
    %8013 = vdwg.mxu0
    %v8014 = vld [vmem:[%s7312 + $0x8] sm:$0x1]
    %v8015 = vld [vmem:[%s7312 + $0x9] sm:$0x1]
    %v8016 = vsel %vm506, %v8001, 0.0
    %8017 = vadd.xlane.f32.xlu0 %v8016
    %v8018 = vpop.xlane.xlu0 %8017
    %v8019 = vsel %vm506, %v8004, 0.0
    %8020 = vadd.xlane.f32.xlu0 %v8019
    %v8021 = vpop.xlane.xlu0 %8020
    %v8022 = vsel %vm650, %v8009, 0.0
    %8023 = vadd.xlane.f32.xlu0 %v8022
    %v8024 = vpop.xlane.xlu0 %8023
    %v8025 = vmul.f32 %v8018, %v654
    %v8026 = vmul.f32 %v8021, %v654
    %v8027 = vmul.f32 %v8024, %v654
    %v8028 = vsub.f32 %v8001, %v8025
    %v8029 = vsub.f32 %v8004, %v8026
    %v8030 = vsub.f32 %v8009, %v8027
    %v8031 = vmul.f32 %v8028, %v8028
    %v8032 = vmul.f32 %v8029, %v8029
    %v8033 = vmul.f32 %v8030, %v8030
    %v8034 = vsel %vm506, %v8031, 0.0
    %8035 = vadd.xlane.f32.xlu0 %v8034
    %v8036 = vpop.xlane.xlu0 %8035
    %v8037 = vsel %vm506, %v8032, 0.0
    %8038 = vadd.xlane.f32.xlu0 %v8037
    %v8039 = vpop.xlane.xlu0 %8038
    %v8040 = vsel %vm650, %v8033, 0.0
    %8041 = vadd.xlane.f32.xlu0 %v8040
    %v8042 = vpop.xlane.xlu0 %8041
    %v8043 = vmul.f32 %v8036, %v654
    %v8044 = vmul.f32 %v8039, %v654
    %v8045 = vmul.f32 %v8042, %v654
    %v8046 = vadd.f32 %v8043, 1e-05
    %v8047 = vadd.f32 %v8044, 1e-05
    %v8048 = vadd.f32 %v8045, 1e-05
    %v8049 = vrsqrt.pop %v8046
    %v8050 = vrsqrt.pop %v8047
    %v8051 = vrsqrt.pop %v8048
    %v8052 = vmul.f32 %v8028, %v8049
    %v8053 = vmul.f32 %v8029, %v8050
    %v8054 = vmul.f32 %v8030, %v8051
    %v8055 = vlaneseq
    %v8056 = vshrl.u32 %v8055, 7
    %v8057 = vsub.s32 0, %v8056
    %v8058 = vrot.slane %v8014, %v8057
    %v8059 = vmul.f32 %v8052, %v8058
    %v8060 = vmul.f32 %v8053, %v8058
    %v8061 = vmul.f32 %v8054, %v8058
    %v8062 = vlaneseq
    %v8063 = vshrl.u32 %v8062, 7
    %v8064 = vsub.s32 0, %v8063
    %v8065 = vrot.slane %v8015, %v8064
    %v8066 = vadd.f32 %v8059, %v8065
    %v8067 = vadd.f32 %v8060, %v8065
    %v8068 = vadd.f32 %v8061, %v8065
    %v8069 = vadd.f32 %v6941, %v8066
    %v8070 = vadd.f32 %v6942, %v8067
    %v8071 = vadd.f32 %v6943, %v8068
    %v8072 = vadd.f32 %v8069, %v696
    %v8073 = vadd.f32 %v8070, %v697
    %v8074 = vadd.f32 %v8071, %v698
    %v8075 = vld [vmem:[#allocation31] sm:$0xf]
    %v8076 = vld [vmem:[#allocation31 + $0x4] sm:$0xf]
    %v8077 = vld [vmem:[#allocation31 + $0x8] sm:$0xf]
    %v8078 = vld [vmem:[#allocation31 + $0xc] sm:$0xf]
    %v8079 = vpack.c.bf16 %v8073, %v8072
    %v8080 = vpack.c.bf16 %v8074, %v8074
    %v8081 = vld [vmem:[%s67] sm:$0x1]
    %v8082 = vlaneseq
    %v8083 = vshrl.u32 %v8082, 7
    %v8084 = vsub.s32 0, %v8083
    %v8085 = vrot.slane %v8081, %v8084
    %v8090 = vunpack.c.l.b16 %v8075
    %v8091 = vunpack.c.l.b16 %v8076
    %v8092 = vunpack.c.l.b16 %v8077
    %v8093 = vunpack.c.l.b16 %v8078
    %v8094 = vpack.c.b16 %v8091, %v8090
    %v8095 = vpack.c.b16 %v8093, %v8092
    %v8099 = vsel %vm506, %v8079, 0
    %v8102 = vsel %vm506, %v8080, 0
    %8104 = vmatprep.subr.bf16.mxu0 0
    %8105 = vmatpush1.bf16.msra.mxu0 %v8094
    %8106 = vmatprep.subr.bf16.mxu0 0
    %8107 = vmatpush1.bf16.msra.mxu0 %v8095
    %8108 = vmatprep.subr.bf16.mxu0 0
    %8109 = vmatpush1.bf16.msra.mxu0 0
    %8110 = vmatprep.subr.bf16.mxu0 0
    %8111 = vmatpush1.bf16.msra.mxu0 0
    %8112 = vmatprep.subr.bf16.mxu0 0
    %8113 = vmatpush1.bf16.msra.mxu0 0
    %8114 = vmatprep.subr.bf16.mxu0 0
    %8115 = vmatpush1.bf16.msra.mxu0 0
    %8116 = vmatprep.subr.bf16.mxu0 0
    %8117 = vmatpush1.bf16.msra.mxu0 0
    %8118 = vmatprep.subr.bf16.mxu0 0
    %8119 = vmatpush1.bf16.msra.mxu0 0
    %8120 = vmatprep.subr.bf16.mxu0 0
    %8121 = vmatpush1.bf16.msra.mxu0 0
    %8122 = vmatprep.subr.bf16.mxu0 0
    %8123 = vmatpush1.bf16.msra.mxu0 0
    %8124 = vmatprep.subr.bf16.mxu0 0
    %8125 = vmatpush1.bf16.msra.mxu0 0
    %8126 = vmatprep.subr.bf16.mxu0 0
    %8127 = vmatpush1.bf16.msra.mxu0 0
    %8128 = vmatprep.subr.bf16.mxu0 0
    %8129 = vmatpush1.bf16.msra.mxu0 0
    %8130 = vmatprep.subr.bf16.mxu0 0
    %8131 = vmatpush1.bf16.msra.mxu0 0
    %8132 = vmatprep.subr.bf16.mxu0 0
    %8133 = vmatpush1.bf16.msra.mxu0 0
    %8134 = vmatprep.subr.bf16.mxu0 0
    %8135 = vmatpush1.bf16.msra.mxu0 0
    %8136 = vmatprep.mubr.bf16.mxu0 0
    %8137 = vmatmul.mubr.bf16.gmra.mrb[0].mxu0 %v8099
    %v8138 = vpop.f32.mrb[0].mxu0
    %v8139 = vadd.f32 %v8085, %v8138
    %v8140 = vpop.f32.mrb[0].mxu0
    %v8141 = vpop.f32.mrb[0].mxu0
    %v8142 = vadd.f32 %v8085, %v8141
    %v8143 = vpop.f32.mrb[0].mxu0
    %8144 = vmatprep.mubr.bf16.mxu0 0
    %8145 = vmatmul.mubr.bf16.gmra.mrb[0].mxu0 %v8102
    %v8146 = vpop.f32.mrb[0].mxu0
    %v8147 = vadd.f32 %v8085, %v8146
    %v8148 = vpop.f32.mrb[0].mxu0
    %v8149 = vpop.f32.mrb[0].mxu0
    %v8150 = vpop.f32.mrb[0].mxu0
    %8151 = vdwg.mxu0
    %v8152 = vmax.f32 %v8139, 0.0
    %v8153 = vmax.f32 %v8142, 0.0
    %v8154 = vmax.f32 %v8147, 0.0
    %s8155 = scalar_lea.vmem [#allocation31], 16
    %v8156 = vld [vmem:[%s8155] sm:$0xf]
    %v8157 = vld [vmem:[%s8155 + $0x4] sm:$0xf]
    %v8158 = vld [vmem:[%s8155 + $0x8] sm:$0xf]
    %v8159 = vld [vmem:[%s8155 + $0xc] sm:$0xf]
    %v8160 = vpack.c.bf16 %v8153, %v8152
    %v8161 = vpack.c.bf16 %v8154, %v8154
    %v8162 = vld [vmem:[%s67 + $0x1] sm:$0x1]
    %v8163 = vlaneseq
    %v8164 = vshrl.u32 %v8163, 7
    %v8165 = vsub.s32 0, %v8164
    %v8166 = vrot.slane %v8162, %v8165
    %v8171 = vunpack.c.l.b16 %v8156
    %v8172 = vunpack.c.l.b16 %v8157
    %v8173 = vunpack.c.l.b16 %v8158
    %v8174 = vunpack.c.l.b16 %v8159
    %v8175 = vpack.c.b16 %v8172, %v8171
    %v8176 = vpack.c.b16 %v8174, %v8173
    %v8180 = vsel %vm506, %v8160, 0
    %v8183 = vsel %vm506, %v8161, 0
    %8185 = vmatprep.subr.bf16.mxu0 0
    %8186 = vmatpush1.bf16.msra.mxu0 %v8175
    %8187 = vmatprep.subr.bf16.mxu0 0
    %8188 = vmatpush1.bf16.msra.mxu0 %v8176
    %8189 = vmatprep.subr.bf16.mxu0 0
    %8190 = vmatpush1.bf16.msra.mxu0 0
    %8191 = vmatprep.subr.bf16.mxu0 0
    %8192 = vmatpush1.bf16.msra.mxu0 0
    %8193 = vmatprep.subr.bf16.mxu0 0
    %8194 = vmatpush1.bf16.msra.mxu0 0
    %8195 = vmatprep.subr.bf16.mxu0 0
    %8196 = vmatpush1.bf16.msra.mxu0 0
    %8197 = vmatprep.subr.bf16.mxu0 0
    %8198 = vmatpush1.bf16.msra.mxu0 0
    %8199 = vmatprep.subr.bf16.mxu0 0
    %8200 = vmatpush1.bf16.msra.mxu0 0
    %8201 = vmatprep.subr.bf16.mxu0 0
    %8202 = vmatpush1.bf16.msra.mxu0 0
    %8203 = vmatprep.subr.bf16.mxu0 0
    %8204 = vmatpush1.bf16.msra.mxu0 0
    %8205 = vmatprep.subr.bf16.mxu0 0
    %8206 = vmatpush1.bf16.msra.mxu0 0
    %8207 = vmatprep.subr.bf16.mxu0 0
    %8208 = vmatpush1.bf16.msra.mxu0 0
    %8209 = vmatprep.subr.bf16.mxu0 0
    %8210 = vmatpush1.bf16.msra.mxu0 0
    %8211 = vmatprep.subr.bf16.mxu0 0
    %8212 = vmatpush1.bf16.msra.mxu0 0
    %8213 = vmatprep.subr.bf16.mxu0 0
    %8214 = vmatpush1.bf16.msra.mxu0 0
    %8215 = vmatprep.subr.bf16.mxu0 0
    %8216 = vmatpush1.bf16.msra.mxu0 0
    %8217 = vmatprep.mubr.bf16.mxu0 0
    %8218 = vmatmul.mubr.bf16.gmra.mrb[0].mxu0 %v8180
    %v8219 = vpop.f32.mrb[0].mxu0
    %v8220 = vadd.f32 %v8166, %v8219
    %v8221 = vpop.f32.mrb[0].mxu0
    %v8222 = vpop.f32.mrb[0].mxu0
    %v8223 = vadd.f32 %v8166, %v8222
    %v8224 = vpop.f32.mrb[0].mxu0
    %8225 = vmatprep.mubr.bf16.mxu0 0
    %8226 = vmatmul.mubr.bf16.gmra.mrb[0].mxu0 %v8183
    %v8227 = vpop.f32.mrb[0].mxu0
    %v8228 = vadd.f32 %v8166, %v8227
    %v8229 = vpop.f32.mrb[0].mxu0
    %v8230 = vpop.f32.mrb[0].mxu0
    %v8231 = vpop.f32.mrb[0].mxu0
    %8232 = vdwg.mxu0
    %v8233 = vmax.f32 %v8220, 0.0
    %v8234 = vmax.f32 %v8223, 0.0
    %v8235 = vmax.f32 %v8228, 0.0
    %v8236 = vld [vmem:[%s65] sm:$0xf]
    %v8237 = vld [vmem:[%s65 + $0x4] sm:$0xf]
    %v8238 = vld [vmem:[%s65 + $0x8] sm:$0xf]
    %v8239 = vld [vmem:[%s65 + $0xc] sm:$0xf]
    %v8240 = vpack.c.bf16 %v8234, %v8233
    %v8241 = vpack.c.bf16 %v8235, %v8235
    %v8242 = vld [vmem:[%s69] sm:$0x1]
    %v8244 = vlaneseq
    %v8245 = vshrl.u32 %v8244, 7
    %v8246 = vsub.s32 0, %v8245
    %v8247 = vrot.slane %v8242, %v8246
    %v8253 = vunpack.c.l.b16 %v8236
    %v8254 = vunpack.c.l.b16 %v8237
    %v8255 = vunpack.c.l.b16 %v8238
    %v8256 = vunpack.c.l.b16 %v8239
    %v8257 = vpack.c.b16 %v8254, %v8253
    %v8258 = vpack.c.b16 %v8256, %v8255
    %v8262 = vsel %vm506, %v8240, 0
    %v8265 = vsel %vm506, %v8241, 0
    %8267 = vmatprep.subr.bf16.mxu0 0
    %8268 = vmatpush1.bf16.msra.mxu0 %v8257
    %8269 = vmatprep.subr.bf16.mxu0 0
    %8270 = vmatpush1.bf16.msra.mxu0 %v8258
    %8271 = vmatprep.subr.bf16.mxu0 0
    %8272 = vmatpush1.bf16.msra.mxu0 0
    %8273 = vmatprep.subr.bf16.mxu0 0
    %8274 = vmatpush1.bf16.msra.mxu0 0
    %8275 = vmatprep.subr.bf16.mxu0 0
    %8276 = vmatpush1.bf16.msra.mxu0 0
    %8277 = vmatprep.subr.bf16.mxu0 0
    %8278 = vmatpush1.bf16.msra.mxu0 0
    %8279 = vmatprep.subr.bf16.mxu0 0
    %8280 = vmatpush1.bf16.msra.mxu0 0
    %8281 = vmatprep.subr.bf16.mxu0 0
    %8282 = vmatpush1.bf16.msra.mxu0 0
    %8283 = vmatprep.subr.bf16.mxu0 0
    %8284 = vmatpush1.bf16.msra.mxu0 0
    %8285 = vmatprep.subr.bf16.mxu0 0
    %8286 = vmatpush1.bf16.msra.mxu0 0
    %8287 = vmatprep.subr.bf16.mxu0 0
    %8288 = vmatpush1.bf16.msra.mxu0 0
    %8289 = vmatprep.subr.bf16.mxu0 0
    %8290 = vmatpush1.bf16.msra.mxu0 0
    %8291 = vmatprep.subr.bf16.mxu0 0
    %8292 = vmatpush1.bf16.msra.mxu0 0
    %8293 = vmatprep.subr.bf16.mxu0 0
    %8294 = vmatpush1.bf16.msra.mxu0 0
    %8295 = vmatprep.subr.bf16.mxu0 0
    %8296 = vmatpush1.bf16.msra.mxu0 0
    %8297 = vmatprep.subr.bf16.mxu0 0
    %8298 = vmatpush1.bf16.msra.mxu0 0
    %8299 = vmatprep.mubr.bf16.mxu0 0
    %8300 = vmatmul.mubr.bf16.gmra.mrb[0].mxu0 %v8262
    %v8301 = vpop.f32.mrb[0].mxu0
    %v8302 = vadd.f32 %v8247, %v8301
    %v8303 = vpop.f32.mrb[0].mxu0
    %v8304 = vpop.f32.mrb[0].mxu0
    %v8305 = vadd.f32 %v8247, %v8304
    %v8306 = vpop.f32.mrb[0].mxu0
    %8307 = vmatprep.mubr.bf16.mxu0 0
    %8308 = vmatmul.mubr.bf16.gmra.mrb[0].mxu0 %v8265
    %v8309 = vpop.f32.mrb[0].mxu0
    %v8310 = vadd.f32 %v8247, %v8309
    %v8311 = vpop.f32.mrb[0].mxu0
    %v8312 = vpop.f32.mrb[0].mxu0
    %v8313 = vpop.f32.mrb[0].mxu0
    %8314 = vdwg.mxu0
    %vm8315 = vcmask 23552
    %8316 = vst.msk [vmem:[%s71] sm:$0xff] %vm8315, %v8302
    %8317 = vst.msk [vmem:[%s71 + $0x8] sm:$0xff] %vm8315, %v8305
    %vm8318 = vcmask 21504
    %8319 = vst.msk [vmem:[%s71 + $0x10] sm:$0x3f] %vm8318, %v8310
    // Predicated region
    $region222: #{_lambda_.1} parent=1 // pred_check
      _
    $region223: #{_lambda_.1} parent=1 // pred_check_branch
      %8321 = sbr.rel (0) target = $region225
    $region224: #{_lambda_.1} parent=1 // pred_region
      _
    $region225: #{_lambda_.1} parent=1 // pred_fallthru
      _
    // Predicated region
    $region226: #{_lambda_.1} parent=1 // pred_check
      _
    $region227: #{_lambda_.1} parent=1 // pred_check_branch
      %8323 = sbr.rel (0) target = $region229
    $region228: #{_lambda_.1} parent=1 // pred_region
      _
    $region229: #{_lambda_.1} parent=1 // pred_fallthru
      _
    %8324 = vsyncpa [#allocation3], 1
    %8325 = vsyncpa [#allocation5], 1
    %8326 = vsyncpa [#allocation8], 1
    %8327 = vsyncpa [#allocation11], 1
    %8328 = vsyncpa [#allocation14], 1
    %8329 = vsyncpa [#allocation17], 1
    %8330 = vsyncpa [#allocation20], 1
    %8331 = vsyncpa [#allocation23], 1
    %8332 = vsyncpa [#allocation26], 1
    %8333 = vsyncpa [#allocation29], 1
    %8334 = vsyncpa [#allocation32], 1

</llo_original>
